<compile_context>
chip_gen: v7x
topology: tpu7x:2x2x1
jax: 0.10.0
libtpu: 0.0.40
codegen_flags: <defaults>
</compile_context>

<pallas_src>
import functools

import jax
import jax.numpy as jnp
from jax import lax
from jax.experimental import pallas as pl
from jax.experimental.pallas import tpu as pltpu


_SLACK = 8  # zero slack rows before/after the flattened padded image


def _round_up(x, m):
    return (x + m - 1) // m * m


def _conv3x3_accumulate(src_ref, w_ref, *, S, Wp, M):
    """3x3 conv (pad=1) over the flattened padded image held in src_ref.

    src_ref : (L, Cp) bf16 ref; padded image occupies rows [S, S + (H+2)*Wp).
    w_ref   : (3, 3*Cp, Cp) bf16 ref; w_ref[kh][kw*Cp + ci, co].
    Returns (M, Cp) f32 conv output for rows 1..H of the padded layout.
    """
    acc = None
    for kh in range(3):
        # Lane-concatenated im2col slab for this kernel row: (M, 3*Cp) bf16.
        # Slices are already bf16 (no cast, no f32 temp).
        slab = jnp.concatenate(
            [src_ref[pl.ds(S + kh * Wp + kw - 1, M), :] for kw in range(3)],
            axis=1,
        )
        part = jnp.dot(slab, w_ref[kh], preferred_element_type=jnp.float32)
        acc = part if acc is None else acc + part
    return acc


def _up_residual_block_kernel(x_ref, w1_ref, w2_ref, bn_ref,
                              out_ref, mid_ref, *, H, W, Wp, Cp, M, S):
    # x_ref   : (L, Cp)  bf16 flattened zero-padded input, L = 2*S + (H+2)*Wp
    # w1_ref  : (3, 3*Cp, Cp) bf16 conv1 weights (kh-major, [kw*Cp+ci, co])
    # w2_ref  : (3, 3*Cp, Cp) bf16 conv2 weights
    # bn_ref  : (4, Cp)  f32  rows = (scale1, bias1, scale2, bias2), folded BN
    # out_ref : (M, Cp)  f32  rows 1..H of the padded layout (wrapper strips pad)
    # mid_ref : (L, Cp)  bf16 VMEM scratch holding the padded conv1 activation
    s1 = bn_ref[0:1, :]
    b1 = bn_ref[1:2, :]
    s2 = bn_ref[2:3, :]
    b2 = bn_ref[3:4, :]

    # ---- conv1 (3x3, pad=1) + BN1 + ReLU -----------------------------------
    a1 = _conv3x3_accumulate(x_ref, w1_ref, S=S, Wp=Wp, M=M)
    h1 = jnp.maximum(a1 * s1 + b1, 0.0)

    # Re-create the conv zero-padding border (columns 0 and W+1..Wp-1 of every
    # image row) with a tiny (Wp, Cp) 0/1 mask broadcast over the H rows.  The
    # reshapes only split/merge leading dims (trailing tile (Wp, Cp) unchanged).
    wcol = lax.broadcasted_iota(jnp.int32, (Wp, Cp), 0)
    maskf = jnp.logical_and(wcol >= 1, wcol <= W).astype(jnp.float32)
    h1 = (h1.reshape(H, Wp, Cp) * maskf[None, :, :]).reshape(M, Cp)
    h1 = h1.astype(jnp.bfloat16)

    # Aligned full-slab stores of the intermediate; only the small halo row
    # blocks (slack + top pad row / bottom pad row + slack) are zero-filled.
    # Kept per grid step (not program_id==0 gated) for 2-TensorCore safety;
    # cost is ~2*(S+Wp)*Cp*2 bytes per step.
    mid_ref[pl.ds(0, S + Wp), :] = jnp.zeros((S + Wp, Cp), jnp.bfloat16)
    mid_ref[pl.ds(S + (H + 1) * Wp, Wp + S), :] = jnp.zeros((Wp + S, Cp),
                                                            jnp.bfloat16)
    mid_ref[pl.ds(S + Wp, M), :] = h1

    # ---- conv2 (3x3, pad=1) + BN2 + residual add + ReLU --------------------
    a2 = _conv3x3_accumulate(mid_ref, w2_ref, S=S, Wp=Wp, M=M)
    res = x_ref[pl.ds(S + Wp, M), :].astype(jnp.float32)   # identity branch
    out_ref[...] = jnp.maximum(a2 * s2 + b2 + res, 0.0)


def _pick_vmem_limit(L, M, Cp):
    """Per-step VMEM estimate (double-buffered blocks + scratch + temps)."""
    bf16, f32 = 2, 4
    est = (2 * L * Cp * bf16                 # x block (bf16, x2 buffers)
           + 2 * 2 * 3 * 3 * Cp * Cp * bf16  # w1 + w2 blocks (x2 buffers)
           + 2 * 4 * Cp * f32                # folded BN block
           + 2 * M * Cp * f32                # output block (x2 buffers)
           + L * Cp * bf16                   # mid scratch (bf16)
           + M * 3 * Cp * bf16               # im2col slab temp
           + 4 * M * Cp * f32)               # acc / h1 / epilogue temps
    try:
        cap = pltpu.get_tpu_info().vmem_capacity_bytes
    except Exception:
        cap = 64 * 1024 * 1024               # conservative (v7x-sized) fallback
    return int(min(max(est + (8 << 20), 32 << 20), int(0.85 * cap)))


def up_residual_block(x_nchw, w1, w2, bn1, bn2, eps=1e-5):
    """Fused UpResidualBlock forward (stride=1, upsample=None, domain=-1).

    x_nchw : (B, C, H, W) input.
    w1, w2 : (C, C, 3, 3) PyTorch OIHW conv weights (bias=False).
    bn1/bn2: tuples (gamma, beta, running_mean, running_var), each (C,).
    Returns (out_nchw, domain) like the PyTorch forward (domain = -1).
    """
    B, C, H, W = x_nchw.shape
    assert w1.shape == (C, C, 3, 3) and w2.shape == (C, C, 3, 3)

    Cp = _round_up(max(C, 128), 128)      # lane dim, multiple of 128
    Wp = _round_up(W + 2, 8)              # padded row length, sublane aligned
    S = _SLACK
    P = (H + 2) * Wp                      # flattened padded image rows
    L = 2 * S + P
    M = H * Wp                            # computed output rows

    # ---- input: NCHW -> zero/channel padded, flattened NHWC, bf16 -----------
    x_nhwc = jnp.transpose(x_nchw, (0, 2, 3, 1)).astype(jnp.bfloat16)
    xp = jnp.pad(x_nhwc, ((0, 0), (1, 1), (1, Wp - W - 1), (0, Cp - C)))
    xext = jnp.pad(xp.reshape(B, P, Cp), ((0, 0), (S, S), (0, 0)))

    # ---- weights: OIHW -> (3, 3*Cp, Cp) bf16, [kh][kw*Cp + ci, co] ----------
    def prep_w(w):
        wt = jnp.transpose(w, (2, 3, 1, 0))                 # (kh, kw, ci, co)
        wt = jnp.pad(wt, ((0, 0), (0, 0), (0, Cp - C), (0, Cp - C)))
        return wt.reshape(3, 3 * Cp, Cp).astype(jnp.bfloat16)

    # ---- eval-mode BatchNorm folded to per-channel scale / bias -------------
    def fold_bn(bn):
        gamma, beta, rmean, rvar = bn
        s = gamma / jnp.sqrt(rvar + eps)
        b = beta - rmean * s
        return (jnp.pad(s, (0, Cp - C)).astype(jnp.float32),
                jnp.pad(b, (0, Cp - C)).astype(jnp.float32))

    s1, b1 = fold_bn(bn1)
    s2, b2 = fold_bn(bn2)
    bn_vec = jnp.stack([s1, b1, s2, b2], axis=0)            # (4, Cp)

    kernel = functools.partial(_up_residual_block_kernel,
                               H=H, W=W, Wp=Wp, Cp=Cp, M=M, S=S)

    out_flat = pl.pallas_call(
        kernel,
        out_shape=jax.ShapeDtypeStruct((B, M, Cp), jnp.float32),
        grid_spec=pltpu.PrefetchScalarGridSpec(
            num_scalar_prefetch=0,
            grid=(B,),
            in_specs=[
                pl.BlockSpec((None, L, Cp), lambda b: (b, 0, 0)),    # xext
                pl.BlockSpec((3, 3 * Cp, Cp), lambda b: (0, 0, 0)),  # w1
                pl.BlockSpec((3, 3 * Cp, Cp), lambda b: (0, 0, 0)),  # w2
                pl.BlockSpec((4, Cp), lambda b: (0, 0)),             # folded BN
            ],
            out_specs=pl.BlockSpec((None, M, Cp), lambda b: (b, 0, 0)),
            scratch_shapes=[pltpu.VMEM((L, Cp), jnp.bfloat16)],
        ),
        compiler_params=pltpu.CompilerParams(
            dimension_semantics=("parallel",),
            vmem_limit_bytes=_pick_vmem_limit(L, M, Cp),
        ),
    )(xext, prep_w(w1), prep_w(w2), bn_vec)

    out = out_flat.reshape(B, H, Wp, Cp)[:, :, 1:W + 1, :C]
    return jnp.transpose(out, (0, 3, 1, 2)), -1


# ----------------------------- references -----------------------------------
def ref_forward_f32(x, w1, w2, bn1, bn2, eps=1e-5):
    """Pure-JAX f32 reference of the PyTorch forward (NCHW, eval-mode BN)."""
    dn = ('NCHW', 'OIHW', 'NCHW')

    def bn_apply(o, bn):
        g, b, rm, rv = bn
        s = g / jnp.sqrt(rv + eps)
        return o * s[None, :, None, None] + (b - rm * s)[None, :, None, None]

    def conv(o, w):
        return lax.conv_general_dilated(o, w, (1, 1), ((1, 1), (1, 1)),
                                        dimension_numbers=dn,
                                        precision=lax.Precision.HIGHEST)

    out = jnp.maximum(bn_apply(conv(x, w1), bn1), 0.0)
    out = bn_apply(conv(out, w2), bn2)
    return jnp.maximum(out + x, 0.0)


def ref_forward_bf16(x, w1, w2, bn1, bn2, eps=1e-5):
    """Reference at the kernel's precision (bf16 operands/residual, f32 acc)."""
    dn = ('NCHW', 'OIHW', 'NCHW')

    def bn_apply(o, bn):
        g, b, rm, rv = bn
        s = g / jnp.sqrt(rv + eps)
        return o * s[None, :, None, None] + (b - rm * s)[None, :, None, None]

    def conv(o, w):
        return lax.conv_general_dilated(
            o.astype(jnp.bfloat16), w.astype(jnp.bfloat16), (1, 1),
            ((1, 1), (1, 1)), dimension_numbers=dn,
            preferred_element_type=jnp.float32)

    out = jnp.maximum(bn_apply(conv(x, w1), bn1), 0.0)
    out = bn_apply(conv(out, w2), bn2)
    res = x.astype(jnp.bfloat16).astype(jnp.float32)   # bf16 residual, like kernel
    return jnp.maximum(out + res, 0.0)


if __name__ == "__main__":
    B, C, H, W = 2, 8, 16, 16   # in_channel == out_channel (required: upsample=None)
    key = jax.random.PRNGKey(0)
    keys = jax.random.split(key, 11)

    x = jax.random.normal(keys[0], (B, C, H, W), dtype=jnp.float32)
    w1 = 0.1 * jax.random.normal(keys[1], (C, C, 3, 3), dtype=jnp.float32)
    w2 = 0.1 * jax.random.normal(keys[2], (C, C, 3, 3), dtype=jnp.float32)

    def make_bn(k0, k1, k2, k3):
        gamma = 1.0 + 0.1 * jax.random.normal(keys[k0], (C,), dtype=jnp.float32)
        beta = 0.1 * jax.random.normal(keys[k1], (C,), dtype=jnp.float32)
        rmean = 0.1 * jax.random.normal(keys[k2], (C,), dtype=jnp.float32)
        rvar = 0.5 + jnp.abs(jax.random.normal(keys[k3], (C,), dtype=jnp.float32))
        return (gamma, beta, rmean, rvar)

    bn1 = make_bn(3, 4, 5, 6)
    bn2 = make_bn(7, 8, 9, 10)

    out, domain = up_residual_block(x, w1, w2, bn1, bn2)
    out = jax.block_until_ready(out)

    assert out.shape == (B, C, H, W)
    assert domain == -1

    # Structural check at matched precision (bf16 operands/residual, f32 acc).
    ref_p = ref_forward_bf16(x, w1, w2, bn1, bn2)
    assert jnp.allclose(out, ref_p, atol=1e-2, rtol=1e-2), \
        "mismatch vs precision-matched (bf16) reference"

    # Semantic check vs the full-f32 PyTorch-equivalent forward (tolerance
    # accounts for bf16 matmul operands / residual).
    ref_full = ref_forward_f32(x, w1, w2, bn1, bn2)
    assert jnp.allclose(out, ref_full, atol=5e-2, rtol=5e-2), \
        "mismatch vs f32 reference"

    print("KERNEL_OK")
</pallas_src>

<mosaic_0001>
module attributes {stable_mosaic.version = 11 : i64} {
  func.func @_up_residual_block_kernel(%arg0: i32, %arg1: memref<1x448x128xbf16, #tpu.memory_space<vmem>>, %arg2: memref<3x384x128xbf16, #tpu.memory_space<vmem>>, %arg3: memref<3x384x128xbf16, #tpu.memory_space<vmem>>, %arg4: memref<4x128xf32, #tpu.memory_space<vmem>>, %arg5: memref<1x384x128xf32, #tpu.memory_space<vmem>>, %arg6: memref<448x128xbf16, #tpu.memory_space<vmem>>) attributes {dimension_semantics = [#tpu.dimension_semantics<parallel>], iteration_bounds = array<i64: 2>, scalar_prefetch = 0 : i64, scratch_operands = 1 : i64, tpu.core_type = #tpu.core_type<tc>, window_params = [{transform_indices = @transform_0, window_bounds = array<i64: 1, 448, 128>}, {pipeline_mode = #tpu.pipeline_mode<synchronous>, transform_indices = @transform_1, window_bounds = array<i64: 3, 384, 128>}, {pipeline_mode = #tpu.pipeline_mode<synchronous>, transform_indices = @transform_2, window_bounds = array<i64: 3, 384, 128>}, {pipeline_mode = #tpu.pipeline_mode<synchronous>, transform_indices = @transform_3, window_bounds = array<i64: 4, 128>}, {transform_indices = @transform_4, window_bounds = array<i64: 1, 384, 128>}]} {
    %c0 = arith.constant 0 : index
    %c0_0 = arith.constant 0 : index
    %0 = vector.load %arg4[%c0, %c0_0] : memref<4x128xf32, #tpu.memory_space<vmem>>, vector<1x128xf32>
    %c1 = arith.constant 1 : index
    %c0_1 = arith.constant 0 : index
    %1 = vector.load %arg4[%c1, %c0_1] : memref<4x128xf32, #tpu.memory_space<vmem>>, vector<1x128xf32>
    %c2 = arith.constant 2 : index
    %c0_2 = arith.constant 0 : index
    %2 = vector.load %arg4[%c2, %c0_2] : memref<4x128xf32, #tpu.memory_space<vmem>>, vector<1x128xf32>
    %c3 = arith.constant 3 : index
    %c0_3 = arith.constant 0 : index
    %3 = vector.load %arg4[%c3, %c0_3] : memref<4x128xf32, #tpu.memory_space<vmem>>, vector<1x128xf32>
    %c0_4 = arith.constant 0 : index
    %c7 = arith.constant 7 : index
    %c0_5 = arith.constant 0 : index
    %4 = vector.load %arg1[%c0_4, %c7, %c0_5] : memref<1x448x128xbf16, #tpu.memory_space<vmem>>, vector<1x384x128xbf16>
    %5 = vector.shape_cast %4 : vector<1x384x128xbf16> to vector<384x128xbf16>
    %c0_6 = arith.constant 0 : index
    %c8 = arith.constant 8 : index
    %c0_7 = arith.constant 0 : index
    %6 = vector.load %arg1[%c0_6, %c8, %c0_7] : memref<1x448x128xbf16, #tpu.memory_space<vmem>>, vector<1x384x128xbf16>
    %7 = vector.shape_cast %6 : vector<1x384x128xbf16> to vector<384x128xbf16>
    %c0_8 = arith.constant 0 : index
    %c9 = arith.constant 9 : index
    %c0_9 = arith.constant 0 : index
    %8 = vector.load %arg1[%c0_8, %c9, %c0_9] : memref<1x448x128xbf16, #tpu.memory_space<vmem>>, vector<1x384x128xbf16>
    %9 = vector.shape_cast %8 : vector<1x384x128xbf16> to vector<384x128xbf16>
    %10 = tpu.concatenate %5, %7, %9 in 1 : vector<384x128xbf16>, vector<384x128xbf16>, vector<384x128xbf16> -> vector<384x384xbf16>
    %c0_10 = arith.constant 0 : index
    %c0_11 = arith.constant 0 : index
    %c0_12 = arith.constant 0 : index
    %11 = vector.load %arg2[%c0_10, %c0_11, %c0_12] : memref<3x384x128xbf16, #tpu.memory_space<vmem>>, vector<1x384x128xbf16>
    %12 = vector.shape_cast %11 : vector<1x384x128xbf16> to vector<384x128xbf16>
    %cst = arith.constant dense<0.000000e+00> : vector<384x128xf32>
    %13 = tpu.matmul %10, %12, %cst {dimension_numbers = #tpu.dot_dimension_numbers<[1], [0], [0], [1], [0, 0, 1, 1], [], []>} : vector<384x384xbf16>, vector<384x128xbf16>, vector<384x128xf32> -> vector<384x128xf32>
    %c0_13 = arith.constant 0 : index
    %c31 = arith.constant 31 : index
    %c0_14 = arith.constant 0 : index
    %14 = vector.load %arg1[%c0_13, %c31, %c0_14] : memref<1x448x128xbf16, #tpu.memory_space<vmem>>, vector<1x384x128xbf16>
    %15 = vector.shape_cast %14 : vector<1x384x128xbf16> to vector<384x128xbf16>
    %c0_15 = arith.constant 0 : index
    %c32 = arith.constant 32 : index
    %c0_16 = arith.constant 0 : index
    %16 = vector.load %arg1[%c0_15, %c32, %c0_16] : memref<1x448x128xbf16, #tpu.memory_space<vmem>>, vector<1x384x128xbf16>
    %17 = vector.shape_cast %16 : vector<1x384x128xbf16> to vector<384x128xbf16>
    %c0_17 = arith.constant 0 : index
    %c33 = arith.constant 33 : index
    %c0_18 = arith.constant 0 : index
    %18 = vector.load %arg1[%c0_17, %c33, %c0_18] : memref<1x448x128xbf16, #tpu.memory_space<vmem>>, vector<1x384x128xbf16>
    %19 = vector.shape_cast %18 : vector<1x384x128xbf16> to vector<384x128xbf16>
    %20 = tpu.concatenate %15, %17, %19 in 1 : vector<384x128xbf16>, vector<384x128xbf16>, vector<384x128xbf16> -> vector<384x384xbf16>
    %c1_19 = arith.constant 1 : index
    %c0_20 = arith.constant 0 : index
    %c0_21 = arith.constant 0 : index
    %21 = vector.load %arg2[%c1_19, %c0_20, %c0_21] : memref<3x384x128xbf16, #tpu.memory_space<vmem>>, vector<1x384x128xbf16>
    %22 = vector.shape_cast %21 : vector<1x384x128xbf16> to vector<384x128xbf16>
    %cst_22 = arith.constant dense<0.000000e+00> : vector<384x128xf32>
    %23 = tpu.matmul %20, %22, %cst_22 {dimension_numbers = #tpu.dot_dimension_numbers<[1], [0], [0], [1], [0, 0, 1, 1], [], []>} : vector<384x384xbf16>, vector<384x128xbf16>, vector<384x128xf32> -> vector<384x128xf32>
    %24 = arith.addf %13, %23 : vector<384x128xf32>
    %c0_23 = arith.constant 0 : index
    %c55 = arith.constant 55 : index
    %c0_24 = arith.constant 0 : index
    %25 = vector.load %arg1[%c0_23, %c55, %c0_24] : memref<1x448x128xbf16, #tpu.memory_space<vmem>>, vector<1x384x128xbf16>
    %26 = vector.shape_cast %25 : vector<1x384x128xbf16> to vector<384x128xbf16>
    %c0_25 = arith.constant 0 : index
    %c56 = arith.constant 56 : index
    %c0_26 = arith.constant 0 : index
    %27 = vector.load %arg1[%c0_25, %c56, %c0_26] : memref<1x448x128xbf16, #tpu.memory_space<vmem>>, vector<1x384x128xbf16>
    %28 = vector.shape_cast %27 : vector<1x384x128xbf16> to vector<384x128xbf16>
    %c0_27 = arith.constant 0 : index
    %c57 = arith.constant 57 : index
    %c0_28 = arith.constant 0 : index
    %29 = vector.load %arg1[%c0_27, %c57, %c0_28] : memref<1x448x128xbf16, #tpu.memory_space<vmem>>, vector<1x384x128xbf16>
    %30 = vector.shape_cast %29 : vector<1x384x128xbf16> to vector<384x128xbf16>
    %31 = tpu.concatenate %26, %28, %30 in 1 : vector<384x128xbf16>, vector<384x128xbf16>, vector<384x128xbf16> -> vector<384x384xbf16>
    %c2_29 = arith.constant 2 : index
    %c0_30 = arith.constant 0 : index
    %c0_31 = arith.constant 0 : index
    %32 = vector.load %arg2[%c2_29, %c0_30, %c0_31] : memref<3x384x128xbf16, #tpu.memory_space<vmem>>, vector<1x384x128xbf16>
    %33 = vector.shape_cast %32 : vector<1x384x128xbf16> to vector<384x128xbf16>
    %cst_32 = arith.constant dense<0.000000e+00> : vector<384x128xf32>
    %34 = tpu.matmul %31, %33, %cst_32 {dimension_numbers = #tpu.dot_dimension_numbers<[1], [0], [0], [1], [0, 0, 1, 1], [], []>} : vector<384x384xbf16>, vector<384x128xbf16>, vector<384x128xf32> -> vector<384x128xf32>
    %35 = arith.addf %24, %34 : vector<384x128xf32>
    %36 = vector.broadcast %0 : vector<1x128xf32> to vector<384x128xf32>
    %37 = arith.mulf %35, %36 : vector<384x128xf32>
    %38 = vector.broadcast %1 : vector<1x128xf32> to vector<384x128xf32>
    %39 = arith.addf %37, %38 : vector<384x128xf32>
    %cst_33 = arith.constant 0.000000e+00 : f32
    %40 = vector.broadcast %cst_33 : f32 to vector<384x128xf32>
    %41 = arith.maximumf %39, %40 : vector<384x128xf32>
    %42 = tpu.iota {dimensions = array<i32: 0>} : vector<24x128xi32>
    %c1_i32 = arith.constant 1 : i32
    %43 = vector.broadcast %c1_i32 : i32 to vector<24x128xi32>
    %44 = arith.cmpi sge, %42, %43 : vector<24x128xi32>
    %c16_i32 = arith.constant 16 : i32
    %45 = vector.broadcast %c16_i32 : i32 to vector<24x128xi32>
    %46 = arith.cmpi sle, %42, %45 : vector<24x128xi32>
    %47 = arith.andi %44, %46 : vector<24x128xi1>
    %48 = arith.extui %47 : vector<24x128xi1> to vector<24x128xi32>
    %49 = arith.sitofp %48 : vector<24x128xi32> to vector<24x128xf32>
    %50 = vector.shape_cast %41 : vector<384x128xf32> to vector<16x24x128xf32>
    %51 = vector.shape_cast %49 : vector<24x128xf32> to vector<1x24x128xf32>
    %52 = vector.broadcast %51 : vector<1x24x128xf32> to vector<16x24x128xf32>
    %53 = arith.mulf %50, %52 : vector<16x24x128xf32>
    %54 = vector.shape_cast %53 : vector<16x24x128xf32> to vector<384x128xf32>
    %55 = arith.truncf %54 : vector<384x128xf32> to vector<384x128xbf16>
    %cst_34 = arith.constant 0.000000e+00 : bf16
    %56 = vector.broadcast %cst_34 : bf16 to vector<32x128xbf16>
    %c0_35 = arith.constant 0 : index
    %c0_36 = arith.constant 0 : index
    %57 = vector.load %arg6[%c0_35, %c0_36] : memref<448x128xbf16, #tpu.memory_space<vmem>>, vector<32x128xbf16>
    tpu.vector_store %arg6[%c0_35, %c0_36], %56 {strides = array<i32>} : memref<448x128xbf16, #tpu.memory_space<vmem>>, vector<32x128xbf16>,
    %cst_37 = arith.constant 0.000000e+00 : bf16
    %58 = vector.broadcast %cst_37 : bf16 to vector<32x128xbf16>
    %c416 = arith.constant 416 : index
    %c0_38 = arith.constant 0 : index
    %59 = vector.load %arg6[%c416, %c0_38] : memref<448x128xbf16, #tpu.memory_space<vmem>>, vector<32x128xbf16>
    tpu.vector_store %arg6[%c416, %c0_38], %58 {strides = array<i32>} : memref<448x128xbf16, #tpu.memory_space<vmem>>, vector<32x128xbf16>,
    %c32_39 = arith.constant 32 : index
    %c0_40 = arith.constant 0 : index
    %60 = vector.load %arg6[%c32_39, %c0_40] : memref<448x128xbf16, #tpu.memory_space<vmem>>, vector<384x128xbf16>
    tpu.vector_store %arg6[%c32_39, %c0_40], %55 {strides = array<i32>} : memref<448x128xbf16, #tpu.memory_space<vmem>>, vector<384x128xbf16>,
    %c7_41 = arith.constant 7 : index
    %c0_42 = arith.constant 0 : index
    %61 = vector.load %arg6[%c7_41, %c0_42] : memref<448x128xbf16, #tpu.memory_space<vmem>>, vector<384x128xbf16>
    %c8_43 = arith.constant 8 : index
    %c0_44 = arith.constant 0 : index
    %62 = vector.load %arg6[%c8_43, %c0_44] : memref<448x128xbf16, #tpu.memory_space<vmem>>, vector<384x128xbf16>
    %c9_45 = arith.constant 9 : index
    %c0_46 = arith.constant 0 : index
    %63 = vector.load %arg6[%c9_45, %c0_46] : memref<448x128xbf16, #tpu.memory_space<vmem>>, vector<384x128xbf16>
    %64 = tpu.concatenate %61, %62, %63 in 1 : vector<384x128xbf16>, vector<384x128xbf16>, vector<384x128xbf16> -> vector<384x384xbf16>
    %c0_47 = arith.constant 0 : index
    %c0_48 = arith.constant 0 : index
    %c0_49 = arith.constant 0 : index
    %65 = vector.load %arg3[%c0_47, %c0_48, %c0_49] : memref<3x384x128xbf16, #tpu.memory_space<vmem>>, vector<1x384x128xbf16>
    %66 = vector.shape_cast %65 : vector<1x384x128xbf16> to vector<384x128xbf16>
    %cst_50 = arith.constant dense<0.000000e+00> : vector<384x128xf32>
    %67 = tpu.matmul %64, %66, %cst_50 {dimension_numbers = #tpu.dot_dimension_numbers<[1], [0], [0], [1], [0, 0, 1, 1], [], []>} : vector<384x384xbf16>, vector<384x128xbf16>, vector<384x128xf32> -> vector<384x128xf32>
    %c31_51 = arith.constant 31 : index
    %c0_52 = arith.constant 0 : index
    %68 = vector.load %arg6[%c31_51, %c0_52] : memref<448x128xbf16, #tpu.memory_space<vmem>>, vector<384x128xbf16>
    %c32_53 = arith.constant 32 : index
    %c0_54 = arith.constant 0 : index
    %69 = vector.load %arg6[%c32_53, %c0_54] : memref<448x128xbf16, #tpu.memory_space<vmem>>, vector<384x128xbf16>
    %c33_55 = arith.constant 33 : index
    %c0_56 = arith.constant 0 : index
    %70 = vector.load %arg6[%c33_55, %c0_56] : memref<448x128xbf16, #tpu.memory_space<vmem>>, vector<384x128xbf16>
    %71 = tpu.concatenate %68, %69, %70 in 1 : vector<384x128xbf16>, vector<384x128xbf16>, vector<384x128xbf16> -> vector<384x384xbf16>
    %c1_57 = arith.constant 1 : index
    %c0_58 = arith.constant 0 : index
    %c0_59 = arith.constant 0 : index
    %72 = vector.load %arg3[%c1_57, %c0_58, %c0_59] : memref<3x384x128xbf16, #tpu.memory_space<vmem>>, vector<1x384x128xbf16>
    %73 = vector.shape_cast %72 : vector<1x384x128xbf16> to vector<384x128xbf16>
    %cst_60 = arith.constant dense<0.000000e+00> : vector<384x128xf32>
    %74 = tpu.matmul %71, %73, %cst_60 {dimension_numbers = #tpu.dot_dimension_numbers<[1], [0], [0], [1], [0, 0, 1, 1], [], []>} : vector<384x384xbf16>, vector<384x128xbf16>, vector<384x128xf32> -> vector<384x128xf32>
    %75 = arith.addf %67, %74 : vector<384x128xf32>
    %c55_61 = arith.constant 55 : index
    %c0_62 = arith.constant 0 : index
    %76 = vector.load %arg6[%c55_61, %c0_62] : memref<448x128xbf16, #tpu.memory_space<vmem>>, vector<384x128xbf16>
    %c56_63 = arith.constant 56 : index
    %c0_64 = arith.constant 0 : index
    %77 = vector.load %arg6[%c56_63, %c0_64] : memref<448x128xbf16, #tpu.memory_space<vmem>>, vector<384x128xbf16>
    %c57_65 = arith.constant 57 : index
    %c0_66 = arith.constant 0 : index
    %78 = vector.load %arg6[%c57_65, %c0_66] : memref<448x128xbf16, #tpu.memory_space<vmem>>, vector<384x128xbf16>
    %79 = tpu.concatenate %76, %77, %78 in 1 : vector<384x128xbf16>, vector<384x128xbf16>, vector<384x128xbf16> -> vector<384x384xbf16>
    %c2_67 = arith.constant 2 : index
    %c0_68 = arith.constant 0 : index
    %c0_69 = arith.constant 0 : index
    %80 = vector.load %arg3[%c2_67, %c0_68, %c0_69] : memref<3x384x128xbf16, #tpu.memory_space<vmem>>, vector<1x384x128xbf16>
    %81 = vector.shape_cast %80 : vector<1x384x128xbf16> to vector<384x128xbf16>
    %cst_70 = arith.constant dense<0.000000e+00> : vector<384x128xf32>
    %82 = tpu.matmul %79, %81, %cst_70 {dimension_numbers = #tpu.dot_dimension_numbers<[1], [0], [0], [1], [0, 0, 1, 1], [], []>} : vector<384x384xbf16>, vector<384x128xbf16>, vector<384x128xf32> -> vector<384x128xf32>
    %83 = arith.addf %75, %82 : vector<384x128xf32>
    %c0_71 = arith.constant 0 : index
    %c32_72 = arith.constant 32 : index
    %c0_73 = arith.constant 0 : index
    %84 = vector.load %arg1[%c0_71, %c32_72, %c0_73] : memref<1x448x128xbf16, #tpu.memory_space<vmem>>, vector<1x384x128xbf16>
    %85 = vector.shape_cast %84 : vector<1x384x128xbf16> to vector<384x128xbf16>
    %86 = arith.extf %85 : vector<384x128xbf16> to vector<384x128xf32>
    %87 = vector.broadcast %2 : vector<1x128xf32> to vector<384x128xf32>
    %88 = arith.mulf %83, %87 : vector<384x128xf32>
    %89 = vector.broadcast %3 : vector<1x128xf32> to vector<384x128xf32>
    %90 = arith.addf %88, %89 : vector<384x128xf32>
    %91 = arith.addf %90, %86 : vector<384x128xf32>
    %cst_74 = arith.constant 0.000000e+00 : f32
    %92 = vector.broadcast %cst_74 : f32 to vector<384x128xf32>
    %93 = arith.maximumf %91, %92 : vector<384x128xf32>
    %c0_75 = arith.constant 0 : index
    %c0_76 = arith.constant 0 : index
    %c0_77 = arith.constant 0 : index
    %94 = vector.load %arg5[%c0_75, %c0_76, %c0_77] : memref<1x384x128xf32, #tpu.memory_space<vmem>>, vector<1x384x128xf32>
    %95 = vector.shape_cast %94 : vector<1x384x128xf32> to vector<384x128xf32>
    %96 = vector.shape_cast %93 : vector<384x128xf32> to vector<1x384x128xf32>
    tpu.vector_store %arg5[%c0_75, %c0_76, %c0_77], %96 {strides = array<i32>} : memref<1x384x128xf32, #tpu.memory_space<vmem>>, vector<1x384x128xf32>,
    return
  }
  func.func @transform_0(%arg0: i32) -> (i32, i32, i32) {
    %c0_i32 = arith.constant 0 : i32
    %c0_i32_0 = arith.constant 0 : i32
    %c0_i32_1 = arith.constant 0 : i32
    return %arg0, %c0_i32, %c0_i32_0 : i32, i32, i32
  }
  func.func @transform_1(%arg0: i32) -> (i32, i32, i32) {
    %c0_i32 = arith.constant 0 : i32
    %c0_i32_0 = arith.constant 0 : i32
    %c0_i32_1 = arith.constant 0 : i32
    %c0_i32_2 = arith.constant 0 : i32
    return %c0_i32, %c0_i32_0, %c0_i32_1 : i32, i32, i32
  }
  func.func @transform_2(%arg0: i32) -> (i32, i32, i32) {
    %c0_i32 = arith.constant 0 : i32
    %c0_i32_0 = arith.constant 0 : i32
    %c0_i32_1 = arith.constant 0 : i32
    %c0_i32_2 = arith.constant 0 : i32
    return %c0_i32, %c0_i32_0, %c0_i32_1 : i32, i32, i32
  }
  func.func @transform_3(%arg0: i32) -> (i32, i32) {
    %c0_i32 = arith.constant 0 : i32
    %c0_i32_0 = arith.constant 0 : i32
    %c0_i32_1 = arith.constant 0 : i32
    return %c0_i32, %c0_i32_0 : i32, i32
  }
  func.func @transform_4(%arg0: i32) -> (i32, i32, i32) {
    %c0_i32 = arith.constant 0 : i32
    %c0_i32_0 = arith.constant 0 : i32
    %c0_i32_1 = arith.constant 0 : i32
    return %arg0, %c0_i32, %c0_i32_0 : i32, i32, i32
  }
}

</mosaic_0001>

<llo_original>
// kernel: tpu_custom_call.1
$region0: #{tpu_custom_call.1}
  #allocation0 [shape = 'u32[]', space=smem, size = 0x4, offset = 0x4, fixed_abs, tag = 'smem constant byte address 0x4 - core index']
  #allocation1 [shape = 'u32[144,128]{1,0:T(1,128)}', space=vmem, size = 0x12000, scoped, tag = 'internal scratch']
  #allocation2 [shape = 'bf16[448,128]{1,0:T(16,128)(2,1)}', space=vmem, size = 0x1c000, scoped, tag = 'scratch operand']
  %s0 = inlined_call_operand.hbm [shape: bf16[2,448,128], index: 0, kind: input, shape index: {}]
  %s1 = inlined_call_operand.hbm [shape: bf16[3,384,128], index: 1, kind: input, shape index: {}]
  %s2 = inlined_call_operand.hbm [shape: bf16[3,384,128], index: 2, kind: input, shape index: {}]
  %s3 = inlined_call_operand.vmem [shape: f32[4,128], index: 3, kind: input, shape index: {}]
  %s4 = inlined_call_operand.hbm [shape: f32[2,384,128], index: 4, kind: output, shape index: {}]
  %s5 = sld [smem:[#allocation0]]
  $region61: #{tpu_custom_call.1} parent=0
    _
  %s7 = ssub.s32 1, %s5
  %s8 = scalar_select 0, %s7, %s5
  $region1: #{tpu_custom_call.1} parent=0
    #allocation3 [shape = 'u8[229376]{0}', space=vmem, size = 0x38000, scoped, tag = 'input window, operand 0']
    #allocation4 [shape = 's32[2]{0}', space=sflag, size = 0x8, scoped, tag = 'scoped memory for tpu_custom_call.1']
    #allocation5 [shape = 's32[2]{0}', space=sflag, size = 0x8, scoped, tag = 'scoped memory for tpu_custom_call.1']
    #allocation6 [shape = 'u8[294912]{0}', space=vmem, size = 0x48000, scoped, tag = 'input window, operand 1, single buffered']
    #allocation7 [shape = 's32[1]{0}', space=sflag, size = 0x4, scoped, tag = 'scoped memory for tpu_custom_call.1']
    #allocation8 [shape = 'u8[294912]{0}', space=vmem, size = 0x48000, scoped, tag = 'input window, operand 2, single buffered']
    #allocation9 [shape = 'u8[393216]{0}', space=vmem, size = 0x60000, scoped, tag = 'output window, operand 0']
    %9 = vsyncpa [#allocation4], 0
    %s10 = scalar_lea.sflag [#allocation4], 1
    %11 = vsyncpa %s10, 0
    %12 = vsyncpa [#allocation7], 0
    %13 = vsyncpa [#allocation5], 0
    %s14 = scalar_lea.sflag [#allocation5], 1
    %15 = vsyncpa %s14, 0
    loop: start=0, step=1, limit=4
    $region2: #{tpu_custom_call.1} parent=1 // loop_pre_header
      _
    $region3: #{tpu_custom_call.1} parent=1 // loop_header
      %s17 = sphi 0, %s21
      %p18 = scmp.ge.s32.totalorder %s17, 4
      %s27 = sphi 0, %s29
      %s30 = sphi 0, %s27
      %s31 = sphi 0, %s30
      %s47 = sphi 0, %s31
      %s51 = sphi 0, %s51
      %s53 = sphi 0, %s51
      %s54 = sphi 0, %s53
      %s68 = sphi 0, %s54
      %s72 = sphi 0, %s72
      %s74 = sphi 0, %s72
      %s75 = sphi 0, %s74
      %s89 = sphi 0, %s75
      %s93 = sphi 0, %s93
      %s95 = sphi 0, %s93
      %s96 = sphi 0, %s95
      %s110 = sphi 0, %s96
      %s116 = sphi 0, %s118
      %s119 = sphi 0, %s116
      %s120 = sphi 0, %s119
      %s136 = sphi 0, %s120
    $region4: #{tpu_custom_call.1} parent=1 // loop_header_branch
      %20 = sbr.rel (%p18) target = $region8
    $region5: #{tpu_custom_call.1} parent=1 // loop_body
      %s22 = ssub.s32 %s17, 1
      %s23 = ssub.s32 %s17, 2
      %s24 = sadd.s32 %s17, 1
      %s25 = ssub.s32 %s17, %s24
      %p26 = scmp.eq.s32.totalorder %s25, 0
      %s28 = sadd.s32 %s27, 1
      %s29 = scalar_select %p26, %s27, %s28
      %p32 = pneg %p26
      %p33 = scmp.eq.s32.totalorder %s17, 1
      %p34 = por %p32, %p33
      %p35 = scmp.ne.s32.totalorder %s27, %s30
      %p36 = scmp.eq.s32.totalorder %s17, 0
      %p37 = por %p35, %p36
      %p38 = scmp.ne.s32.totalorder %s27, %s30
      %p39 = scmp.eq.s32.totalorder %s22, 1
      %p40 = por %p38, %p39
      %p41 = scmp.ne.s32.totalorder %s30, %s31
      %p42 = scmp.eq.s32.totalorder %s22, 0
      %p43 = por %p41, %p42
      %p44 = scmp.ne.s32.totalorder %s30, %s31
      %p45 = scmp.eq.s32.totalorder %s23, 1
      %p46 = por %p44, %p45
      %p48 = scmp.ne.s32.totalorder %s31, %s47
      %p49 = scmp.eq.s32.totalorder %s23, 0
      %p50 = por %p48, %p49
      %s52 = sadd.s32 %s51, 1
      %p55 = scmp.eq.s32.totalorder %s17, 1
      %p56 = scmp.ne.s32.totalorder %s51, %s53
      %p57 = scmp.eq.s32.totalorder %s17, 0
      %p58 = por %p56, %p57
      %p59 = scmp.ne.s32.totalorder %s51, %s53
      %p60 = scmp.eq.s32.totalorder %s22, 1
      %p61 = por %p59, %p60
      %p62 = scmp.ne.s32.totalorder %s53, %s54
      %p63 = scmp.eq.s32.totalorder %s22, 0
      %p64 = por %p62, %p63
      %p65 = scmp.ne.s32.totalorder %s53, %s54
      %p66 = scmp.eq.s32.totalorder %s23, 1
      %p67 = por %p65, %p66
      %p69 = scmp.ne.s32.totalorder %s54, %s68
      %p70 = scmp.eq.s32.totalorder %s23, 0
      %p71 = por %p69, %p70
      %s73 = sadd.s32 %s72, 1
      %p76 = scmp.eq.s32.totalorder %s17, 1
      %p77 = scmp.ne.s32.totalorder %s72, %s74
      %p78 = scmp.eq.s32.totalorder %s17, 0
      %p79 = por %p77, %p78
      %p80 = scmp.ne.s32.totalorder %s72, %s74
      %p81 = scmp.eq.s32.totalorder %s22, 1
      %p82 = por %p80, %p81
      %p83 = scmp.ne.s32.totalorder %s74, %s75
      %p84 = scmp.eq.s32.totalorder %s22, 0
      %p85 = por %p83, %p84
      %p86 = scmp.ne.s32.totalorder %s74, %s75
      %p87 = scmp.eq.s32.totalorder %s23, 1
      %p88 = por %p86, %p87
      %p90 = scmp.ne.s32.totalorder %s75, %s89
      %p91 = scmp.eq.s32.totalorder %s23, 0
      %p92 = por %p90, %p91
      %s94 = sadd.s32 %s93, 1
      %p97 = scmp.eq.s32.totalorder %s17, 1
      %p98 = scmp.ne.s32.totalorder %s93, %s95
      %p99 = scmp.eq.s32.totalorder %s17, 0
      %p100 = por %p98, %p99
      %p101 = scmp.ne.s32.totalorder %s93, %s95
      %p102 = scmp.eq.s32.totalorder %s22, 1
      %p103 = por %p101, %p102
      %p104 = scmp.ne.s32.totalorder %s95, %s96
      %p105 = scmp.eq.s32.totalorder %s22, 0
      %p106 = por %p104, %p105
      %p107 = scmp.ne.s32.totalorder %s95, %s96
      %p108 = scmp.eq.s32.totalorder %s23, 1
      %p109 = por %p107, %p108
      %p111 = scmp.ne.s32.totalorder %s96, %s110
      %p112 = scmp.eq.s32.totalorder %s23, 0
      %p113 = por %p111, %p112
      %s114 = ssub.s32 %s17, %s24
      %p115 = scmp.eq.s32.totalorder %s114, 0
      %s117 = sadd.s32 %s116, 1
      %s118 = scalar_select %p115, %s116, %s117
      %p121 = pneg %p115
      %p122 = scmp.eq.s32.totalorder %s17, 1
      %p123 = por %p121, %p122
      %p124 = scmp.ne.s32.totalorder %s116, %s119
      %p125 = scmp.eq.s32.totalorder %s17, 0
      %p126 = por %p124, %p125
      %p127 = scmp.ne.s32.totalorder %s116, %s119
      %p128 = scmp.eq.s32.totalorder %s22, 1
      %p129 = por %p127, %p128
      %p130 = scmp.ne.s32.totalorder %s119, %s120
      %p131 = scmp.eq.s32.totalorder %s22, 0
      %p132 = por %p130, %p131
      %p133 = scmp.ne.s32.totalorder %s119, %s120
      %p134 = scmp.eq.s32.totalorder %s23, 1
      %p135 = por %p133, %p134
      %p137 = scmp.ne.s32.totalorder %s120, %s136
      %p138 = scmp.eq.s32.totalorder %s23, 0
      %p139 = por %p137, %p138
      %p140 = scmp.le.s32.totalorder 1, %s17
      %p141 = scmp.lt.s32.totalorder %s17, 3
      %p142 = pnand %p140, %p141
      %p143 = pneg %p142
      // Predicated region
      $region9: #{tpu_custom_call.1} parent=5 // pred_check
        _
      $region10: #{tpu_custom_call.1} parent=5 // pred_check_branch
        %145 = sbr.rel (%p142) target = $region12
      $region11: #{tpu_custom_call.1} parent=5 // pred_region
        %s146 = ssub.s32 %s17, 1
        // Predicated region
        $region13: #{tpu_custom_call.1} parent=11 // pred_check
          %p147 = pneg %p64
        $region14: #{tpu_custom_call.1} parent=11 // pred_check_branch
          %149 = sbr.rel (%p147) target = $region16
        $region15: #{tpu_custom_call.1} parent=11 // pred_region
          %s151 = ssub.s32 9216, 9216
          %152 = vsyncadd [#allocation7], %s151
          %s153 = sshll.u32 [#allocation6], 4
          %s154 = int_to_ptr.vmem [resolvable:$true] %s153
          %159 = dma.hbm_to_vmem [thread:$0]  %s1, 9216, %s154, [#allocation7], 64, 64, 4
        $region16: #{tpu_custom_call.1} parent=11 // pred_fallthru
          _
        // Predicated region
        $region17: #{tpu_custom_call.1} parent=11 // pred_check
          %p160 = pneg %p85
        $region18: #{tpu_custom_call.1} parent=11 // pred_check_branch
          %162 = sbr.rel (%p160) target = $region20
        $region19: #{tpu_custom_call.1} parent=11 // pred_region
          %s164 = ssub.s32 9216, 9216
          %165 = vsyncadd [#allocation7], %s164
          %s166 = sshll.u32 [#allocation8], 4
          %s167 = int_to_ptr.vmem [resolvable:$true] %s166
          %172 = dma.hbm_to_vmem [thread:$0]  %s2, 9216, %s167, [#allocation7], 64, 64, 4
        $region20: #{tpu_custom_call.1} parent=11 // pred_fallthru
          _
        // Predicated region
        $region21: #{tpu_custom_call.1} parent=11 // pred_check
          %p173 = pneg %p106
        $region22: #{tpu_custom_call.1} parent=11 // pred_check_branch
          %175 = sbr.rel (%p173) target = $region24
        $region23: #{tpu_custom_call.1} parent=11 // pred_region
          _
        $region24: #{tpu_custom_call.1} parent=11 // pred_fallthru
          _
      $region12: #{tpu_custom_call.1} parent=5 // pred_fallthru
        _
      %p176 = scmp.lt.s32.totalorder %s17, 2
      // Predicated region
      $region25: #{tpu_custom_call.1} parent=5 // pred_check
        %p177 = pneg %p176
      $region26: #{tpu_custom_call.1} parent=5 // pred_check_branch
        %179 = sbr.rel (%p177) target = $region28
      $region27: #{tpu_custom_call.1} parent=5 // pred_region
        // Predicated region
        $region29: #{tpu_custom_call.1} parent=27 // pred_check
          %p180 = pneg %p37
        $region30: #{tpu_custom_call.1} parent=27 // pred_check_branch
          %182 = sbr.rel (%p180) target = $region32
        $region31: #{tpu_custom_call.1} parent=27 // pred_region
          %s183 = sand.u32 %s27, 1
          %s184 = scalar_lea.sflag [#allocation4], %s183
          %s185 = sand.u32 %s27, 1
          %s186 = smul.addr %s185, 224
          %s187 = scalar_lea.vmem [#allocation3], %s186
          %s189 = ssub.s32 3584, 3584
          %190 = vsyncadd %s184, %s189
          %s191 = smul.addr %s17, 56
          %s192 = smul.addr %s191, 64
          %s193 = scalar_lea.hbm %s0, %s192
          %s194 = sshll.u32 %s187, 4
          %s195 = int_to_ptr.vmem [resolvable:$true] %s194
          %200 = dma.hbm_to_vmem [thread:$0]  %s193, 3584, %s195, %s184, 64, 64, 4
        $region32: #{tpu_custom_call.1} parent=27 // pred_fallthru
          _
      $region28: #{tpu_custom_call.1} parent=5 // pred_fallthru
        _
      %p201 = scmp.le.s32.totalorder 1, %s17
      %p202 = scmp.lt.s32.totalorder %s17, 3
      %p203 = pnand %p201, %p202
      %p204 = pneg %p203
      // Predicated region
      $region33: #{tpu_custom_call.1} parent=5 // pred_check
        _
      $region34: #{tpu_custom_call.1} parent=5 // pred_check_branch
        %206 = sbr.rel (%p203) target = $region36
      $region35: #{tpu_custom_call.1} parent=5 // pred_region
        %s207 = ssub.s32 %s17, 1
        %s208 = sand.u32 %s30, 1
        %s209 = scalar_lea.sflag [#allocation4], %s208
        %s210 = sand.u32 %s30, 1
        %s211 = smul.addr %s210, 224
        %s212 = scalar_lea.vmem [#allocation3], %s211
        // Predicated region
        $region37: #{tpu_custom_call.1} parent=35 // pred_check
          %p213 = pneg %p43
        $region38: #{tpu_custom_call.1} parent=35 // pred_check_branch
          %215 = sbr.rel (%p213) target = $region40
        $region39: #{tpu_custom_call.1} parent=35 // pred_region
          %216 = dma.done %s209, 3584
        $region40: #{tpu_custom_call.1} parent=35 // pred_fallthru
          _
        // Predicated region
        $region41: #{tpu_custom_call.1} parent=35 // pred_check
          %p217 = pneg %p64
        $region42: #{tpu_custom_call.1} parent=35 // pred_check_branch
          %219 = sbr.rel (%p217) target = $region44
        $region43: #{tpu_custom_call.1} parent=35 // pred_region
          %220 = dma.done [#allocation7], 9216
        $region44: #{tpu_custom_call.1} parent=35 // pred_fallthru
          _
        // Predicated region
        $region45: #{tpu_custom_call.1} parent=35 // pred_check
          %p221 = pneg %p85
        $region46: #{tpu_custom_call.1} parent=35 // pred_check_branch
          %223 = sbr.rel (%p221) target = $region48
        $region47: #{tpu_custom_call.1} parent=35 // pred_region
          %224 = dma.done [#allocation7], 9216
        $region48: #{tpu_custom_call.1} parent=35 // pred_fallthru
          _
        %s225 = sand.u32 %s30, 1
        %s226 = scalar_lea.sflag [#allocation4], %s225
        %s227 = sand.u32 %s30, 1
        %s228 = smul.addr %s227, 224
        %s229 = scalar_lea.vmem [#allocation3], %s228
        %p230 = pneg %p43
        %p231 = pneg %p40
        %p232 = pneg %p64
        %p233 = pneg %p61
        %p234 = pneg %p85
        %p235 = pneg %p82
        %p236 = pneg %p106
        %p237 = pneg %p103
        %p238 = pneg %p132
        %p239 = pneg %p129
        %s240 = sand.u32 %s119, 1
        %s241 = scalar_lea.sflag [#allocation5], %s240
        %s242 = sand.u32 %s119, 1
        %s243 = smul.addr %s242, 384
        %s244 = scalar_lea.vmem [#allocation9], %s243
        %v246 = vld [vmem:[%s3] sm:$0x1]
        %v247 = vld [vmem:[%s3 + $0x1] sm:$0x1]
        %v248 = vld [vmem:[%s3 + $0x2] sm:$0x1]
        %v249 = vld [vmem:[%s3 + $0x3] sm:$0x1]
        %v250 = vld [vmem:[%s212] sm:$0x8]
        %v251 = vld [vmem:[%s212 + $0x4] sm:$0xf]
        %v252 = vld [vmem:[%s212 + $0x8] sm:$0xf]
        %v253 = vld [vmem:[%s212 + $0xc] sm:$0xf]
        %v254 = vld [vmem:[%s212 + $0x10] sm:$0xf]
        %v255 = vld [vmem:[%s212 + $0x14] sm:$0xf]
        %v256 = vld [vmem:[%s212 + $0x18] sm:$0xf]
        %v257 = vld [vmem:[%s212 + $0x1c] sm:$0xf]
        %v258 = vld [vmem:[%s212 + $0x20] sm:$0xf]
        %v259 = vld [vmem:[%s212 + $0x24] sm:$0xf]
        %v260 = vld [vmem:[%s212 + $0x28] sm:$0xf]
        %v261 = vld [vmem:[%s212 + $0x2c] sm:$0xf]
        %v262 = vld [vmem:[%s212 + $0x30] sm:$0xf]
        %v263 = vld [vmem:[%s212 + $0x34] sm:$0xf]
        %v264 = vld [vmem:[%s212 + $0x38] sm:$0xf]
        %v265 = vld [vmem:[%s212 + $0x3c] sm:$0xf]
        %v266 = vld [vmem:[%s212 + $0x40] sm:$0xf]
        %v267 = vld [vmem:[%s212 + $0x44] sm:$0xf]
        %v268 = vld [vmem:[%s212 + $0x48] sm:$0xf]
        %v269 = vld [vmem:[%s212 + $0x4c] sm:$0xf]
        %v270 = vld [vmem:[%s212 + $0x50] sm:$0xf]
        %v271 = vld [vmem:[%s212 + $0x54] sm:$0xf]
        %v272 = vld [vmem:[%s212 + $0x58] sm:$0xf]
        %v273 = vld [vmem:[%s212 + $0x5c] sm:$0xf]
        %v274 = vld [vmem:[%s212 + $0x60] sm:$0xf]
        %v275 = vld [vmem:[%s212 + $0x64] sm:$0xf]
        %v276 = vld [vmem:[%s212 + $0x68] sm:$0xf]
        %v277 = vld [vmem:[%s212 + $0x6c] sm:$0xf]
        %v278 = vld [vmem:[%s212 + $0x70] sm:$0xf]
        %v279 = vld [vmem:[%s212 + $0x74] sm:$0xf]
        %v280 = vld [vmem:[%s212 + $0x78] sm:$0xf]
        %v281 = vld [vmem:[%s212 + $0x7c] sm:$0xf]
        %v282 = vld [vmem:[%s212 + $0x80] sm:$0xf]
        %v283 = vld [vmem:[%s212 + $0x84] sm:$0xf]
        %v284 = vld [vmem:[%s212 + $0x88] sm:$0xf]
        %v285 = vld [vmem:[%s212 + $0x8c] sm:$0xf]
        %v286 = vld [vmem:[%s212 + $0x90] sm:$0xf]
        %v287 = vld [vmem:[%s212 + $0x94] sm:$0xf]
        %v288 = vld [vmem:[%s212 + $0x98] sm:$0xf]
        %v289 = vld [vmem:[%s212 + $0x9c] sm:$0xf]
        %v290 = vld [vmem:[%s212 + $0xa0] sm:$0xf]
        %v291 = vld [vmem:[%s212 + $0xa4] sm:$0xf]
        %v292 = vld [vmem:[%s212 + $0xa8] sm:$0xf]
        %v293 = vld [vmem:[%s212 + $0xac] sm:$0xf]
        %v294 = vld [vmem:[%s212 + $0xb0] sm:$0xf]
        %v295 = vld [vmem:[%s212 + $0xb4] sm:$0xf]
        %v296 = vld [vmem:[%s212 + $0xb8] sm:$0xf]
        %v297 = vld [vmem:[%s212 + $0xbc] sm:$0xf]
        %v298 = vld [vmem:[%s212 + $0xc0] sm:$0xf]
        %v299 = vld [vmem:[%s212 + $0xc4] sm:$0x1]
        %v349 = vunpack.c.l.b16 %v250
        %v350 = vunpack.c.l.b16 %v251
        %v351 = vunpack.c.l.b16 %v252
        %v352 = vunpack.c.l.b16 %v253
        %v353 = vunpack.c.l.b16 %v254
        %v354 = vunpack.c.l.b16 %v255
        %v355 = vunpack.c.l.b16 %v256
        %v356 = vunpack.c.l.b16 %v257
        %v357 = vunpack.c.l.b16 %v258
        %v358 = vunpack.c.l.b16 %v259
        %v359 = vunpack.c.l.b16 %v260
        %v360 = vunpack.c.l.b16 %v261
        %v361 = vunpack.c.l.b16 %v262
        %v362 = vunpack.c.l.b16 %v263
        %v363 = vunpack.c.l.b16 %v264
        %v364 = vunpack.c.l.b16 %v265
        %v365 = vunpack.c.l.b16 %v266
        %v366 = vunpack.c.l.b16 %v267
        %v367 = vunpack.c.l.b16 %v268
        %v368 = vunpack.c.l.b16 %v269
        %v369 = vunpack.c.l.b16 %v270
        %v370 = vunpack.c.l.b16 %v271
        %v371 = vunpack.c.l.b16 %v272
        %v372 = vunpack.c.l.b16 %v273
        %v373 = vunpack.c.l.b16 %v274
        %v374 = vunpack.c.l.b16 %v275
        %v375 = vunpack.c.l.b16 %v276
        %v376 = vunpack.c.l.b16 %v277
        %v377 = vunpack.c.l.b16 %v278
        %v378 = vunpack.c.l.b16 %v279
        %v379 = vunpack.c.l.b16 %v280
        %v380 = vunpack.c.l.b16 %v281
        %v381 = vunpack.c.l.b16 %v282
        %v382 = vunpack.c.l.b16 %v283
        %v383 = vunpack.c.l.b16 %v284
        %v384 = vunpack.c.l.b16 %v285
        %v385 = vunpack.c.l.b16 %v286
        %v386 = vunpack.c.l.b16 %v287
        %v387 = vunpack.c.l.b16 %v288
        %v388 = vunpack.c.l.b16 %v289
        %v389 = vunpack.c.l.b16 %v290
        %v390 = vunpack.c.l.b16 %v291
        %v391 = vunpack.c.l.b16 %v292
        %v392 = vunpack.c.l.b16 %v293
        %v393 = vunpack.c.l.b16 %v294
        %v394 = vunpack.c.l.b16 %v295
        %v395 = vunpack.c.l.b16 %v296
        %v396 = vunpack.c.l.b16 %v297
        %v397 = vunpack.c.l.b16 %v298
        %v398 = vpack.c.b16 %v350, %v349
        %v399 = vpack.c.b16 %v352, %v351
        %v400 = vpack.c.b16 %v354, %v353
        %v401 = vpack.c.b16 %v356, %v355
        %v402 = vpack.c.b16 %v358, %v357
        %v403 = vpack.c.b16 %v360, %v359
        %v404 = vpack.c.b16 %v362, %v361
        %v405 = vpack.c.b16 %v364, %v363
        %v406 = vpack.c.b16 %v366, %v365
        %v407 = vpack.c.b16 %v368, %v367
        %v408 = vpack.c.b16 %v370, %v369
        %v409 = vpack.c.b16 %v372, %v371
        %v410 = vpack.c.b16 %v374, %v373
        %v411 = vpack.c.b16 %v376, %v375
        %v412 = vpack.c.b16 %v378, %v377
        %v413 = vpack.c.b16 %v380, %v379
        %v414 = vpack.c.b16 %v382, %v381
        %v415 = vpack.c.b16 %v384, %v383
        %v416 = vpack.c.b16 %v386, %v385
        %v417 = vpack.c.b16 %v388, %v387
        %v418 = vpack.c.b16 %v390, %v389
        %v419 = vpack.c.b16 %v392, %v391
        %v420 = vpack.c.b16 %v394, %v393
        %v421 = vpack.c.b16 %v396, %v395
        %v422 = vpack.c.b16 %v397, %v397
        %v423 = vpack.c.b16 %v351, %v350
        %v424 = vpack.c.b16 %v353, %v352
        %v425 = vpack.c.b16 %v355, %v354
        %v426 = vpack.c.b16 %v357, %v356
        %v427 = vpack.c.b16 %v359, %v358
        %v428 = vpack.c.b16 %v361, %v360
        %v429 = vpack.c.b16 %v363, %v362
        %v430 = vpack.c.b16 %v365, %v364
        %v431 = vpack.c.b16 %v367, %v366
        %v432 = vpack.c.b16 %v369, %v368
        %v433 = vpack.c.b16 %v371, %v370
        %v434 = vpack.c.b16 %v373, %v372
        %v435 = vpack.c.b16 %v375, %v374
        %v436 = vpack.c.b16 %v377, %v376
        %v437 = vpack.c.b16 %v379, %v378
        %v438 = vpack.c.b16 %v381, %v380
        %v439 = vpack.c.b16 %v383, %v382
        %v440 = vpack.c.b16 %v385, %v384
        %v441 = vpack.c.b16 %v387, %v386
        %v442 = vpack.c.b16 %v389, %v388
        %v443 = vpack.c.b16 %v391, %v390
        %v444 = vpack.c.b16 %v393, %v392
        %v445 = vpack.c.b16 %v395, %v394
        %v446 = vpack.c.b16 %v397, %v396
        %vm447 = vsmask.f32 3328
        %v449 = vshrl.u32 %v423, 16
        %v451 = vrot.slane %v449, 4
        %v452 = vshll.u32 %v423, 16
        %v454 = vrot.slane %v452, 5
        %v455 = vor.u32 %v451, %v454
        %v457 = vshrl.u32 %v424, 16
        %v459 = vrot.slane %v457, 4
        %v460 = vshll.u32 %v424, 16
        %v462 = vrot.slane %v460, 5
        %v463 = vor.u32 %v459, %v462
        %v464 = vsel %vm447, %v455, %v463
        %v466 = vshrl.u32 %v425, 16
        %v468 = vrot.slane %v466, 4
        %v469 = vshll.u32 %v425, 16
        %v471 = vrot.slane %v469, 5
        %v472 = vor.u32 %v468, %v471
        %v473 = vsel %vm447, %v463, %v472
        %v475 = vshrl.u32 %v426, 16
        %v477 = vrot.slane %v475, 4
        %v478 = vshll.u32 %v426, 16
        %v480 = vrot.slane %v478, 5
        %v481 = vor.u32 %v477, %v480
        %v482 = vsel %vm447, %v472, %v481
        %v484 = vshrl.u32 %v427, 16
        %v486 = vrot.slane %v484, 4
        %v487 = vshll.u32 %v427, 16
        %v489 = vrot.slane %v487, 5
        %v490 = vor.u32 %v486, %v489
        %v491 = vsel %vm447, %v481, %v490
        %v493 = vshrl.u32 %v428, 16
        %v495 = vrot.slane %v493, 4
        %v496 = vshll.u32 %v428, 16
        %v498 = vrot.slane %v496, 5
        %v499 = vor.u32 %v495, %v498
        %v500 = vsel %vm447, %v490, %v499
        %v502 = vshrl.u32 %v429, 16
        %v504 = vrot.slane %v502, 4
        %v505 = vshll.u32 %v429, 16
        %v507 = vrot.slane %v505, 5
        %v508 = vor.u32 %v504, %v507
        %v509 = vsel %vm447, %v499, %v508
        %v511 = vshrl.u32 %v430, 16
        %v513 = vrot.slane %v511, 4
        %v514 = vshll.u32 %v430, 16
        %v516 = vrot.slane %v514, 5
        %v517 = vor.u32 %v513, %v516
        %v518 = vsel %vm447, %v508, %v517
        %v520 = vshrl.u32 %v431, 16
        %v522 = vrot.slane %v520, 4
        %v523 = vshll.u32 %v431, 16
        %v525 = vrot.slane %v523, 5
        %v526 = vor.u32 %v522, %v525
        %v527 = vsel %vm447, %v517, %v526
        %v529 = vshrl.u32 %v432, 16
        %v531 = vrot.slane %v529, 4
        %v532 = vshll.u32 %v432, 16
        %v534 = vrot.slane %v532, 5
        %v535 = vor.u32 %v531, %v534
        %v536 = vsel %vm447, %v526, %v535
        %v538 = vshrl.u32 %v433, 16
        %v540 = vrot.slane %v538, 4
        %v541 = vshll.u32 %v433, 16
        %v543 = vrot.slane %v541, 5
        %v544 = vor.u32 %v540, %v543
        %v545 = vsel %vm447, %v535, %v544
        %v547 = vshrl.u32 %v434, 16
        %v549 = vrot.slane %v547, 4
        %v550 = vshll.u32 %v434, 16
        %v552 = vrot.slane %v550, 5
        %v553 = vor.u32 %v549, %v552
        %v554 = vsel %vm447, %v544, %v553
        %v556 = vshrl.u32 %v435, 16
        %v558 = vrot.slane %v556, 4
        %v559 = vshll.u32 %v435, 16
        %v561 = vrot.slane %v559, 5
        %v562 = vor.u32 %v558, %v561
        %v563 = vsel %vm447, %v553, %v562
        %v565 = vshrl.u32 %v436, 16
        %v567 = vrot.slane %v565, 4
        %v568 = vshll.u32 %v436, 16
        %v570 = vrot.slane %v568, 5
        %v571 = vor.u32 %v567, %v570
        %v572 = vsel %vm447, %v562, %v571
        %v574 = vshrl.u32 %v437, 16
        %v576 = vrot.slane %v574, 4
        %v577 = vshll.u32 %v437, 16
        %v579 = vrot.slane %v577, 5
        %v580 = vor.u32 %v576, %v579
        %v581 = vsel %vm447, %v571, %v580
        %v583 = vshrl.u32 %v438, 16
        %v585 = vrot.slane %v583, 4
        %v586 = vshll.u32 %v438, 16
        %v588 = vrot.slane %v586, 5
        %v589 = vor.u32 %v585, %v588
        %v590 = vsel %vm447, %v580, %v589
        %v592 = vshrl.u32 %v439, 16
        %v594 = vrot.slane %v592, 4
        %v595 = vshll.u32 %v439, 16
        %v597 = vrot.slane %v595, 5
        %v598 = vor.u32 %v594, %v597
        %v599 = vsel %vm447, %v589, %v598
        %v601 = vshrl.u32 %v440, 16
        %v603 = vrot.slane %v601, 4
        %v604 = vshll.u32 %v440, 16
        %v606 = vrot.slane %v604, 5
        %v607 = vor.u32 %v603, %v606
        %v608 = vsel %vm447, %v598, %v607
        %v610 = vshrl.u32 %v441, 16
        %v612 = vrot.slane %v610, 4
        %v613 = vshll.u32 %v441, 16
        %v615 = vrot.slane %v613, 5
        %v616 = vor.u32 %v612, %v615
        %v617 = vsel %vm447, %v607, %v616
        %v619 = vshrl.u32 %v442, 16
        %v621 = vrot.slane %v619, 4
        %v622 = vshll.u32 %v442, 16
        %v624 = vrot.slane %v622, 5
        %v625 = vor.u32 %v621, %v624
        %v626 = vsel %vm447, %v616, %v625
        %v628 = vshrl.u32 %v443, 16
        %v630 = vrot.slane %v628, 4
        %v631 = vshll.u32 %v443, 16
        %v633 = vrot.slane %v631, 5
        %v634 = vor.u32 %v630, %v633
        %v635 = vsel %vm447, %v625, %v634
        %v637 = vshrl.u32 %v444, 16
        %v639 = vrot.slane %v637, 4
        %v640 = vshll.u32 %v444, 16
        %v642 = vrot.slane %v640, 5
        %v643 = vor.u32 %v639, %v642
        %v644 = vsel %vm447, %v634, %v643
        %v646 = vshrl.u32 %v445, 16
        %v648 = vrot.slane %v646, 4
        %v649 = vshll.u32 %v445, 16
        %v651 = vrot.slane %v649, 5
        %v652 = vor.u32 %v648, %v651
        %v653 = vsel %vm447, %v643, %v652
        %v655 = vshrl.u32 %v446, 16
        %v657 = vrot.slane %v655, 4
        %v658 = vshll.u32 %v446, 16
        %v660 = vrot.slane %v658, 5
        %v661 = vor.u32 %v657, %v660
        %v662 = vsel %vm447, %v652, %v661
        %v664 = vunpack.c.l.b16 %v299
        %v665 = vpack.c.b16 %v664, %v664
        %vm666 = vcmask 1042432
        %v667 = vrot.slane %v423, 5
        %v668 = vrot.slane %v424, 5
        %v669 = vsel %vm666, %v667, %v668
        %v670 = vrot.slane %v425, 5
        %v671 = vsel %vm666, %v668, %v670
        %v672 = vrot.slane %v426, 5
        %v673 = vsel %vm666, %v670, %v672
        %v674 = vrot.slane %v427, 5
        %v675 = vsel %vm666, %v672, %v674
        %v676 = vrot.slane %v428, 5
        %v677 = vsel %vm666, %v674, %v676
        %v678 = vrot.slane %v429, 5
        %v679 = vsel %vm666, %v676, %v678
        %v680 = vrot.slane %v430, 5
        %v681 = vsel %vm666, %v678, %v680
        %v682 = vrot.slane %v431, 5
        %v683 = vsel %vm666, %v680, %v682
        %v684 = vrot.slane %v432, 5
        %v685 = vsel %vm666, %v682, %v684
        %v686 = vrot.slane %v433, 5
        %v687 = vsel %vm666, %v684, %v686
        %v688 = vrot.slane %v434, 5
        %v689 = vsel %vm666, %v686, %v688
        %v690 = vrot.slane %v435, 5
        %v691 = vsel %vm666, %v688, %v690
        %v692 = vrot.slane %v436, 5
        %v693 = vsel %vm666, %v690, %v692
        %v694 = vrot.slane %v437, 5
        %v695 = vsel %vm666, %v692, %v694
        %v696 = vrot.slane %v438, 5
        %v697 = vsel %vm666, %v694, %v696
        %v698 = vrot.slane %v439, 5
        %v699 = vsel %vm666, %v696, %v698
        %v700 = vrot.slane %v440, 5
        %v701 = vsel %vm666, %v698, %v700
        %v702 = vrot.slane %v441, 5
        %v703 = vsel %vm666, %v700, %v702
        %v704 = vrot.slane %v442, 5
        %v705 = vsel %vm666, %v702, %v704
        %v706 = vrot.slane %v443, 5
        %v707 = vsel %vm666, %v704, %v706
        %v708 = vrot.slane %v444, 5
        %v709 = vsel %vm666, %v706, %v708
        %v710 = vrot.slane %v445, 5
        %v711 = vsel %vm666, %v708, %v710
        %v712 = vrot.slane %v446, 5
        %v713 = vsel %vm666, %v710, %v712
        %v714 = vrot.slane %v665, 5
        %v715 = vsel %vm666, %v712, %v714
        %v716 = vld [vmem:[#allocation6] sm:$0xf]
        %v717 = vld [vmem:[#allocation6 + $0x4] sm:$0xf]
        %v718 = vld [vmem:[#allocation6 + $0x8] sm:$0xf]
        %v719 = vld [vmem:[#allocation6 + $0xc] sm:$0xf]
        %v720 = vld [vmem:[#allocation6 + $0x10] sm:$0xf]
        %v721 = vld [vmem:[#allocation6 + $0x14] sm:$0xf]
        %v722 = vld [vmem:[#allocation6 + $0x18] sm:$0xf]
        %v723 = vld [vmem:[#allocation6 + $0x1c] sm:$0xf]
        %v724 = vld [vmem:[#allocation6 + $0x20] sm:$0xf]
        %v725 = vld [vmem:[#allocation6 + $0x24] sm:$0xf]
        %v726 = vld [vmem:[#allocation6 + $0x28] sm:$0xf]
        %v727 = vld [vmem:[#allocation6 + $0x2c] sm:$0xf]
        %v728 = vld [vmem:[#allocation6 + $0x30] sm:$0xf]
        %v729 = vld [vmem:[#allocation6 + $0x34] sm:$0xf]
        %v730 = vld [vmem:[#allocation6 + $0x38] sm:$0xf]
        %v731 = vld [vmem:[#allocation6 + $0x3c] sm:$0xf]
        %v732 = vld [vmem:[#allocation6 + $0x40] sm:$0xf]
        %v733 = vld [vmem:[#allocation6 + $0x44] sm:$0xf]
        %v734 = vld [vmem:[#allocation6 + $0x48] sm:$0xf]
        %v735 = vld [vmem:[#allocation6 + $0x4c] sm:$0xf]
        %v736 = vld [vmem:[#allocation6 + $0x50] sm:$0xf]
        %v737 = vld [vmem:[#allocation6 + $0x54] sm:$0xf]
        %v738 = vld [vmem:[#allocation6 + $0x58] sm:$0xf]
        %v739 = vld [vmem:[#allocation6 + $0x5c] sm:$0xf]
        %v740 = vld [vmem:[#allocation6 + $0x60] sm:$0xf]
        %v741 = vld [vmem:[#allocation6 + $0x64] sm:$0xf]
        %v742 = vld [vmem:[#allocation6 + $0x68] sm:$0xf]
        %v743 = vld [vmem:[#allocation6 + $0x6c] sm:$0xf]
        %v744 = vld [vmem:[#allocation6 + $0x70] sm:$0xf]
        %v745 = vld [vmem:[#allocation6 + $0x74] sm:$0xf]
        %v746 = vld [vmem:[#allocation6 + $0x78] sm:$0xf]
        %v747 = vld [vmem:[#allocation6 + $0x7c] sm:$0xf]
        %v748 = vld [vmem:[#allocation6 + $0x80] sm:$0xf]
        %v749 = vld [vmem:[#allocation6 + $0x84] sm:$0xf]
        %v750 = vld [vmem:[#allocation6 + $0x88] sm:$0xf]
        %v751 = vld [vmem:[#allocation6 + $0x8c] sm:$0xf]
        %v752 = vld [vmem:[#allocation6 + $0x90] sm:$0xf]
        %v753 = vld [vmem:[#allocation6 + $0x94] sm:$0xf]
        %v754 = vld [vmem:[#allocation6 + $0x98] sm:$0xf]
        %v755 = vld [vmem:[#allocation6 + $0x9c] sm:$0xf]
        %v756 = vld [vmem:[#allocation6 + $0xa0] sm:$0xf]
        %v757 = vld [vmem:[#allocation6 + $0xa4] sm:$0xf]
        %v758 = vld [vmem:[#allocation6 + $0xa8] sm:$0xf]
        %v759 = vld [vmem:[#allocation6 + $0xac] sm:$0xf]
        %v760 = vld [vmem:[#allocation6 + $0xb0] sm:$0xf]
        %v761 = vld [vmem:[#allocation6 + $0xb4] sm:$0xf]
        %v762 = vld [vmem:[#allocation6 + $0xb8] sm:$0xf]
        %v763 = vld [vmem:[#allocation6 + $0xbc] sm:$0xf]
        %v764 = vld [vmem:[%s212 + $0xc] sm:$0x8]
        %v765 = vld [vmem:[%s212 + $0xc4] sm:$0xf]
        %v766 = vld [vmem:[%s212 + $0xc8] sm:$0xf]
        %v767 = vld [vmem:[%s212 + $0xcc] sm:$0xf]
        %v768 = vld [vmem:[%s212 + $0xd0] sm:$0x1]
        %v773 = vunpack.c.l.b16 %v764
        %v774 = vunpack.c.l.b16 %v765
        %v775 = vunpack.c.l.b16 %v766
        %v776 = vunpack.c.l.b16 %v767
        %v777 = vpack.c.b16 %v353, %v773
        %v778 = vpack.c.b16 %v775, %v774
        %v779 = vpack.c.b16 %v776, %v776
        %v780 = vpack.c.b16 %v774, %v397
        %v781 = vpack.c.b16 %v776, %v775
        %v783 = vshrl.u32 %v400, 16
        %v785 = vrot.slane %v783, 4
        %v786 = vshll.u32 %v400, 16
        %v788 = vrot.slane %v786, 5
        %v789 = vor.u32 %v785, %v788
        %v791 = vshrl.u32 %v401, 16
        %v793 = vrot.slane %v791, 4
        %v794 = vshll.u32 %v401, 16
        %v796 = vrot.slane %v794, 5
        %v797 = vor.u32 %v793, %v796
        %v798 = vsel %vm447, %v789, %v797
        %v800 = vshrl.u32 %v402, 16
        %v802 = vrot.slane %v800, 4
        %v803 = vshll.u32 %v402, 16
        %v805 = vrot.slane %v803, 5
        %v806 = vor.u32 %v802, %v805
        %v807 = vsel %vm447, %v797, %v806
        %v809 = vshrl.u32 %v403, 16
        %v811 = vrot.slane %v809, 4
        %v812 = vshll.u32 %v403, 16
        %v814 = vrot.slane %v812, 5
        %v815 = vor.u32 %v811, %v814
        %v816 = vsel %vm447, %v806, %v815
        %v818 = vshrl.u32 %v404, 16
        %v820 = vrot.slane %v818, 4
        %v821 = vshll.u32 %v404, 16
        %v823 = vrot.slane %v821, 5
        %v824 = vor.u32 %v820, %v823
        %v825 = vsel %vm447, %v815, %v824
        %v827 = vshrl.u32 %v405, 16
        %v829 = vrot.slane %v827, 4
        %v830 = vshll.u32 %v405, 16
        %v832 = vrot.slane %v830, 5
        %v833 = vor.u32 %v829, %v832
        %v834 = vsel %vm447, %v824, %v833
        %v836 = vshrl.u32 %v406, 16
        %v838 = vrot.slane %v836, 4
        %v839 = vshll.u32 %v406, 16
        %v841 = vrot.slane %v839, 5
        %v842 = vor.u32 %v838, %v841
        %v843 = vsel %vm447, %v833, %v842
        %v845 = vshrl.u32 %v407, 16
        %v847 = vrot.slane %v845, 4
        %v848 = vshll.u32 %v407, 16
        %v850 = vrot.slane %v848, 5
        %v851 = vor.u32 %v847, %v850
        %v852 = vsel %vm447, %v842, %v851
        %v854 = vshrl.u32 %v408, 16
        %v856 = vrot.slane %v854, 4
        %v857 = vshll.u32 %v408, 16
        %v859 = vrot.slane %v857, 5
        %v860 = vor.u32 %v856, %v859
        %v861 = vsel %vm447, %v851, %v860
        %v863 = vshrl.u32 %v409, 16
        %v865 = vrot.slane %v863, 4
        %v866 = vshll.u32 %v409, 16
        %v868 = vrot.slane %v866, 5
        %v869 = vor.u32 %v865, %v868
        %v870 = vsel %vm447, %v860, %v869
        %v872 = vshrl.u32 %v410, 16
        %v874 = vrot.slane %v872, 4
        %v875 = vshll.u32 %v410, 16
        %v877 = vrot.slane %v875, 5
        %v878 = vor.u32 %v874, %v877
        %v879 = vsel %vm447, %v869, %v878
        %v881 = vshrl.u32 %v411, 16
        %v883 = vrot.slane %v881, 4
        %v884 = vshll.u32 %v411, 16
        %v886 = vrot.slane %v884, 5
        %v887 = vor.u32 %v883, %v886
        %v888 = vsel %vm447, %v878, %v887
        %v890 = vshrl.u32 %v412, 16
        %v892 = vrot.slane %v890, 4
        %v893 = vshll.u32 %v412, 16
        %v895 = vrot.slane %v893, 5
        %v896 = vor.u32 %v892, %v895
        %v897 = vsel %vm447, %v887, %v896
        %v899 = vshrl.u32 %v413, 16
        %v901 = vrot.slane %v899, 4
        %v902 = vshll.u32 %v413, 16
        %v904 = vrot.slane %v902, 5
        %v905 = vor.u32 %v901, %v904
        %v906 = vsel %vm447, %v896, %v905
        %v908 = vshrl.u32 %v414, 16
        %v910 = vrot.slane %v908, 4
        %v911 = vshll.u32 %v414, 16
        %v913 = vrot.slane %v911, 5
        %v914 = vor.u32 %v910, %v913
        %v915 = vsel %vm447, %v905, %v914
        %v917 = vshrl.u32 %v415, 16
        %v919 = vrot.slane %v917, 4
        %v920 = vshll.u32 %v415, 16
        %v922 = vrot.slane %v920, 5
        %v923 = vor.u32 %v919, %v922
        %v924 = vsel %vm447, %v914, %v923
        %v926 = vshrl.u32 %v416, 16
        %v928 = vrot.slane %v926, 4
        %v929 = vshll.u32 %v416, 16
        %v931 = vrot.slane %v929, 5
        %v932 = vor.u32 %v928, %v931
        %v933 = vsel %vm447, %v923, %v932
        %v935 = vshrl.u32 %v417, 16
        %v937 = vrot.slane %v935, 4
        %v938 = vshll.u32 %v417, 16
        %v940 = vrot.slane %v938, 5
        %v941 = vor.u32 %v937, %v940
        %v942 = vsel %vm447, %v932, %v941
        %v944 = vshrl.u32 %v418, 16
        %v946 = vrot.slane %v944, 4
        %v947 = vshll.u32 %v418, 16
        %v949 = vrot.slane %v947, 5
        %v950 = vor.u32 %v946, %v949
        %v951 = vsel %vm447, %v941, %v950
        %v953 = vshrl.u32 %v419, 16
        %v955 = vrot.slane %v953, 4
        %v956 = vshll.u32 %v419, 16
        %v958 = vrot.slane %v956, 5
        %v959 = vor.u32 %v955, %v958
        %v960 = vsel %vm447, %v950, %v959
        %v962 = vshrl.u32 %v420, 16
        %v964 = vrot.slane %v962, 4
        %v965 = vshll.u32 %v420, 16
        %v967 = vrot.slane %v965, 5
        %v968 = vor.u32 %v964, %v967
        %v969 = vsel %vm447, %v959, %v968
        %v971 = vshrl.u32 %v421, 16
        %v973 = vrot.slane %v971, 4
        %v974 = vshll.u32 %v421, 16
        %v976 = vrot.slane %v974, 5
        %v977 = vor.u32 %v973, %v976
        %v978 = vsel %vm447, %v968, %v977
        %v980 = vshrl.u32 %v780, 16
        %v982 = vrot.slane %v980, 4
        %v983 = vshll.u32 %v780, 16
        %v985 = vrot.slane %v983, 5
        %v986 = vor.u32 %v982, %v985
        %v987 = vsel %vm447, %v977, %v986
        %v989 = vshrl.u32 %v781, 16
        %v991 = vrot.slane %v989, 4
        %v992 = vshll.u32 %v781, 16
        %v994 = vrot.slane %v992, 5
        %v995 = vor.u32 %v991, %v994
        %v996 = vsel %vm447, %v986, %v995
        %v998 = vunpack.c.l.b16 %v768
        %v999 = vpack.c.b16 %v998, %v998
        %v1000 = vrot.slane %v400, 5
        %v1001 = vrot.slane %v401, 5
        %v1002 = vsel %vm666, %v1000, %v1001
        %v1003 = vrot.slane %v402, 5
        %v1004 = vsel %vm666, %v1001, %v1003
        %v1005 = vrot.slane %v403, 5
        %v1006 = vsel %vm666, %v1003, %v1005
        %v1007 = vrot.slane %v404, 5
        %v1008 = vsel %vm666, %v1005, %v1007
        %v1009 = vrot.slane %v405, 5
        %v1010 = vsel %vm666, %v1007, %v1009
        %v1011 = vrot.slane %v406, 5
        %v1012 = vsel %vm666, %v1009, %v1011
        %v1013 = vrot.slane %v407, 5
        %v1014 = vsel %vm666, %v1011, %v1013
        %v1015 = vrot.slane %v408, 5
        %v1016 = vsel %vm666, %v1013, %v1015
        %v1017 = vrot.slane %v409, 5
        %v1018 = vsel %vm666, %v1015, %v1017
        %v1019 = vrot.slane %v410, 5
        %v1020 = vsel %vm666, %v1017, %v1019
        %v1021 = vrot.slane %v411, 5
        %v1022 = vsel %vm666, %v1019, %v1021
        %v1023 = vrot.slane %v412, 5
        %v1024 = vsel %vm666, %v1021, %v1023
        %v1025 = vrot.slane %v413, 5
        %v1026 = vsel %vm666, %v1023, %v1025
        %v1027 = vrot.slane %v414, 5
        %v1028 = vsel %vm666, %v1025, %v1027
        %v1029 = vrot.slane %v415, 5
        %v1030 = vsel %vm666, %v1027, %v1029
        %v1031 = vrot.slane %v416, 5
        %v1032 = vsel %vm666, %v1029, %v1031
        %v1033 = vrot.slane %v417, 5
        %v1034 = vsel %vm666, %v1031, %v1033
        %v1035 = vrot.slane %v418, 5
        %v1036 = vsel %vm666, %v1033, %v1035
        %v1037 = vrot.slane %v419, 5
        %v1038 = vsel %vm666, %v1035, %v1037
        %v1039 = vrot.slane %v420, 5
        %v1040 = vsel %vm666, %v1037, %v1039
        %v1041 = vrot.slane %v421, 5
        %v1042 = vsel %vm666, %v1039, %v1041
        %v1043 = vrot.slane %v780, 5
        %v1044 = vsel %vm666, %v1041, %v1043
        %v1045 = vrot.slane %v781, 5
        %v1046 = vsel %vm666, %v1043, %v1045
        %v1047 = vrot.slane %v999, 5
        %v1048 = vsel %vm666, %v1045, %v1047
        %s1049 = scalar_lea.vmem [#allocation6], 192
        %v1050 = vld [vmem:[%s1049] sm:$0xf]
        %v1051 = vld [vmem:[%s1049 + $0x4] sm:$0xf]
        %v1052 = vld [vmem:[%s1049 + $0x8] sm:$0xf]
        %v1053 = vld [vmem:[%s1049 + $0xc] sm:$0xf]
        %v1054 = vld [vmem:[%s1049 + $0x10] sm:$0xf]
        %v1055 = vld [vmem:[%s1049 + $0x14] sm:$0xf]
        %v1056 = vld [vmem:[%s1049 + $0x18] sm:$0xf]
        %v1057 = vld [vmem:[%s1049 + $0x1c] sm:$0xf]
        %v1058 = vld [vmem:[%s1049 + $0x20] sm:$0xf]
        %v1059 = vld [vmem:[%s1049 + $0x24] sm:$0xf]
        %v1060 = vld [vmem:[%s1049 + $0x28] sm:$0xf]
        %v1061 = vld [vmem:[%s1049 + $0x2c] sm:$0xf]
        %v1062 = vld [vmem:[%s1049 + $0x30] sm:$0xf]
        %v1063 = vld [vmem:[%s1049 + $0x34] sm:$0xf]
        %v1064 = vld [vmem:[%s1049 + $0x38] sm:$0xf]
        %v1065 = vld [vmem:[%s1049 + $0x3c] sm:$0xf]
        %v1066 = vld [vmem:[%s1049 + $0x40] sm:$0xf]
        %v1067 = vld [vmem:[%s1049 + $0x44] sm:$0xf]
        %v1068 = vld [vmem:[%s1049 + $0x48] sm:$0xf]
        %v1069 = vld [vmem:[%s1049 + $0x4c] sm:$0xf]
        %v1070 = vld [vmem:[%s1049 + $0x50] sm:$0xf]
        %v1071 = vld [vmem:[%s1049 + $0x54] sm:$0xf]
        %v1072 = vld [vmem:[%s1049 + $0x58] sm:$0xf]
        %v1073 = vld [vmem:[%s1049 + $0x5c] sm:$0xf]
        %v1074 = vld [vmem:[%s1049 + $0x60] sm:$0xf]
        %v1075 = vld [vmem:[%s1049 + $0x64] sm:$0xf]
        %v1076 = vld [vmem:[%s1049 + $0x68] sm:$0xf]
        %v1077 = vld [vmem:[%s1049 + $0x6c] sm:$0xf]
        %v1078 = vld [vmem:[%s1049 + $0x70] sm:$0xf]
        %v1079 = vld [vmem:[%s1049 + $0x74] sm:$0xf]
        %v1080 = vld [vmem:[%s1049 + $0x78] sm:$0xf]
        %v1081 = vld [vmem:[%s1049 + $0x7c] sm:$0xf]
        %v1082 = vld [vmem:[%s1049 + $0x80] sm:$0xf]
        %v1083 = vld [vmem:[%s1049 + $0x84] sm:$0xf]
        %v1084 = vld [vmem:[%s1049 + $0x88] sm:$0xf]
        %v1085 = vld [vmem:[%s1049 + $0x8c] sm:$0xf]
        %v1086 = vld [vmem:[%s1049 + $0x90] sm:$0xf]
        %v1087 = vld [vmem:[%s1049 + $0x94] sm:$0xf]
        %v1088 = vld [vmem:[%s1049 + $0x98] sm:$0xf]
        %v1089 = vld [vmem:[%s1049 + $0x9c] sm:$0xf]
        %v1090 = vld [vmem:[%s1049 + $0xa0] sm:$0xf]
        %v1091 = vld [vmem:[%s1049 + $0xa4] sm:$0xf]
        %v1092 = vld [vmem:[%s1049 + $0xa8] sm:$0xf]
        %v1093 = vld [vmem:[%s1049 + $0xac] sm:$0xf]
        %v1094 = vld [vmem:[%s1049 + $0xb0] sm:$0xf]
        %v1095 = vld [vmem:[%s1049 + $0xb4] sm:$0xf]
        %v1096 = vld [vmem:[%s1049 + $0xb8] sm:$0xf]
        %v1097 = vld [vmem:[%s1049 + $0xbc] sm:$0xf]
        %vm1098 = vsmask.f32 4352
        %v1100 = vshrl.u32 %v777, 16
        %v1102 = vrot.slane %v1100, 3
        %v1103 = vshll.u32 %v777, 16
        %v1105 = vrot.slane %v1103, 4
        %v1106 = vor.u32 %v1102, %v1105
        %v1107 = vrot.slane %v466, 3
        %v1108 = vrot.slane %v469, 4
        %v1109 = vor.u32 %v1107, %v1108
        %v1110 = vsel %vm1098, %v1106, %v1109
        %v1112 = vshrl.u32 %v789, 16
        %v1114 = vrot.slane %v1112, 3
        %v1115 = vshll.u32 %v789, 16
        %v1117 = vrot.slane %v1115, 4
        %v1118 = vor.u32 %v1114, %v1117
        %v1120 = vshrl.u32 %v798, 16
        %v1122 = vrot.slane %v1120, 3
        %v1123 = vshll.u32 %v798, 16
        %v1125 = vrot.slane %v1123, 4
        %v1126 = vor.u32 %v1122, %v1125
        %v1127 = vsel %vm1098, %v1118, %v1126
        %v1129 = vshrl.u32 %v1000, 16
        %v1131 = vrot.slane %v1129, 3
        %v1132 = vshll.u32 %v1000, 16
        %v1134 = vrot.slane %v1132, 4
        %v1135 = vor.u32 %v1131, %v1134
        %v1137 = vshrl.u32 %v1002, 16
        %v1139 = vrot.slane %v1137, 3
        %v1140 = vshll.u32 %v1002, 16
        %v1142 = vrot.slane %v1140, 4
        %v1143 = vor.u32 %v1139, %v1142
        %v1144 = vsel %vm1098, %v1135, %v1143
        %v1145 = vrot.slane %v475, 3
        %v1146 = vrot.slane %v478, 4
        %v1147 = vor.u32 %v1145, %v1146
        %v1148 = vsel %vm1098, %v1109, %v1147
        %v1150 = vshrl.u32 %v807, 16
        %v1152 = vrot.slane %v1150, 3
        %v1153 = vshll.u32 %v807, 16
        %v1155 = vrot.slane %v1153, 4
        %v1156 = vor.u32 %v1152, %v1155
        %v1157 = vsel %vm1098, %v1126, %v1156
        %v1159 = vshrl.u32 %v1004, 16
        %v1161 = vrot.slane %v1159, 3
        %v1162 = vshll.u32 %v1004, 16
        %v1164 = vrot.slane %v1162, 4
        %v1165 = vor.u32 %v1161, %v1164
        %v1166 = vsel %vm1098, %v1143, %v1165
        %v1167 = vrot.slane %v484, 3
        %v1168 = vrot.slane %v487, 4
        %v1169 = vor.u32 %v1167, %v1168
        %v1170 = vsel %vm1098, %v1147, %v1169
        %v1172 = vshrl.u32 %v816, 16
        %v1174 = vrot.slane %v1172, 3
        %v1175 = vshll.u32 %v816, 16
        %v1177 = vrot.slane %v1175, 4
        %v1178 = vor.u32 %v1174, %v1177
        %v1179 = vsel %vm1098, %v1156, %v1178
        %v1181 = vshrl.u32 %v1006, 16
        %v1183 = vrot.slane %v1181, 3
        %v1184 = vshll.u32 %v1006, 16
        %v1186 = vrot.slane %v1184, 4
        %v1187 = vor.u32 %v1183, %v1186
        %v1188 = vsel %vm1098, %v1165, %v1187
        %v1189 = vrot.slane %v493, 3
        %v1190 = vrot.slane %v496, 4
        %v1191 = vor.u32 %v1189, %v1190
        %v1192 = vsel %vm1098, %v1169, %v1191
        %v1194 = vshrl.u32 %v825, 16
        %v1196 = vrot.slane %v1194, 3
        %v1197 = vshll.u32 %v825, 16
        %v1199 = vrot.slane %v1197, 4
        %v1200 = vor.u32 %v1196, %v1199
        %v1201 = vsel %vm1098, %v1178, %v1200
        %v1203 = vshrl.u32 %v1008, 16
        %v1205 = vrot.slane %v1203, 3
        %v1206 = vshll.u32 %v1008, 16
        %v1208 = vrot.slane %v1206, 4
        %v1209 = vor.u32 %v1205, %v1208
        %v1210 = vsel %vm1098, %v1187, %v1209
        %v1211 = vrot.slane %v502, 3
        %v1212 = vrot.slane %v505, 4
        %v1213 = vor.u32 %v1211, %v1212
        %v1214 = vsel %vm1098, %v1191, %v1213
        %v1216 = vshrl.u32 %v834, 16
        %v1218 = vrot.slane %v1216, 3
        %v1219 = vshll.u32 %v834, 16
        %v1221 = vrot.slane %v1219, 4
        %v1222 = vor.u32 %v1218, %v1221
        %v1223 = vsel %vm1098, %v1200, %v1222
        %v1225 = vshrl.u32 %v1010, 16
        %v1227 = vrot.slane %v1225, 3
        %v1228 = vshll.u32 %v1010, 16
        %v1230 = vrot.slane %v1228, 4
        %v1231 = vor.u32 %v1227, %v1230
        %v1232 = vsel %vm1098, %v1209, %v1231
        %v1233 = vrot.slane %v511, 3
        %v1234 = vrot.slane %v514, 4
        %v1235 = vor.u32 %v1233, %v1234
        %v1236 = vsel %vm1098, %v1213, %v1235
        %v1238 = vshrl.u32 %v843, 16
        %v1240 = vrot.slane %v1238, 3
        %v1241 = vshll.u32 %v843, 16
        %v1243 = vrot.slane %v1241, 4
        %v1244 = vor.u32 %v1240, %v1243
        %v1245 = vsel %vm1098, %v1222, %v1244
        %v1247 = vshrl.u32 %v1012, 16
        %v1249 = vrot.slane %v1247, 3
        %v1250 = vshll.u32 %v1012, 16
        %v1252 = vrot.slane %v1250, 4
        %v1253 = vor.u32 %v1249, %v1252
        %v1254 = vsel %vm1098, %v1231, %v1253
        %v1255 = vrot.slane %v520, 3
        %v1256 = vrot.slane %v523, 4
        %v1257 = vor.u32 %v1255, %v1256
        %v1258 = vsel %vm1098, %v1235, %v1257
        %v1260 = vshrl.u32 %v852, 16
        %v1262 = vrot.slane %v1260, 3
        %v1263 = vshll.u32 %v852, 16
        %v1265 = vrot.slane %v1263, 4
        %v1266 = vor.u32 %v1262, %v1265
        %v1267 = vsel %vm1098, %v1244, %v1266
        %v1269 = vshrl.u32 %v1014, 16
        %v1271 = vrot.slane %v1269, 3
        %v1272 = vshll.u32 %v1014, 16
        %v1274 = vrot.slane %v1272, 4
        %v1275 = vor.u32 %v1271, %v1274
        %v1276 = vsel %vm1098, %v1253, %v1275
        %v1277 = vrot.slane %v529, 3
        %v1278 = vrot.slane %v532, 4
        %v1279 = vor.u32 %v1277, %v1278
        %v1280 = vsel %vm1098, %v1257, %v1279
        %v1282 = vshrl.u32 %v861, 16
        %v1284 = vrot.slane %v1282, 3
        %v1285 = vshll.u32 %v861, 16
        %v1287 = vrot.slane %v1285, 4
        %v1288 = vor.u32 %v1284, %v1287
        %v1289 = vsel %vm1098, %v1266, %v1288
        %v1291 = vshrl.u32 %v1016, 16
        %v1293 = vrot.slane %v1291, 3
        %v1294 = vshll.u32 %v1016, 16
        %v1296 = vrot.slane %v1294, 4
        %v1297 = vor.u32 %v1293, %v1296
        %v1298 = vsel %vm1098, %v1275, %v1297
        %v1299 = vrot.slane %v538, 3
        %v1300 = vrot.slane %v541, 4
        %v1301 = vor.u32 %v1299, %v1300
        %v1302 = vsel %vm1098, %v1279, %v1301
        %v1304 = vshrl.u32 %v870, 16
        %v1306 = vrot.slane %v1304, 3
        %v1307 = vshll.u32 %v870, 16
        %v1309 = vrot.slane %v1307, 4
        %v1310 = vor.u32 %v1306, %v1309
        %v1311 = vsel %vm1098, %v1288, %v1310
        %v1313 = vshrl.u32 %v1018, 16
        %v1315 = vrot.slane %v1313, 3
        %v1316 = vshll.u32 %v1018, 16
        %v1318 = vrot.slane %v1316, 4
        %v1319 = vor.u32 %v1315, %v1318
        %v1320 = vsel %vm1098, %v1297, %v1319
        %v1321 = vrot.slane %v547, 3
        %v1322 = vrot.slane %v550, 4
        %v1323 = vor.u32 %v1321, %v1322
        %v1324 = vsel %vm1098, %v1301, %v1323
        %v1326 = vshrl.u32 %v879, 16
        %v1328 = vrot.slane %v1326, 3
        %v1329 = vshll.u32 %v879, 16
        %v1331 = vrot.slane %v1329, 4
        %v1332 = vor.u32 %v1328, %v1331
        %v1333 = vsel %vm1098, %v1310, %v1332
        %v1335 = vshrl.u32 %v1020, 16
        %v1337 = vrot.slane %v1335, 3
        %v1338 = vshll.u32 %v1020, 16
        %v1340 = vrot.slane %v1338, 4
        %v1341 = vor.u32 %v1337, %v1340
        %v1342 = vsel %vm1098, %v1319, %v1341
        %v1343 = vrot.slane %v556, 3
        %v1344 = vrot.slane %v559, 4
        %v1345 = vor.u32 %v1343, %v1344
        %v1346 = vsel %vm1098, %v1323, %v1345
        %v1348 = vshrl.u32 %v888, 16
        %v1350 = vrot.slane %v1348, 3
        %v1351 = vshll.u32 %v888, 16
        %v1353 = vrot.slane %v1351, 4
        %v1354 = vor.u32 %v1350, %v1353
        %v1355 = vsel %vm1098, %v1332, %v1354
        %v1357 = vshrl.u32 %v1022, 16
        %v1359 = vrot.slane %v1357, 3
        %v1360 = vshll.u32 %v1022, 16
        %v1362 = vrot.slane %v1360, 4
        %v1363 = vor.u32 %v1359, %v1362
        %v1364 = vsel %vm1098, %v1341, %v1363
        %v1365 = vrot.slane %v565, 3
        %v1366 = vrot.slane %v568, 4
        %v1367 = vor.u32 %v1365, %v1366
        %v1368 = vsel %vm1098, %v1345, %v1367
        %v1370 = vshrl.u32 %v897, 16
        %v1372 = vrot.slane %v1370, 3
        %v1373 = vshll.u32 %v897, 16
        %v1375 = vrot.slane %v1373, 4
        %v1376 = vor.u32 %v1372, %v1375
        %v1377 = vsel %vm1098, %v1354, %v1376
        %v1379 = vshrl.u32 %v1024, 16
        %v1381 = vrot.slane %v1379, 3
        %v1382 = vshll.u32 %v1024, 16
        %v1384 = vrot.slane %v1382, 4
        %v1385 = vor.u32 %v1381, %v1384
        %v1386 = vsel %vm1098, %v1363, %v1385
        %v1387 = vrot.slane %v574, 3
        %v1388 = vrot.slane %v577, 4
        %v1389 = vor.u32 %v1387, %v1388
        %v1390 = vsel %vm1098, %v1367, %v1389
        %v1392 = vshrl.u32 %v906, 16
        %v1394 = vrot.slane %v1392, 3
        %v1395 = vshll.u32 %v906, 16
        %v1397 = vrot.slane %v1395, 4
        %v1398 = vor.u32 %v1394, %v1397
        %v1399 = vsel %vm1098, %v1376, %v1398
        %v1401 = vshrl.u32 %v1026, 16
        %v1403 = vrot.slane %v1401, 3
        %v1404 = vshll.u32 %v1026, 16
        %v1406 = vrot.slane %v1404, 4
        %v1407 = vor.u32 %v1403, %v1406
        %v1408 = vsel %vm1098, %v1385, %v1407
        %v1409 = vrot.slane %v583, 3
        %v1410 = vrot.slane %v586, 4
        %v1411 = vor.u32 %v1409, %v1410
        %v1412 = vsel %vm1098, %v1389, %v1411
        %v1414 = vshrl.u32 %v915, 16
        %v1416 = vrot.slane %v1414, 3
        %v1417 = vshll.u32 %v915, 16
        %v1419 = vrot.slane %v1417, 4
        %v1420 = vor.u32 %v1416, %v1419
        %v1421 = vsel %vm1098, %v1398, %v1420
        %v1423 = vshrl.u32 %v1028, 16
        %v1425 = vrot.slane %v1423, 3
        %v1426 = vshll.u32 %v1028, 16
        %v1428 = vrot.slane %v1426, 4
        %v1429 = vor.u32 %v1425, %v1428
        %v1430 = vsel %vm1098, %v1407, %v1429
        %v1431 = vrot.slane %v592, 3
        %v1432 = vrot.slane %v595, 4
        %v1433 = vor.u32 %v1431, %v1432
        %v1434 = vsel %vm1098, %v1411, %v1433
        %v1436 = vshrl.u32 %v924, 16
        %v1438 = vrot.slane %v1436, 3
        %v1439 = vshll.u32 %v924, 16
        %v1441 = vrot.slane %v1439, 4
        %v1442 = vor.u32 %v1438, %v1441
        %v1443 = vsel %vm1098, %v1420, %v1442
        %v1445 = vshrl.u32 %v1030, 16
        %v1447 = vrot.slane %v1445, 3
        %v1448 = vshll.u32 %v1030, 16
        %v1450 = vrot.slane %v1448, 4
        %v1451 = vor.u32 %v1447, %v1450
        %v1452 = vsel %vm1098, %v1429, %v1451
        %v1453 = vrot.slane %v601, 3
        %v1454 = vrot.slane %v604, 4
        %v1455 = vor.u32 %v1453, %v1454
        %v1456 = vsel %vm1098, %v1433, %v1455
        %v1458 = vshrl.u32 %v933, 16
        %v1460 = vrot.slane %v1458, 3
        %v1461 = vshll.u32 %v933, 16
        %v1463 = vrot.slane %v1461, 4
        %v1464 = vor.u32 %v1460, %v1463
        %v1465 = vsel %vm1098, %v1442, %v1464
        %v1467 = vshrl.u32 %v1032, 16
        %v1469 = vrot.slane %v1467, 3
        %v1470 = vshll.u32 %v1032, 16
        %v1472 = vrot.slane %v1470, 4
        %v1473 = vor.u32 %v1469, %v1472
        %v1474 = vsel %vm1098, %v1451, %v1473
        %v1475 = vrot.slane %v610, 3
        %v1476 = vrot.slane %v613, 4
        %v1477 = vor.u32 %v1475, %v1476
        %v1478 = vsel %vm1098, %v1455, %v1477
        %v1480 = vshrl.u32 %v942, 16
        %v1482 = vrot.slane %v1480, 3
        %v1483 = vshll.u32 %v942, 16
        %v1485 = vrot.slane %v1483, 4
        %v1486 = vor.u32 %v1482, %v1485
        %v1487 = vsel %vm1098, %v1464, %v1486
        %v1489 = vshrl.u32 %v1034, 16
        %v1491 = vrot.slane %v1489, 3
        %v1492 = vshll.u32 %v1034, 16
        %v1494 = vrot.slane %v1492, 4
        %v1495 = vor.u32 %v1491, %v1494
        %v1496 = vsel %vm1098, %v1473, %v1495
        %v1497 = vrot.slane %v619, 3
        %v1498 = vrot.slane %v622, 4
        %v1499 = vor.u32 %v1497, %v1498
        %v1500 = vsel %vm1098, %v1477, %v1499
        %v1502 = vshrl.u32 %v951, 16
        %v1504 = vrot.slane %v1502, 3
        %v1505 = vshll.u32 %v951, 16
        %v1507 = vrot.slane %v1505, 4
        %v1508 = vor.u32 %v1504, %v1507
        %v1509 = vsel %vm1098, %v1486, %v1508
        %v1511 = vshrl.u32 %v1036, 16
        %v1513 = vrot.slane %v1511, 3
        %v1514 = vshll.u32 %v1036, 16
        %v1516 = vrot.slane %v1514, 4
        %v1517 = vor.u32 %v1513, %v1516
        %v1518 = vsel %vm1098, %v1495, %v1517
        %v1519 = vrot.slane %v628, 3
        %v1520 = vrot.slane %v631, 4
        %v1521 = vor.u32 %v1519, %v1520
        %v1522 = vsel %vm1098, %v1499, %v1521
        %v1524 = vshrl.u32 %v960, 16
        %v1526 = vrot.slane %v1524, 3
        %v1527 = vshll.u32 %v960, 16
        %v1529 = vrot.slane %v1527, 4
        %v1530 = vor.u32 %v1526, %v1529
        %v1531 = vsel %vm1098, %v1508, %v1530
        %v1533 = vshrl.u32 %v1038, 16
        %v1535 = vrot.slane %v1533, 3
        %v1536 = vshll.u32 %v1038, 16
        %v1538 = vrot.slane %v1536, 4
        %v1539 = vor.u32 %v1535, %v1538
        %v1540 = vsel %vm1098, %v1517, %v1539
        %v1541 = vrot.slane %v637, 3
        %v1542 = vrot.slane %v640, 4
        %v1543 = vor.u32 %v1541, %v1542
        %v1544 = vsel %vm1098, %v1521, %v1543
        %v1546 = vshrl.u32 %v969, 16
        %v1548 = vrot.slane %v1546, 3
        %v1549 = vshll.u32 %v969, 16
        %v1551 = vrot.slane %v1549, 4
        %v1552 = vor.u32 %v1548, %v1551
        %v1553 = vsel %vm1098, %v1530, %v1552
        %v1555 = vshrl.u32 %v1040, 16
        %v1557 = vrot.slane %v1555, 3
        %v1558 = vshll.u32 %v1040, 16
        %v1560 = vrot.slane %v1558, 4
        %v1561 = vor.u32 %v1557, %v1560
        %v1562 = vsel %vm1098, %v1539, %v1561
        %v1563 = vrot.slane %v646, 3
        %v1564 = vrot.slane %v649, 4
        %v1565 = vor.u32 %v1563, %v1564
        %v1566 = vsel %vm1098, %v1543, %v1565
        %v1568 = vshrl.u32 %v978, 16
        %v1570 = vrot.slane %v1568, 3
        %v1571 = vshll.u32 %v978, 16
        %v1573 = vrot.slane %v1571, 4
        %v1574 = vor.u32 %v1570, %v1573
        %v1575 = vsel %vm1098, %v1552, %v1574
        %v1577 = vshrl.u32 %v1042, 16
        %v1579 = vrot.slane %v1577, 3
        %v1580 = vshll.u32 %v1042, 16
        %v1582 = vrot.slane %v1580, 4
        %v1583 = vor.u32 %v1579, %v1582
        %v1584 = vsel %vm1098, %v1561, %v1583
        %v1585 = vrot.slane %v655, 3
        %v1586 = vrot.slane %v658, 4
        %v1587 = vor.u32 %v1585, %v1586
        %v1588 = vsel %vm1098, %v1565, %v1587
        %v1590 = vshrl.u32 %v987, 16
        %v1592 = vrot.slane %v1590, 3
        %v1593 = vshll.u32 %v987, 16
        %v1595 = vrot.slane %v1593, 4
        %v1596 = vor.u32 %v1592, %v1595
        %v1597 = vsel %vm1098, %v1574, %v1596
        %v1599 = vshrl.u32 %v1044, 16
        %v1601 = vrot.slane %v1599, 3
        %v1602 = vshll.u32 %v1044, 16
        %v1604 = vrot.slane %v1602, 4
        %v1605 = vor.u32 %v1601, %v1604
        %v1606 = vsel %vm1098, %v1583, %v1605
        %v1608 = vshrl.u32 %v778, 16
        %v1610 = vrot.slane %v1608, 3
        %v1611 = vshll.u32 %v778, 16
        %v1613 = vrot.slane %v1611, 4
        %v1614 = vor.u32 %v1610, %v1613
        %v1615 = vsel %vm1098, %v1587, %v1614
        %v1617 = vshrl.u32 %v996, 16
        %v1619 = vrot.slane %v1617, 3
        %v1620 = vshll.u32 %v996, 16
        %v1622 = vrot.slane %v1620, 4
        %v1623 = vor.u32 %v1619, %v1622
        %v1624 = vsel %vm1098, %v1596, %v1623
        %v1626 = vshrl.u32 %v1046, 16
        %v1628 = vrot.slane %v1626, 3
        %v1629 = vshll.u32 %v1046, 16
        %v1631 = vrot.slane %v1629, 4
        %v1632 = vor.u32 %v1628, %v1631
        %v1633 = vsel %vm1098, %v1605, %v1632
        %v1635 = vshrl.u32 %v779, 16
        %v1637 = vrot.slane %v1635, 3
        %v1638 = vshll.u32 %v779, 16
        %v1640 = vrot.slane %v1638, 4
        %v1641 = vor.u32 %v1637, %v1640
        %v1642 = vsel %vm1098, %v1614, %v1641
        %v1644 = vshrl.u32 %v995, 16
        %v1646 = vrot.slane %v1644, 3
        %v1647 = vshll.u32 %v995, 16
        %v1649 = vrot.slane %v1647, 4
        %v1650 = vor.u32 %v1646, %v1649
        %v1651 = vsel %vm1098, %v1623, %v1650
        %v1653 = vshrl.u32 %v1048, 16
        %v1655 = vrot.slane %v1653, 3
        %v1656 = vshll.u32 %v1048, 16
        %v1658 = vrot.slane %v1656, 4
        %v1659 = vor.u32 %v1655, %v1658
        %v1660 = vsel %vm1098, %v1632, %v1659
        %v1781 = vunpack.c.l.b16 %v1050
        %v1782 = vunpack.c.l.b16 %v1051
        %v1783 = vunpack.c.l.b16 %v1052
        %v1784 = vunpack.c.l.b16 %v1053
        %v1785 = vunpack.c.l.b16 %v1054
        %v1786 = vunpack.c.l.b16 %v1055
        %v1787 = vunpack.c.l.b16 %v1056
        %v1788 = vunpack.c.l.b16 %v1057
        %v1789 = vunpack.c.l.b16 %v1058
        %v1790 = vunpack.c.l.b16 %v1059
        %v1791 = vunpack.c.l.b16 %v1060
        %v1792 = vunpack.c.l.b16 %v1061
        %v1793 = vunpack.c.l.b16 %v1062
        %v1794 = vunpack.c.l.b16 %v1063
        %v1795 = vunpack.c.l.b16 %v1064
        %v1796 = vunpack.c.l.b16 %v1065
        %v1797 = vunpack.c.l.b16 %v1066
        %v1798 = vunpack.c.l.b16 %v1067
        %v1799 = vunpack.c.l.b16 %v1068
        %v1800 = vunpack.c.l.b16 %v1069
        %v1801 = vunpack.c.l.b16 %v1070
        %v1802 = vunpack.c.l.b16 %v1071
        %v1803 = vunpack.c.l.b16 %v1072
        %v1804 = vunpack.c.l.b16 %v1073
        %v1805 = vunpack.c.l.b16 %v1074
        %v1806 = vunpack.c.l.b16 %v1075
        %v1807 = vunpack.c.l.b16 %v1076
        %v1808 = vunpack.c.l.b16 %v1077
        %v1809 = vunpack.c.l.b16 %v1078
        %v1810 = vunpack.c.l.b16 %v1079
        %v1811 = vunpack.c.l.b16 %v1080
        %v1812 = vunpack.c.l.b16 %v1081
        %v1813 = vunpack.c.l.b16 %v1082
        %v1814 = vunpack.c.l.b16 %v1083
        %v1815 = vunpack.c.l.b16 %v1084
        %v1816 = vunpack.c.l.b16 %v1085
        %v1817 = vunpack.c.l.b16 %v1086
        %v1818 = vunpack.c.l.b16 %v1087
        %v1819 = vunpack.c.l.b16 %v1088
        %v1820 = vunpack.c.l.b16 %v1089
        %v1821 = vunpack.c.l.b16 %v1090
        %v1822 = vunpack.c.l.b16 %v1091
        %v1823 = vunpack.c.l.b16 %v1092
        %v1824 = vunpack.c.l.b16 %v1093
        %v1825 = vunpack.c.l.b16 %v1094
        %v1826 = vunpack.c.l.b16 %v1095
        %v1827 = vunpack.c.l.b16 %v1096
        %v1828 = vunpack.c.l.b16 %v1097
        %v1829 = vpack.c.b16 %v1782, %v1781
        %v1830 = vpack.c.b16 %v1784, %v1783
        %v1831 = vpack.c.b16 %v1786, %v1785
        %v1832 = vpack.c.b16 %v1788, %v1787
        %v1833 = vpack.c.b16 %v1790, %v1789
        %v1834 = vpack.c.b16 %v1792, %v1791
        %v1835 = vpack.c.b16 %v1794, %v1793
        %v1836 = vpack.c.b16 %v1796, %v1795
        %v1837 = vpack.c.b16 %v1798, %v1797
        %v1838 = vpack.c.b16 %v1800, %v1799
        %v1839 = vpack.c.b16 %v1802, %v1801
        %v1840 = vpack.c.b16 %v1804, %v1803
        %v1841 = vpack.c.b16 %v1806, %v1805
        %v1842 = vpack.c.b16 %v1808, %v1807
        %v1843 = vpack.c.b16 %v1810, %v1809
        %v1844 = vpack.c.b16 %v1812, %v1811
        %v1845 = vpack.c.b16 %v1814, %v1813
        %v1846 = vpack.c.b16 %v1816, %v1815
        %v1847 = vpack.c.b16 %v1818, %v1817
        %v1848 = vpack.c.b16 %v1820, %v1819
        %v1849 = vpack.c.b16 %v1822, %v1821
        %v1850 = vpack.c.b16 %v1824, %v1823
        %v1851 = vpack.c.b16 %v1826, %v1825
        %v1852 = vpack.c.b16 %v1828, %v1827
        %1877 = vmatprep.subr.bf16.mxu0 0
        %1878 = vmatpush1.bf16.msra.mxu0 %v1829
        %1879 = vmatprep.subr.bf16.mxu0 0
        %1880 = vmatpush1.bf16.msra.mxu0 %v1830
        %1881 = vmatprep.subr.bf16.mxu0 0
        %1882 = vmatpush1.bf16.msra.mxu0 %v1831
        %1883 = vmatprep.subr.bf16.mxu0 0
        %1884 = vmatpush1.bf16.msra.mxu0 %v1832
        %1885 = vmatprep.subr.bf16.mxu0 0
        %1886 = vmatpush1.bf16.msra.mxu0 %v1833
        %1887 = vmatprep.subr.bf16.mxu0 0
        %1888 = vmatpush1.bf16.msra.mxu0 %v1834
        %1889 = vmatprep.subr.bf16.mxu0 0
        %1890 = vmatpush1.bf16.msra.mxu0 %v1835
        %1891 = vmatprep.subr.bf16.mxu0 0
        %1892 = vmatpush1.bf16.msra.mxu0 %v1836
        %1893 = vmatprep.subr.bf16.mxu0 0
        %1894 = vmatpush1.bf16.msra.mxu0 %v1837
        %1895 = vmatprep.subr.bf16.mxu0 0
        %1896 = vmatpush1.bf16.msra.mxu0 %v1838
        %1897 = vmatprep.subr.bf16.mxu0 0
        %1898 = vmatpush1.bf16.msra.mxu0 %v1839
        %1899 = vmatprep.subr.bf16.mxu0 0
        %1900 = vmatpush1.bf16.msra.mxu0 %v1840
        %1901 = vmatprep.subr.bf16.mxu0 0
        %1902 = vmatpush1.bf16.msra.mxu0 %v1841
        %1903 = vmatprep.subr.bf16.mxu0 0
        %1904 = vmatpush1.bf16.msra.mxu0 %v1842
        %1905 = vmatprep.subr.bf16.mxu0 0
        %1906 = vmatpush1.bf16.msra.mxu0 %v1843
        %1907 = vmatprep.subr.bf16.mxu0 0
        %1908 = vmatpush1.bf16.msra.mxu0 %v1844
        %1909 = vmatprep.mubr.bf16.mxu0 %v1127
        %1910 = vmatmul.mubr.bf16.gmra.mrb[0].mxu0 %v1110
        %v1911 = vpop.f32.mrb[0].mxu0
        %v1912 = vadd.f32 0.0, %v1911
        %v1913 = vpop.f32.mrb[0].mxu0
        %v1914 = vpop.f32.mrb[0].mxu0
        %v1915 = vadd.f32 0.0, %v1914
        %v1916 = vpop.f32.mrb[0].mxu0
        %1917 = vmatprep.mubr.bf16.mxu0 %v1157
        %1918 = vmatmul.mubr.bf16.gmra.mrb[0].mxu0 %v1148
        %v1919 = vpop.f32.mrb[0].mxu0
        %v1920 = vadd.f32 0.0, %v1919
        %v1921 = vpop.f32.mrb[0].mxu0
        %v1922 = vpop.f32.mrb[0].mxu0
        %v1923 = vadd.f32 0.0, %v1922
        %v1924 = vpop.f32.mrb[0].mxu0
        %1925 = vmatprep.mubr.bf16.mxu0 %v1179
        %1926 = vmatmul.mubr.bf16.gmra.mrb[0].mxu0 %v1170
        %v1927 = vpop.f32.mrb[0].mxu0
        %v1928 = vadd.f32 0.0, %v1927
        %v1929 = vpop.f32.mrb[0].mxu0
        %v1930 = vpop.f32.mrb[0].mxu0
        %v1931 = vadd.f32 0.0, %v1930
        %v1932 = vpop.f32.mrb[0].mxu0
        %1933 = vmatprep.mubr.bf16.mxu0 %v1201
        %1934 = vmatmul.mubr.bf16.gmra.mrb[0].mxu0 %v1192
        %v1935 = vpop.f32.mrb[0].mxu0
        %v1936 = vadd.f32 0.0, %v1935
        %v1937 = vpop.f32.mrb[0].mxu0
        %v1938 = vpop.f32.mrb[0].mxu0
        %v1939 = vadd.f32 0.0, %v1938
        %v1940 = vpop.f32.mrb[0].mxu0
        %1941 = vmatprep.mubr.bf16.mxu0 %v1223
        %1942 = vmatmul.mubr.bf16.gmra.mrb[0].mxu0 %v1214
        %v1943 = vpop.f32.mrb[0].mxu0
        %v1944 = vadd.f32 0.0, %v1943
        %v1945 = vpop.f32.mrb[0].mxu0
        %v1946 = vpop.f32.mrb[0].mxu0
        %v1947 = vadd.f32 0.0, %v1946
        %v1948 = vpop.f32.mrb[0].mxu0
        %1949 = vmatprep.mubr.bf16.mxu0 %v1245
        %1950 = vmatmul.mubr.bf16.gmra.mrb[0].mxu0 %v1236
        %v1951 = vpop.f32.mrb[0].mxu0
        %v1952 = vadd.f32 0.0, %v1951
        %v1953 = vpop.f32.mrb[0].mxu0
        %v1954 = vpop.f32.mrb[0].mxu0
        %v1955 = vadd.f32 0.0, %v1954
        %v1956 = vpop.f32.mrb[0].mxu0
        %1957 = vmatprep.mubr.bf16.mxu0 %v1267
        %1958 = vmatmul.mubr.bf16.gmra.mrb[0].mxu0 %v1258
        %v1959 = vpop.f32.mrb[0].mxu0
        %v1960 = vadd.f32 0.0, %v1959
        %v1961 = vpop.f32.mrb[0].mxu0
        %v1962 = vpop.f32.mrb[0].mxu0
        %v1963 = vadd.f32 0.0, %v1962
        %v1964 = vpop.f32.mrb[0].mxu0
        %1965 = vmatprep.mubr.bf16.mxu0 %v1289
        %1966 = vmatmul.mubr.bf16.gmra.mrb[0].mxu0 %v1280
        %v1967 = vpop.f32.mrb[0].mxu0
        %v1968 = vadd.f32 0.0, %v1967
        %v1969 = vpop.f32.mrb[0].mxu0
        %v1970 = vpop.f32.mrb[0].mxu0
        %v1971 = vadd.f32 0.0, %v1970
        %v1972 = vpop.f32.mrb[0].mxu0
        %1973 = vmatprep.mubr.bf16.mxu0 %v1311
        %1974 = vmatmul.mubr.bf16.gmra.mrb[0].mxu0 %v1302
        %v1975 = vpop.f32.mrb[0].mxu0
        %v1976 = vadd.f32 0.0, %v1975
        %v1977 = vpop.f32.mrb[0].mxu0
        %v1978 = vpop.f32.mrb[0].mxu0
        %v1979 = vadd.f32 0.0, %v1978
        %v1980 = vpop.f32.mrb[0].mxu0
        %1981 = vmatprep.mubr.bf16.mxu0 %v1333
        %1982 = vmatmul.mubr.bf16.gmra.mrb[0].mxu0 %v1324
        %v1983 = vpop.f32.mrb[0].mxu0
        %v1984 = vadd.f32 0.0, %v1983
        %v1985 = vpop.f32.mrb[0].mxu0
        %v1986 = vpop.f32.mrb[0].mxu0
        %v1987 = vadd.f32 0.0, %v1986
        %v1988 = vpop.f32.mrb[0].mxu0
        %1989 = vmatprep.mubr.bf16.mxu0 %v1355
        %1990 = vmatmul.mubr.bf16.gmra.mrb[0].mxu0 %v1346
        %v1991 = vpop.f32.mrb[0].mxu0
        %v1992 = vadd.f32 0.0, %v1991
        %v1993 = vpop.f32.mrb[0].mxu0
        %v1994 = vpop.f32.mrb[0].mxu0
        %v1995 = vadd.f32 0.0, %v1994
        %v1996 = vpop.f32.mrb[0].mxu0
        %1997 = vmatprep.mubr.bf16.mxu0 %v1377
        %1998 = vmatmul.mubr.bf16.gmra.mrb[0].mxu0 %v1368
        %v1999 = vpop.f32.mrb[0].mxu0
        %v2000 = vadd.f32 0.0, %v1999
        %v2001 = vpop.f32.mrb[0].mxu0
        %v2002 = vpop.f32.mrb[0].mxu0
        %v2003 = vadd.f32 0.0, %v2002
        %v2004 = vpop.f32.mrb[0].mxu0
        %2005 = vmatprep.mubr.bf16.mxu0 %v1399
        %2006 = vmatmul.mubr.bf16.gmra.mrb[0].mxu0 %v1390
        %v2007 = vpop.f32.mrb[0].mxu0
        %v2008 = vadd.f32 0.0, %v2007
        %v2009 = vpop.f32.mrb[0].mxu0
        %v2010 = vpop.f32.mrb[0].mxu0
        %v2011 = vadd.f32 0.0, %v2010
        %v2012 = vpop.f32.mrb[0].mxu0
        %2013 = vmatprep.mubr.bf16.mxu0 %v1421
        %2014 = vmatmul.mubr.bf16.gmra.mrb[0].mxu0 %v1412
        %v2015 = vpop.f32.mrb[0].mxu0
        %v2016 = vadd.f32 0.0, %v2015
        %v2017 = vpop.f32.mrb[0].mxu0
        %v2018 = vpop.f32.mrb[0].mxu0
        %v2019 = vadd.f32 0.0, %v2018
        %v2020 = vpop.f32.mrb[0].mxu0
        %2021 = vmatprep.mubr.bf16.mxu0 %v1443
        %2022 = vmatmul.mubr.bf16.gmra.mrb[0].mxu0 %v1434
        %v2023 = vpop.f32.mrb[0].mxu0
        %v2024 = vadd.f32 0.0, %v2023
        %v2025 = vpop.f32.mrb[0].mxu0
        %v2026 = vpop.f32.mrb[0].mxu0
        %v2027 = vadd.f32 0.0, %v2026
        %v2028 = vpop.f32.mrb[0].mxu0
        %2029 = vmatprep.mubr.bf16.mxu0 %v1465
        %2030 = vmatmul.mubr.bf16.gmra.mrb[0].mxu0 %v1456
        %v2031 = vpop.f32.mrb[0].mxu0
        %v2032 = vadd.f32 0.0, %v2031
        %v2033 = vpop.f32.mrb[0].mxu0
        %v2034 = vpop.f32.mrb[0].mxu0
        %v2035 = vadd.f32 0.0, %v2034
        %v2036 = vpop.f32.mrb[0].mxu0
        %2037 = vmatprep.mubr.bf16.mxu0 %v1487
        %2038 = vmatmul.mubr.bf16.gmra.mrb[0].mxu0 %v1478
        %v2039 = vpop.f32.mrb[0].mxu0
        %v2040 = vadd.f32 0.0, %v2039
        %v2041 = vpop.f32.mrb[0].mxu0
        %v2042 = vpop.f32.mrb[0].mxu0
        %v2043 = vadd.f32 0.0, %v2042
        %v2044 = vpop.f32.mrb[0].mxu0
        %2045 = vmatprep.mubr.bf16.mxu0 %v1509
        %2046 = vmatmul.mubr.bf16.gmra.mrb[0].mxu0 %v1500
        %v2047 = vpop.f32.mrb[0].mxu0
        %v2048 = vadd.f32 0.0, %v2047
        %v2049 = vpop.f32.mrb[0].mxu0
        %v2050 = vpop.f32.mrb[0].mxu0
        %v2051 = vadd.f32 0.0, %v2050
        %v2052 = vpop.f32.mrb[0].mxu0
        %2053 = vmatprep.mubr.bf16.mxu0 %v1531
        %2054 = vmatmul.mubr.bf16.gmra.mrb[0].mxu0 %v1522
        %v2055 = vpop.f32.mrb[0].mxu0
        %v2056 = vadd.f32 0.0, %v2055
        %v2057 = vpop.f32.mrb[0].mxu0
        %v2058 = vpop.f32.mrb[0].mxu0
        %v2059 = vadd.f32 0.0, %v2058
        %v2060 = vpop.f32.mrb[0].mxu0
        %2061 = vmatprep.mubr.bf16.mxu0 %v1553
        %2062 = vmatmul.mubr.bf16.gmra.mrb[0].mxu0 %v1544
        %v2063 = vpop.f32.mrb[0].mxu0
        %v2064 = vadd.f32 0.0, %v2063
        %v2065 = vpop.f32.mrb[0].mxu0
        %v2066 = vpop.f32.mrb[0].mxu0
        %v2067 = vadd.f32 0.0, %v2066
        %v2068 = vpop.f32.mrb[0].mxu0
        %2069 = vmatprep.mubr.bf16.mxu0 %v1575
        %2070 = vmatmul.mubr.bf16.gmra.mrb[0].mxu0 %v1566
        %v2071 = vpop.f32.mrb[0].mxu0
        %v2072 = vadd.f32 0.0, %v2071
        %v2073 = vpop.f32.mrb[0].mxu0
        %v2074 = vpop.f32.mrb[0].mxu0
        %v2075 = vadd.f32 0.0, %v2074
        %v2076 = vpop.f32.mrb[0].mxu0
        %2077 = vmatprep.mubr.bf16.mxu0 %v1597
        %2078 = vmatmul.mubr.bf16.gmra.mrb[0].mxu0 %v1588
        %v2079 = vpop.f32.mrb[0].mxu0
        %v2080 = vadd.f32 0.0, %v2079
        %v2081 = vpop.f32.mrb[0].mxu0
        %v2082 = vpop.f32.mrb[0].mxu0
        %v2083 = vadd.f32 0.0, %v2082
        %v2084 = vpop.f32.mrb[0].mxu0
        %2085 = vmatprep.mubr.bf16.mxu0 %v1624
        %2086 = vmatmul.mubr.bf16.gmra.mrb[0].mxu0 %v1615
        %v2087 = vpop.f32.mrb[0].mxu0
        %v2088 = vadd.f32 0.0, %v2087
        %v2089 = vpop.f32.mrb[0].mxu0
        %v2090 = vpop.f32.mrb[0].mxu0
        %v2091 = vadd.f32 0.0, %v2090
        %v2092 = vpop.f32.mrb[0].mxu0
        %2093 = vmatprep.mubr.bf16.mxu0 %v1651
        %2094 = vmatmul.mubr.bf16.gmra.mrb[0].mxu0 %v1642
        %v2095 = vpop.f32.mrb[0].mxu0
        %v2096 = vadd.f32 0.0, %v2095
        %v2097 = vpop.f32.mrb[0].mxu0
        %v2098 = vpop.f32.mrb[0].mxu0
        %v2099 = vadd.f32 0.0, %v2098
        %v2100 = vpop.f32.mrb[0].mxu0
        %2101 = vdwg.mxu0
        %2102 = vmatprep.subr.bf16.mxu0 0
        %2103 = vmatpush1.bf16.msra.mxu0 %v1845
        %2104 = vmatprep.subr.bf16.mxu0 0
        %2105 = vmatpush1.bf16.msra.mxu0 %v1846
        %2106 = vmatprep.subr.bf16.mxu0 0
        %2107 = vmatpush1.bf16.msra.mxu0 %v1847
        %2108 = vmatprep.subr.bf16.mxu0 0
        %2109 = vmatpush1.bf16.msra.mxu0 %v1848
        %2110 = vmatprep.subr.bf16.mxu0 0
        %2111 = vmatpush1.bf16.msra.mxu0 %v1849
        %2112 = vmatprep.subr.bf16.mxu0 0
        %2113 = vmatpush1.bf16.msra.mxu0 %v1850
        %2114 = vmatprep.subr.bf16.mxu0 0
        %2115 = vmatpush1.bf16.msra.mxu0 %v1851
        %2116 = vmatprep.subr.bf16.mxu0 0
        %2117 = vmatpush1.bf16.msra.mxu0 %v1852
        %2118 = vmatprep.subr.bf16.mxu0 0
        %2119 = vmatpush1.bf16.msra.mxu0 0
        %2120 = vmatprep.subr.bf16.mxu0 0
        %2121 = vmatpush1.bf16.msra.mxu0 0
        %2122 = vmatprep.subr.bf16.mxu0 0
        %2123 = vmatpush1.bf16.msra.mxu0 0
        %2124 = vmatprep.subr.bf16.mxu0 0
        %2125 = vmatpush1.bf16.msra.mxu0 0
        %2126 = vmatprep.subr.bf16.mxu0 0
        %2127 = vmatpush1.bf16.msra.mxu0 0
        %2128 = vmatprep.subr.bf16.mxu0 0
        %2129 = vmatpush1.bf16.msra.mxu0 0
        %2130 = vmatprep.subr.bf16.mxu0 0
        %2131 = vmatpush1.bf16.msra.mxu0 0
        %2132 = vmatprep.subr.bf16.mxu0 0
        %2133 = vmatpush1.bf16.msra.mxu0 0
        %2134 = vmatprep.mubr.bf16.mxu0 0
        %2135 = vmatmul.mubr.bf16.gmra.mrb[0].mxu0 %v1144
        %v2136 = vpop.f32.mrb[0].mxu0
        %v2137 = vadd.f32 %v1912, %v2136
        %v2138 = vpop.f32.mrb[0].mxu0
        %v2139 = vpop.f32.mrb[0].mxu0
        %v2140 = vadd.f32 %v1915, %v2139
        %v2141 = vpop.f32.mrb[0].mxu0
        %2142 = vmatprep.mubr.bf16.mxu0 0
        %2143 = vmatmul.mubr.bf16.gmra.mrb[0].mxu0 %v1166
        %v2144 = vpop.f32.mrb[0].mxu0
        %v2145 = vadd.f32 %v1920, %v2144
        %v2146 = vpop.f32.mrb[0].mxu0
        %v2147 = vpop.f32.mrb[0].mxu0
        %v2148 = vadd.f32 %v1923, %v2147
        %v2149 = vpop.f32.mrb[0].mxu0
        %2150 = vmatprep.mubr.bf16.mxu0 0
        %2151 = vmatmul.mubr.bf16.gmra.mrb[0].mxu0 %v1188
        %v2152 = vpop.f32.mrb[0].mxu0
        %v2153 = vadd.f32 %v1928, %v2152
        %v2154 = vpop.f32.mrb[0].mxu0
        %v2155 = vpop.f32.mrb[0].mxu0
        %v2156 = vadd.f32 %v1931, %v2155
        %v2157 = vpop.f32.mrb[0].mxu0
        %2158 = vmatprep.mubr.bf16.mxu0 0
        %2159 = vmatmul.mubr.bf16.gmra.mrb[0].mxu0 %v1210
        %v2160 = vpop.f32.mrb[0].mxu0
        %v2161 = vadd.f32 %v1936, %v2160
        %v2162 = vpop.f32.mrb[0].mxu0
        %v2163 = vpop.f32.mrb[0].mxu0
        %v2164 = vadd.f32 %v1939, %v2163
        %v2165 = vpop.f32.mrb[0].mxu0
        %2166 = vmatprep.mubr.bf16.mxu0 0
        %2167 = vmatmul.mubr.bf16.gmra.mrb[0].mxu0 %v1232
        %v2168 = vpop.f32.mrb[0].mxu0
        %v2169 = vadd.f32 %v1944, %v2168
        %v2170 = vpop.f32.mrb[0].mxu0
        %v2171 = vpop.f32.mrb[0].mxu0
        %v2172 = vadd.f32 %v1947, %v2171
        %v2173 = vpop.f32.mrb[0].mxu0
        %2174 = vmatprep.mubr.bf16.mxu0 0
        %2175 = vmatmul.mubr.bf16.gmra.mrb[0].mxu0 %v1254
        %v2176 = vpop.f32.mrb[0].mxu0
        %v2177 = vadd.f32 %v1952, %v2176
        %v2178 = vpop.f32.mrb[0].mxu0
        %v2179 = vpop.f32.mrb[0].mxu0
        %v2180 = vadd.f32 %v1955, %v2179
        %v2181 = vpop.f32.mrb[0].mxu0
        %2182 = vmatprep.mubr.bf16.mxu0 0
        %2183 = vmatmul.mubr.bf16.gmra.mrb[0].mxu0 %v1276
        %v2184 = vpop.f32.mrb[0].mxu0
        %v2185 = vadd.f32 %v1960, %v2184
        %v2186 = vpop.f32.mrb[0].mxu0
        %v2187 = vpop.f32.mrb[0].mxu0
        %v2188 = vadd.f32 %v1963, %v2187
        %v2189 = vpop.f32.mrb[0].mxu0
        %2190 = vmatprep.mubr.bf16.mxu0 0
        %2191 = vmatmul.mubr.bf16.gmra.mrb[0].mxu0 %v1298
        %v2192 = vpop.f32.mrb[0].mxu0
        %v2193 = vadd.f32 %v1968, %v2192
        %v2194 = vpop.f32.mrb[0].mxu0
        %v2195 = vpop.f32.mrb[0].mxu0
        %v2196 = vadd.f32 %v1971, %v2195
        %v2197 = vpop.f32.mrb[0].mxu0
        %2198 = vmatprep.mubr.bf16.mxu0 0
        %2199 = vmatmul.mubr.bf16.gmra.mrb[0].mxu0 %v1320
        %v2200 = vpop.f32.mrb[0].mxu0
        %v2201 = vadd.f32 %v1976, %v2200
        %v2202 = vpop.f32.mrb[0].mxu0
        %v2203 = vpop.f32.mrb[0].mxu0
        %v2204 = vadd.f32 %v1979, %v2203
        %v2205 = vpop.f32.mrb[0].mxu0
        %2206 = vmatprep.mubr.bf16.mxu0 0
        %2207 = vmatmul.mubr.bf16.gmra.mrb[0].mxu0 %v1342
        %v2208 = vpop.f32.mrb[0].mxu0
        %v2209 = vadd.f32 %v1984, %v2208
        %v2210 = vpop.f32.mrb[0].mxu0
        %v2211 = vpop.f32.mrb[0].mxu0
        %v2212 = vadd.f32 %v1987, %v2211
        %v2213 = vpop.f32.mrb[0].mxu0
        %2214 = vmatprep.mubr.bf16.mxu0 0
        %2215 = vmatmul.mubr.bf16.gmra.mrb[0].mxu0 %v1364
        %v2216 = vpop.f32.mrb[0].mxu0
        %v2217 = vadd.f32 %v1992, %v2216
        %v2218 = vpop.f32.mrb[0].mxu0
        %v2219 = vpop.f32.mrb[0].mxu0
        %v2220 = vadd.f32 %v1995, %v2219
        %v2221 = vpop.f32.mrb[0].mxu0
        %2222 = vmatprep.mubr.bf16.mxu0 0
        %2223 = vmatmul.mubr.bf16.gmra.mrb[0].mxu0 %v1386
        %v2224 = vpop.f32.mrb[0].mxu0
        %v2225 = vadd.f32 %v2000, %v2224
        %v2226 = vpop.f32.mrb[0].mxu0
        %v2227 = vpop.f32.mrb[0].mxu0
        %v2228 = vadd.f32 %v2003, %v2227
        %v2229 = vpop.f32.mrb[0].mxu0
        %2230 = vmatprep.mubr.bf16.mxu0 0
        %2231 = vmatmul.mubr.bf16.gmra.mrb[0].mxu0 %v1408
        %v2232 = vpop.f32.mrb[0].mxu0
        %v2233 = vadd.f32 %v2008, %v2232
        %v2234 = vpop.f32.mrb[0].mxu0
        %v2235 = vpop.f32.mrb[0].mxu0
        %v2236 = vadd.f32 %v2011, %v2235
        %v2237 = vpop.f32.mrb[0].mxu0
        %2238 = vmatprep.mubr.bf16.mxu0 0
        %2239 = vmatmul.mubr.bf16.gmra.mrb[0].mxu0 %v1430
        %v2240 = vpop.f32.mrb[0].mxu0
        %v2241 = vadd.f32 %v2016, %v2240
        %v2242 = vpop.f32.mrb[0].mxu0
        %v2243 = vpop.f32.mrb[0].mxu0
        %v2244 = vadd.f32 %v2019, %v2243
        %v2245 = vpop.f32.mrb[0].mxu0
        %2246 = vmatprep.mubr.bf16.mxu0 0
        %2247 = vmatmul.mubr.bf16.gmra.mrb[0].mxu0 %v1452
        %v2248 = vpop.f32.mrb[0].mxu0
        %v2249 = vadd.f32 %v2024, %v2248
        %v2250 = vpop.f32.mrb[0].mxu0
        %v2251 = vpop.f32.mrb[0].mxu0
        %v2252 = vadd.f32 %v2027, %v2251
        %v2253 = vpop.f32.mrb[0].mxu0
        %2254 = vmatprep.mubr.bf16.mxu0 0
        %2255 = vmatmul.mubr.bf16.gmra.mrb[0].mxu0 %v1474
        %v2256 = vpop.f32.mrb[0].mxu0
        %v2257 = vadd.f32 %v2032, %v2256
        %v2258 = vpop.f32.mrb[0].mxu0
        %v2259 = vpop.f32.mrb[0].mxu0
        %v2260 = vadd.f32 %v2035, %v2259
        %v2261 = vpop.f32.mrb[0].mxu0
        %2262 = vmatprep.mubr.bf16.mxu0 0
        %2263 = vmatmul.mubr.bf16.gmra.mrb[0].mxu0 %v1496
        %v2264 = vpop.f32.mrb[0].mxu0
        %v2265 = vadd.f32 %v2040, %v2264
        %v2266 = vpop.f32.mrb[0].mxu0
        %v2267 = vpop.f32.mrb[0].mxu0
        %v2268 = vadd.f32 %v2043, %v2267
        %v2269 = vpop.f32.mrb[0].mxu0
        %2270 = vmatprep.mubr.bf16.mxu0 0
        %2271 = vmatmul.mubr.bf16.gmra.mrb[0].mxu0 %v1518
        %v2272 = vpop.f32.mrb[0].mxu0
        %v2273 = vadd.f32 %v2048, %v2272
        %v2274 = vpop.f32.mrb[0].mxu0
        %v2275 = vpop.f32.mrb[0].mxu0
        %v2276 = vadd.f32 %v2051, %v2275
        %v2277 = vpop.f32.mrb[0].mxu0
        %2278 = vmatprep.mubr.bf16.mxu0 0
        %2279 = vmatmul.mubr.bf16.gmra.mrb[0].mxu0 %v1540
        %v2280 = vpop.f32.mrb[0].mxu0
        %v2281 = vadd.f32 %v2056, %v2280
        %v2282 = vpop.f32.mrb[0].mxu0
        %v2283 = vpop.f32.mrb[0].mxu0
        %v2284 = vadd.f32 %v2059, %v2283
        %v2285 = vpop.f32.mrb[0].mxu0
        %2286 = vmatprep.mubr.bf16.mxu0 0
        %2287 = vmatmul.mubr.bf16.gmra.mrb[0].mxu0 %v1562
        %v2288 = vpop.f32.mrb[0].mxu0
        %v2289 = vadd.f32 %v2064, %v2288
        %v2290 = vpop.f32.mrb[0].mxu0
        %v2291 = vpop.f32.mrb[0].mxu0
        %v2292 = vadd.f32 %v2067, %v2291
        %v2293 = vpop.f32.mrb[0].mxu0
        %2294 = vmatprep.mubr.bf16.mxu0 0
        %2295 = vmatmul.mubr.bf16.gmra.mrb[0].mxu0 %v1584
        %v2296 = vpop.f32.mrb[0].mxu0
        %v2297 = vadd.f32 %v2072, %v2296
        %v2298 = vpop.f32.mrb[0].mxu0
        %v2299 = vpop.f32.mrb[0].mxu0
        %v2300 = vadd.f32 %v2075, %v2299
        %v2301 = vpop.f32.mrb[0].mxu0
        %2302 = vmatprep.mubr.bf16.mxu0 0
        %2303 = vmatmul.mubr.bf16.gmra.mrb[0].mxu0 %v1606
        %v2304 = vpop.f32.mrb[0].mxu0
        %v2305 = vadd.f32 %v2080, %v2304
        %v2306 = vpop.f32.mrb[0].mxu0
        %v2307 = vpop.f32.mrb[0].mxu0
        %v2308 = vadd.f32 %v2083, %v2307
        %v2309 = vpop.f32.mrb[0].mxu0
        %2310 = vmatprep.mubr.bf16.mxu0 0
        %2311 = vmatmul.mubr.bf16.gmra.mrb[0].mxu0 %v1633
        %v2312 = vpop.f32.mrb[0].mxu0
        %v2313 = vadd.f32 %v2088, %v2312
        %v2314 = vpop.f32.mrb[0].mxu0
        %v2315 = vpop.f32.mrb[0].mxu0
        %v2316 = vadd.f32 %v2091, %v2315
        %v2317 = vpop.f32.mrb[0].mxu0
        %2318 = vmatprep.mubr.bf16.mxu0 0
        %2319 = vmatmul.mubr.bf16.gmra.mrb[0].mxu0 %v1660
        %v2320 = vpop.f32.mrb[0].mxu0
        %v2321 = vadd.f32 %v2096, %v2320
        %v2322 = vpop.f32.mrb[0].mxu0
        %v2323 = vpop.f32.mrb[0].mxu0
        %v2324 = vadd.f32 %v2099, %v2323
        %v2325 = vpop.f32.mrb[0].mxu0
        %2326 = vdwg.mxu0
        %v2328 = vshrl.u32 %v398, 16
        %v2330 = vrot.slane %v2328, 3
        %v2331 = vshll.u32 %v398, 16
        %v2333 = vrot.slane %v2331, 4
        %v2334 = vor.u32 %v2330, %v2333
        %v2336 = vshrl.u32 %v399, 16
        %v2338 = vrot.slane %v2336, 3
        %v2339 = vshll.u32 %v399, 16
        %v2341 = vrot.slane %v2339, 4
        %v2342 = vor.u32 %v2338, %v2341
        %v2343 = vsel %vm1098, %v2334, %v2342
        %v2345 = vshrl.u32 %v455, 16
        %v2347 = vrot.slane %v2345, 3
        %v2348 = vshll.u32 %v455, 16
        %v2350 = vrot.slane %v2348, 4
        %v2351 = vor.u32 %v2347, %v2350
        %v2353 = vshrl.u32 %v464, 16
        %v2355 = vrot.slane %v2353, 3
        %v2356 = vshll.u32 %v464, 16
        %v2358 = vrot.slane %v2356, 4
        %v2359 = vor.u32 %v2355, %v2358
        %v2360 = vsel %vm1098, %v2351, %v2359
        %v2362 = vshrl.u32 %v667, 16
        %v2364 = vrot.slane %v2362, 3
        %v2365 = vshll.u32 %v667, 16
        %v2367 = vrot.slane %v2365, 4
        %v2368 = vor.u32 %v2364, %v2367
        %v2370 = vshrl.u32 %v669, 16
        %v2372 = vrot.slane %v2370, 3
        %v2373 = vshll.u32 %v669, 16
        %v2375 = vrot.slane %v2373, 4
        %v2376 = vor.u32 %v2372, %v2375
        %v2377 = vsel %vm1098, %v2368, %v2376
        %v2378 = vrot.slane %v783, 3
        %v2379 = vrot.slane %v786, 4
        %v2380 = vor.u32 %v2378, %v2379
        %v2381 = vsel %vm1098, %v2342, %v2380
        %v2383 = vshrl.u32 %v473, 16
        %v2385 = vrot.slane %v2383, 3
        %v2386 = vshll.u32 %v473, 16
        %v2388 = vrot.slane %v2386, 4
        %v2389 = vor.u32 %v2385, %v2388
        %v2390 = vsel %vm1098, %v2359, %v2389
        %v2392 = vshrl.u32 %v671, 16
        %v2394 = vrot.slane %v2392, 3
        %v2395 = vshll.u32 %v671, 16
        %v2397 = vrot.slane %v2395, 4
        %v2398 = vor.u32 %v2394, %v2397
        %v2399 = vsel %vm1098, %v2376, %v2398
        %v2400 = vrot.slane %v791, 3
        %v2401 = vrot.slane %v794, 4
        %v2402 = vor.u32 %v2400, %v2401
        %v2403 = vsel %vm1098, %v2380, %v2402
        %v2405 = vshrl.u32 %v482, 16
        %v2407 = vrot.slane %v2405, 3
        %v2408 = vshll.u32 %v482, 16
        %v2410 = vrot.slane %v2408, 4
        %v2411 = vor.u32 %v2407, %v2410
        %v2412 = vsel %vm1098, %v2389, %v2411
        %v2414 = vshrl.u32 %v673, 16
        %v2416 = vrot.slane %v2414, 3
        %v2417 = vshll.u32 %v673, 16
        %v2419 = vrot.slane %v2417, 4
        %v2420 = vor.u32 %v2416, %v2419
        %v2421 = vsel %vm1098, %v2398, %v2420
        %v2422 = vrot.slane %v800, 3
        %v2423 = vrot.slane %v803, 4
        %v2424 = vor.u32 %v2422, %v2423
        %v2425 = vsel %vm1098, %v2402, %v2424
        %v2427 = vshrl.u32 %v491, 16
        %v2429 = vrot.slane %v2427, 3
        %v2430 = vshll.u32 %v491, 16
        %v2432 = vrot.slane %v2430, 4
        %v2433 = vor.u32 %v2429, %v2432
        %v2434 = vsel %vm1098, %v2411, %v2433
        %v2436 = vshrl.u32 %v675, 16
        %v2438 = vrot.slane %v2436, 3
        %v2439 = vshll.u32 %v675, 16
        %v2441 = vrot.slane %v2439, 4
        %v2442 = vor.u32 %v2438, %v2441
        %v2443 = vsel %vm1098, %v2420, %v2442
        %v2444 = vrot.slane %v809, 3
        %v2445 = vrot.slane %v812, 4
        %v2446 = vor.u32 %v2444, %v2445
        %v2447 = vsel %vm1098, %v2424, %v2446
        %v2449 = vshrl.u32 %v500, 16
        %v2451 = vrot.slane %v2449, 3
        %v2452 = vshll.u32 %v500, 16
        %v2454 = vrot.slane %v2452, 4
        %v2455 = vor.u32 %v2451, %v2454
        %v2456 = vsel %vm1098, %v2433, %v2455
        %v2458 = vshrl.u32 %v677, 16
        %v2460 = vrot.slane %v2458, 3
        %v2461 = vshll.u32 %v677, 16
        %v2463 = vrot.slane %v2461, 4
        %v2464 = vor.u32 %v2460, %v2463
        %v2465 = vsel %vm1098, %v2442, %v2464
        %v2466 = vrot.slane %v818, 3
        %v2467 = vrot.slane %v821, 4
        %v2468 = vor.u32 %v2466, %v2467
        %v2469 = vsel %vm1098, %v2446, %v2468
        %v2471 = vshrl.u32 %v509, 16
        %v2473 = vrot.slane %v2471, 3
        %v2474 = vshll.u32 %v509, 16
        %v2476 = vrot.slane %v2474, 4
        %v2477 = vor.u32 %v2473, %v2476
        %v2478 = vsel %vm1098, %v2455, %v2477
        %v2480 = vshrl.u32 %v679, 16
        %v2482 = vrot.slane %v2480, 3
        %v2483 = vshll.u32 %v679, 16
        %v2485 = vrot.slane %v2483, 4
        %v2486 = vor.u32 %v2482, %v2485
        %v2487 = vsel %vm1098, %v2464, %v2486
        %v2488 = vrot.slane %v827, 3
        %v2489 = vrot.slane %v830, 4
        %v2490 = vor.u32 %v2488, %v2489
        %v2491 = vsel %vm1098, %v2468, %v2490
        %v2493 = vshrl.u32 %v518, 16
        %v2495 = vrot.slane %v2493, 3
        %v2496 = vshll.u32 %v518, 16
        %v2498 = vrot.slane %v2496, 4
        %v2499 = vor.u32 %v2495, %v2498
        %v2500 = vsel %vm1098, %v2477, %v2499
        %v2502 = vshrl.u32 %v681, 16
        %v2504 = vrot.slane %v2502, 3
        %v2505 = vshll.u32 %v681, 16
        %v2507 = vrot.slane %v2505, 4
        %v2508 = vor.u32 %v2504, %v2507
        %v2509 = vsel %vm1098, %v2486, %v2508
        %v2510 = vrot.slane %v836, 3
        %v2511 = vrot.slane %v839, 4
        %v2512 = vor.u32 %v2510, %v2511
        %v2513 = vsel %vm1098, %v2490, %v2512
        %v2515 = vshrl.u32 %v527, 16
        %v2517 = vrot.slane %v2515, 3
        %v2518 = vshll.u32 %v527, 16
        %v2520 = vrot.slane %v2518, 4
        %v2521 = vor.u32 %v2517, %v2520
        %v2522 = vsel %vm1098, %v2499, %v2521
        %v2524 = vshrl.u32 %v683, 16
        %v2526 = vrot.slane %v2524, 3
        %v2527 = vshll.u32 %v683, 16
        %v2529 = vrot.slane %v2527, 4
        %v2530 = vor.u32 %v2526, %v2529
        %v2531 = vsel %vm1098, %v2508, %v2530
        %v2532 = vrot.slane %v845, 3
        %v2533 = vrot.slane %v848, 4
        %v2534 = vor.u32 %v2532, %v2533
        %v2535 = vsel %vm1098, %v2512, %v2534
        %v2537 = vshrl.u32 %v536, 16
        %v2539 = vrot.slane %v2537, 3
        %v2540 = vshll.u32 %v536, 16
        %v2542 = vrot.slane %v2540, 4
        %v2543 = vor.u32 %v2539, %v2542
        %v2544 = vsel %vm1098, %v2521, %v2543
        %v2546 = vshrl.u32 %v685, 16
        %v2548 = vrot.slane %v2546, 3
        %v2549 = vshll.u32 %v685, 16
        %v2551 = vrot.slane %v2549, 4
        %v2552 = vor.u32 %v2548, %v2551
        %v2553 = vsel %vm1098, %v2530, %v2552
        %v2554 = vrot.slane %v854, 3
        %v2555 = vrot.slane %v857, 4
        %v2556 = vor.u32 %v2554, %v2555
        %v2557 = vsel %vm1098, %v2534, %v2556
        %v2559 = vshrl.u32 %v545, 16
        %v2561 = vrot.slane %v2559, 3
        %v2562 = vshll.u32 %v545, 16
        %v2564 = vrot.slane %v2562, 4
        %v2565 = vor.u32 %v2561, %v2564
        %v2566 = vsel %vm1098, %v2543, %v2565
        %v2568 = vshrl.u32 %v687, 16
        %v2570 = vrot.slane %v2568, 3
        %v2571 = vshll.u32 %v687, 16
        %v2573 = vrot.slane %v2571, 4
        %v2574 = vor.u32 %v2570, %v2573
        %v2575 = vsel %vm1098, %v2552, %v2574
        %v2576 = vrot.slane %v863, 3
        %v2577 = vrot.slane %v866, 4
        %v2578 = vor.u32 %v2576, %v2577
        %v2579 = vsel %vm1098, %v2556, %v2578
        %v2581 = vshrl.u32 %v554, 16
        %v2583 = vrot.slane %v2581, 3
        %v2584 = vshll.u32 %v554, 16
        %v2586 = vrot.slane %v2584, 4
        %v2587 = vor.u32 %v2583, %v2586
        %v2588 = vsel %vm1098, %v2565, %v2587
        %v2590 = vshrl.u32 %v689, 16
        %v2592 = vrot.slane %v2590, 3
        %v2593 = vshll.u32 %v689, 16
        %v2595 = vrot.slane %v2593, 4
        %v2596 = vor.u32 %v2592, %v2595
        %v2597 = vsel %vm1098, %v2574, %v2596
        %v2598 = vrot.slane %v872, 3
        %v2599 = vrot.slane %v875, 4
        %v2600 = vor.u32 %v2598, %v2599
        %v2601 = vsel %vm1098, %v2578, %v2600
        %v2603 = vshrl.u32 %v563, 16
        %v2605 = vrot.slane %v2603, 3
        %v2606 = vshll.u32 %v563, 16
        %v2608 = vrot.slane %v2606, 4
        %v2609 = vor.u32 %v2605, %v2608
        %v2610 = vsel %vm1098, %v2587, %v2609
        %v2612 = vshrl.u32 %v691, 16
        %v2614 = vrot.slane %v2612, 3
        %v2615 = vshll.u32 %v691, 16
        %v2617 = vrot.slane %v2615, 4
        %v2618 = vor.u32 %v2614, %v2617
        %v2619 = vsel %vm1098, %v2596, %v2618
        %v2620 = vrot.slane %v881, 3
        %v2621 = vrot.slane %v884, 4
        %v2622 = vor.u32 %v2620, %v2621
        %v2623 = vsel %vm1098, %v2600, %v2622
        %v2625 = vshrl.u32 %v572, 16
        %v2627 = vrot.slane %v2625, 3
        %v2628 = vshll.u32 %v572, 16
        %v2630 = vrot.slane %v2628, 4
        %v2631 = vor.u32 %v2627, %v2630
        %v2632 = vsel %vm1098, %v2609, %v2631
        %v2634 = vshrl.u32 %v693, 16
        %v2636 = vrot.slane %v2634, 3
        %v2637 = vshll.u32 %v693, 16
        %v2639 = vrot.slane %v2637, 4
        %v2640 = vor.u32 %v2636, %v2639
        %v2641 = vsel %vm1098, %v2618, %v2640
        %v2642 = vrot.slane %v890, 3
        %v2643 = vrot.slane %v893, 4
        %v2644 = vor.u32 %v2642, %v2643
        %v2645 = vsel %vm1098, %v2622, %v2644
        %v2647 = vshrl.u32 %v581, 16
        %v2649 = vrot.slane %v2647, 3
        %v2650 = vshll.u32 %v581, 16
        %v2652 = vrot.slane %v2650, 4
        %v2653 = vor.u32 %v2649, %v2652
        %v2654 = vsel %vm1098, %v2631, %v2653
        %v2656 = vshrl.u32 %v695, 16
        %v2658 = vrot.slane %v2656, 3
        %v2659 = vshll.u32 %v695, 16
        %v2661 = vrot.slane %v2659, 4
        %v2662 = vor.u32 %v2658, %v2661
        %v2663 = vsel %vm1098, %v2640, %v2662
        %v2664 = vrot.slane %v899, 3
        %v2665 = vrot.slane %v902, 4
        %v2666 = vor.u32 %v2664, %v2665
        %v2667 = vsel %vm1098, %v2644, %v2666
        %v2669 = vshrl.u32 %v590, 16
        %v2671 = vrot.slane %v2669, 3
        %v2672 = vshll.u32 %v590, 16
        %v2674 = vrot.slane %v2672, 4
        %v2675 = vor.u32 %v2671, %v2674
        %v2676 = vsel %vm1098, %v2653, %v2675
        %v2678 = vshrl.u32 %v697, 16
        %v2680 = vrot.slane %v2678, 3
        %v2681 = vshll.u32 %v697, 16
        %v2683 = vrot.slane %v2681, 4
        %v2684 = vor.u32 %v2680, %v2683
        %v2685 = vsel %vm1098, %v2662, %v2684
        %v2686 = vrot.slane %v908, 3
        %v2687 = vrot.slane %v911, 4
        %v2688 = vor.u32 %v2686, %v2687
        %v2689 = vsel %vm1098, %v2666, %v2688
        %v2691 = vshrl.u32 %v599, 16
        %v2693 = vrot.slane %v2691, 3
        %v2694 = vshll.u32 %v599, 16
        %v2696 = vrot.slane %v2694, 4
        %v2697 = vor.u32 %v2693, %v2696
        %v2698 = vsel %vm1098, %v2675, %v2697
        %v2700 = vshrl.u32 %v699, 16
        %v2702 = vrot.slane %v2700, 3
        %v2703 = vshll.u32 %v699, 16
        %v2705 = vrot.slane %v2703, 4
        %v2706 = vor.u32 %v2702, %v2705
        %v2707 = vsel %vm1098, %v2684, %v2706
        %v2708 = vrot.slane %v917, 3
        %v2709 = vrot.slane %v920, 4
        %v2710 = vor.u32 %v2708, %v2709
        %v2711 = vsel %vm1098, %v2688, %v2710
        %v2713 = vshrl.u32 %v608, 16
        %v2715 = vrot.slane %v2713, 3
        %v2716 = vshll.u32 %v608, 16
        %v2718 = vrot.slane %v2716, 4
        %v2719 = vor.u32 %v2715, %v2718
        %v2720 = vsel %vm1098, %v2697, %v2719
        %v2722 = vshrl.u32 %v701, 16
        %v2724 = vrot.slane %v2722, 3
        %v2725 = vshll.u32 %v701, 16
        %v2727 = vrot.slane %v2725, 4
        %v2728 = vor.u32 %v2724, %v2727
        %v2729 = vsel %vm1098, %v2706, %v2728
        %v2730 = vrot.slane %v926, 3
        %v2731 = vrot.slane %v929, 4
        %v2732 = vor.u32 %v2730, %v2731
        %v2733 = vsel %vm1098, %v2710, %v2732
        %v2735 = vshrl.u32 %v617, 16
        %v2737 = vrot.slane %v2735, 3
        %v2738 = vshll.u32 %v617, 16
        %v2740 = vrot.slane %v2738, 4
        %v2741 = vor.u32 %v2737, %v2740
        %v2742 = vsel %vm1098, %v2719, %v2741
        %v2744 = vshrl.u32 %v703, 16
        %v2746 = vrot.slane %v2744, 3
        %v2747 = vshll.u32 %v703, 16
        %v2749 = vrot.slane %v2747, 4
        %v2750 = vor.u32 %v2746, %v2749
        %v2751 = vsel %vm1098, %v2728, %v2750
        %v2752 = vrot.slane %v935, 3
        %v2753 = vrot.slane %v938, 4
        %v2754 = vor.u32 %v2752, %v2753
        %v2755 = vsel %vm1098, %v2732, %v2754
        %v2757 = vshrl.u32 %v626, 16
        %v2759 = vrot.slane %v2757, 3
        %v2760 = vshll.u32 %v626, 16
        %v2762 = vrot.slane %v2760, 4
        %v2763 = vor.u32 %v2759, %v2762
        %v2764 = vsel %vm1098, %v2741, %v2763
        %v2766 = vshrl.u32 %v705, 16
        %v2768 = vrot.slane %v2766, 3
        %v2769 = vshll.u32 %v705, 16
        %v2771 = vrot.slane %v2769, 4
        %v2772 = vor.u32 %v2768, %v2771
        %v2773 = vsel %vm1098, %v2750, %v2772
        %v2774 = vrot.slane %v944, 3
        %v2775 = vrot.slane %v947, 4
        %v2776 = vor.u32 %v2774, %v2775
        %v2777 = vsel %vm1098, %v2754, %v2776
        %v2779 = vshrl.u32 %v635, 16
        %v2781 = vrot.slane %v2779, 3
        %v2782 = vshll.u32 %v635, 16
        %v2784 = vrot.slane %v2782, 4
        %v2785 = vor.u32 %v2781, %v2784
        %v2786 = vsel %vm1098, %v2763, %v2785
        %v2788 = vshrl.u32 %v707, 16
        %v2790 = vrot.slane %v2788, 3
        %v2791 = vshll.u32 %v707, 16
        %v2793 = vrot.slane %v2791, 4
        %v2794 = vor.u32 %v2790, %v2793
        %v2795 = vsel %vm1098, %v2772, %v2794
        %v2796 = vrot.slane %v953, 3
        %v2797 = vrot.slane %v956, 4
        %v2798 = vor.u32 %v2796, %v2797
        %v2799 = vsel %vm1098, %v2776, %v2798
        %v2801 = vshrl.u32 %v644, 16
        %v2803 = vrot.slane %v2801, 3
        %v2804 = vshll.u32 %v644, 16
        %v2806 = vrot.slane %v2804, 4
        %v2807 = vor.u32 %v2803, %v2806
        %v2808 = vsel %vm1098, %v2785, %v2807
        %v2810 = vshrl.u32 %v709, 16
        %v2812 = vrot.slane %v2810, 3
        %v2813 = vshll.u32 %v709, 16
        %v2815 = vrot.slane %v2813, 4
        %v2816 = vor.u32 %v2812, %v2815
        %v2817 = vsel %vm1098, %v2794, %v2816
        %v2818 = vrot.slane %v962, 3
        %v2819 = vrot.slane %v965, 4
        %v2820 = vor.u32 %v2818, %v2819
        %v2821 = vsel %vm1098, %v2798, %v2820
        %v2823 = vshrl.u32 %v653, 16
        %v2825 = vrot.slane %v2823, 3
        %v2826 = vshll.u32 %v653, 16
        %v2828 = vrot.slane %v2826, 4
        %v2829 = vor.u32 %v2825, %v2828
        %v2830 = vsel %vm1098, %v2807, %v2829
        %v2832 = vshrl.u32 %v711, 16
        %v2834 = vrot.slane %v2832, 3
        %v2835 = vshll.u32 %v711, 16
        %v2837 = vrot.slane %v2835, 4
        %v2838 = vor.u32 %v2834, %v2837
        %v2839 = vsel %vm1098, %v2816, %v2838
        %v2840 = vrot.slane %v971, 3
        %v2841 = vrot.slane %v974, 4
        %v2842 = vor.u32 %v2840, %v2841
        %v2843 = vsel %vm1098, %v2820, %v2842
        %v2845 = vshrl.u32 %v662, 16
        %v2847 = vrot.slane %v2845, 3
        %v2848 = vshll.u32 %v662, 16
        %v2850 = vrot.slane %v2848, 4
        %v2851 = vor.u32 %v2847, %v2850
        %v2852 = vsel %vm1098, %v2829, %v2851
        %v2854 = vshrl.u32 %v713, 16
        %v2856 = vrot.slane %v2854, 3
        %v2857 = vshll.u32 %v713, 16
        %v2859 = vrot.slane %v2857, 4
        %v2860 = vor.u32 %v2856, %v2859
        %v2861 = vsel %vm1098, %v2838, %v2860
        %v2863 = vshrl.u32 %v422, 16
        %v2865 = vrot.slane %v2863, 3
        %v2866 = vshll.u32 %v422, 16
        %v2868 = vrot.slane %v2866, 4
        %v2869 = vor.u32 %v2865, %v2868
        %v2870 = vsel %vm1098, %v2842, %v2869
        %v2872 = vshrl.u32 %v661, 16
        %v2874 = vrot.slane %v2872, 3
        %v2875 = vshll.u32 %v661, 16
        %v2877 = vrot.slane %v2875, 4
        %v2878 = vor.u32 %v2874, %v2877
        %v2879 = vsel %vm1098, %v2851, %v2878
        %v2881 = vshrl.u32 %v715, 16
        %v2883 = vrot.slane %v2881, 3
        %v2884 = vshll.u32 %v715, 16
        %v2886 = vrot.slane %v2884, 4
        %v2887 = vor.u32 %v2883, %v2886
        %v2888 = vsel %vm1098, %v2860, %v2887
        %v3009 = vunpack.c.l.b16 %v716
        %v3010 = vunpack.c.l.b16 %v717
        %v3011 = vunpack.c.l.b16 %v718
        %v3012 = vunpack.c.l.b16 %v719
        %v3013 = vunpack.c.l.b16 %v720
        %v3014 = vunpack.c.l.b16 %v721
        %v3015 = vunpack.c.l.b16 %v722
        %v3016 = vunpack.c.l.b16 %v723
        %v3017 = vunpack.c.l.b16 %v724
        %v3018 = vunpack.c.l.b16 %v725
        %v3019 = vunpack.c.l.b16 %v726
        %v3020 = vunpack.c.l.b16 %v727
        %v3021 = vunpack.c.l.b16 %v728
        %v3022 = vunpack.c.l.b16 %v729
        %v3023 = vunpack.c.l.b16 %v730
        %v3024 = vunpack.c.l.b16 %v731
        %v3025 = vunpack.c.l.b16 %v732
        %v3026 = vunpack.c.l.b16 %v733
        %v3027 = vunpack.c.l.b16 %v734
        %v3028 = vunpack.c.l.b16 %v735
        %v3029 = vunpack.c.l.b16 %v736
        %v3030 = vunpack.c.l.b16 %v737
        %v3031 = vunpack.c.l.b16 %v738
        %v3032 = vunpack.c.l.b16 %v739
        %v3033 = vunpack.c.l.b16 %v740
        %v3034 = vunpack.c.l.b16 %v741
        %v3035 = vunpack.c.l.b16 %v742
        %v3036 = vunpack.c.l.b16 %v743
        %v3037 = vunpack.c.l.b16 %v744
        %v3038 = vunpack.c.l.b16 %v745
        %v3039 = vunpack.c.l.b16 %v746
        %v3040 = vunpack.c.l.b16 %v747
        %v3041 = vunpack.c.l.b16 %v748
        %v3042 = vunpack.c.l.b16 %v749
        %v3043 = vunpack.c.l.b16 %v750
        %v3044 = vunpack.c.l.b16 %v751
        %v3045 = vunpack.c.l.b16 %v752
        %v3046 = vunpack.c.l.b16 %v753
        %v3047 = vunpack.c.l.b16 %v754
        %v3048 = vunpack.c.l.b16 %v755
        %v3049 = vunpack.c.l.b16 %v756
        %v3050 = vunpack.c.l.b16 %v757
        %v3051 = vunpack.c.l.b16 %v758
        %v3052 = vunpack.c.l.b16 %v759
        %v3053 = vunpack.c.l.b16 %v760
        %v3054 = vunpack.c.l.b16 %v761
        %v3055 = vunpack.c.l.b16 %v762
        %v3056 = vunpack.c.l.b16 %v763
        %v3057 = vpack.c.b16 %v3010, %v3009
        %v3058 = vpack.c.b16 %v3012, %v3011
        %v3059 = vpack.c.b16 %v3014, %v3013
        %v3060 = vpack.c.b16 %v3016, %v3015
        %v3061 = vpack.c.b16 %v3018, %v3017
        %v3062 = vpack.c.b16 %v3020, %v3019
        %v3063 = vpack.c.b16 %v3022, %v3021
        %v3064 = vpack.c.b16 %v3024, %v3023
        %v3065 = vpack.c.b16 %v3026, %v3025
        %v3066 = vpack.c.b16 %v3028, %v3027
        %v3067 = vpack.c.b16 %v3030, %v3029
        %v3068 = vpack.c.b16 %v3032, %v3031
        %v3069 = vpack.c.b16 %v3034, %v3033
        %v3070 = vpack.c.b16 %v3036, %v3035
        %v3071 = vpack.c.b16 %v3038, %v3037
        %v3072 = vpack.c.b16 %v3040, %v3039
        %v3073 = vpack.c.b16 %v3042, %v3041
        %v3074 = vpack.c.b16 %v3044, %v3043
        %v3075 = vpack.c.b16 %v3046, %v3045
        %v3076 = vpack.c.b16 %v3048, %v3047
        %v3077 = vpack.c.b16 %v3050, %v3049
        %v3078 = vpack.c.b16 %v3052, %v3051
        %v3079 = vpack.c.b16 %v3054, %v3053
        %v3080 = vpack.c.b16 %v3056, %v3055
        %3105 = vmatprep.subr.bf16.mxu0 0
        %3106 = vmatpush1.bf16.msra.mxu0 %v3057
        %3107 = vmatprep.subr.bf16.mxu0 0
        %3108 = vmatpush1.bf16.msra.mxu0 %v3058
        %3109 = vmatprep.subr.bf16.mxu0 0
        %3110 = vmatpush1.bf16.msra.mxu0 %v3059
        %3111 = vmatprep.subr.bf16.mxu0 0
        %3112 = vmatpush1.bf16.msra.mxu0 %v3060
        %3113 = vmatprep.subr.bf16.mxu0 0
        %3114 = vmatpush1.bf16.msra.mxu0 %v3061
        %3115 = vmatprep.subr.bf16.mxu0 0
        %3116 = vmatpush1.bf16.msra.mxu0 %v3062
        %3117 = vmatprep.subr.bf16.mxu0 0
        %3118 = vmatpush1.bf16.msra.mxu0 %v3063
        %3119 = vmatprep.subr.bf16.mxu0 0
        %3120 = vmatpush1.bf16.msra.mxu0 %v3064
        %3121 = vmatprep.subr.bf16.mxu0 0
        %3122 = vmatpush1.bf16.msra.mxu0 %v3065
        %3123 = vmatprep.subr.bf16.mxu0 0
        %3124 = vmatpush1.bf16.msra.mxu0 %v3066
        %3125 = vmatprep.subr.bf16.mxu0 0
        %3126 = vmatpush1.bf16.msra.mxu0 %v3067
        %3127 = vmatprep.subr.bf16.mxu0 0
        %3128 = vmatpush1.bf16.msra.mxu0 %v3068
        %3129 = vmatprep.subr.bf16.mxu0 0
        %3130 = vmatpush1.bf16.msra.mxu0 %v3069
        %3131 = vmatprep.subr.bf16.mxu0 0
        %3132 = vmatpush1.bf16.msra.mxu0 %v3070
        %3133 = vmatprep.subr.bf16.mxu0 0
        %3134 = vmatpush1.bf16.msra.mxu0 %v3071
        %3135 = vmatprep.subr.bf16.mxu0 0
        %3136 = vmatpush1.bf16.msra.mxu0 %v3072
        %3137 = vmatprep.mubr.bf16.mxu0 %v2360
        %3138 = vmatmul.mubr.bf16.gmra.mrb[0].mxu0 %v2343
        %v3139 = vpop.f32.mrb[0].mxu0
        %v3140 = vadd.f32 %v2137, %v3139
        %v3141 = vpop.f32.mrb[0].mxu0
        %v3142 = vpop.f32.mrb[0].mxu0
        %v3143 = vadd.f32 %v2140, %v3142
        %v3144 = vpop.f32.mrb[0].mxu0
        %3145 = vmatprep.mubr.bf16.mxu0 %v2390
        %3146 = vmatmul.mubr.bf16.gmra.mrb[0].mxu0 %v2381
        %v3147 = vpop.f32.mrb[0].mxu0
        %v3148 = vadd.f32 %v2145, %v3147
        %v3149 = vpop.f32.mrb[0].mxu0
        %v3150 = vpop.f32.mrb[0].mxu0
        %v3151 = vadd.f32 %v2148, %v3150
        %v3152 = vpop.f32.mrb[0].mxu0
        %3153 = vmatprep.mubr.bf16.mxu0 %v2412
        %3154 = vmatmul.mubr.bf16.gmra.mrb[0].mxu0 %v2403
        %v3155 = vpop.f32.mrb[0].mxu0
        %v3156 = vadd.f32 %v2153, %v3155
        %v3157 = vpop.f32.mrb[0].mxu0
        %v3158 = vpop.f32.mrb[0].mxu0
        %v3159 = vadd.f32 %v2156, %v3158
        %v3160 = vpop.f32.mrb[0].mxu0
        %3161 = vmatprep.mubr.bf16.mxu0 %v2434
        %3162 = vmatmul.mubr.bf16.gmra.mrb[0].mxu0 %v2425
        %v3163 = vpop.f32.mrb[0].mxu0
        %v3164 = vadd.f32 %v2161, %v3163
        %v3165 = vpop.f32.mrb[0].mxu0
        %v3166 = vpop.f32.mrb[0].mxu0
        %v3167 = vadd.f32 %v2164, %v3166
        %v3168 = vpop.f32.mrb[0].mxu0
        %3169 = vmatprep.mubr.bf16.mxu0 %v2456
        %3170 = vmatmul.mubr.bf16.gmra.mrb[0].mxu0 %v2447
        %v3171 = vpop.f32.mrb[0].mxu0
        %v3172 = vadd.f32 %v2169, %v3171
        %v3173 = vpop.f32.mrb[0].mxu0
        %v3174 = vpop.f32.mrb[0].mxu0
        %v3175 = vadd.f32 %v2172, %v3174
        %v3176 = vpop.f32.mrb[0].mxu0
        %3177 = vmatprep.mubr.bf16.mxu0 %v2478
        %3178 = vmatmul.mubr.bf16.gmra.mrb[0].mxu0 %v2469
        %v3179 = vpop.f32.mrb[0].mxu0
        %v3180 = vadd.f32 %v2177, %v3179
        %v3181 = vpop.f32.mrb[0].mxu0
        %v3182 = vpop.f32.mrb[0].mxu0
        %v3183 = vadd.f32 %v2180, %v3182
        %v3184 = vpop.f32.mrb[0].mxu0
        %3185 = vmatprep.mubr.bf16.mxu0 %v2500
        %3186 = vmatmul.mubr.bf16.gmra.mrb[0].mxu0 %v2491
        %v3187 = vpop.f32.mrb[0].mxu0
        %v3188 = vadd.f32 %v2185, %v3187
        %v3189 = vpop.f32.mrb[0].mxu0
        %v3190 = vpop.f32.mrb[0].mxu0
        %v3191 = vadd.f32 %v2188, %v3190
        %v3192 = vpop.f32.mrb[0].mxu0
        %3193 = vmatprep.mubr.bf16.mxu0 %v2522
        %3194 = vmatmul.mubr.bf16.gmra.mrb[0].mxu0 %v2513
        %v3195 = vpop.f32.mrb[0].mxu0
        %v3196 = vadd.f32 %v2193, %v3195
        %v3197 = vpop.f32.mrb[0].mxu0
        %v3198 = vpop.f32.mrb[0].mxu0
        %v3199 = vadd.f32 %v2196, %v3198
        %v3200 = vpop.f32.mrb[0].mxu0
        %3201 = vmatprep.mubr.bf16.mxu0 %v2544
        %3202 = vmatmul.mubr.bf16.gmra.mrb[0].mxu0 %v2535
        %v3203 = vpop.f32.mrb[0].mxu0
        %v3204 = vadd.f32 %v2201, %v3203
        %v3205 = vpop.f32.mrb[0].mxu0
        %v3206 = vpop.f32.mrb[0].mxu0
        %v3207 = vadd.f32 %v2204, %v3206
        %v3208 = vpop.f32.mrb[0].mxu0
        %3209 = vmatprep.mubr.bf16.mxu0 %v2566
        %3210 = vmatmul.mubr.bf16.gmra.mrb[0].mxu0 %v2557
        %v3211 = vpop.f32.mrb[0].mxu0
        %v3212 = vadd.f32 %v2209, %v3211
        %v3213 = vpop.f32.mrb[0].mxu0
        %v3214 = vpop.f32.mrb[0].mxu0
        %v3215 = vadd.f32 %v2212, %v3214
        %v3216 = vpop.f32.mrb[0].mxu0
        %3217 = vmatprep.mubr.bf16.mxu0 %v2588
        %3218 = vmatmul.mubr.bf16.gmra.mrb[0].mxu0 %v2579
        %v3219 = vpop.f32.mrb[0].mxu0
        %v3220 = vadd.f32 %v2217, %v3219
        %v3221 = vpop.f32.mrb[0].mxu0
        %v3222 = vpop.f32.mrb[0].mxu0
        %v3223 = vadd.f32 %v2220, %v3222
        %v3224 = vpop.f32.mrb[0].mxu0
        %3225 = vmatprep.mubr.bf16.mxu0 %v2610
        %3226 = vmatmul.mubr.bf16.gmra.mrb[0].mxu0 %v2601
        %v3227 = vpop.f32.mrb[0].mxu0
        %v3228 = vadd.f32 %v2225, %v3227
        %v3229 = vpop.f32.mrb[0].mxu0
        %v3230 = vpop.f32.mrb[0].mxu0
        %v3231 = vadd.f32 %v2228, %v3230
        %v3232 = vpop.f32.mrb[0].mxu0
        %3233 = vmatprep.mubr.bf16.mxu0 %v2632
        %3234 = vmatmul.mubr.bf16.gmra.mrb[0].mxu0 %v2623
        %v3235 = vpop.f32.mrb[0].mxu0
        %v3236 = vadd.f32 %v2233, %v3235
        %v3237 = vpop.f32.mrb[0].mxu0
        %v3238 = vpop.f32.mrb[0].mxu0
        %v3239 = vadd.f32 %v2236, %v3238
        %v3240 = vpop.f32.mrb[0].mxu0
        %3241 = vmatprep.mubr.bf16.mxu0 %v2654
        %3242 = vmatmul.mubr.bf16.gmra.mrb[0].mxu0 %v2645
        %v3243 = vpop.f32.mrb[0].mxu0
        %v3244 = vadd.f32 %v2241, %v3243
        %v3245 = vpop.f32.mrb[0].mxu0
        %v3246 = vpop.f32.mrb[0].mxu0
        %v3247 = vadd.f32 %v2244, %v3246
        %v3248 = vpop.f32.mrb[0].mxu0
        %3249 = vmatprep.mubr.bf16.mxu0 %v2676
        %3250 = vmatmul.mubr.bf16.gmra.mrb[0].mxu0 %v2667
        %v3251 = vpop.f32.mrb[0].mxu0
        %v3252 = vadd.f32 %v2249, %v3251
        %v3253 = vpop.f32.mrb[0].mxu0
        %v3254 = vpop.f32.mrb[0].mxu0
        %v3255 = vadd.f32 %v2252, %v3254
        %v3256 = vpop.f32.mrb[0].mxu0
        %3257 = vmatprep.mubr.bf16.mxu0 %v2698
        %3258 = vmatmul.mubr.bf16.gmra.mrb[0].mxu0 %v2689
        %v3259 = vpop.f32.mrb[0].mxu0
        %v3260 = vadd.f32 %v2257, %v3259
        %v3261 = vpop.f32.mrb[0].mxu0
        %v3262 = vpop.f32.mrb[0].mxu0
        %v3263 = vadd.f32 %v2260, %v3262
        %v3264 = vpop.f32.mrb[0].mxu0
        %3265 = vmatprep.mubr.bf16.mxu0 %v2720
        %3266 = vmatmul.mubr.bf16.gmra.mrb[0].mxu0 %v2711
        %v3267 = vpop.f32.mrb[0].mxu0
        %v3268 = vadd.f32 %v2265, %v3267
        %v3269 = vpop.f32.mrb[0].mxu0
        %v3270 = vpop.f32.mrb[0].mxu0
        %v3271 = vadd.f32 %v2268, %v3270
        %v3272 = vpop.f32.mrb[0].mxu0
        %3273 = vmatprep.mubr.bf16.mxu0 %v2742
        %3274 = vmatmul.mubr.bf16.gmra.mrb[0].mxu0 %v2733
        %v3275 = vpop.f32.mrb[0].mxu0
        %v3276 = vadd.f32 %v2273, %v3275
        %v3277 = vpop.f32.mrb[0].mxu0
        %v3278 = vpop.f32.mrb[0].mxu0
        %v3279 = vadd.f32 %v2276, %v3278
        %v3280 = vpop.f32.mrb[0].mxu0
        %3281 = vmatprep.mubr.bf16.mxu0 %v2764
        %3282 = vmatmul.mubr.bf16.gmra.mrb[0].mxu0 %v2755
        %v3283 = vpop.f32.mrb[0].mxu0
        %v3284 = vadd.f32 %v2281, %v3283
        %v3285 = vpop.f32.mrb[0].mxu0
        %v3286 = vpop.f32.mrb[0].mxu0
        %v3287 = vadd.f32 %v2284, %v3286
        %v3288 = vpop.f32.mrb[0].mxu0
        %3289 = vmatprep.mubr.bf16.mxu0 %v2786
        %3290 = vmatmul.mubr.bf16.gmra.mrb[0].mxu0 %v2777
        %v3291 = vpop.f32.mrb[0].mxu0
        %v3292 = vadd.f32 %v2289, %v3291
        %v3293 = vpop.f32.mrb[0].mxu0
        %v3294 = vpop.f32.mrb[0].mxu0
        %v3295 = vadd.f32 %v2292, %v3294
        %v3296 = vpop.f32.mrb[0].mxu0
        %3297 = vmatprep.mubr.bf16.mxu0 %v2808
        %3298 = vmatmul.mubr.bf16.gmra.mrb[0].mxu0 %v2799
        %v3299 = vpop.f32.mrb[0].mxu0
        %v3300 = vadd.f32 %v2297, %v3299
        %v3301 = vpop.f32.mrb[0].mxu0
        %v3302 = vpop.f32.mrb[0].mxu0
        %v3303 = vadd.f32 %v2300, %v3302
        %v3304 = vpop.f32.mrb[0].mxu0
        %3305 = vmatprep.mubr.bf16.mxu0 %v2830
        %3306 = vmatmul.mubr.bf16.gmra.mrb[0].mxu0 %v2821
        %v3307 = vpop.f32.mrb[0].mxu0
        %v3308 = vadd.f32 %v2305, %v3307
        %v3309 = vpop.f32.mrb[0].mxu0
        %v3310 = vpop.f32.mrb[0].mxu0
        %v3311 = vadd.f32 %v2308, %v3310
        %v3312 = vpop.f32.mrb[0].mxu0
        %3313 = vmatprep.mubr.bf16.mxu0 %v2852
        %3314 = vmatmul.mubr.bf16.gmra.mrb[0].mxu0 %v2843
        %v3315 = vpop.f32.mrb[0].mxu0
        %v3316 = vadd.f32 %v2313, %v3315
        %v3317 = vpop.f32.mrb[0].mxu0
        %v3318 = vpop.f32.mrb[0].mxu0
        %v3319 = vadd.f32 %v2316, %v3318
        %v3320 = vpop.f32.mrb[0].mxu0
        %3321 = vmatprep.mubr.bf16.mxu0 %v2879
        %3322 = vmatmul.mubr.bf16.gmra.mrb[0].mxu0 %v2870
        %v3323 = vpop.f32.mrb[0].mxu0
        %v3324 = vadd.f32 %v2321, %v3323
        %v3325 = vpop.f32.mrb[0].mxu0
        %v3326 = vpop.f32.mrb[0].mxu0
        %v3327 = vadd.f32 %v2324, %v3326
        %v3328 = vpop.f32.mrb[0].mxu0
        %3329 = vdwg.mxu0
        %3330 = vmatprep.subr.bf16.mxu0 0
        %3331 = vmatpush1.bf16.msra.mxu0 %v3073
        %3332 = vmatprep.subr.bf16.mxu0 0
        %3333 = vmatpush1.bf16.msra.mxu0 %v3074
        %3334 = vmatprep.subr.bf16.mxu0 0
        %3335 = vmatpush1.bf16.msra.mxu0 %v3075
        %3336 = vmatprep.subr.bf16.mxu0 0
        %3337 = vmatpush1.bf16.msra.mxu0 %v3076
        %3338 = vmatprep.subr.bf16.mxu0 0
        %3339 = vmatpush1.bf16.msra.mxu0 %v3077
        %3340 = vmatprep.subr.bf16.mxu0 0
        %3341 = vmatpush1.bf16.msra.mxu0 %v3078
        %3342 = vmatprep.subr.bf16.mxu0 0
        %3343 = vmatpush1.bf16.msra.mxu0 %v3079
        %3344 = vmatprep.subr.bf16.mxu0 0
        %3345 = vmatpush1.bf16.msra.mxu0 %v3080
        %3346 = vmatprep.subr.bf16.mxu0 0
        %3347 = vmatpush1.bf16.msra.mxu0 0
        %3348 = vmatprep.subr.bf16.mxu0 0
        %3349 = vmatpush1.bf16.msra.mxu0 0
        %3350 = vmatprep.subr.bf16.mxu0 0
        %3351 = vmatpush1.bf16.msra.mxu0 0
        %3352 = vmatprep.subr.bf16.mxu0 0
        %3353 = vmatpush1.bf16.msra.mxu0 0
        %3354 = vmatprep.subr.bf16.mxu0 0
        %3355 = vmatpush1.bf16.msra.mxu0 0
        %3356 = vmatprep.subr.bf16.mxu0 0
        %3357 = vmatpush1.bf16.msra.mxu0 0
        %3358 = vmatprep.subr.bf16.mxu0 0
        %3359 = vmatpush1.bf16.msra.mxu0 0
        %3360 = vmatprep.subr.bf16.mxu0 0
        %3361 = vmatpush1.bf16.msra.mxu0 0
        %3362 = vmatprep.mubr.bf16.mxu0 0
        %3363 = vmatmul.mubr.bf16.gmra.mrb[0].mxu0 %v2377
        %v3364 = vpop.f32.mrb[0].mxu0
        %v3365 = vadd.f32 %v3140, %v3364
        %v3366 = vpop.f32.mrb[0].mxu0
        %v3367 = vpop.f32.mrb[0].mxu0
        %v3368 = vadd.f32 %v3143, %v3367
        %v3369 = vpop.f32.mrb[0].mxu0
        %3370 = vmatprep.mubr.bf16.mxu0 0
        %3371 = vmatmul.mubr.bf16.gmra.mrb[0].mxu0 %v2399
        %v3372 = vpop.f32.mrb[0].mxu0
        %v3373 = vadd.f32 %v3148, %v3372
        %v3374 = vpop.f32.mrb[0].mxu0
        %v3375 = vpop.f32.mrb[0].mxu0
        %v3376 = vadd.f32 %v3151, %v3375
        %v3377 = vpop.f32.mrb[0].mxu0
        %3378 = vmatprep.mubr.bf16.mxu0 0
        %3379 = vmatmul.mubr.bf16.gmra.mrb[0].mxu0 %v2421
        %v3380 = vpop.f32.mrb[0].mxu0
        %v3381 = vadd.f32 %v3156, %v3380
        %v3382 = vpop.f32.mrb[0].mxu0
        %v3383 = vpop.f32.mrb[0].mxu0
        %v3384 = vadd.f32 %v3159, %v3383
        %v3385 = vpop.f32.mrb[0].mxu0
        %3386 = vmatprep.mubr.bf16.mxu0 0
        %3387 = vmatmul.mubr.bf16.gmra.mrb[0].mxu0 %v2443
        %v3388 = vpop.f32.mrb[0].mxu0
        %v3389 = vadd.f32 %v3164, %v3388
        %v3390 = vpop.f32.mrb[0].mxu0
        %v3391 = vpop.f32.mrb[0].mxu0
        %v3392 = vadd.f32 %v3167, %v3391
        %v3393 = vpop.f32.mrb[0].mxu0
        %3394 = vmatprep.mubr.bf16.mxu0 0
        %3395 = vmatmul.mubr.bf16.gmra.mrb[0].mxu0 %v2465
        %v3396 = vpop.f32.mrb[0].mxu0
        %v3397 = vadd.f32 %v3172, %v3396
        %v3398 = vpop.f32.mrb[0].mxu0
        %v3399 = vpop.f32.mrb[0].mxu0
        %v3400 = vadd.f32 %v3175, %v3399
        %v3401 = vpop.f32.mrb[0].mxu0
        %3402 = vmatprep.mubr.bf16.mxu0 0
        %3403 = vmatmul.mubr.bf16.gmra.mrb[0].mxu0 %v2487
        %v3404 = vpop.f32.mrb[0].mxu0
        %v3405 = vadd.f32 %v3180, %v3404
        %v3406 = vpop.f32.mrb[0].mxu0
        %v3407 = vpop.f32.mrb[0].mxu0
        %v3408 = vadd.f32 %v3183, %v3407
        %v3409 = vpop.f32.mrb[0].mxu0
        %3410 = vmatprep.mubr.bf16.mxu0 0
        %3411 = vmatmul.mubr.bf16.gmra.mrb[0].mxu0 %v2509
        %v3412 = vpop.f32.mrb[0].mxu0
        %v3413 = vadd.f32 %v3188, %v3412
        %v3414 = vpop.f32.mrb[0].mxu0
        %v3415 = vpop.f32.mrb[0].mxu0
        %v3416 = vadd.f32 %v3191, %v3415
        %v3417 = vpop.f32.mrb[0].mxu0
        %3418 = vmatprep.mubr.bf16.mxu0 0
        %3419 = vmatmul.mubr.bf16.gmra.mrb[0].mxu0 %v2531
        %v3420 = vpop.f32.mrb[0].mxu0
        %v3421 = vadd.f32 %v3196, %v3420
        %v3422 = vpop.f32.mrb[0].mxu0
        %v3423 = vpop.f32.mrb[0].mxu0
        %v3424 = vadd.f32 %v3199, %v3423
        %v3425 = vpop.f32.mrb[0].mxu0
        %3426 = vmatprep.mubr.bf16.mxu0 0
        %3427 = vmatmul.mubr.bf16.gmra.mrb[0].mxu0 %v2553
        %v3428 = vpop.f32.mrb[0].mxu0
        %v3429 = vadd.f32 %v3204, %v3428
        %v3430 = vpop.f32.mrb[0].mxu0
        %v3431 = vpop.f32.mrb[0].mxu0
        %v3432 = vadd.f32 %v3207, %v3431
        %v3433 = vpop.f32.mrb[0].mxu0
        %3434 = vmatprep.mubr.bf16.mxu0 0
        %3435 = vmatmul.mubr.bf16.gmra.mrb[0].mxu0 %v2575
        %v3436 = vpop.f32.mrb[0].mxu0
        %v3437 = vadd.f32 %v3212, %v3436
        %v3438 = vpop.f32.mrb[0].mxu0
        %v3439 = vpop.f32.mrb[0].mxu0
        %v3440 = vadd.f32 %v3215, %v3439
        %v3441 = vpop.f32.mrb[0].mxu0
        %3442 = vmatprep.mubr.bf16.mxu0 0
        %3443 = vmatmul.mubr.bf16.gmra.mrb[0].mxu0 %v2597
        %v3444 = vpop.f32.mrb[0].mxu0
        %v3445 = vadd.f32 %v3220, %v3444
        %v3446 = vpop.f32.mrb[0].mxu0
        %v3447 = vpop.f32.mrb[0].mxu0
        %v3448 = vadd.f32 %v3223, %v3447
        %v3449 = vpop.f32.mrb[0].mxu0
        %3450 = vmatprep.mubr.bf16.mxu0 0
        %3451 = vmatmul.mubr.bf16.gmra.mrb[0].mxu0 %v2619
        %v3452 = vpop.f32.mrb[0].mxu0
        %v3453 = vadd.f32 %v3228, %v3452
        %v3454 = vpop.f32.mrb[0].mxu0
        %v3455 = vpop.f32.mrb[0].mxu0
        %v3456 = vadd.f32 %v3231, %v3455
        %v3457 = vpop.f32.mrb[0].mxu0
        %3458 = vmatprep.mubr.bf16.mxu0 0
        %3459 = vmatmul.mubr.bf16.gmra.mrb[0].mxu0 %v2641
        %v3460 = vpop.f32.mrb[0].mxu0
        %v3461 = vadd.f32 %v3236, %v3460
        %v3462 = vpop.f32.mrb[0].mxu0
        %v3463 = vpop.f32.mrb[0].mxu0
        %v3464 = vadd.f32 %v3239, %v3463
        %v3465 = vpop.f32.mrb[0].mxu0
        %3466 = vmatprep.mubr.bf16.mxu0 0
        %3467 = vmatmul.mubr.bf16.gmra.mrb[0].mxu0 %v2663
        %v3468 = vpop.f32.mrb[0].mxu0
        %v3469 = vadd.f32 %v3244, %v3468
        %v3470 = vpop.f32.mrb[0].mxu0
        %v3471 = vpop.f32.mrb[0].mxu0
        %v3472 = vadd.f32 %v3247, %v3471
        %v3473 = vpop.f32.mrb[0].mxu0
        %3474 = vmatprep.mubr.bf16.mxu0 0
        %3475 = vmatmul.mubr.bf16.gmra.mrb[0].mxu0 %v2685
        %v3476 = vpop.f32.mrb[0].mxu0
        %v3477 = vadd.f32 %v3252, %v3476
        %v3478 = vpop.f32.mrb[0].mxu0
        %v3479 = vpop.f32.mrb[0].mxu0
        %v3480 = vadd.f32 %v3255, %v3479
        %v3481 = vpop.f32.mrb[0].mxu0
        %3482 = vmatprep.mubr.bf16.mxu0 0
        %3483 = vmatmul.mubr.bf16.gmra.mrb[0].mxu0 %v2707
        %v3484 = vpop.f32.mrb[0].mxu0
        %v3485 = vadd.f32 %v3260, %v3484
        %v3486 = vpop.f32.mrb[0].mxu0
        %v3487 = vpop.f32.mrb[0].mxu0
        %v3488 = vadd.f32 %v3263, %v3487
        %v3489 = vpop.f32.mrb[0].mxu0
        %3490 = vmatprep.mubr.bf16.mxu0 0
        %3491 = vmatmul.mubr.bf16.gmra.mrb[0].mxu0 %v2729
        %v3492 = vpop.f32.mrb[0].mxu0
        %v3493 = vadd.f32 %v3268, %v3492
        %v3494 = vpop.f32.mrb[0].mxu0
        %v3495 = vpop.f32.mrb[0].mxu0
        %v3496 = vadd.f32 %v3271, %v3495
        %v3497 = vpop.f32.mrb[0].mxu0
        %3498 = vmatprep.mubr.bf16.mxu0 0
        %3499 = vmatmul.mubr.bf16.gmra.mrb[0].mxu0 %v2751
        %v3500 = vpop.f32.mrb[0].mxu0
        %v3501 = vadd.f32 %v3276, %v3500
        %v3502 = vpop.f32.mrb[0].mxu0
        %v3503 = vpop.f32.mrb[0].mxu0
        %v3504 = vadd.f32 %v3279, %v3503
        %v3505 = vpop.f32.mrb[0].mxu0
        %3506 = vmatprep.mubr.bf16.mxu0 0
        %3507 = vmatmul.mubr.bf16.gmra.mrb[0].mxu0 %v2773
        %v3508 = vpop.f32.mrb[0].mxu0
        %v3509 = vadd.f32 %v3284, %v3508
        %v3510 = vpop.f32.mrb[0].mxu0
        %v3511 = vpop.f32.mrb[0].mxu0
        %v3512 = vadd.f32 %v3287, %v3511
        %v3513 = vpop.f32.mrb[0].mxu0
        %3514 = vmatprep.mubr.bf16.mxu0 0
        %3515 = vmatmul.mubr.bf16.gmra.mrb[0].mxu0 %v2795
        %v3516 = vpop.f32.mrb[0].mxu0
        %v3517 = vadd.f32 %v3292, %v3516
        %v3518 = vpop.f32.mrb[0].mxu0
        %v3519 = vpop.f32.mrb[0].mxu0
        %v3520 = vadd.f32 %v3295, %v3519
        %v3521 = vpop.f32.mrb[0].mxu0
        %3522 = vmatprep.mubr.bf16.mxu0 0
        %3523 = vmatmul.mubr.bf16.gmra.mrb[0].mxu0 %v2817
        %v3524 = vpop.f32.mrb[0].mxu0
        %v3525 = vadd.f32 %v3300, %v3524
        %v3526 = vpop.f32.mrb[0].mxu0
        %v3527 = vpop.f32.mrb[0].mxu0
        %v3528 = vadd.f32 %v3303, %v3527
        %v3529 = vpop.f32.mrb[0].mxu0
        %3530 = vmatprep.mubr.bf16.mxu0 0
        %3531 = vmatmul.mubr.bf16.gmra.mrb[0].mxu0 %v2839
        %v3532 = vpop.f32.mrb[0].mxu0
        %v3533 = vadd.f32 %v3308, %v3532
        %v3534 = vpop.f32.mrb[0].mxu0
        %v3535 = vpop.f32.mrb[0].mxu0
        %v3536 = vadd.f32 %v3311, %v3535
        %v3537 = vpop.f32.mrb[0].mxu0
        %3538 = vmatprep.mubr.bf16.mxu0 0
        %3539 = vmatmul.mubr.bf16.gmra.mrb[0].mxu0 %v2861
        %v3540 = vpop.f32.mrb[0].mxu0
        %v3541 = vadd.f32 %v3316, %v3540
        %v3542 = vpop.f32.mrb[0].mxu0
        %v3543 = vpop.f32.mrb[0].mxu0
        %v3544 = vadd.f32 %v3319, %v3543
        %v3545 = vpop.f32.mrb[0].mxu0
        %3546 = vmatprep.mubr.bf16.mxu0 0
        %3547 = vmatmul.mubr.bf16.gmra.mrb[0].mxu0 %v2888
        %v3548 = vpop.f32.mrb[0].mxu0
        %v3549 = vadd.f32 %v3324, %v3548
        %v3550 = vpop.f32.mrb[0].mxu0
        %v3551 = vpop.f32.mrb[0].mxu0
        %v3552 = vadd.f32 %v3327, %v3551
        %v3553 = vpop.f32.mrb[0].mxu0
        %3554 = vdwg.mxu0
        %v3555 = vld [vmem:[%s212 + $0x18] sm:$0x8]
        %v3556 = vld [vmem:[%s212 + $0x1c] sm:$0xf]
        %v3557 = vld [vmem:[%s212 + $0x20] sm:$0xf]
        %v3558 = vld [vmem:[%s212 + $0x24] sm:$0xf]
        %v3559 = vld [vmem:[%s212 + $0x28] sm:$0xf]
        %v3560 = vld [vmem:[%s212 + $0x2c] sm:$0xf]
        %v3561 = vld [vmem:[%s212 + $0x30] sm:$0xf]
        %v3562 = vld [vmem:[%s212 + $0x34] sm:$0xf]
        %v3563 = vld [vmem:[%s212 + $0x38] sm:$0xf]
        %v3564 = vld [vmem:[%s212 + $0x3c] sm:$0xf]
        %v3565 = vld [vmem:[%s212 + $0x40] sm:$0xf]
        %v3566 = vld [vmem:[%s212 + $0x44] sm:$0xf]
        %v3567 = vld [vmem:[%s212 + $0x48] sm:$0xf]
        %v3568 = vld [vmem:[%s212 + $0x4c] sm:$0xf]
        %v3569 = vld [vmem:[%s212 + $0x50] sm:$0xf]
        %v3570 = vld [vmem:[%s212 + $0x54] sm:$0xf]
        %v3571 = vld [vmem:[%s212 + $0x58] sm:$0xf]
        %v3572 = vld [vmem:[%s212 + $0x5c] sm:$0xf]
        %v3573 = vld [vmem:[%s212 + $0x60] sm:$0xf]
        %v3574 = vld [vmem:[%s212 + $0x64] sm:$0xf]
        %v3575 = vld [vmem:[%s212 + $0x68] sm:$0xf]
        %v3576 = vld [vmem:[%s212 + $0x6c] sm:$0xf]
        %v3577 = vld [vmem:[%s212 + $0x70] sm:$0xf]
        %v3578 = vld [vmem:[%s212 + $0x74] sm:$0xf]
        %v3579 = vld [vmem:[%s212 + $0x78] sm:$0xf]
        %v3580 = vld [vmem:[%s212 + $0x7c] sm:$0xf]
        %v3581 = vld [vmem:[%s212 + $0x80] sm:$0xf]
        %v3582 = vld [vmem:[%s212 + $0x84] sm:$0xf]
        %v3583 = vld [vmem:[%s212 + $0x88] sm:$0xf]
        %v3584 = vld [vmem:[%s212 + $0x8c] sm:$0xf]
        %v3585 = vld [vmem:[%s212 + $0x90] sm:$0xf]
        %v3586 = vld [vmem:[%s212 + $0x94] sm:$0xf]
        %v3587 = vld [vmem:[%s212 + $0x98] sm:$0xf]
        %v3588 = vld [vmem:[%s212 + $0x9c] sm:$0xf]
        %v3589 = vld [vmem:[%s212 + $0xa0] sm:$0xf]
        %v3590 = vld [vmem:[%s212 + $0xa4] sm:$0xf]
        %v3591 = vld [vmem:[%s212 + $0xa8] sm:$0xf]
        %v3592 = vld [vmem:[%s212 + $0xac] sm:$0xf]
        %v3593 = vld [vmem:[%s212 + $0xb0] sm:$0xf]
        %v3594 = vld [vmem:[%s212 + $0xb4] sm:$0xf]
        %v3595 = vld [vmem:[%s212 + $0xb8] sm:$0xf]
        %v3596 = vld [vmem:[%s212 + $0xbc] sm:$0xf]
        %v3597 = vld [vmem:[%s212 + $0xc0] sm:$0xf]
        %v3598 = vld [vmem:[%s212 + $0xc4] sm:$0xf]
        %v3599 = vld [vmem:[%s212 + $0xc8] sm:$0xf]
        %v3600 = vld [vmem:[%s212 + $0xcc] sm:$0xf]
        %v3601 = vld [vmem:[%s212 + $0xd0] sm:$0xf]
        %v3602 = vld [vmem:[%s212 + $0xd4] sm:$0xf]
        %v3603 = vld [vmem:[%s212 + $0xd8] sm:$0xf]
        %v3604 = vld [vmem:[%s212 + $0x1c] sm:$0xf]
        %v3605 = vld [vmem:[%s212 + $0x20] sm:$0xf]
        %v3606 = vld [vmem:[%s212 + $0x24] sm:$0xf]
        %v3607 = vld [vmem:[%s212 + $0x28] sm:$0xf]
        %v3608 = vld [vmem:[%s212 + $0x2c] sm:$0xf]
        %v3609 = vld [vmem:[%s212 + $0x30] sm:$0xf]
        %v3610 = vld [vmem:[%s212 + $0x34] sm:$0xf]
        %v3611 = vld [vmem:[%s212 + $0x38] sm:$0xf]
        %v3612 = vld [vmem:[%s212 + $0x3c] sm:$0xf]
        %v3613 = vld [vmem:[%s212 + $0x40] sm:$0xf]
        %v3614 = vld [vmem:[%s212 + $0x44] sm:$0xf]
        %v3615 = vld [vmem:[%s212 + $0x48] sm:$0xf]
        %v3616 = vld [vmem:[%s212 + $0x4c] sm:$0xf]
        %v3617 = vld [vmem:[%s212 + $0x50] sm:$0xf]
        %v3618 = vld [vmem:[%s212 + $0x54] sm:$0xf]
        %v3619 = vld [vmem:[%s212 + $0x58] sm:$0xf]
        %v3620 = vld [vmem:[%s212 + $0x5c] sm:$0xf]
        %v3621 = vld [vmem:[%s212 + $0x60] sm:$0xf]
        %v3622 = vld [vmem:[%s212 + $0x64] sm:$0xf]
        %v3623 = vld [vmem:[%s212 + $0x68] sm:$0xf]
        %v3624 = vld [vmem:[%s212 + $0x6c] sm:$0xf]
        %v3625 = vld [vmem:[%s212 + $0x70] sm:$0xf]
        %v3626 = vld [vmem:[%s212 + $0x74] sm:$0xf]
        %v3627 = vld [vmem:[%s212 + $0x78] sm:$0xf]
        %v3628 = vld [vmem:[%s212 + $0x7c] sm:$0xf]
        %v3629 = vld [vmem:[%s212 + $0x80] sm:$0xf]
        %v3630 = vld [vmem:[%s212 + $0x84] sm:$0xf]
        %v3631 = vld [vmem:[%s212 + $0x88] sm:$0xf]
        %v3632 = vld [vmem:[%s212 + $0x8c] sm:$0xf]
        %v3633 = vld [vmem:[%s212 + $0x90] sm:$0xf]
        %v3634 = vld [vmem:[%s212 + $0x94] sm:$0xf]
        %v3635 = vld [vmem:[%s212 + $0x98] sm:$0xf]
        %v3636 = vld [vmem:[%s212 + $0x9c] sm:$0xf]
        %v3637 = vld [vmem:[%s212 + $0xa0] sm:$0xf]
        %v3638 = vld [vmem:[%s212 + $0xa4] sm:$0xf]
        %v3639 = vld [vmem:[%s212 + $0xa8] sm:$0xf]
        %v3640 = vld [vmem:[%s212 + $0xac] sm:$0xf]
        %v3641 = vld [vmem:[%s212 + $0xb0] sm:$0xf]
        %v3642 = vld [vmem:[%s212 + $0xb4] sm:$0xf]
        %v3643 = vld [vmem:[%s212 + $0xb8] sm:$0xf]
        %v3644 = vld [vmem:[%s212 + $0xbc] sm:$0xf]
        %v3645 = vld [vmem:[%s212 + $0xc0] sm:$0xf]
        %v3646 = vld [vmem:[%s212 + $0xc4] sm:$0xf]
        %v3647 = vld [vmem:[%s212 + $0xc8] sm:$0xf]
        %v3648 = vld [vmem:[%s212 + $0xcc] sm:$0xf]
        %v3649 = vld [vmem:[%s212 + $0xd0] sm:$0xf]
        %v3650 = vld [vmem:[%s212 + $0xd4] sm:$0xf]
        %v3651 = vld [vmem:[%s212 + $0xd8] sm:$0xf]
        %v3652 = vld [vmem:[%s212 + $0xdc] sm:$0x1]
        %v3702 = vunpack.c.l.b16 %v3555
        %v3703 = vunpack.c.l.b16 %v3556
        %v3704 = vunpack.c.l.b16 %v3557
        %v3705 = vunpack.c.l.b16 %v3558
        %v3706 = vunpack.c.l.b16 %v3559
        %v3707 = vunpack.c.l.b16 %v3560
        %v3708 = vunpack.c.l.b16 %v3561
        %v3709 = vunpack.c.l.b16 %v3562
        %v3710 = vunpack.c.l.b16 %v3563
        %v3711 = vunpack.c.l.b16 %v3564
        %v3712 = vunpack.c.l.b16 %v3565
        %v3713 = vunpack.c.l.b16 %v3566
        %v3714 = vunpack.c.l.b16 %v3567
        %v3715 = vunpack.c.l.b16 %v3568
        %v3716 = vunpack.c.l.b16 %v3569
        %v3717 = vunpack.c.l.b16 %v3570
        %v3718 = vunpack.c.l.b16 %v3571
        %v3719 = vunpack.c.l.b16 %v3572
        %v3720 = vunpack.c.l.b16 %v3573
        %v3721 = vunpack.c.l.b16 %v3574
        %v3722 = vunpack.c.l.b16 %v3575
        %v3723 = vunpack.c.l.b16 %v3576
        %v3724 = vunpack.c.l.b16 %v3577
        %v3725 = vunpack.c.l.b16 %v3578
        %v3726 = vunpack.c.l.b16 %v3579
        %v3727 = vunpack.c.l.b16 %v3580
        %v3728 = vunpack.c.l.b16 %v3581
        %v3729 = vunpack.c.l.b16 %v3582
        %v3730 = vunpack.c.l.b16 %v3583
        %v3731 = vunpack.c.l.b16 %v3584
        %v3732 = vunpack.c.l.b16 %v3585
        %v3733 = vunpack.c.l.b16 %v3586
        %v3734 = vunpack.c.l.b16 %v3587
        %v3735 = vunpack.c.l.b16 %v3588
        %v3736 = vunpack.c.l.b16 %v3589
        %v3737 = vunpack.c.l.b16 %v3590
        %v3738 = vunpack.c.l.b16 %v3591
        %v3739 = vunpack.c.l.b16 %v3592
        %v3740 = vunpack.c.l.b16 %v3593
        %v3741 = vunpack.c.l.b16 %v3594
        %v3742 = vunpack.c.l.b16 %v3595
        %v3743 = vunpack.c.l.b16 %v3596
        %v3744 = vunpack.c.l.b16 %v3597
        %v3745 = vunpack.c.l.b16 %v3598
        %v3746 = vunpack.c.l.b16 %v3599
        %v3747 = vunpack.c.l.b16 %v3600
        %v3748 = vunpack.c.l.b16 %v3601
        %v3749 = vunpack.c.l.b16 %v3602
        %v3750 = vunpack.c.l.b16 %v3603
        %v3751 = vpack.c.b16 %v3703, %v3702
        %v3752 = vpack.c.b16 %v3705, %v3704
        %v3753 = vpack.c.b16 %v3707, %v3706
        %v3754 = vpack.c.b16 %v3709, %v3708
        %v3755 = vpack.c.b16 %v3711, %v3710
        %v3756 = vpack.c.b16 %v3713, %v3712
        %v3757 = vpack.c.b16 %v3715, %v3714
        %v3758 = vpack.c.b16 %v3717, %v3716
        %v3759 = vpack.c.b16 %v3719, %v3718
        %v3760 = vpack.c.b16 %v3721, %v3720
        %v3761 = vpack.c.b16 %v3723, %v3722
        %v3762 = vpack.c.b16 %v3725, %v3724
        %v3763 = vpack.c.b16 %v3727, %v3726
        %v3764 = vpack.c.b16 %v3729, %v3728
        %v3765 = vpack.c.b16 %v3731, %v3730
        %v3766 = vpack.c.b16 %v3733, %v3732
        %v3767 = vpack.c.b16 %v3735, %v3734
        %v3768 = vpack.c.b16 %v3737, %v3736
        %v3769 = vpack.c.b16 %v3739, %v3738
        %v3770 = vpack.c.b16 %v3741, %v3740
        %v3771 = vpack.c.b16 %v3743, %v3742
        %v3772 = vpack.c.b16 %v3745, %v3744
        %v3773 = vpack.c.b16 %v3747, %v3746
        %v3774 = vpack.c.b16 %v3749, %v3748
        %v3775 = vpack.c.b16 %v3750, %v3750
        %v3776 = vpack.c.b16 %v3704, %v3703
        %v3777 = vpack.c.b16 %v3706, %v3705
        %v3778 = vpack.c.b16 %v3708, %v3707
        %v3779 = vpack.c.b16 %v3710, %v3709
        %v3780 = vpack.c.b16 %v3712, %v3711
        %v3781 = vpack.c.b16 %v3714, %v3713
        %v3782 = vpack.c.b16 %v3716, %v3715
        %v3783 = vpack.c.b16 %v3718, %v3717
        %v3784 = vpack.c.b16 %v3720, %v3719
        %v3785 = vpack.c.b16 %v3722, %v3721
        %v3786 = vpack.c.b16 %v3724, %v3723
        %v3787 = vpack.c.b16 %v3726, %v3725
        %v3788 = vpack.c.b16 %v3728, %v3727
        %v3789 = vpack.c.b16 %v3730, %v3729
        %v3790 = vpack.c.b16 %v3732, %v3731
        %v3791 = vpack.c.b16 %v3734, %v3733
        %v3792 = vpack.c.b16 %v3736, %v3735
        %v3793 = vpack.c.b16 %v3738, %v3737
        %v3794 = vpack.c.b16 %v3740, %v3739
        %v3795 = vpack.c.b16 %v3742, %v3741
        %v3796 = vpack.c.b16 %v3744, %v3743
        %v3797 = vpack.c.b16 %v3746, %v3745
        %v3798 = vpack.c.b16 %v3748, %v3747
        %v3799 = vpack.c.b16 %v3750, %v3749
        %v3801 = vshrl.u32 %v3776, 16
        %v3803 = vrot.slane %v3801, 4
        %v3804 = vshll.u32 %v3776, 16
        %v3806 = vrot.slane %v3804, 5
        %v3807 = vor.u32 %v3803, %v3806
        %v3809 = vshrl.u32 %v3777, 16
        %v3811 = vrot.slane %v3809, 4
        %v3812 = vshll.u32 %v3777, 16
        %v3814 = vrot.slane %v3812, 5
        %v3815 = vor.u32 %v3811, %v3814
        %v3816 = vsel %vm447, %v3807, %v3815
        %v3818 = vshrl.u32 %v3778, 16
        %v3820 = vrot.slane %v3818, 4
        %v3821 = vshll.u32 %v3778, 16
        %v3823 = vrot.slane %v3821, 5
        %v3824 = vor.u32 %v3820, %v3823
        %v3825 = vsel %vm447, %v3815, %v3824
        %v3827 = vshrl.u32 %v3779, 16
        %v3829 = vrot.slane %v3827, 4
        %v3830 = vshll.u32 %v3779, 16
        %v3832 = vrot.slane %v3830, 5
        %v3833 = vor.u32 %v3829, %v3832
        %v3834 = vsel %vm447, %v3824, %v3833
        %v3836 = vshrl.u32 %v3780, 16
        %v3838 = vrot.slane %v3836, 4
        %v3839 = vshll.u32 %v3780, 16
        %v3841 = vrot.slane %v3839, 5
        %v3842 = vor.u32 %v3838, %v3841
        %v3843 = vsel %vm447, %v3833, %v3842
        %v3845 = vshrl.u32 %v3781, 16
        %v3847 = vrot.slane %v3845, 4
        %v3848 = vshll.u32 %v3781, 16
        %v3850 = vrot.slane %v3848, 5
        %v3851 = vor.u32 %v3847, %v3850
        %v3852 = vsel %vm447, %v3842, %v3851
        %v3854 = vshrl.u32 %v3782, 16
        %v3856 = vrot.slane %v3854, 4
        %v3857 = vshll.u32 %v3782, 16
        %v3859 = vrot.slane %v3857, 5
        %v3860 = vor.u32 %v3856, %v3859
        %v3861 = vsel %vm447, %v3851, %v3860
        %v3863 = vshrl.u32 %v3783, 16
        %v3865 = vrot.slane %v3863, 4
        %v3866 = vshll.u32 %v3783, 16
        %v3868 = vrot.slane %v3866, 5
        %v3869 = vor.u32 %v3865, %v3868
        %v3870 = vsel %vm447, %v3860, %v3869
        %v3872 = vshrl.u32 %v3784, 16
        %v3874 = vrot.slane %v3872, 4
        %v3875 = vshll.u32 %v3784, 16
        %v3877 = vrot.slane %v3875, 5
        %v3878 = vor.u32 %v3874, %v3877
        %v3879 = vsel %vm447, %v3869, %v3878
        %v3881 = vshrl.u32 %v3785, 16
        %v3883 = vrot.slane %v3881, 4
        %v3884 = vshll.u32 %v3785, 16
        %v3886 = vrot.slane %v3884, 5
        %v3887 = vor.u32 %v3883, %v3886
        %v3888 = vsel %vm447, %v3878, %v3887
        %v3890 = vshrl.u32 %v3786, 16
        %v3892 = vrot.slane %v3890, 4
        %v3893 = vshll.u32 %v3786, 16
        %v3895 = vrot.slane %v3893, 5
        %v3896 = vor.u32 %v3892, %v3895
        %v3897 = vsel %vm447, %v3887, %v3896
        %v3899 = vshrl.u32 %v3787, 16
        %v3901 = vrot.slane %v3899, 4
        %v3902 = vshll.u32 %v3787, 16
        %v3904 = vrot.slane %v3902, 5
        %v3905 = vor.u32 %v3901, %v3904
        %v3906 = vsel %vm447, %v3896, %v3905
        %v3908 = vshrl.u32 %v3788, 16
        %v3910 = vrot.slane %v3908, 4
        %v3911 = vshll.u32 %v3788, 16
        %v3913 = vrot.slane %v3911, 5
        %v3914 = vor.u32 %v3910, %v3913
        %v3915 = vsel %vm447, %v3905, %v3914
        %v3917 = vshrl.u32 %v3789, 16
        %v3919 = vrot.slane %v3917, 4
        %v3920 = vshll.u32 %v3789, 16
        %v3922 = vrot.slane %v3920, 5
        %v3923 = vor.u32 %v3919, %v3922
        %v3924 = vsel %vm447, %v3914, %v3923
        %v3926 = vshrl.u32 %v3790, 16
        %v3928 = vrot.slane %v3926, 4
        %v3929 = vshll.u32 %v3790, 16
        %v3931 = vrot.slane %v3929, 5
        %v3932 = vor.u32 %v3928, %v3931
        %v3933 = vsel %vm447, %v3923, %v3932
        %v3935 = vshrl.u32 %v3791, 16
        %v3937 = vrot.slane %v3935, 4
        %v3938 = vshll.u32 %v3791, 16
        %v3940 = vrot.slane %v3938, 5
        %v3941 = vor.u32 %v3937, %v3940
        %v3942 = vsel %vm447, %v3932, %v3941
        %v3944 = vshrl.u32 %v3792, 16
        %v3946 = vrot.slane %v3944, 4
        %v3947 = vshll.u32 %v3792, 16
        %v3949 = vrot.slane %v3947, 5
        %v3950 = vor.u32 %v3946, %v3949
        %v3951 = vsel %vm447, %v3941, %v3950
        %v3953 = vshrl.u32 %v3793, 16
        %v3955 = vrot.slane %v3953, 4
        %v3956 = vshll.u32 %v3793, 16
        %v3958 = vrot.slane %v3956, 5
        %v3959 = vor.u32 %v3955, %v3958
        %v3960 = vsel %vm447, %v3950, %v3959
        %v3962 = vshrl.u32 %v3794, 16
        %v3964 = vrot.slane %v3962, 4
        %v3965 = vshll.u32 %v3794, 16
        %v3967 = vrot.slane %v3965, 5
        %v3968 = vor.u32 %v3964, %v3967
        %v3969 = vsel %vm447, %v3959, %v3968
        %v3971 = vshrl.u32 %v3795, 16
        %v3973 = vrot.slane %v3971, 4
        %v3974 = vshll.u32 %v3795, 16
        %v3976 = vrot.slane %v3974, 5
        %v3977 = vor.u32 %v3973, %v3976
        %v3978 = vsel %vm447, %v3968, %v3977
        %v3980 = vshrl.u32 %v3796, 16
        %v3982 = vrot.slane %v3980, 4
        %v3983 = vshll.u32 %v3796, 16
        %v3985 = vrot.slane %v3983, 5
        %v3986 = vor.u32 %v3982, %v3985
        %v3987 = vsel %vm447, %v3977, %v3986
        %v3989 = vshrl.u32 %v3797, 16
        %v3991 = vrot.slane %v3989, 4
        %v3992 = vshll.u32 %v3797, 16
        %v3994 = vrot.slane %v3992, 5
        %v3995 = vor.u32 %v3991, %v3994
        %v3996 = vsel %vm447, %v3986, %v3995
        %v3998 = vshrl.u32 %v3798, 16
        %v4000 = vrot.slane %v3998, 4
        %v4001 = vshll.u32 %v3798, 16
        %v4003 = vrot.slane %v4001, 5
        %v4004 = vor.u32 %v4000, %v4003
        %v4005 = vsel %vm447, %v3995, %v4004
        %v4007 = vshrl.u32 %v3799, 16
        %v4009 = vrot.slane %v4007, 4
        %v4010 = vshll.u32 %v3799, 16
        %v4012 = vrot.slane %v4010, 5
        %v4013 = vor.u32 %v4009, %v4012
        %v4014 = vsel %vm447, %v4004, %v4013
        %v4064 = vunpack.c.l.b16 %v3604
        %v4065 = vunpack.c.l.b16 %v3605
        %v4066 = vunpack.c.l.b16 %v3606
        %v4067 = vunpack.c.l.b16 %v3607
        %v4068 = vunpack.c.l.b16 %v3608
        %v4069 = vunpack.c.l.b16 %v3609
        %v4070 = vunpack.c.l.b16 %v3610
        %v4071 = vunpack.c.l.b16 %v3611
        %v4072 = vunpack.c.l.b16 %v3612
        %v4073 = vunpack.c.l.b16 %v3613
        %v4074 = vunpack.c.l.b16 %v3614
        %v4075 = vunpack.c.l.b16 %v3615
        %v4076 = vunpack.c.l.b16 %v3616
        %v4077 = vunpack.c.l.b16 %v3617
        %v4078 = vunpack.c.l.b16 %v3618
        %v4079 = vunpack.c.l.b16 %v3619
        %v4080 = vunpack.c.l.b16 %v3620
        %v4081 = vunpack.c.l.b16 %v3621
        %v4082 = vunpack.c.l.b16 %v3622
        %v4083 = vunpack.c.l.b16 %v3623
        %v4084 = vunpack.c.l.b16 %v3624
        %v4085 = vunpack.c.l.b16 %v3625
        %v4086 = vunpack.c.l.b16 %v3626
        %v4087 = vunpack.c.l.b16 %v3627
        %v4088 = vunpack.c.l.b16 %v3628
        %v4089 = vunpack.c.l.b16 %v3629
        %v4090 = vunpack.c.l.b16 %v3630
        %v4091 = vunpack.c.l.b16 %v3631
        %v4092 = vunpack.c.l.b16 %v3632
        %v4093 = vunpack.c.l.b16 %v3633
        %v4094 = vunpack.c.l.b16 %v3634
        %v4095 = vunpack.c.l.b16 %v3635
        %v4096 = vunpack.c.l.b16 %v3636
        %v4097 = vunpack.c.l.b16 %v3637
        %v4098 = vunpack.c.l.b16 %v3638
        %v4099 = vunpack.c.l.b16 %v3639
        %v4100 = vunpack.c.l.b16 %v3640
        %v4101 = vunpack.c.l.b16 %v3641
        %v4102 = vunpack.c.l.b16 %v3642
        %v4103 = vunpack.c.l.b16 %v3643
        %v4104 = vunpack.c.l.b16 %v3644
        %v4105 = vunpack.c.l.b16 %v3645
        %v4106 = vunpack.c.l.b16 %v3646
        %v4107 = vunpack.c.l.b16 %v3647
        %v4108 = vunpack.c.l.b16 %v3648
        %v4109 = vunpack.c.l.b16 %v3649
        %v4110 = vunpack.c.l.b16 %v3650
        %v4111 = vunpack.c.l.b16 %v3651
        %v4112 = vunpack.c.l.b16 %v3652
        %v4113 = vpack.c.b16 %v4065, %v4064
        %v4114 = vpack.c.b16 %v4067, %v4066
        %v4115 = vpack.c.b16 %v4069, %v4068
        %v4116 = vpack.c.b16 %v4071, %v4070
        %v4117 = vpack.c.b16 %v4073, %v4072
        %v4118 = vpack.c.b16 %v4075, %v4074
        %v4119 = vpack.c.b16 %v4077, %v4076
        %v4120 = vpack.c.b16 %v4079, %v4078
        %v4121 = vpack.c.b16 %v4081, %v4080
        %v4122 = vpack.c.b16 %v4083, %v4082
        %v4123 = vpack.c.b16 %v4085, %v4084
        %v4124 = vpack.c.b16 %v4087, %v4086
        %v4125 = vpack.c.b16 %v4089, %v4088
        %v4126 = vpack.c.b16 %v4091, %v4090
        %v4127 = vpack.c.b16 %v4093, %v4092
        %v4128 = vpack.c.b16 %v4095, %v4094
        %v4129 = vpack.c.b16 %v4097, %v4096
        %v4130 = vpack.c.b16 %v4099, %v4098
        %v4131 = vpack.c.b16 %v4101, %v4100
        %v4132 = vpack.c.b16 %v4103, %v4102
        %v4133 = vpack.c.b16 %v4105, %v4104
        %v4134 = vpack.c.b16 %v4107, %v4106
        %v4135 = vpack.c.b16 %v4109, %v4108
        %v4136 = vpack.c.b16 %v4111, %v4110
        %v4137 = vpack.c.b16 %v4112, %v4112
        %v4138 = vrot.slane %v4113, 5
        %v4139 = vrot.slane %v4114, 5
        %v4140 = vsel %vm666, %v4138, %v4139
        %v4141 = vrot.slane %v4115, 5
        %v4142 = vsel %vm666, %v4139, %v4141
        %v4143 = vrot.slane %v4116, 5
        %v4144 = vsel %vm666, %v4141, %v4143
        %v4145 = vrot.slane %v4117, 5
        %v4146 = vsel %vm666, %v4143, %v4145
        %v4147 = vrot.slane %v4118, 5
        %v4148 = vsel %vm666, %v4145, %v4147
        %v4149 = vrot.slane %v4119, 5
        %v4150 = vsel %vm666, %v4147, %v4149
        %v4151 = vrot.slane %v4120, 5
        %v4152 = vsel %vm666, %v4149, %v4151
        %v4153 = vrot.slane %v4121, 5
        %v4154 = vsel %vm666, %v4151, %v4153
        %v4155 = vrot.slane %v4122, 5
        %v4156 = vsel %vm666, %v4153, %v4155
        %v4157 = vrot.slane %v4123, 5
        %v4158 = vsel %vm666, %v4155, %v4157
        %v4159 = vrot.slane %v4124, 5
        %v4160 = vsel %vm666, %v4157, %v4159
        %v4161 = vrot.slane %v4125, 5
        %v4162 = vsel %vm666, %v4159, %v4161
        %v4163 = vrot.slane %v4126, 5
        %v4164 = vsel %vm666, %v4161, %v4163
        %v4165 = vrot.slane %v4127, 5
        %v4166 = vsel %vm666, %v4163, %v4165
        %v4167 = vrot.slane %v4128, 5
        %v4168 = vsel %vm666, %v4165, %v4167
        %v4169 = vrot.slane %v4129, 5
        %v4170 = vsel %vm666, %v4167, %v4169
        %v4171 = vrot.slane %v4130, 5
        %v4172 = vsel %vm666, %v4169, %v4171
        %v4173 = vrot.slane %v4131, 5
        %v4174 = vsel %vm666, %v4171, %v4173
        %v4175 = vrot.slane %v4132, 5
        %v4176 = vsel %vm666, %v4173, %v4175
        %v4177 = vrot.slane %v4133, 5
        %v4178 = vsel %vm666, %v4175, %v4177
        %v4179 = vrot.slane %v4134, 5
        %v4180 = vsel %vm666, %v4177, %v4179
        %v4181 = vrot.slane %v4135, 5
        %v4182 = vsel %vm666, %v4179, %v4181
        %v4183 = vrot.slane %v4136, 5
        %v4184 = vsel %vm666, %v4181, %v4183
        %v4185 = vrot.slane %v4137, 5
        %v4186 = vsel %vm666, %v4183, %v4185
        %s4187 = scalar_lea.vmem [#allocation6], 384
        %v4188 = vld [vmem:[%s4187] sm:$0xf]
        %v4189 = vld [vmem:[%s4187 + $0x4] sm:$0xf]
        %v4190 = vld [vmem:[%s4187 + $0x8] sm:$0xf]
        %v4191 = vld [vmem:[%s4187 + $0xc] sm:$0xf]
        %v4192 = vld [vmem:[%s4187 + $0x10] sm:$0xf]
        %v4193 = vld [vmem:[%s4187 + $0x14] sm:$0xf]
        %v4194 = vld [vmem:[%s4187 + $0x18] sm:$0xf]
        %v4195 = vld [vmem:[%s4187 + $0x1c] sm:$0xf]
        %v4196 = vld [vmem:[%s4187 + $0x20] sm:$0xf]
        %v4197 = vld [vmem:[%s4187 + $0x24] sm:$0xf]
        %v4198 = vld [vmem:[%s4187 + $0x28] sm:$0xf]
        %v4199 = vld [vmem:[%s4187 + $0x2c] sm:$0xf]
        %v4200 = vld [vmem:[%s4187 + $0x30] sm:$0xf]
        %v4201 = vld [vmem:[%s4187 + $0x34] sm:$0xf]
        %v4202 = vld [vmem:[%s4187 + $0x38] sm:$0xf]
        %v4203 = vld [vmem:[%s4187 + $0x3c] sm:$0xf]
        %v4204 = vld [vmem:[%s4187 + $0x40] sm:$0xf]
        %v4205 = vld [vmem:[%s4187 + $0x44] sm:$0xf]
        %v4206 = vld [vmem:[%s4187 + $0x48] sm:$0xf]
        %v4207 = vld [vmem:[%s4187 + $0x4c] sm:$0xf]
        %v4208 = vld [vmem:[%s4187 + $0x50] sm:$0xf]
        %v4209 = vld [vmem:[%s4187 + $0x54] sm:$0xf]
        %v4210 = vld [vmem:[%s4187 + $0x58] sm:$0xf]
        %v4211 = vld [vmem:[%s4187 + $0x5c] sm:$0xf]
        %v4212 = vld [vmem:[%s4187 + $0x60] sm:$0xf]
        %v4213 = vld [vmem:[%s4187 + $0x64] sm:$0xf]
        %v4214 = vld [vmem:[%s4187 + $0x68] sm:$0xf]
        %v4215 = vld [vmem:[%s4187 + $0x6c] sm:$0xf]
        %v4216 = vld [vmem:[%s4187 + $0x70] sm:$0xf]
        %v4217 = vld [vmem:[%s4187 + $0x74] sm:$0xf]
        %v4218 = vld [vmem:[%s4187 + $0x78] sm:$0xf]
        %v4219 = vld [vmem:[%s4187 + $0x7c] sm:$0xf]
        %v4220 = vld [vmem:[%s4187 + $0x80] sm:$0xf]
        %v4221 = vld [vmem:[%s4187 + $0x84] sm:$0xf]
        %v4222 = vld [vmem:[%s4187 + $0x88] sm:$0xf]
        %v4223 = vld [vmem:[%s4187 + $0x8c] sm:$0xf]
        %v4224 = vld [vmem:[%s4187 + $0x90] sm:$0xf]
        %v4225 = vld [vmem:[%s4187 + $0x94] sm:$0xf]
        %v4226 = vld [vmem:[%s4187 + $0x98] sm:$0xf]
        %v4227 = vld [vmem:[%s4187 + $0x9c] sm:$0xf]
        %v4228 = vld [vmem:[%s4187 + $0xa0] sm:$0xf]
        %v4229 = vld [vmem:[%s4187 + $0xa4] sm:$0xf]
        %v4230 = vld [vmem:[%s4187 + $0xa8] sm:$0xf]
        %v4231 = vld [vmem:[%s4187 + $0xac] sm:$0xf]
        %v4232 = vld [vmem:[%s4187 + $0xb0] sm:$0xf]
        %v4233 = vld [vmem:[%s4187 + $0xb4] sm:$0xf]
        %v4234 = vld [vmem:[%s4187 + $0xb8] sm:$0xf]
        %v4235 = vld [vmem:[%s4187 + $0xbc] sm:$0xf]
        %v4237 = vshrl.u32 %v3751, 16
        %v4239 = vrot.slane %v4237, 3
        %v4240 = vshll.u32 %v3751, 16
        %v4242 = vrot.slane %v4240, 4
        %v4243 = vor.u32 %v4239, %v4242
        %v4245 = vshrl.u32 %v3752, 16
        %v4247 = vrot.slane %v4245, 3
        %v4248 = vshll.u32 %v3752, 16
        %v4250 = vrot.slane %v4248, 4
        %v4251 = vor.u32 %v4247, %v4250
        %v4252 = vsel %vm1098, %v4243, %v4251
        %v4254 = vshrl.u32 %v3807, 16
        %v4256 = vrot.slane %v4254, 3
        %v4257 = vshll.u32 %v3807, 16
        %v4259 = vrot.slane %v4257, 4
        %v4260 = vor.u32 %v4256, %v4259
        %v4262 = vshrl.u32 %v3816, 16
        %v4264 = vrot.slane %v4262, 3
        %v4265 = vshll.u32 %v3816, 16
        %v4267 = vrot.slane %v4265, 4
        %v4268 = vor.u32 %v4264, %v4267
        %v4269 = vsel %vm1098, %v4260, %v4268
        %v4271 = vshrl.u32 %v4138, 16
        %v4273 = vrot.slane %v4271, 3
        %v4274 = vshll.u32 %v4138, 16
        %v4276 = vrot.slane %v4274, 4
        %v4277 = vor.u32 %v4273, %v4276
        %v4279 = vshrl.u32 %v4140, 16
        %v4281 = vrot.slane %v4279, 3
        %v4282 = vshll.u32 %v4140, 16
        %v4284 = vrot.slane %v4282, 4
        %v4285 = vor.u32 %v4281, %v4284
        %v4286 = vsel %vm1098, %v4277, %v4285
        %v4288 = vshrl.u32 %v3753, 16
        %v4290 = vrot.slane %v4288, 3
        %v4291 = vshll.u32 %v3753, 16
        %v4293 = vrot.slane %v4291, 4
        %v4294 = vor.u32 %v4290, %v4293
        %v4295 = vsel %vm1098, %v4251, %v4294
        %v4297 = vshrl.u32 %v3825, 16
        %v4299 = vrot.slane %v4297, 3
        %v4300 = vshll.u32 %v3825, 16
        %v4302 = vrot.slane %v4300, 4
        %v4303 = vor.u32 %v4299, %v4302
        %v4304 = vsel %vm1098, %v4268, %v4303
        %v4306 = vshrl.u32 %v4142, 16
        %v4308 = vrot.slane %v4306, 3
        %v4309 = vshll.u32 %v4142, 16
        %v4311 = vrot.slane %v4309, 4
        %v4312 = vor.u32 %v4308, %v4311
        %v4313 = vsel %vm1098, %v4285, %v4312
        %v4315 = vshrl.u32 %v3754, 16
        %v4317 = vrot.slane %v4315, 3
        %v4318 = vshll.u32 %v3754, 16
        %v4320 = vrot.slane %v4318, 4
        %v4321 = vor.u32 %v4317, %v4320
        %v4322 = vsel %vm1098, %v4294, %v4321
        %v4324 = vshrl.u32 %v3834, 16
        %v4326 = vrot.slane %v4324, 3
        %v4327 = vshll.u32 %v3834, 16
        %v4329 = vrot.slane %v4327, 4
        %v4330 = vor.u32 %v4326, %v4329
        %v4331 = vsel %vm1098, %v4303, %v4330
        %v4333 = vshrl.u32 %v4144, 16
        %v4335 = vrot.slane %v4333, 3
        %v4336 = vshll.u32 %v4144, 16
        %v4338 = vrot.slane %v4336, 4
        %v4339 = vor.u32 %v4335, %v4338
        %v4340 = vsel %vm1098, %v4312, %v4339
        %v4342 = vshrl.u32 %v3755, 16
        %v4344 = vrot.slane %v4342, 3
        %v4345 = vshll.u32 %v3755, 16
        %v4347 = vrot.slane %v4345, 4
        %v4348 = vor.u32 %v4344, %v4347
        %v4349 = vsel %vm1098, %v4321, %v4348
        %v4351 = vshrl.u32 %v3843, 16
        %v4353 = vrot.slane %v4351, 3
        %v4354 = vshll.u32 %v3843, 16
        %v4356 = vrot.slane %v4354, 4
        %v4357 = vor.u32 %v4353, %v4356
        %v4358 = vsel %vm1098, %v4330, %v4357
        %v4360 = vshrl.u32 %v4146, 16
        %v4362 = vrot.slane %v4360, 3
        %v4363 = vshll.u32 %v4146, 16
        %v4365 = vrot.slane %v4363, 4
        %v4366 = vor.u32 %v4362, %v4365
        %v4367 = vsel %vm1098, %v4339, %v4366
        %v4369 = vshrl.u32 %v3756, 16
        %v4371 = vrot.slane %v4369, 3
        %v4372 = vshll.u32 %v3756, 16
        %v4374 = vrot.slane %v4372, 4
        %v4375 = vor.u32 %v4371, %v4374
        %v4376 = vsel %vm1098, %v4348, %v4375
        %v4378 = vshrl.u32 %v3852, 16
        %v4380 = vrot.slane %v4378, 3
        %v4381 = vshll.u32 %v3852, 16
        %v4383 = vrot.slane %v4381, 4
        %v4384 = vor.u32 %v4380, %v4383
        %v4385 = vsel %vm1098, %v4357, %v4384
        %v4387 = vshrl.u32 %v4148, 16
        %v4389 = vrot.slane %v4387, 3
        %v4390 = vshll.u32 %v4148, 16
        %v4392 = vrot.slane %v4390, 4
        %v4393 = vor.u32 %v4389, %v4392
        %v4394 = vsel %vm1098, %v4366, %v4393
        %v4396 = vshrl.u32 %v3757, 16
        %v4398 = vrot.slane %v4396, 3
        %v4399 = vshll.u32 %v3757, 16
        %v4401 = vrot.slane %v4399, 4
        %v4402 = vor.u32 %v4398, %v4401
        %v4403 = vsel %vm1098, %v4375, %v4402
        %v4405 = vshrl.u32 %v3861, 16
        %v4407 = vrot.slane %v4405, 3
        %v4408 = vshll.u32 %v3861, 16
        %v4410 = vrot.slane %v4408, 4
        %v4411 = vor.u32 %v4407, %v4410
        %v4412 = vsel %vm1098, %v4384, %v4411
        %v4414 = vshrl.u32 %v4150, 16
        %v4416 = vrot.slane %v4414, 3
        %v4417 = vshll.u32 %v4150, 16
        %v4419 = vrot.slane %v4417, 4
        %v4420 = vor.u32 %v4416, %v4419
        %v4421 = vsel %vm1098, %v4393, %v4420
        %v4423 = vshrl.u32 %v3758, 16
        %v4425 = vrot.slane %v4423, 3
        %v4426 = vshll.u32 %v3758, 16
        %v4428 = vrot.slane %v4426, 4
        %v4429 = vor.u32 %v4425, %v4428
        %v4430 = vsel %vm1098, %v4402, %v4429
        %v4432 = vshrl.u32 %v3870, 16
        %v4434 = vrot.slane %v4432, 3
        %v4435 = vshll.u32 %v3870, 16
        %v4437 = vrot.slane %v4435, 4
        %v4438 = vor.u32 %v4434, %v4437
        %v4439 = vsel %vm1098, %v4411, %v4438
        %v4441 = vshrl.u32 %v4152, 16
        %v4443 = vrot.slane %v4441, 3
        %v4444 = vshll.u32 %v4152, 16
        %v4446 = vrot.slane %v4444, 4
        %v4447 = vor.u32 %v4443, %v4446
        %v4448 = vsel %vm1098, %v4420, %v4447
        %v4450 = vshrl.u32 %v3759, 16
        %v4452 = vrot.slane %v4450, 3
        %v4453 = vshll.u32 %v3759, 16
        %v4455 = vrot.slane %v4453, 4
        %v4456 = vor.u32 %v4452, %v4455
        %v4457 = vsel %vm1098, %v4429, %v4456
        %v4459 = vshrl.u32 %v3879, 16
        %v4461 = vrot.slane %v4459, 3
        %v4462 = vshll.u32 %v3879, 16
        %v4464 = vrot.slane %v4462, 4
        %v4465 = vor.u32 %v4461, %v4464
        %v4466 = vsel %vm1098, %v4438, %v4465
        %v4468 = vshrl.u32 %v4154, 16
        %v4470 = vrot.slane %v4468, 3
        %v4471 = vshll.u32 %v4154, 16
        %v4473 = vrot.slane %v4471, 4
        %v4474 = vor.u32 %v4470, %v4473
        %v4475 = vsel %vm1098, %v4447, %v4474
        %v4477 = vshrl.u32 %v3760, 16
        %v4479 = vrot.slane %v4477, 3
        %v4480 = vshll.u32 %v3760, 16
        %v4482 = vrot.slane %v4480, 4
        %v4483 = vor.u32 %v4479, %v4482
        %v4484 = vsel %vm1098, %v4456, %v4483
        %v4486 = vshrl.u32 %v3888, 16
        %v4488 = vrot.slane %v4486, 3
        %v4489 = vshll.u32 %v3888, 16
        %v4491 = vrot.slane %v4489, 4
        %v4492 = vor.u32 %v4488, %v4491
        %v4493 = vsel %vm1098, %v4465, %v4492
        %v4495 = vshrl.u32 %v4156, 16
        %v4497 = vrot.slane %v4495, 3
        %v4498 = vshll.u32 %v4156, 16
        %v4500 = vrot.slane %v4498, 4
        %v4501 = vor.u32 %v4497, %v4500
        %v4502 = vsel %vm1098, %v4474, %v4501
        %v4504 = vshrl.u32 %v3761, 16
        %v4506 = vrot.slane %v4504, 3
        %v4507 = vshll.u32 %v3761, 16
        %v4509 = vrot.slane %v4507, 4
        %v4510 = vor.u32 %v4506, %v4509
        %v4511 = vsel %vm1098, %v4483, %v4510
        %v4513 = vshrl.u32 %v3897, 16
        %v4515 = vrot.slane %v4513, 3
        %v4516 = vshll.u32 %v3897, 16
        %v4518 = vrot.slane %v4516, 4
        %v4519 = vor.u32 %v4515, %v4518
        %v4520 = vsel %vm1098, %v4492, %v4519
        %v4522 = vshrl.u32 %v4158, 16
        %v4524 = vrot.slane %v4522, 3
        %v4525 = vshll.u32 %v4158, 16
        %v4527 = vrot.slane %v4525, 4
        %v4528 = vor.u32 %v4524, %v4527
        %v4529 = vsel %vm1098, %v4501, %v4528
        %v4531 = vshrl.u32 %v3762, 16
        %v4533 = vrot.slane %v4531, 3
        %v4534 = vshll.u32 %v3762, 16
        %v4536 = vrot.slane %v4534, 4
        %v4537 = vor.u32 %v4533, %v4536
        %v4538 = vsel %vm1098, %v4510, %v4537
        %v4540 = vshrl.u32 %v3906, 16
        %v4542 = vrot.slane %v4540, 3
        %v4543 = vshll.u32 %v3906, 16
        %v4545 = vrot.slane %v4543, 4
        %v4546 = vor.u32 %v4542, %v4545
        %v4547 = vsel %vm1098, %v4519, %v4546
        %v4549 = vshrl.u32 %v4160, 16
        %v4551 = vrot.slane %v4549, 3
        %v4552 = vshll.u32 %v4160, 16
        %v4554 = vrot.slane %v4552, 4
        %v4555 = vor.u32 %v4551, %v4554
        %v4556 = vsel %vm1098, %v4528, %v4555
        %v4558 = vshrl.u32 %v3763, 16
        %v4560 = vrot.slane %v4558, 3
        %v4561 = vshll.u32 %v3763, 16
        %v4563 = vrot.slane %v4561, 4
        %v4564 = vor.u32 %v4560, %v4563
        %v4565 = vsel %vm1098, %v4537, %v4564
        %v4567 = vshrl.u32 %v3915, 16
        %v4569 = vrot.slane %v4567, 3
        %v4570 = vshll.u32 %v3915, 16
        %v4572 = vrot.slane %v4570, 4
        %v4573 = vor.u32 %v4569, %v4572
        %v4574 = vsel %vm1098, %v4546, %v4573
        %v4576 = vshrl.u32 %v4162, 16
        %v4578 = vrot.slane %v4576, 3
        %v4579 = vshll.u32 %v4162, 16
        %v4581 = vrot.slane %v4579, 4
        %v4582 = vor.u32 %v4578, %v4581
        %v4583 = vsel %vm1098, %v4555, %v4582
        %v4585 = vshrl.u32 %v3764, 16
        %v4587 = vrot.slane %v4585, 3
        %v4588 = vshll.u32 %v3764, 16
        %v4590 = vrot.slane %v4588, 4
        %v4591 = vor.u32 %v4587, %v4590
        %v4592 = vsel %vm1098, %v4564, %v4591
        %v4594 = vshrl.u32 %v3924, 16
        %v4596 = vrot.slane %v4594, 3
        %v4597 = vshll.u32 %v3924, 16
        %v4599 = vrot.slane %v4597, 4
        %v4600 = vor.u32 %v4596, %v4599
        %v4601 = vsel %vm1098, %v4573, %v4600
        %v4603 = vshrl.u32 %v4164, 16
        %v4605 = vrot.slane %v4603, 3
        %v4606 = vshll.u32 %v4164, 16
        %v4608 = vrot.slane %v4606, 4
        %v4609 = vor.u32 %v4605, %v4608
        %v4610 = vsel %vm1098, %v4582, %v4609
        %v4612 = vshrl.u32 %v3765, 16
        %v4614 = vrot.slane %v4612, 3
        %v4615 = vshll.u32 %v3765, 16
        %v4617 = vrot.slane %v4615, 4
        %v4618 = vor.u32 %v4614, %v4617
        %v4619 = vsel %vm1098, %v4591, %v4618
        %v4621 = vshrl.u32 %v3933, 16
        %v4623 = vrot.slane %v4621, 3
        %v4624 = vshll.u32 %v3933, 16
        %v4626 = vrot.slane %v4624, 4
        %v4627 = vor.u32 %v4623, %v4626
        %v4628 = vsel %vm1098, %v4600, %v4627
        %v4630 = vshrl.u32 %v4166, 16
        %v4632 = vrot.slane %v4630, 3
        %v4633 = vshll.u32 %v4166, 16
        %v4635 = vrot.slane %v4633, 4
        %v4636 = vor.u32 %v4632, %v4635
        %v4637 = vsel %vm1098, %v4609, %v4636
        %v4639 = vshrl.u32 %v3766, 16
        %v4641 = vrot.slane %v4639, 3
        %v4642 = vshll.u32 %v3766, 16
        %v4644 = vrot.slane %v4642, 4
        %v4645 = vor.u32 %v4641, %v4644
        %v4646 = vsel %vm1098, %v4618, %v4645
        %v4648 = vshrl.u32 %v3942, 16
        %v4650 = vrot.slane %v4648, 3
        %v4651 = vshll.u32 %v3942, 16
        %v4653 = vrot.slane %v4651, 4
        %v4654 = vor.u32 %v4650, %v4653
        %v4655 = vsel %vm1098, %v4627, %v4654
        %v4657 = vshrl.u32 %v4168, 16
        %v4659 = vrot.slane %v4657, 3
        %v4660 = vshll.u32 %v4168, 16
        %v4662 = vrot.slane %v4660, 4
        %v4663 = vor.u32 %v4659, %v4662
        %v4664 = vsel %vm1098, %v4636, %v4663
        %v4666 = vshrl.u32 %v3767, 16
        %v4668 = vrot.slane %v4666, 3
        %v4669 = vshll.u32 %v3767, 16
        %v4671 = vrot.slane %v4669, 4
        %v4672 = vor.u32 %v4668, %v4671
        %v4673 = vsel %vm1098, %v4645, %v4672
        %v4675 = vshrl.u32 %v3951, 16
        %v4677 = vrot.slane %v4675, 3
        %v4678 = vshll.u32 %v3951, 16
        %v4680 = vrot.slane %v4678, 4
        %v4681 = vor.u32 %v4677, %v4680
        %v4682 = vsel %vm1098, %v4654, %v4681
        %v4684 = vshrl.u32 %v4170, 16
        %v4686 = vrot.slane %v4684, 3
        %v4687 = vshll.u32 %v4170, 16
        %v4689 = vrot.slane %v4687, 4
        %v4690 = vor.u32 %v4686, %v4689
        %v4691 = vsel %vm1098, %v4663, %v4690
        %v4693 = vshrl.u32 %v3768, 16
        %v4695 = vrot.slane %v4693, 3
        %v4696 = vshll.u32 %v3768, 16
        %v4698 = vrot.slane %v4696, 4
        %v4699 = vor.u32 %v4695, %v4698
        %v4700 = vsel %vm1098, %v4672, %v4699
        %v4702 = vshrl.u32 %v3960, 16
        %v4704 = vrot.slane %v4702, 3
        %v4705 = vshll.u32 %v3960, 16
        %v4707 = vrot.slane %v4705, 4
        %v4708 = vor.u32 %v4704, %v4707
        %v4709 = vsel %vm1098, %v4681, %v4708
        %v4711 = vshrl.u32 %v4172, 16
        %v4713 = vrot.slane %v4711, 3
        %v4714 = vshll.u32 %v4172, 16
        %v4716 = vrot.slane %v4714, 4
        %v4717 = vor.u32 %v4713, %v4716
        %v4718 = vsel %vm1098, %v4690, %v4717
        %v4720 = vshrl.u32 %v3769, 16
        %v4722 = vrot.slane %v4720, 3
        %v4723 = vshll.u32 %v3769, 16
        %v4725 = vrot.slane %v4723, 4
        %v4726 = vor.u32 %v4722, %v4725
        %v4727 = vsel %vm1098, %v4699, %v4726
        %v4729 = vshrl.u32 %v3969, 16
        %v4731 = vrot.slane %v4729, 3
        %v4732 = vshll.u32 %v3969, 16
        %v4734 = vrot.slane %v4732, 4
        %v4735 = vor.u32 %v4731, %v4734
        %v4736 = vsel %vm1098, %v4708, %v4735
        %v4738 = vshrl.u32 %v4174, 16
        %v4740 = vrot.slane %v4738, 3
        %v4741 = vshll.u32 %v4174, 16
        %v4743 = vrot.slane %v4741, 4
        %v4744 = vor.u32 %v4740, %v4743
        %v4745 = vsel %vm1098, %v4717, %v4744
        %v4747 = vshrl.u32 %v3770, 16
        %v4749 = vrot.slane %v4747, 3
        %v4750 = vshll.u32 %v3770, 16
        %v4752 = vrot.slane %v4750, 4
        %v4753 = vor.u32 %v4749, %v4752
        %v4754 = vsel %vm1098, %v4726, %v4753
        %v4756 = vshrl.u32 %v3978, 16
        %v4758 = vrot.slane %v4756, 3
        %v4759 = vshll.u32 %v3978, 16
        %v4761 = vrot.slane %v4759, 4
        %v4762 = vor.u32 %v4758, %v4761
        %v4763 = vsel %vm1098, %v4735, %v4762
        %v4765 = vshrl.u32 %v4176, 16
        %v4767 = vrot.slane %v4765, 3
        %v4768 = vshll.u32 %v4176, 16
        %v4770 = vrot.slane %v4768, 4
        %v4771 = vor.u32 %v4767, %v4770
        %v4772 = vsel %vm1098, %v4744, %v4771
        %v4774 = vshrl.u32 %v3771, 16
        %v4776 = vrot.slane %v4774, 3
        %v4777 = vshll.u32 %v3771, 16
        %v4779 = vrot.slane %v4777, 4
        %v4780 = vor.u32 %v4776, %v4779
        %v4781 = vsel %vm1098, %v4753, %v4780
        %v4783 = vshrl.u32 %v3987, 16
        %v4785 = vrot.slane %v4783, 3
        %v4786 = vshll.u32 %v3987, 16
        %v4788 = vrot.slane %v4786, 4
        %v4789 = vor.u32 %v4785, %v4788
        %v4790 = vsel %vm1098, %v4762, %v4789
        %v4792 = vshrl.u32 %v4178, 16
        %v4794 = vrot.slane %v4792, 3
        %v4795 = vshll.u32 %v4178, 16
        %v4797 = vrot.slane %v4795, 4
        %v4798 = vor.u32 %v4794, %v4797
        %v4799 = vsel %vm1098, %v4771, %v4798
        %v4801 = vshrl.u32 %v3772, 16
        %v4803 = vrot.slane %v4801, 3
        %v4804 = vshll.u32 %v3772, 16
        %v4806 = vrot.slane %v4804, 4
        %v4807 = vor.u32 %v4803, %v4806
        %v4808 = vsel %vm1098, %v4780, %v4807
        %v4810 = vshrl.u32 %v3996, 16
        %v4812 = vrot.slane %v4810, 3
        %v4813 = vshll.u32 %v3996, 16
        %v4815 = vrot.slane %v4813, 4
        %v4816 = vor.u32 %v4812, %v4815
        %v4817 = vsel %vm1098, %v4789, %v4816
        %v4819 = vshrl.u32 %v4180, 16
        %v4821 = vrot.slane %v4819, 3
        %v4822 = vshll.u32 %v4180, 16
        %v4824 = vrot.slane %v4822, 4
        %v4825 = vor.u32 %v4821, %v4824
        %v4826 = vsel %vm1098, %v4798, %v4825
        %v4828 = vshrl.u32 %v3773, 16
        %v4830 = vrot.slane %v4828, 3
        %v4831 = vshll.u32 %v3773, 16
        %v4833 = vrot.slane %v4831, 4
        %v4834 = vor.u32 %v4830, %v4833
        %v4835 = vsel %vm1098, %v4807, %v4834
        %v4837 = vshrl.u32 %v4005, 16
        %v4839 = vrot.slane %v4837, 3
        %v4840 = vshll.u32 %v4005, 16
        %v4842 = vrot.slane %v4840, 4
        %v4843 = vor.u32 %v4839, %v4842
        %v4844 = vsel %vm1098, %v4816, %v4843
        %v4846 = vshrl.u32 %v4182, 16
        %v4848 = vrot.slane %v4846, 3
        %v4849 = vshll.u32 %v4182, 16
        %v4851 = vrot.slane %v4849, 4
        %v4852 = vor.u32 %v4848, %v4851
        %v4853 = vsel %vm1098, %v4825, %v4852
        %v4855 = vshrl.u32 %v3774, 16
        %v4857 = vrot.slane %v4855, 3
        %v4858 = vshll.u32 %v3774, 16
        %v4860 = vrot.slane %v4858, 4
        %v4861 = vor.u32 %v4857, %v4860
        %v4862 = vsel %vm1098, %v4834, %v4861
        %v4864 = vshrl.u32 %v4014, 16
        %v4866 = vrot.slane %v4864, 3
        %v4867 = vshll.u32 %v4014, 16
        %v4869 = vrot.slane %v4867, 4
        %v4870 = vor.u32 %v4866, %v4869
        %v4871 = vsel %vm1098, %v4843, %v4870
        %v4873 = vshrl.u32 %v4184, 16
        %v4875 = vrot.slane %v4873, 3
        %v4876 = vshll.u32 %v4184, 16
        %v4878 = vrot.slane %v4876, 4
        %v4879 = vor.u32 %v4875, %v4878
        %v4880 = vsel %vm1098, %v4852, %v4879
        %v4882 = vshrl.u32 %v3775, 16
        %v4884 = vrot.slane %v4882, 3
        %v4885 = vshll.u32 %v3775, 16
        %v4887 = vrot.slane %v4885, 4
        %v4888 = vor.u32 %v4884, %v4887
        %v4889 = vsel %vm1098, %v4861, %v4888
        %v4891 = vshrl.u32 %v4013, 16
        %v4893 = vrot.slane %v4891, 3
        %v4894 = vshll.u32 %v4013, 16
        %v4896 = vrot.slane %v4894, 4
        %v4897 = vor.u32 %v4893, %v4896
        %v4898 = vsel %vm1098, %v4870, %v4897
        %v4900 = vshrl.u32 %v4186, 16
        %v4902 = vrot.slane %v4900, 3
        %v4903 = vshll.u32 %v4186, 16
        %v4905 = vrot.slane %v4903, 4
        %v4906 = vor.u32 %v4902, %v4905
        %v4907 = vsel %vm1098, %v4879, %v4906
        %v5028 = vunpack.c.l.b16 %v4188
        %v5029 = vunpack.c.l.b16 %v4189
        %v5030 = vunpack.c.l.b16 %v4190
        %v5031 = vunpack.c.l.b16 %v4191
        %v5032 = vunpack.c.l.b16 %v4192
        %v5033 = vunpack.c.l.b16 %v4193
        %v5034 = vunpack.c.l.b16 %v4194
        %v5035 = vunpack.c.l.b16 %v4195
        %v5036 = vunpack.c.l.b16 %v4196
        %v5037 = vunpack.c.l.b16 %v4197
        %v5038 = vunpack.c.l.b16 %v4198
        %v5039 = vunpack.c.l.b16 %v4199
        %v5040 = vunpack.c.l.b16 %v4200
        %v5041 = vunpack.c.l.b16 %v4201
        %v5042 = vunpack.c.l.b16 %v4202
        %v5043 = vunpack.c.l.b16 %v4203
        %v5044 = vunpack.c.l.b16 %v4204
        %v5045 = vunpack.c.l.b16 %v4205
        %v5046 = vunpack.c.l.b16 %v4206
        %v5047 = vunpack.c.l.b16 %v4207
        %v5048 = vunpack.c.l.b16 %v4208
        %v5049 = vunpack.c.l.b16 %v4209
        %v5050 = vunpack.c.l.b16 %v4210
        %v5051 = vunpack.c.l.b16 %v4211
        %v5052 = vunpack.c.l.b16 %v4212
        %v5053 = vunpack.c.l.b16 %v4213
        %v5054 = vunpack.c.l.b16 %v4214
        %v5055 = vunpack.c.l.b16 %v4215
        %v5056 = vunpack.c.l.b16 %v4216
        %v5057 = vunpack.c.l.b16 %v4217
        %v5058 = vunpack.c.l.b16 %v4218
        %v5059 = vunpack.c.l.b16 %v4219
        %v5060 = vunpack.c.l.b16 %v4220
        %v5061 = vunpack.c.l.b16 %v4221
        %v5062 = vunpack.c.l.b16 %v4222
        %v5063 = vunpack.c.l.b16 %v4223
        %v5064 = vunpack.c.l.b16 %v4224
        %v5065 = vunpack.c.l.b16 %v4225
        %v5066 = vunpack.c.l.b16 %v4226
        %v5067 = vunpack.c.l.b16 %v4227
        %v5068 = vunpack.c.l.b16 %v4228
        %v5069 = vunpack.c.l.b16 %v4229
        %v5070 = vunpack.c.l.b16 %v4230
        %v5071 = vunpack.c.l.b16 %v4231
        %v5072 = vunpack.c.l.b16 %v4232
        %v5073 = vunpack.c.l.b16 %v4233
        %v5074 = vunpack.c.l.b16 %v4234
        %v5075 = vunpack.c.l.b16 %v4235
        %v5076 = vpack.c.b16 %v5029, %v5028
        %v5077 = vpack.c.b16 %v5031, %v5030
        %v5078 = vpack.c.b16 %v5033, %v5032
        %v5079 = vpack.c.b16 %v5035, %v5034
        %v5080 = vpack.c.b16 %v5037, %v5036
        %v5081 = vpack.c.b16 %v5039, %v5038
        %v5082 = vpack.c.b16 %v5041, %v5040
        %v5083 = vpack.c.b16 %v5043, %v5042
        %v5084 = vpack.c.b16 %v5045, %v5044
        %v5085 = vpack.c.b16 %v5047, %v5046
        %v5086 = vpack.c.b16 %v5049, %v5048
        %v5087 = vpack.c.b16 %v5051, %v5050
        %v5088 = vpack.c.b16 %v5053, %v5052
        %v5089 = vpack.c.b16 %v5055, %v5054
        %v5090 = vpack.c.b16 %v5057, %v5056
        %v5091 = vpack.c.b16 %v5059, %v5058
        %v5092 = vpack.c.b16 %v5061, %v5060
        %v5093 = vpack.c.b16 %v5063, %v5062
        %v5094 = vpack.c.b16 %v5065, %v5064
        %v5095 = vpack.c.b16 %v5067, %v5066
        %v5096 = vpack.c.b16 %v5069, %v5068
        %v5097 = vpack.c.b16 %v5071, %v5070
        %v5098 = vpack.c.b16 %v5073, %v5072
        %v5099 = vpack.c.b16 %v5075, %v5074
        %5124 = vmatprep.subr.bf16.mxu0 0
        %5125 = vmatpush1.bf16.msra.mxu0 %v5076
        %5126 = vmatprep.subr.bf16.mxu0 0
        %5127 = vmatpush1.bf16.msra.mxu0 %v5077
        %5128 = vmatprep.subr.bf16.mxu0 0
        %5129 = vmatpush1.bf16.msra.mxu0 %v5078
        %5130 = vmatprep.subr.bf16.mxu0 0
        %5131 = vmatpush1.bf16.msra.mxu0 %v5079
        %5132 = vmatprep.subr.bf16.mxu0 0
        %5133 = vmatpush1.bf16.msra.mxu0 %v5080
        %5134 = vmatprep.subr.bf16.mxu0 0
        %5135 = vmatpush1.bf16.msra.mxu0 %v5081
        %5136 = vmatprep.subr.bf16.mxu0 0
        %5137 = vmatpush1.bf16.msra.mxu0 %v5082
        %5138 = vmatprep.subr.bf16.mxu0 0
        %5139 = vmatpush1.bf16.msra.mxu0 %v5083
        %5140 = vmatprep.subr.bf16.mxu0 0
        %5141 = vmatpush1.bf16.msra.mxu0 %v5084
        %5142 = vmatprep.subr.bf16.mxu0 0
        %5143 = vmatpush1.bf16.msra.mxu0 %v5085
        %5144 = vmatprep.subr.bf16.mxu0 0
        %5145 = vmatpush1.bf16.msra.mxu0 %v5086
        %5146 = vmatprep.subr.bf16.mxu0 0
        %5147 = vmatpush1.bf16.msra.mxu0 %v5087
        %5148 = vmatprep.subr.bf16.mxu0 0
        %5149 = vmatpush1.bf16.msra.mxu0 %v5088
        %5150 = vmatprep.subr.bf16.mxu0 0
        %5151 = vmatpush1.bf16.msra.mxu0 %v5089
        %5152 = vmatprep.subr.bf16.mxu0 0
        %5153 = vmatpush1.bf16.msra.mxu0 %v5090
        %5154 = vmatprep.subr.bf16.mxu0 0
        %5155 = vmatpush1.bf16.msra.mxu0 %v5091
        %5156 = vmatprep.mubr.bf16.mxu0 %v4269
        %5157 = vmatmul.mubr.bf16.gmra.mrb[0].mxu0 %v4252
        %v5158 = vpop.f32.mrb[0].mxu0
        %v5159 = vadd.f32 0.0, %v5158
        %v5160 = vpop.f32.mrb[0].mxu0
        %v5161 = vpop.f32.mrb[0].mxu0
        %v5162 = vadd.f32 0.0, %v5161
        %v5163 = vpop.f32.mrb[0].mxu0
        %5164 = vmatprep.mubr.bf16.mxu0 %v4304
        %5165 = vmatmul.mubr.bf16.gmra.mrb[0].mxu0 %v4295
        %v5166 = vpop.f32.mrb[0].mxu0
        %v5167 = vadd.f32 0.0, %v5166
        %v5168 = vpop.f32.mrb[0].mxu0
        %v5169 = vpop.f32.mrb[0].mxu0
        %v5170 = vadd.f32 0.0, %v5169
        %v5171 = vpop.f32.mrb[0].mxu0
        %5172 = vmatprep.mubr.bf16.mxu0 %v4331
        %5173 = vmatmul.mubr.bf16.gmra.mrb[0].mxu0 %v4322
        %v5174 = vpop.f32.mrb[0].mxu0
        %v5175 = vadd.f32 0.0, %v5174
        %v5176 = vpop.f32.mrb[0].mxu0
        %v5177 = vpop.f32.mrb[0].mxu0
        %v5178 = vadd.f32 0.0, %v5177
        %v5179 = vpop.f32.mrb[0].mxu0
        %5180 = vmatprep.mubr.bf16.mxu0 %v4358
        %5181 = vmatmul.mubr.bf16.gmra.mrb[0].mxu0 %v4349
        %v5182 = vpop.f32.mrb[0].mxu0
        %v5183 = vadd.f32 0.0, %v5182
        %v5184 = vpop.f32.mrb[0].mxu0
        %v5185 = vpop.f32.mrb[0].mxu0
        %v5186 = vadd.f32 0.0, %v5185
        %v5187 = vpop.f32.mrb[0].mxu0
        %5188 = vmatprep.mubr.bf16.mxu0 %v4385
        %5189 = vmatmul.mubr.bf16.gmra.mrb[0].mxu0 %v4376
        %v5190 = vpop.f32.mrb[0].mxu0
        %v5191 = vadd.f32 0.0, %v5190
        %v5192 = vpop.f32.mrb[0].mxu0
        %v5193 = vpop.f32.mrb[0].mxu0
        %v5194 = vadd.f32 0.0, %v5193
        %v5195 = vpop.f32.mrb[0].mxu0
        %5196 = vmatprep.mubr.bf16.mxu0 %v4412
        %5197 = vmatmul.mubr.bf16.gmra.mrb[0].mxu0 %v4403
        %v5198 = vpop.f32.mrb[0].mxu0
        %v5199 = vadd.f32 0.0, %v5198
        %v5200 = vpop.f32.mrb[0].mxu0
        %v5201 = vpop.f32.mrb[0].mxu0
        %v5202 = vadd.f32 0.0, %v5201
        %v5203 = vpop.f32.mrb[0].mxu0
        %5204 = vmatprep.mubr.bf16.mxu0 %v4439
        %5205 = vmatmul.mubr.bf16.gmra.mrb[0].mxu0 %v4430
        %v5206 = vpop.f32.mrb[0].mxu0
        %v5207 = vadd.f32 0.0, %v5206
        %v5208 = vpop.f32.mrb[0].mxu0
        %v5209 = vpop.f32.mrb[0].mxu0
        %v5210 = vadd.f32 0.0, %v5209
        %v5211 = vpop.f32.mrb[0].mxu0
        %5212 = vmatprep.mubr.bf16.mxu0 %v4466
        %5213 = vmatmul.mubr.bf16.gmra.mrb[0].mxu0 %v4457
        %v5214 = vpop.f32.mrb[0].mxu0
        %v5215 = vadd.f32 0.0, %v5214
        %v5216 = vpop.f32.mrb[0].mxu0
        %v5217 = vpop.f32.mrb[0].mxu0
        %v5218 = vadd.f32 0.0, %v5217
        %v5219 = vpop.f32.mrb[0].mxu0
        %5220 = vmatprep.mubr.bf16.mxu0 %v4493
        %5221 = vmatmul.mubr.bf16.gmra.mrb[0].mxu0 %v4484
        %v5222 = vpop.f32.mrb[0].mxu0
        %v5223 = vadd.f32 0.0, %v5222
        %v5224 = vpop.f32.mrb[0].mxu0
        %v5225 = vpop.f32.mrb[0].mxu0
        %v5226 = vadd.f32 0.0, %v5225
        %v5227 = vpop.f32.mrb[0].mxu0
        %5228 = vmatprep.mubr.bf16.mxu0 %v4520
        %5229 = vmatmul.mubr.bf16.gmra.mrb[0].mxu0 %v4511
        %v5230 = vpop.f32.mrb[0].mxu0
        %v5231 = vadd.f32 0.0, %v5230
        %v5232 = vpop.f32.mrb[0].mxu0
        %v5233 = vpop.f32.mrb[0].mxu0
        %v5234 = vadd.f32 0.0, %v5233
        %v5235 = vpop.f32.mrb[0].mxu0
        %5236 = vmatprep.mubr.bf16.mxu0 %v4547
        %5237 = vmatmul.mubr.bf16.gmra.mrb[0].mxu0 %v4538
        %v5238 = vpop.f32.mrb[0].mxu0
        %v5239 = vadd.f32 0.0, %v5238
        %v5240 = vpop.f32.mrb[0].mxu0
        %v5241 = vpop.f32.mrb[0].mxu0
        %v5242 = vadd.f32 0.0, %v5241
        %v5243 = vpop.f32.mrb[0].mxu0
        %5244 = vmatprep.mubr.bf16.mxu0 %v4574
        %5245 = vmatmul.mubr.bf16.gmra.mrb[0].mxu0 %v4565
        %v5246 = vpop.f32.mrb[0].mxu0
        %v5247 = vadd.f32 0.0, %v5246
        %v5248 = vpop.f32.mrb[0].mxu0
        %v5249 = vpop.f32.mrb[0].mxu0
        %v5250 = vadd.f32 0.0, %v5249
        %v5251 = vpop.f32.mrb[0].mxu0
        %5252 = vmatprep.mubr.bf16.mxu0 %v4601
        %5253 = vmatmul.mubr.bf16.gmra.mrb[0].mxu0 %v4592
        %v5254 = vpop.f32.mrb[0].mxu0
        %v5255 = vadd.f32 0.0, %v5254
        %v5256 = vpop.f32.mrb[0].mxu0
        %v5257 = vpop.f32.mrb[0].mxu0
        %v5258 = vadd.f32 0.0, %v5257
        %v5259 = vpop.f32.mrb[0].mxu0
        %5260 = vmatprep.mubr.bf16.mxu0 %v4628
        %5261 = vmatmul.mubr.bf16.gmra.mrb[0].mxu0 %v4619
        %v5262 = vpop.f32.mrb[0].mxu0
        %v5263 = vadd.f32 0.0, %v5262
        %v5264 = vpop.f32.mrb[0].mxu0
        %v5265 = vpop.f32.mrb[0].mxu0
        %v5266 = vadd.f32 0.0, %v5265
        %v5267 = vpop.f32.mrb[0].mxu0
        %5268 = vmatprep.mubr.bf16.mxu0 %v4655
        %5269 = vmatmul.mubr.bf16.gmra.mrb[0].mxu0 %v4646
        %v5270 = vpop.f32.mrb[0].mxu0
        %v5271 = vadd.f32 0.0, %v5270
        %v5272 = vpop.f32.mrb[0].mxu0
        %v5273 = vpop.f32.mrb[0].mxu0
        %v5274 = vadd.f32 0.0, %v5273
        %v5275 = vpop.f32.mrb[0].mxu0
        %5276 = vmatprep.mubr.bf16.mxu0 %v4682
        %5277 = vmatmul.mubr.bf16.gmra.mrb[0].mxu0 %v4673
        %v5278 = vpop.f32.mrb[0].mxu0
        %v5279 = vadd.f32 0.0, %v5278
        %v5280 = vpop.f32.mrb[0].mxu0
        %v5281 = vpop.f32.mrb[0].mxu0
        %v5282 = vadd.f32 0.0, %v5281
        %v5283 = vpop.f32.mrb[0].mxu0
        %5284 = vmatprep.mubr.bf16.mxu0 %v4709
        %5285 = vmatmul.mubr.bf16.gmra.mrb[0].mxu0 %v4700
        %v5286 = vpop.f32.mrb[0].mxu0
        %v5287 = vadd.f32 0.0, %v5286
        %v5288 = vpop.f32.mrb[0].mxu0
        %v5289 = vpop.f32.mrb[0].mxu0
        %v5290 = vadd.f32 0.0, %v5289
        %v5291 = vpop.f32.mrb[0].mxu0
        %5292 = vmatprep.mubr.bf16.mxu0 %v4736
        %5293 = vmatmul.mubr.bf16.gmra.mrb[0].mxu0 %v4727
        %v5294 = vpop.f32.mrb[0].mxu0
        %v5295 = vadd.f32 0.0, %v5294
        %v5296 = vpop.f32.mrb[0].mxu0
        %v5297 = vpop.f32.mrb[0].mxu0
        %v5298 = vadd.f32 0.0, %v5297
        %v5299 = vpop.f32.mrb[0].mxu0
        %5300 = vmatprep.mubr.bf16.mxu0 %v4763
        %5301 = vmatmul.mubr.bf16.gmra.mrb[0].mxu0 %v4754
        %v5302 = vpop.f32.mrb[0].mxu0
        %v5303 = vadd.f32 0.0, %v5302
        %v5304 = vpop.f32.mrb[0].mxu0
        %v5305 = vpop.f32.mrb[0].mxu0
        %v5306 = vadd.f32 0.0, %v5305
        %v5307 = vpop.f32.mrb[0].mxu0
        %5308 = vmatprep.mubr.bf16.mxu0 %v4790
        %5309 = vmatmul.mubr.bf16.gmra.mrb[0].mxu0 %v4781
        %v5310 = vpop.f32.mrb[0].mxu0
        %v5311 = vadd.f32 0.0, %v5310
        %v5312 = vpop.f32.mrb[0].mxu0
        %v5313 = vpop.f32.mrb[0].mxu0
        %v5314 = vadd.f32 0.0, %v5313
        %v5315 = vpop.f32.mrb[0].mxu0
        %5316 = vmatprep.mubr.bf16.mxu0 %v4817
        %5317 = vmatmul.mubr.bf16.gmra.mrb[0].mxu0 %v4808
        %v5318 = vpop.f32.mrb[0].mxu0
        %v5319 = vadd.f32 0.0, %v5318
        %v5320 = vpop.f32.mrb[0].mxu0
        %v5321 = vpop.f32.mrb[0].mxu0
        %v5322 = vadd.f32 0.0, %v5321
        %v5323 = vpop.f32.mrb[0].mxu0
        %5324 = vmatprep.mubr.bf16.mxu0 %v4844
        %5325 = vmatmul.mubr.bf16.gmra.mrb[0].mxu0 %v4835
        %v5326 = vpop.f32.mrb[0].mxu0
        %v5327 = vadd.f32 0.0, %v5326
        %v5328 = vpop.f32.mrb[0].mxu0
        %v5329 = vpop.f32.mrb[0].mxu0
        %v5330 = vadd.f32 0.0, %v5329
        %v5331 = vpop.f32.mrb[0].mxu0
        %5332 = vmatprep.mubr.bf16.mxu0 %v4871
        %5333 = vmatmul.mubr.bf16.gmra.mrb[0].mxu0 %v4862
        %v5334 = vpop.f32.mrb[0].mxu0
        %v5335 = vadd.f32 0.0, %v5334
        %v5336 = vpop.f32.mrb[0].mxu0
        %v5337 = vpop.f32.mrb[0].mxu0
        %v5338 = vadd.f32 0.0, %v5337
        %v5339 = vpop.f32.mrb[0].mxu0
        %5340 = vmatprep.mubr.bf16.mxu0 %v4898
        %5341 = vmatmul.mubr.bf16.gmra.mrb[0].mxu0 %v4889
        %v5342 = vpop.f32.mrb[0].mxu0
        %v5343 = vadd.f32 0.0, %v5342
        %v5344 = vpop.f32.mrb[0].mxu0
        %v5345 = vpop.f32.mrb[0].mxu0
        %v5346 = vadd.f32 0.0, %v5345
        %v5347 = vpop.f32.mrb[0].mxu0
        %5348 = vdwg.mxu0
        %5349 = vmatprep.subr.bf16.mxu0 0
        %5350 = vmatpush1.bf16.msra.mxu0 %v5092
        %5351 = vmatprep.subr.bf16.mxu0 0
        %5352 = vmatpush1.bf16.msra.mxu0 %v5093
        %5353 = vmatprep.subr.bf16.mxu0 0
        %5354 = vmatpush1.bf16.msra.mxu0 %v5094
        %5355 = vmatprep.subr.bf16.mxu0 0
        %5356 = vmatpush1.bf16.msra.mxu0 %v5095
        %5357 = vmatprep.subr.bf16.mxu0 0
        %5358 = vmatpush1.bf16.msra.mxu0 %v5096
        %5359 = vmatprep.subr.bf16.mxu0 0
        %5360 = vmatpush1.bf16.msra.mxu0 %v5097
        %5361 = vmatprep.subr.bf16.mxu0 0
        %5362 = vmatpush1.bf16.msra.mxu0 %v5098
        %5363 = vmatprep.subr.bf16.mxu0 0
        %5364 = vmatpush1.bf16.msra.mxu0 %v5099
        %5365 = vmatprep.subr.bf16.mxu0 0
        %5366 = vmatpush1.bf16.msra.mxu0 0
        %5367 = vmatprep.subr.bf16.mxu0 0
        %5368 = vmatpush1.bf16.msra.mxu0 0
        %5369 = vmatprep.subr.bf16.mxu0 0
        %5370 = vmatpush1.bf16.msra.mxu0 0
        %5371 = vmatprep.subr.bf16.mxu0 0
        %5372 = vmatpush1.bf16.msra.mxu0 0
        %5373 = vmatprep.subr.bf16.mxu0 0
        %5374 = vmatpush1.bf16.msra.mxu0 0
        %5375 = vmatprep.subr.bf16.mxu0 0
        %5376 = vmatpush1.bf16.msra.mxu0 0
        %5377 = vmatprep.subr.bf16.mxu0 0
        %5378 = vmatpush1.bf16.msra.mxu0 0
        %5379 = vmatprep.subr.bf16.mxu0 0
        %5380 = vmatpush1.bf16.msra.mxu0 0
        %5381 = vmatprep.mubr.bf16.mxu0 0
        %5382 = vmatmul.mubr.bf16.gmra.mrb[0].mxu0 %v4286
        %v5383 = vpop.f32.mrb[0].mxu0
        %v5384 = vadd.f32 %v5159, %v5383
        %v5385 = vpop.f32.mrb[0].mxu0
        %v5386 = vpop.f32.mrb[0].mxu0
        %v5387 = vadd.f32 %v5162, %v5386
        %v5388 = vpop.f32.mrb[0].mxu0
        %5389 = vmatprep.mubr.bf16.mxu0 0
        %5390 = vmatmul.mubr.bf16.gmra.mrb[0].mxu0 %v4313
        %v5391 = vpop.f32.mrb[0].mxu0
        %v5392 = vadd.f32 %v5167, %v5391
        %v5393 = vpop.f32.mrb[0].mxu0
        %v5394 = vpop.f32.mrb[0].mxu0
        %v5395 = vadd.f32 %v5170, %v5394
        %v5396 = vpop.f32.mrb[0].mxu0
        %5397 = vmatprep.mubr.bf16.mxu0 0
        %5398 = vmatmul.mubr.bf16.gmra.mrb[0].mxu0 %v4340
        %v5399 = vpop.f32.mrb[0].mxu0
        %v5400 = vadd.f32 %v5175, %v5399
        %v5401 = vpop.f32.mrb[0].mxu0
        %v5402 = vpop.f32.mrb[0].mxu0
        %v5403 = vadd.f32 %v5178, %v5402
        %v5404 = vpop.f32.mrb[0].mxu0
        %5405 = vmatprep.mubr.bf16.mxu0 0
        %5406 = vmatmul.mubr.bf16.gmra.mrb[0].mxu0 %v4367
        %v5407 = vpop.f32.mrb[0].mxu0
        %v5408 = vadd.f32 %v5183, %v5407
        %v5409 = vpop.f32.mrb[0].mxu0
        %v5410 = vpop.f32.mrb[0].mxu0
        %v5411 = vadd.f32 %v5186, %v5410
        %v5412 = vpop.f32.mrb[0].mxu0
        %5413 = vmatprep.mubr.bf16.mxu0 0
        %5414 = vmatmul.mubr.bf16.gmra.mrb[0].mxu0 %v4394
        %v5415 = vpop.f32.mrb[0].mxu0
        %v5416 = vadd.f32 %v5191, %v5415
        %v5417 = vpop.f32.mrb[0].mxu0
        %v5418 = vpop.f32.mrb[0].mxu0
        %v5419 = vadd.f32 %v5194, %v5418
        %v5420 = vpop.f32.mrb[0].mxu0
        %5421 = vmatprep.mubr.bf16.mxu0 0
        %5422 = vmatmul.mubr.bf16.gmra.mrb[0].mxu0 %v4421
        %v5423 = vpop.f32.mrb[0].mxu0
        %v5424 = vadd.f32 %v5199, %v5423
        %v5425 = vpop.f32.mrb[0].mxu0
        %v5426 = vpop.f32.mrb[0].mxu0
        %v5427 = vadd.f32 %v5202, %v5426
        %v5428 = vpop.f32.mrb[0].mxu0
        %5429 = vmatprep.mubr.bf16.mxu0 0
        %5430 = vmatmul.mubr.bf16.gmra.mrb[0].mxu0 %v4448
        %v5431 = vpop.f32.mrb[0].mxu0
        %v5432 = vadd.f32 %v5207, %v5431
        %v5433 = vpop.f32.mrb[0].mxu0
        %v5434 = vpop.f32.mrb[0].mxu0
        %v5435 = vadd.f32 %v5210, %v5434
        %v5436 = vpop.f32.mrb[0].mxu0
        %5437 = vmatprep.mubr.bf16.mxu0 0
        %5438 = vmatmul.mubr.bf16.gmra.mrb[0].mxu0 %v4475
        %v5439 = vpop.f32.mrb[0].mxu0
        %v5440 = vadd.f32 %v5215, %v5439
        %v5441 = vpop.f32.mrb[0].mxu0
        %v5442 = vpop.f32.mrb[0].mxu0
        %v5443 = vadd.f32 %v5218, %v5442
        %v5444 = vpop.f32.mrb[0].mxu0
        %5445 = vmatprep.mubr.bf16.mxu0 0
        %5446 = vmatmul.mubr.bf16.gmra.mrb[0].mxu0 %v4502
        %v5447 = vpop.f32.mrb[0].mxu0
        %v5448 = vadd.f32 %v5223, %v5447
        %v5449 = vpop.f32.mrb[0].mxu0
        %v5450 = vpop.f32.mrb[0].mxu0
        %v5451 = vadd.f32 %v5226, %v5450
        %v5452 = vpop.f32.mrb[0].mxu0
        %5453 = vmatprep.mubr.bf16.mxu0 0
        %5454 = vmatmul.mubr.bf16.gmra.mrb[0].mxu0 %v4529
        %v5455 = vpop.f32.mrb[0].mxu0
        %v5456 = vadd.f32 %v5231, %v5455
        %v5457 = vpop.f32.mrb[0].mxu0
        %v5458 = vpop.f32.mrb[0].mxu0
        %v5459 = vadd.f32 %v5234, %v5458
        %v5460 = vpop.f32.mrb[0].mxu0
        %5461 = vmatprep.mubr.bf16.mxu0 0
        %5462 = vmatmul.mubr.bf16.gmra.mrb[0].mxu0 %v4556
        %v5463 = vpop.f32.mrb[0].mxu0
        %v5464 = vadd.f32 %v5239, %v5463
        %v5465 = vpop.f32.mrb[0].mxu0
        %v5466 = vpop.f32.mrb[0].mxu0
        %v5467 = vadd.f32 %v5242, %v5466
        %v5468 = vpop.f32.mrb[0].mxu0
        %5469 = vmatprep.mubr.bf16.mxu0 0
        %5470 = vmatmul.mubr.bf16.gmra.mrb[0].mxu0 %v4583
        %v5471 = vpop.f32.mrb[0].mxu0
        %v5472 = vadd.f32 %v5247, %v5471
        %v5473 = vpop.f32.mrb[0].mxu0
        %v5474 = vpop.f32.mrb[0].mxu0
        %v5475 = vadd.f32 %v5250, %v5474
        %v5476 = vpop.f32.mrb[0].mxu0
        %5477 = vmatprep.mubr.bf16.mxu0 0
        %5478 = vmatmul.mubr.bf16.gmra.mrb[0].mxu0 %v4610
        %v5479 = vpop.f32.mrb[0].mxu0
        %v5480 = vadd.f32 %v5255, %v5479
        %v5481 = vpop.f32.mrb[0].mxu0
        %v5482 = vpop.f32.mrb[0].mxu0
        %v5483 = vadd.f32 %v5258, %v5482
        %v5484 = vpop.f32.mrb[0].mxu0
        %5485 = vmatprep.mubr.bf16.mxu0 0
        %5486 = vmatmul.mubr.bf16.gmra.mrb[0].mxu0 %v4637
        %v5487 = vpop.f32.mrb[0].mxu0
        %v5488 = vadd.f32 %v5263, %v5487
        %v5489 = vpop.f32.mrb[0].mxu0
        %v5490 = vpop.f32.mrb[0].mxu0
        %v5491 = vadd.f32 %v5266, %v5490
        %v5492 = vpop.f32.mrb[0].mxu0
        %5493 = vmatprep.mubr.bf16.mxu0 0
        %5494 = vmatmul.mubr.bf16.gmra.mrb[0].mxu0 %v4664
        %v5495 = vpop.f32.mrb[0].mxu0
        %v5496 = vadd.f32 %v5271, %v5495
        %v5497 = vpop.f32.mrb[0].mxu0
        %v5498 = vpop.f32.mrb[0].mxu0
        %v5499 = vadd.f32 %v5274, %v5498
        %v5500 = vpop.f32.mrb[0].mxu0
        %5501 = vmatprep.mubr.bf16.mxu0 0
        %5502 = vmatmul.mubr.bf16.gmra.mrb[0].mxu0 %v4691
        %v5503 = vpop.f32.mrb[0].mxu0
        %v5504 = vadd.f32 %v5279, %v5503
        %v5505 = vpop.f32.mrb[0].mxu0
        %v5506 = vpop.f32.mrb[0].mxu0
        %v5507 = vadd.f32 %v5282, %v5506
        %v5508 = vpop.f32.mrb[0].mxu0
        %5509 = vmatprep.mubr.bf16.mxu0 0
        %5510 = vmatmul.mubr.bf16.gmra.mrb[0].mxu0 %v4718
        %v5511 = vpop.f32.mrb[0].mxu0
        %v5512 = vadd.f32 %v5287, %v5511
        %v5513 = vpop.f32.mrb[0].mxu0
        %v5514 = vpop.f32.mrb[0].mxu0
        %v5515 = vadd.f32 %v5290, %v5514
        %v5516 = vpop.f32.mrb[0].mxu0
        %5517 = vmatprep.mubr.bf16.mxu0 0
        %5518 = vmatmul.mubr.bf16.gmra.mrb[0].mxu0 %v4745
        %v5519 = vpop.f32.mrb[0].mxu0
        %v5520 = vadd.f32 %v5295, %v5519
        %v5521 = vpop.f32.mrb[0].mxu0
        %v5522 = vpop.f32.mrb[0].mxu0
        %v5523 = vadd.f32 %v5298, %v5522
        %v5524 = vpop.f32.mrb[0].mxu0
        %5525 = vmatprep.mubr.bf16.mxu0 0
        %5526 = vmatmul.mubr.bf16.gmra.mrb[0].mxu0 %v4772
        %v5527 = vpop.f32.mrb[0].mxu0
        %v5528 = vadd.f32 %v5303, %v5527
        %v5529 = vpop.f32.mrb[0].mxu0
        %v5530 = vpop.f32.mrb[0].mxu0
        %v5531 = vadd.f32 %v5306, %v5530
        %v5532 = vpop.f32.mrb[0].mxu0
        %5533 = vmatprep.mubr.bf16.mxu0 0
        %5534 = vmatmul.mubr.bf16.gmra.mrb[0].mxu0 %v4799
        %v5535 = vpop.f32.mrb[0].mxu0
        %v5536 = vadd.f32 %v5311, %v5535
        %v5537 = vpop.f32.mrb[0].mxu0
        %v5538 = vpop.f32.mrb[0].mxu0
        %v5539 = vadd.f32 %v5314, %v5538
        %v5540 = vpop.f32.mrb[0].mxu0
        %5541 = vmatprep.mubr.bf16.mxu0 0
        %5542 = vmatmul.mubr.bf16.gmra.mrb[0].mxu0 %v4826
        %v5543 = vpop.f32.mrb[0].mxu0
        %v5544 = vadd.f32 %v5319, %v5543
        %v5545 = vpop.f32.mrb[0].mxu0
        %v5546 = vpop.f32.mrb[0].mxu0
        %v5547 = vadd.f32 %v5322, %v5546
        %v5548 = vpop.f32.mrb[0].mxu0
        %5549 = vmatprep.mubr.bf16.mxu0 0
        %5550 = vmatmul.mubr.bf16.gmra.mrb[0].mxu0 %v4853
        %v5551 = vpop.f32.mrb[0].mxu0
        %v5552 = vadd.f32 %v5327, %v5551
        %v5553 = vpop.f32.mrb[0].mxu0
        %v5554 = vpop.f32.mrb[0].mxu0
        %v5555 = vadd.f32 %v5330, %v5554
        %v5556 = vpop.f32.mrb[0].mxu0
        %5557 = vmatprep.mubr.bf16.mxu0 0
        %5558 = vmatmul.mubr.bf16.gmra.mrb[0].mxu0 %v4880
        %v5559 = vpop.f32.mrb[0].mxu0
        %v5560 = vadd.f32 %v5335, %v5559
        %v5561 = vpop.f32.mrb[0].mxu0
        %v5562 = vpop.f32.mrb[0].mxu0
        %v5563 = vadd.f32 %v5338, %v5562
        %v5564 = vpop.f32.mrb[0].mxu0
        %5565 = vmatprep.mubr.bf16.mxu0 0
        %5566 = vmatmul.mubr.bf16.gmra.mrb[0].mxu0 %v4907
        %v5567 = vpop.f32.mrb[0].mxu0
        %v5568 = vadd.f32 %v5343, %v5567
        %v5569 = vpop.f32.mrb[0].mxu0
        %v5570 = vpop.f32.mrb[0].mxu0
        %v5571 = vadd.f32 %v5346, %v5570
        %v5572 = vpop.f32.mrb[0].mxu0
        %5573 = vdwg.mxu0
        %v5574 = vadd.f32 %v3365, %v5384
        %v5575 = vadd.f32 %v3368, %v5387
        %v5576 = vadd.f32 %v3373, %v5392
        %v5577 = vadd.f32 %v3376, %v5395
        %v5578 = vadd.f32 %v3381, %v5400
        %v5579 = vadd.f32 %v3384, %v5403
        %v5580 = vadd.f32 %v3389, %v5408
        %v5581 = vadd.f32 %v3392, %v5411
        %v5582 = vadd.f32 %v3397, %v5416
        %v5583 = vadd.f32 %v3400, %v5419
        %v5584 = vadd.f32 %v3405, %v5424
        %v5585 = vadd.f32 %v3408, %v5427
        %v5586 = vadd.f32 %v3413, %v5432
        %v5587 = vadd.f32 %v3416, %v5435
        %v5588 = vadd.f32 %v3421, %v5440
        %v5589 = vadd.f32 %v3424, %v5443
        %v5590 = vadd.f32 %v3429, %v5448
        %v5591 = vadd.f32 %v3432, %v5451
        %v5592 = vadd.f32 %v3437, %v5456
        %v5593 = vadd.f32 %v3440, %v5459
        %v5594 = vadd.f32 %v3445, %v5464
        %v5595 = vadd.f32 %v3448, %v5467
        %v5596 = vadd.f32 %v3453, %v5472
        %v5597 = vadd.f32 %v3456, %v5475
        %v5598 = vadd.f32 %v3461, %v5480
        %v5599 = vadd.f32 %v3464, %v5483
        %v5600 = vadd.f32 %v3469, %v5488
        %v5601 = vadd.f32 %v3472, %v5491
        %v5602 = vadd.f32 %v3477, %v5496
        %v5603 = vadd.f32 %v3480, %v5499
        %v5604 = vadd.f32 %v3485, %v5504
        %v5605 = vadd.f32 %v3488, %v5507
        %v5606 = vadd.f32 %v3493, %v5512
        %v5607 = vadd.f32 %v3496, %v5515
        %v5608 = vadd.f32 %v3501, %v5520
        %v5609 = vadd.f32 %v3504, %v5523
        %v5610 = vadd.f32 %v3509, %v5528
        %v5611 = vadd.f32 %v3512, %v5531
        %v5612 = vadd.f32 %v3517, %v5536
        %v5613 = vadd.f32 %v3520, %v5539
        %v5614 = vadd.f32 %v3525, %v5544
        %v5615 = vadd.f32 %v3528, %v5547
        %v5616 = vadd.f32 %v3533, %v5552
        %v5617 = vadd.f32 %v3536, %v5555
        %v5618 = vadd.f32 %v3541, %v5560
        %v5619 = vadd.f32 %v3544, %v5563
        %v5620 = vadd.f32 %v3549, %v5568
        %v5621 = vadd.f32 %v3552, %v5571
        %v5622 = vlaneseq
        %v5623 = vshrl.u32 %v5622, 7
        %v5624 = vsub.s32 0, %v5623
        %v5625 = vrot.slane %v246, %v5624
        %v5626 = vmul.f32 %v5574, %v5625
        %v5627 = vmul.f32 %v5575, %v5625
        %v5628 = vmul.f32 %v5576, %v5625
        %v5629 = vmul.f32 %v5577, %v5625
        %v5630 = vmul.f32 %v5578, %v5625
        %v5631 = vmul.f32 %v5579, %v5625
        %v5632 = vmul.f32 %v5580, %v5625
        %v5633 = vmul.f32 %v5581, %v5625
        %v5634 = vmul.f32 %v5582, %v5625
        %v5635 = vmul.f32 %v5583, %v5625
        %v5636 = vmul.f32 %v5584, %v5625
        %v5637 = vmul.f32 %v5585, %v5625
        %v5638 = vmul.f32 %v5586, %v5625
        %v5639 = vmul.f32 %v5587, %v5625
        %v5640 = vmul.f32 %v5588, %v5625
        %v5641 = vmul.f32 %v5589, %v5625
        %v5642 = vmul.f32 %v5590, %v5625
        %v5643 = vmul.f32 %v5591, %v5625
        %v5644 = vmul.f32 %v5592, %v5625
        %v5645 = vmul.f32 %v5593, %v5625
        %v5646 = vmul.f32 %v5594, %v5625
        %v5647 = vmul.f32 %v5595, %v5625
        %v5648 = vmul.f32 %v5596, %v5625
        %v5649 = vmul.f32 %v5597, %v5625
        %v5650 = vmul.f32 %v5598, %v5625
        %v5651 = vmul.f32 %v5599, %v5625
        %v5652 = vmul.f32 %v5600, %v5625
        %v5653 = vmul.f32 %v5601, %v5625
        %v5654 = vmul.f32 %v5602, %v5625
        %v5655 = vmul.f32 %v5603, %v5625
        %v5656 = vmul.f32 %v5604, %v5625
        %v5657 = vmul.f32 %v5605, %v5625
        %v5658 = vmul.f32 %v5606, %v5625
        %v5659 = vmul.f32 %v5607, %v5625
        %v5660 = vmul.f32 %v5608, %v5625
        %v5661 = vmul.f32 %v5609, %v5625
        %v5662 = vmul.f32 %v5610, %v5625
        %v5663 = vmul.f32 %v5611, %v5625
        %v5664 = vmul.f32 %v5612, %v5625
        %v5665 = vmul.f32 %v5613, %v5625
        %v5666 = vmul.f32 %v5614, %v5625
        %v5667 = vmul.f32 %v5615, %v5625
        %v5668 = vmul.f32 %v5616, %v5625
        %v5669 = vmul.f32 %v5617, %v5625
        %v5670 = vmul.f32 %v5618, %v5625
        %v5671 = vmul.f32 %v5619, %v5625
        %v5672 = vmul.f32 %v5620, %v5625
        %v5673 = vmul.f32 %v5621, %v5625
        %v5674 = vlaneseq
        %v5675 = vshrl.u32 %v5674, 7
        %v5676 = vsub.s32 0, %v5675
        %v5677 = vrot.slane %v247, %v5676
        %v5678 = vadd.f32 %v5626, %v5677
        %v5679 = vadd.f32 %v5627, %v5677
        %v5680 = vadd.f32 %v5628, %v5677
        %v5681 = vadd.f32 %v5629, %v5677
        %v5682 = vadd.f32 %v5630, %v5677
        %v5683 = vadd.f32 %v5631, %v5677
        %v5684 = vadd.f32 %v5632, %v5677
        %v5685 = vadd.f32 %v5633, %v5677
        %v5686 = vadd.f32 %v5634, %v5677
        %v5687 = vadd.f32 %v5635, %v5677
        %v5688 = vadd.f32 %v5636, %v5677
        %v5689 = vadd.f32 %v5637, %v5677
        %v5690 = vadd.f32 %v5638, %v5677
        %v5691 = vadd.f32 %v5639, %v5677
        %v5692 = vadd.f32 %v5640, %v5677
        %v5693 = vadd.f32 %v5641, %v5677
        %v5694 = vadd.f32 %v5642, %v5677
        %v5695 = vadd.f32 %v5643, %v5677
        %v5696 = vadd.f32 %v5644, %v5677
        %v5697 = vadd.f32 %v5645, %v5677
        %v5698 = vadd.f32 %v5646, %v5677
        %v5699 = vadd.f32 %v5647, %v5677
        %v5700 = vadd.f32 %v5648, %v5677
        %v5701 = vadd.f32 %v5649, %v5677
        %v5702 = vadd.f32 %v5650, %v5677
        %v5703 = vadd.f32 %v5651, %v5677
        %v5704 = vadd.f32 %v5652, %v5677
        %v5705 = vadd.f32 %v5653, %v5677
        %v5706 = vadd.f32 %v5654, %v5677
        %v5707 = vadd.f32 %v5655, %v5677
        %v5708 = vadd.f32 %v5656, %v5677
        %v5709 = vadd.f32 %v5657, %v5677
        %v5710 = vadd.f32 %v5658, %v5677
        %v5711 = vadd.f32 %v5659, %v5677
        %v5712 = vadd.f32 %v5660, %v5677
        %v5713 = vadd.f32 %v5661, %v5677
        %v5714 = vadd.f32 %v5662, %v5677
        %v5715 = vadd.f32 %v5663, %v5677
        %v5716 = vadd.f32 %v5664, %v5677
        %v5717 = vadd.f32 %v5665, %v5677
        %v5718 = vadd.f32 %v5666, %v5677
        %v5719 = vadd.f32 %v5667, %v5677
        %v5720 = vadd.f32 %v5668, %v5677
        %v5721 = vadd.f32 %v5669, %v5677
        %v5722 = vadd.f32 %v5670, %v5677
        %v5723 = vadd.f32 %v5671, %v5677
        %v5724 = vadd.f32 %v5672, %v5677
        %v5725 = vadd.f32 %v5673, %v5677
        %v5726 = vmax.f32 %v5678, 0.0
        %v5727 = vmax.f32 %v5679, 0.0
        %v5728 = vmax.f32 %v5680, 0.0
        %v5729 = vmax.f32 %v5681, 0.0
        %v5730 = vmax.f32 %v5682, 0.0
        %v5731 = vmax.f32 %v5683, 0.0
        %v5732 = vmax.f32 %v5684, 0.0
        %v5733 = vmax.f32 %v5685, 0.0
        %v5734 = vmax.f32 %v5686, 0.0
        %v5735 = vmax.f32 %v5687, 0.0
        %v5736 = vmax.f32 %v5688, 0.0
        %v5737 = vmax.f32 %v5689, 0.0
        %v5738 = vmax.f32 %v5690, 0.0
        %v5739 = vmax.f32 %v5691, 0.0
        %v5740 = vmax.f32 %v5692, 0.0
        %v5741 = vmax.f32 %v5693, 0.0
        %v5742 = vmax.f32 %v5694, 0.0
        %v5743 = vmax.f32 %v5695, 0.0
        %v5744 = vmax.f32 %v5696, 0.0
        %v5745 = vmax.f32 %v5697, 0.0
        %v5746 = vmax.f32 %v5698, 0.0
        %v5747 = vmax.f32 %v5699, 0.0
        %v5748 = vmax.f32 %v5700, 0.0
        %v5749 = vmax.f32 %v5701, 0.0
        %v5750 = vmax.f32 %v5702, 0.0
        %v5751 = vmax.f32 %v5703, 0.0
        %v5752 = vmax.f32 %v5704, 0.0
        %v5753 = vmax.f32 %v5705, 0.0
        %v5754 = vmax.f32 %v5706, 0.0
        %v5755 = vmax.f32 %v5707, 0.0
        %v5756 = vmax.f32 %v5708, 0.0
        %v5757 = vmax.f32 %v5709, 0.0
        %v5758 = vmax.f32 %v5710, 0.0
        %v5759 = vmax.f32 %v5711, 0.0
        %v5760 = vmax.f32 %v5712, 0.0
        %v5761 = vmax.f32 %v5713, 0.0
        %v5762 = vmax.f32 %v5714, 0.0
        %v5763 = vmax.f32 %v5715, 0.0
        %v5764 = vmax.f32 %v5716, 0.0
        %v5765 = vmax.f32 %v5717, 0.0
        %v5766 = vmax.f32 %v5718, 0.0
        %v5767 = vmax.f32 %v5719, 0.0
        %v5768 = vmax.f32 %v5720, 0.0
        %v5769 = vmax.f32 %v5721, 0.0
        %v5770 = vmax.f32 %v5722, 0.0
        %v5771 = vmax.f32 %v5723, 0.0
        %v5772 = vmax.f32 %v5724, 0.0
        %v5773 = vmax.f32 %v5725, 0.0
        %v5774 = vlaneseq
        %v5775 = vshrl.u32 %v5774, 7
        %v5776 = vadd.s32 %v5775, 8
        %v5777 = vadd.s32 %v5775, 16
        %vm5778 = vcmp.ge.s32.totalorder %v5775, 1
        %vm5779 = vcmp.ge.s32.totalorder %v5776, 1
        %vm5780 = vcmp.ge.s32.totalorder %v5777, 1
        %vm5781 = vcmp.le.s32.totalorder %v5775, 16
        %vm5782 = vcmp.le.s32.totalorder %v5776, 16
        %vm5783 = vcmp.le.s32.totalorder %v5777, 16
        %vm5784 = vmand %vm5778, %vm5781
        %vm5785 = vmand %vm5779, %vm5782
        %vm5786 = vmand %vm5780, %vm5783
        %v5787 = vsel %vm5784, 1, 0
        %v5788 = vsel %vm5785, 1, 0
        %v5789 = vsel %vm5786, 1, 0
        %v5790 = vcvt.s32.f32 %v5787
        %v5791 = vcvt.s32.f32 %v5788
        %v5792 = vcvt.s32.f32 %v5789
        %v5793 = vmul.f32 %v5726, %v5790
        %v5794 = vmul.f32 %v5727, %v5791
        %v5795 = vmul.f32 %v5728, %v5792
        %v5796 = vmul.f32 %v5729, %v5790
        %v5797 = vmul.f32 %v5730, %v5791
        %v5798 = vmul.f32 %v5731, %v5792
        %v5799 = vmul.f32 %v5732, %v5790
        %v5800 = vmul.f32 %v5733, %v5791
        %v5801 = vmul.f32 %v5734, %v5792
        %v5802 = vmul.f32 %v5735, %v5790
        %v5803 = vmul.f32 %v5736, %v5791
        %v5804 = vmul.f32 %v5737, %v5792
        %v5805 = vmul.f32 %v5738, %v5790
        %v5806 = vmul.f32 %v5739, %v5791
        %v5807 = vmul.f32 %v5740, %v5792
        %v5808 = vmul.f32 %v5741, %v5790
        %v5809 = vmul.f32 %v5742, %v5791
        %v5810 = vmul.f32 %v5743, %v5792
        %v5811 = vmul.f32 %v5744, %v5790
        %v5812 = vmul.f32 %v5745, %v5791
        %v5813 = vmul.f32 %v5746, %v5792
        %v5814 = vmul.f32 %v5747, %v5790
        %v5815 = vmul.f32 %v5748, %v5791
        %v5816 = vmul.f32 %v5749, %v5792
        %v5817 = vmul.f32 %v5750, %v5790
        %v5818 = vmul.f32 %v5751, %v5791
        %v5819 = vmul.f32 %v5752, %v5792
        %v5820 = vmul.f32 %v5753, %v5790
        %v5821 = vmul.f32 %v5754, %v5791
        %v5822 = vmul.f32 %v5755, %v5792
        %v5823 = vmul.f32 %v5756, %v5790
        %v5824 = vmul.f32 %v5757, %v5791
        %v5825 = vmul.f32 %v5758, %v5792
        %v5826 = vmul.f32 %v5759, %v5790
        %v5827 = vmul.f32 %v5760, %v5791
        %v5828 = vmul.f32 %v5761, %v5792
        %v5829 = vmul.f32 %v5762, %v5790
        %v5830 = vmul.f32 %v5763, %v5791
        %v5831 = vmul.f32 %v5764, %v5792
        %v5832 = vmul.f32 %v5765, %v5790
        %v5833 = vmul.f32 %v5766, %v5791
        %v5834 = vmul.f32 %v5767, %v5792
        %v5835 = vmul.f32 %v5768, %v5790
        %v5836 = vmul.f32 %v5769, %v5791
        %v5837 = vmul.f32 %v5770, %v5792
        %v5838 = vmul.f32 %v5771, %v5790
        %v5839 = vmul.f32 %v5772, %v5791
        %v5840 = vmul.f32 %v5773, %v5792
        %v5841 = vpack.c.bf16 %v5794, %v5793
        %v5842 = vpack.c.bf16 %v5796, %v5795
        %v5843 = vpack.c.bf16 %v5798, %v5797
        %v5844 = vpack.c.bf16 %v5800, %v5799
        %v5845 = vpack.c.bf16 %v5802, %v5801
        %v5846 = vpack.c.bf16 %v5804, %v5803
        %v5847 = vpack.c.bf16 %v5806, %v5805
        %v5848 = vpack.c.bf16 %v5808, %v5807
        %v5849 = vpack.c.bf16 %v5810, %v5809
        %v5850 = vpack.c.bf16 %v5812, %v5811
        %v5851 = vpack.c.bf16 %v5814, %v5813
        %v5852 = vpack.c.bf16 %v5816, %v5815
        %v5853 = vpack.c.bf16 %v5818, %v5817
        %v5854 = vpack.c.bf16 %v5820, %v5819
        %v5855 = vpack.c.bf16 %v5822, %v5821
        %v5856 = vpack.c.bf16 %v5824, %v5823
        %v5857 = vpack.c.bf16 %v5826, %v5825
        %v5858 = vpack.c.bf16 %v5828, %v5827
        %v5859 = vpack.c.bf16 %v5830, %v5829
        %v5860 = vpack.c.bf16 %v5832, %v5831
        %v5861 = vpack.c.bf16 %v5834, %v5833
        %v5862 = vpack.c.bf16 %v5836, %v5835
        %v5863 = vpack.c.bf16 %v5838, %v5837
        %v5864 = vpack.c.bf16 %v5840, %v5839
        %5865 = vst [vmem:[#allocation2] sm:$0xff] 0
        %5866 = vst [vmem:[#allocation2 + $0x8] sm:$0xff] 0
        %5867 = vst [vmem:[#allocation2 + $0xd0] sm:$0xff] 0
        %5868 = vst [vmem:[#allocation2 + $0xd8] sm:$0xff] 0
        %5869 = vst [vmem:[#allocation2 + $0x10] sm:$0xff] %v5841
        %5870 = vst [vmem:[#allocation2 + $0x18] sm:$0xff] %v5842
        %5871 = vst [vmem:[#allocation2 + $0x20] sm:$0xff] %v5843
        %5872 = vst [vmem:[#allocation2 + $0x28] sm:$0xff] %v5844
        %5873 = vst [vmem:[#allocation2 + $0x30] sm:$0xff] %v5845
        %5874 = vst [vmem:[#allocation2 + $0x38] sm:$0xff] %v5846
        %5875 = vst [vmem:[#allocation2 + $0x40] sm:$0xff] %v5847
        %5876 = vst [vmem:[#allocation2 + $0x48] sm:$0xff] %v5848
        %5877 = vst [vmem:[#allocation2 + $0x50] sm:$0xff] %v5849
        %5878 = vst [vmem:[#allocation2 + $0x58] sm:$0xff] %v5850
        %5879 = vst [vmem:[#allocation2 + $0x60] sm:$0xff] %v5851
        %5880 = vst [vmem:[#allocation2 + $0x68] sm:$0xff] %v5852
        %5881 = vst [vmem:[#allocation2 + $0x70] sm:$0xff] %v5853
        %5882 = vst [vmem:[#allocation2 + $0x78] sm:$0xff] %v5854
        %5883 = vst [vmem:[#allocation2 + $0x80] sm:$0xff] %v5855
        %5884 = vst [vmem:[#allocation2 + $0x88] sm:$0xff] %v5856
        %5885 = vst [vmem:[#allocation2 + $0x90] sm:$0xff] %v5857
        %5886 = vst [vmem:[#allocation2 + $0x98] sm:$0xff] %v5858
        %5887 = vst [vmem:[#allocation2 + $0xa0] sm:$0xff] %v5859
        %5888 = vst [vmem:[#allocation2 + $0xa8] sm:$0xff] %v5860
        %5889 = vst [vmem:[#allocation2 + $0xb0] sm:$0xff] %v5861
        %5890 = vst [vmem:[#allocation2 + $0xb8] sm:$0xff] %v5862
        %5891 = vst [vmem:[#allocation2 + $0xc0] sm:$0xff] %v5863
        %5892 = vst [vmem:[#allocation2 + $0xc8] sm:$0xff] %v5864
        %v5893 = vld [vmem:[#allocation2] sm:$0xf8]
        %v5894 = vld [vmem:[#allocation2 + $0x8] sm:$0xff]
        %v5895 = vld [vmem:[#allocation2 + $0x10] sm:$0xff]
        %v5896 = vld [vmem:[#allocation2 + $0x18] sm:$0xff]
        %v5897 = vld [vmem:[#allocation2 + $0x20] sm:$0xff]
        %v5898 = vld [vmem:[#allocation2 + $0x28] sm:$0xff]
        %v5899 = vld [vmem:[#allocation2 + $0x30] sm:$0xff]
        %v5900 = vld [vmem:[#allocation2 + $0x38] sm:$0xff]
        %v5901 = vld [vmem:[#allocation2 + $0x40] sm:$0xff]
        %v5902 = vld [vmem:[#allocation2 + $0x48] sm:$0xff]
        %v5903 = vld [vmem:[#allocation2 + $0x50] sm:$0xff]
        %v5904 = vld [vmem:[#allocation2 + $0x58] sm:$0xff]
        %v5905 = vld [vmem:[#allocation2 + $0x60] sm:$0xff]
        %v5906 = vld [vmem:[#allocation2 + $0x68] sm:$0xff]
        %v5907 = vld [vmem:[#allocation2 + $0x70] sm:$0xff]
        %v5908 = vld [vmem:[#allocation2 + $0x78] sm:$0xff]
        %v5909 = vld [vmem:[#allocation2 + $0x80] sm:$0xff]
        %v5910 = vld [vmem:[#allocation2 + $0x88] sm:$0xff]
        %v5911 = vld [vmem:[#allocation2 + $0x90] sm:$0xff]
        %v5912 = vld [vmem:[#allocation2 + $0x98] sm:$0xff]
        %v5913 = vld [vmem:[#allocation2 + $0xa0] sm:$0xff]
        %v5914 = vld [vmem:[#allocation2 + $0xa8] sm:$0xff]
        %v5915 = vld [vmem:[#allocation2 + $0xb0] sm:$0xff]
        %v5916 = vld [vmem:[#allocation2 + $0xb8] sm:$0xff]
        %v5917 = vld [vmem:[#allocation2 + $0xc0] sm:$0xf]
        %v5918 = vld [vmem:[#allocation2] sm:$0xf0]
        %v5919 = vld [vmem:[#allocation2 + $0xc0] sm:$0x1f]
        %vm5920 = vsmask.f32 7424
        %v5922 = vshrl.u32 %v5918, 16
        %v5924 = vshll.u32 %v5918, 16
        %v5926 = vrot.slane %v5924, 1
        %v5927 = vor.u32 %v5922, %v5926
        %v5929 = vshll.u32 %v5894, 16
        %v5931 = vrot.slane %v5929, 1
        %v5932 = vsel %vm5920, %v5927, %v5931
        %v5933 = vshrl.u32 %v5894, 16
        %v5935 = vor.u32 %v5933, %v5931
        %v5937 = vshll.u32 %v5895, 16
        %v5939 = vrot.slane %v5937, 1
        %v5940 = vsel %vm5920, %v5935, %v5939
        %v5941 = vshrl.u32 %v5895, 16
        %v5943 = vor.u32 %v5941, %v5939
        %v5945 = vshll.u32 %v5896, 16
        %v5947 = vrot.slane %v5945, 1
        %v5948 = vsel %vm5920, %v5943, %v5947
        %v5949 = vshrl.u32 %v5896, 16
        %v5951 = vor.u32 %v5949, %v5947
        %v5953 = vshll.u32 %v5897, 16
        %v5955 = vrot.slane %v5953, 1
        %v5956 = vsel %vm5920, %v5951, %v5955
        %v5957 = vshrl.u32 %v5897, 16
        %v5959 = vor.u32 %v5957, %v5955
        %v5961 = vshll.u32 %v5898, 16
        %v5963 = vrot.slane %v5961, 1
        %v5964 = vsel %vm5920, %v5959, %v5963
        %v5965 = vshrl.u32 %v5898, 16
        %v5967 = vor.u32 %v5965, %v5963
        %v5969 = vshll.u32 %v5899, 16
        %v5971 = vrot.slane %v5969, 1
        %v5972 = vsel %vm5920, %v5967, %v5971
        %v5973 = vshrl.u32 %v5899, 16
        %v5975 = vor.u32 %v5973, %v5971
        %v5977 = vshll.u32 %v5900, 16
        %v5979 = vrot.slane %v5977, 1
        %v5980 = vsel %vm5920, %v5975, %v5979
        %v5981 = vshrl.u32 %v5900, 16
        %v5983 = vor.u32 %v5981, %v5979
        %v5985 = vshll.u32 %v5901, 16
        %v5987 = vrot.slane %v5985, 1
        %v5988 = vsel %vm5920, %v5983, %v5987
        %v5989 = vshrl.u32 %v5901, 16
        %v5991 = vor.u32 %v5989, %v5987
        %v5993 = vshll.u32 %v5902, 16
        %v5995 = vrot.slane %v5993, 1
        %v5996 = vsel %vm5920, %v5991, %v5995
        %v5997 = vshrl.u32 %v5902, 16
        %v5999 = vor.u32 %v5997, %v5995
        %v6001 = vshll.u32 %v5903, 16
        %v6003 = vrot.slane %v6001, 1
        %v6004 = vsel %vm5920, %v5999, %v6003
        %v6005 = vshrl.u32 %v5903, 16
        %v6007 = vor.u32 %v6005, %v6003
        %v6009 = vshll.u32 %v5904, 16
        %v6011 = vrot.slane %v6009, 1
        %v6012 = vsel %vm5920, %v6007, %v6011
        %v6013 = vshrl.u32 %v5904, 16
        %v6015 = vor.u32 %v6013, %v6011
        %v6017 = vshll.u32 %v5905, 16
        %v6019 = vrot.slane %v6017, 1
        %v6020 = vsel %vm5920, %v6015, %v6019
        %v6021 = vshrl.u32 %v5905, 16
        %v6023 = vor.u32 %v6021, %v6019
        %v6025 = vshll.u32 %v5906, 16
        %v6027 = vrot.slane %v6025, 1
        %v6028 = vsel %vm5920, %v6023, %v6027
        %v6029 = vshrl.u32 %v5906, 16
        %v6031 = vor.u32 %v6029, %v6027
        %v6033 = vshll.u32 %v5907, 16
        %v6035 = vrot.slane %v6033, 1
        %v6036 = vsel %vm5920, %v6031, %v6035
        %v6037 = vshrl.u32 %v5907, 16
        %v6039 = vor.u32 %v6037, %v6035
        %v6041 = vshll.u32 %v5908, 16
        %v6043 = vrot.slane %v6041, 1
        %v6044 = vsel %vm5920, %v6039, %v6043
        %v6045 = vshrl.u32 %v5908, 16
        %v6047 = vor.u32 %v6045, %v6043
        %v6049 = vshll.u32 %v5909, 16
        %v6051 = vrot.slane %v6049, 1
        %v6052 = vsel %vm5920, %v6047, %v6051
        %v6053 = vshrl.u32 %v5909, 16
        %v6055 = vor.u32 %v6053, %v6051
        %v6057 = vshll.u32 %v5910, 16
        %v6059 = vrot.slane %v6057, 1
        %v6060 = vsel %vm5920, %v6055, %v6059
        %v6061 = vshrl.u32 %v5910, 16
        %v6063 = vor.u32 %v6061, %v6059
        %v6065 = vshll.u32 %v5911, 16
        %v6067 = vrot.slane %v6065, 1
        %v6068 = vsel %vm5920, %v6063, %v6067
        %v6069 = vshrl.u32 %v5911, 16
        %v6071 = vor.u32 %v6069, %v6067
        %v6073 = vshll.u32 %v5912, 16
        %v6075 = vrot.slane %v6073, 1
        %v6076 = vsel %vm5920, %v6071, %v6075
        %v6077 = vshrl.u32 %v5912, 16
        %v6079 = vor.u32 %v6077, %v6075
        %v6081 = vshll.u32 %v5913, 16
        %v6083 = vrot.slane %v6081, 1
        %v6084 = vsel %vm5920, %v6079, %v6083
        %v6085 = vshrl.u32 %v5913, 16
        %v6087 = vor.u32 %v6085, %v6083
        %v6089 = vshll.u32 %v5914, 16
        %v6091 = vrot.slane %v6089, 1
        %v6092 = vsel %vm5920, %v6087, %v6091
        %v6093 = vshrl.u32 %v5914, 16
        %v6095 = vor.u32 %v6093, %v6091
        %v6097 = vshll.u32 %v5915, 16
        %v6099 = vrot.slane %v6097, 1
        %v6100 = vsel %vm5920, %v6095, %v6099
        %v6101 = vshrl.u32 %v5915, 16
        %v6103 = vor.u32 %v6101, %v6099
        %v6105 = vshll.u32 %v5916, 16
        %v6107 = vrot.slane %v6105, 1
        %v6108 = vsel %vm5920, %v6103, %v6107
        %v6109 = vshrl.u32 %v5916, 16
        %v6111 = vor.u32 %v6109, %v6107
        %v6113 = vshll.u32 %v5917, 16
        %v6115 = vrot.slane %v6113, 1
        %v6116 = vsel %vm5920, %v6111, %v6115
        %v6117 = vshrl.u32 %v5917, 16
        %v6119 = vor.u32 %v6117, %v6115
        %vm6145 = vcmask 1046528
        %v6146 = vrot.slane %v5918, 1
        %v6147 = vrot.slane %v5894, 1
        %v6148 = vsel %vm6145, %v6146, %v6147
        %v6149 = vrot.slane %v5895, 1
        %v6150 = vsel %vm6145, %v6147, %v6149
        %v6151 = vrot.slane %v5896, 1
        %v6152 = vsel %vm6145, %v6149, %v6151
        %v6153 = vrot.slane %v5897, 1
        %v6154 = vsel %vm6145, %v6151, %v6153
        %v6155 = vrot.slane %v5898, 1
        %v6156 = vsel %vm6145, %v6153, %v6155
        %v6157 = vrot.slane %v5899, 1
        %v6158 = vsel %vm6145, %v6155, %v6157
        %v6159 = vrot.slane %v5900, 1
        %v6160 = vsel %vm6145, %v6157, %v6159
        %v6161 = vrot.slane %v5901, 1
        %v6162 = vsel %vm6145, %v6159, %v6161
        %v6163 = vrot.slane %v5902, 1
        %v6164 = vsel %vm6145, %v6161, %v6163
        %v6165 = vrot.slane %v5903, 1
        %v6166 = vsel %vm6145, %v6163, %v6165
        %v6167 = vrot.slane %v5904, 1
        %v6168 = vsel %vm6145, %v6165, %v6167
        %v6169 = vrot.slane %v5905, 1
        %v6170 = vsel %vm6145, %v6167, %v6169
        %v6171 = vrot.slane %v5906, 1
        %v6172 = vsel %vm6145, %v6169, %v6171
        %v6173 = vrot.slane %v5907, 1
        %v6174 = vsel %vm6145, %v6171, %v6173
        %v6175 = vrot.slane %v5908, 1
        %v6176 = vsel %vm6145, %v6173, %v6175
        %v6177 = vrot.slane %v5909, 1
        %v6178 = vsel %vm6145, %v6175, %v6177
        %v6179 = vrot.slane %v5910, 1
        %v6180 = vsel %vm6145, %v6177, %v6179
        %v6181 = vrot.slane %v5911, 1
        %v6182 = vsel %vm6145, %v6179, %v6181
        %v6183 = vrot.slane %v5912, 1
        %v6184 = vsel %vm6145, %v6181, %v6183
        %v6185 = vrot.slane %v5913, 1
        %v6186 = vsel %vm6145, %v6183, %v6185
        %v6187 = vrot.slane %v5914, 1
        %v6188 = vsel %vm6145, %v6185, %v6187
        %v6189 = vrot.slane %v5915, 1
        %v6190 = vsel %vm6145, %v6187, %v6189
        %v6191 = vrot.slane %v5916, 1
        %v6192 = vsel %vm6145, %v6189, %v6191
        %v6193 = vrot.slane %v5919, 1
        %v6194 = vsel %vm6145, %v6191, %v6193
        %v6195 = vld [vmem:[#allocation8] sm:$0xf]
        %v6196 = vld [vmem:[#allocation8 + $0x4] sm:$0xf]
        %v6197 = vld [vmem:[#allocation8 + $0x8] sm:$0xf]
        %v6198 = vld [vmem:[#allocation8 + $0xc] sm:$0xf]
        %v6199 = vld [vmem:[#allocation8 + $0x10] sm:$0xf]
        %v6200 = vld [vmem:[#allocation8 + $0x14] sm:$0xf]
        %v6201 = vld [vmem:[#allocation8 + $0x18] sm:$0xf]
        %v6202 = vld [vmem:[#allocation8 + $0x1c] sm:$0xf]
        %v6203 = vld [vmem:[#allocation8 + $0x20] sm:$0xf]
        %v6204 = vld [vmem:[#allocation8 + $0x24] sm:$0xf]
        %v6205 = vld [vmem:[#allocation8 + $0x28] sm:$0xf]
        %v6206 = vld [vmem:[#allocation8 + $0x2c] sm:$0xf]
        %v6207 = vld [vmem:[#allocation8 + $0x30] sm:$0xf]
        %v6208 = vld [vmem:[#allocation8 + $0x34] sm:$0xf]
        %v6209 = vld [vmem:[#allocation8 + $0x38] sm:$0xf]
        %v6210 = vld [vmem:[#allocation8 + $0x3c] sm:$0xf]
        %v6211 = vld [vmem:[#allocation8 + $0x40] sm:$0xf]
        %v6212 = vld [vmem:[#allocation8 + $0x44] sm:$0xf]
        %v6213 = vld [vmem:[#allocation8 + $0x48] sm:$0xf]
        %v6214 = vld [vmem:[#allocation8 + $0x4c] sm:$0xf]
        %v6215 = vld [vmem:[#allocation8 + $0x50] sm:$0xf]
        %v6216 = vld [vmem:[#allocation8 + $0x54] sm:$0xf]
        %v6217 = vld [vmem:[#allocation8 + $0x58] sm:$0xf]
        %v6218 = vld [vmem:[#allocation8 + $0x5c] sm:$0xf]
        %v6219 = vld [vmem:[#allocation8 + $0x60] sm:$0xf]
        %v6220 = vld [vmem:[#allocation8 + $0x64] sm:$0xf]
        %v6221 = vld [vmem:[#allocation8 + $0x68] sm:$0xf]
        %v6222 = vld [vmem:[#allocation8 + $0x6c] sm:$0xf]
        %v6223 = vld [vmem:[#allocation8 + $0x70] sm:$0xf]
        %v6224 = vld [vmem:[#allocation8 + $0x74] sm:$0xf]
        %v6225 = vld [vmem:[#allocation8 + $0x78] sm:$0xf]
        %v6226 = vld [vmem:[#allocation8 + $0x7c] sm:$0xf]
        %v6227 = vld [vmem:[#allocation8 + $0x80] sm:$0xf]
        %v6228 = vld [vmem:[#allocation8 + $0x84] sm:$0xf]
        %v6229 = vld [vmem:[#allocation8 + $0x88] sm:$0xf]
        %v6230 = vld [vmem:[#allocation8 + $0x8c] sm:$0xf]
        %v6231 = vld [vmem:[#allocation8 + $0x90] sm:$0xf]
        %v6232 = vld [vmem:[#allocation8 + $0x94] sm:$0xf]
        %v6233 = vld [vmem:[#allocation8 + $0x98] sm:$0xf]
        %v6234 = vld [vmem:[#allocation8 + $0x9c] sm:$0xf]
        %v6235 = vld [vmem:[#allocation8 + $0xa0] sm:$0xf]
        %v6236 = vld [vmem:[#allocation8 + $0xa4] sm:$0xf]
        %v6237 = vld [vmem:[#allocation8 + $0xa8] sm:$0xf]
        %v6238 = vld [vmem:[#allocation8 + $0xac] sm:$0xf]
        %v6239 = vld [vmem:[#allocation8 + $0xb0] sm:$0xf]
        %v6240 = vld [vmem:[#allocation8 + $0xb4] sm:$0xf]
        %v6241 = vld [vmem:[#allocation8 + $0xb8] sm:$0xf]
        %v6242 = vld [vmem:[#allocation8 + $0xbc] sm:$0xf]
        %v6243 = vld [vmem:[#allocation2 + $0x8] sm:$0x80]
        %v6244 = vld [vmem:[#allocation2 + $0xc0] sm:$0xff]
        %v6245 = vld [vmem:[#allocation2 + $0xc8] sm:$0xff]
        %v6246 = vld [vmem:[#allocation2 + $0xd0] sm:$0x1]
        %v6248 = vshll.u32 %v6244, 16
        %v6250 = vrot.slane %v6248, 1
        %v6251 = vsel %vm5920, %v6111, %v6250
        %v6252 = vshrl.u32 %v6244, 16
        %v6254 = vor.u32 %v6252, %v6250
        %v6256 = vshll.u32 %v6245, 16
        %v6258 = vrot.slane %v6256, 1
        %v6259 = vsel %vm5920, %v6254, %v6258
        %v6260 = vshrl.u32 %v6245, 16
        %v6262 = vor.u32 %v6260, %v6258
        %v6266 = vrot.slane %v6244, 1
        %v6267 = vsel %vm6145, %v6191, %v6266
        %v6268 = vrot.slane %v6245, 1
        %v6269 = vsel %vm6145, %v6266, %v6268
        %v6270 = vrot.slane %v6246, 1
        %v6271 = vsel %vm6145, %v6268, %v6270
        %s6272 = scalar_lea.vmem [#allocation8], 192
        %v6273 = vld [vmem:[%s6272] sm:$0xf]
        %v6274 = vld [vmem:[%s6272 + $0x4] sm:$0xf]
        %v6275 = vld [vmem:[%s6272 + $0x8] sm:$0xf]
        %v6276 = vld [vmem:[%s6272 + $0xc] sm:$0xf]
        %v6277 = vld [vmem:[%s6272 + $0x10] sm:$0xf]
        %v6278 = vld [vmem:[%s6272 + $0x14] sm:$0xf]
        %v6279 = vld [vmem:[%s6272 + $0x18] sm:$0xf]
        %v6280 = vld [vmem:[%s6272 + $0x1c] sm:$0xf]
        %v6281 = vld [vmem:[%s6272 + $0x20] sm:$0xf]
        %v6282 = vld [vmem:[%s6272 + $0x24] sm:$0xf]
        %v6283 = vld [vmem:[%s6272 + $0x28] sm:$0xf]
        %v6284 = vld [vmem:[%s6272 + $0x2c] sm:$0xf]
        %v6285 = vld [vmem:[%s6272 + $0x30] sm:$0xf]
        %v6286 = vld [vmem:[%s6272 + $0x34] sm:$0xf]
        %v6287 = vld [vmem:[%s6272 + $0x38] sm:$0xf]
        %v6288 = vld [vmem:[%s6272 + $0x3c] sm:$0xf]
        %v6289 = vld [vmem:[%s6272 + $0x40] sm:$0xf]
        %v6290 = vld [vmem:[%s6272 + $0x44] sm:$0xf]
        %v6291 = vld [vmem:[%s6272 + $0x48] sm:$0xf]
        %v6292 = vld [vmem:[%s6272 + $0x4c] sm:$0xf]
        %v6293 = vld [vmem:[%s6272 + $0x50] sm:$0xf]
        %v6294 = vld [vmem:[%s6272 + $0x54] sm:$0xf]
        %v6295 = vld [vmem:[%s6272 + $0x58] sm:$0xf]
        %v6296 = vld [vmem:[%s6272 + $0x5c] sm:$0xf]
        %v6297 = vld [vmem:[%s6272 + $0x60] sm:$0xf]
        %v6298 = vld [vmem:[%s6272 + $0x64] sm:$0xf]
        %v6299 = vld [vmem:[%s6272 + $0x68] sm:$0xf]
        %v6300 = vld [vmem:[%s6272 + $0x6c] sm:$0xf]
        %v6301 = vld [vmem:[%s6272 + $0x70] sm:$0xf]
        %v6302 = vld [vmem:[%s6272 + $0x74] sm:$0xf]
        %v6303 = vld [vmem:[%s6272 + $0x78] sm:$0xf]
        %v6304 = vld [vmem:[%s6272 + $0x7c] sm:$0xf]
        %v6305 = vld [vmem:[%s6272 + $0x80] sm:$0xf]
        %v6306 = vld [vmem:[%s6272 + $0x84] sm:$0xf]
        %v6307 = vld [vmem:[%s6272 + $0x88] sm:$0xf]
        %v6308 = vld [vmem:[%s6272 + $0x8c] sm:$0xf]
        %v6309 = vld [vmem:[%s6272 + $0x90] sm:$0xf]
        %v6310 = vld [vmem:[%s6272 + $0x94] sm:$0xf]
        %v6311 = vld [vmem:[%s6272 + $0x98] sm:$0xf]
        %v6312 = vld [vmem:[%s6272 + $0x9c] sm:$0xf]
        %v6313 = vld [vmem:[%s6272 + $0xa0] sm:$0xf]
        %v6314 = vld [vmem:[%s6272 + $0xa4] sm:$0xf]
        %v6315 = vld [vmem:[%s6272 + $0xa8] sm:$0xf]
        %v6316 = vld [vmem:[%s6272 + $0xac] sm:$0xf]
        %v6317 = vld [vmem:[%s6272 + $0xb0] sm:$0xf]
        %v6318 = vld [vmem:[%s6272 + $0xb4] sm:$0xf]
        %v6319 = vld [vmem:[%s6272 + $0xb8] sm:$0xf]
        %v6320 = vld [vmem:[%s6272 + $0xbc] sm:$0xf]
        %vm6321 = vsmask.f32 256
        %v6323 = vshrl.u32 %v6243, 16
        %v6325 = vrot.slane %v6323, 7
        %v6326 = vrot.slane %v5941, 7
        %v6327 = vor.u32 %v6326, %v5937
        %v6328 = vsel %vm6321, %v6325, %v6327
        %v6330 = vshrl.u32 %v5939, 16
        %v6332 = vrot.slane %v6330, 7
        %v6334 = vshrl.u32 %v5948, 16
        %v6336 = vrot.slane %v6334, 7
        %v6337 = vshll.u32 %v5948, 16
        %v6339 = vor.u32 %v6336, %v6337
        %v6340 = vsel %vm6321, %v6332, %v6339
        %v6342 = vshrl.u32 %v6149, 16
        %v6344 = vrot.slane %v6342, 7
        %v6346 = vshrl.u32 %v6152, 16
        %v6348 = vrot.slane %v6346, 7
        %v6349 = vshll.u32 %v6152, 16
        %v6351 = vor.u32 %v6348, %v6349
        %v6352 = vsel %vm6321, %v6344, %v6351
        %v6353 = vrot.slane %v5949, 7
        %v6354 = vor.u32 %v6353, %v5945
        %v6355 = vsel %vm6321, %v6326, %v6354
        %v6357 = vshrl.u32 %v5956, 16
        %v6359 = vrot.slane %v6357, 7
        %v6360 = vshll.u32 %v5956, 16
        %v6362 = vor.u32 %v6359, %v6360
        %v6363 = vsel %vm6321, %v6336, %v6362
        %v6365 = vshrl.u32 %v6154, 16
        %v6367 = vrot.slane %v6365, 7
        %v6368 = vshll.u32 %v6154, 16
        %v6370 = vor.u32 %v6367, %v6368
        %v6371 = vsel %vm6321, %v6348, %v6370
        %v6372 = vrot.slane %v5957, 7
        %v6373 = vor.u32 %v6372, %v5953
        %v6374 = vsel %vm6321, %v6353, %v6373
        %v6376 = vshrl.u32 %v5964, 16
        %v6378 = vrot.slane %v6376, 7
        %v6379 = vshll.u32 %v5964, 16
        %v6381 = vor.u32 %v6378, %v6379
        %v6382 = vsel %vm6321, %v6359, %v6381
        %v6384 = vshrl.u32 %v6156, 16
        %v6386 = vrot.slane %v6384, 7
        %v6387 = vshll.u32 %v6156, 16
        %v6389 = vor.u32 %v6386, %v6387
        %v6390 = vsel %vm6321, %v6367, %v6389
        %v6391 = vrot.slane %v5965, 7
        %v6392 = vor.u32 %v6391, %v5961
        %v6393 = vsel %vm6321, %v6372, %v6392
        %v6395 = vshrl.u32 %v5972, 16
        %v6397 = vrot.slane %v6395, 7
        %v6398 = vshll.u32 %v5972, 16
        %v6400 = vor.u32 %v6397, %v6398
        %v6401 = vsel %vm6321, %v6378, %v6400
        %v6403 = vshrl.u32 %v6158, 16
        %v6405 = vrot.slane %v6403, 7
        %v6406 = vshll.u32 %v6158, 16
        %v6408 = vor.u32 %v6405, %v6406
        %v6409 = vsel %vm6321, %v6386, %v6408
        %v6410 = vrot.slane %v5973, 7
        %v6411 = vor.u32 %v6410, %v5969
        %v6412 = vsel %vm6321, %v6391, %v6411
        %v6414 = vshrl.u32 %v5980, 16
        %v6416 = vrot.slane %v6414, 7
        %v6417 = vshll.u32 %v5980, 16
        %v6419 = vor.u32 %v6416, %v6417
        %v6420 = vsel %vm6321, %v6397, %v6419
        %v6422 = vshrl.u32 %v6160, 16
        %v6424 = vrot.slane %v6422, 7
        %v6425 = vshll.u32 %v6160, 16
        %v6427 = vor.u32 %v6424, %v6425
        %v6428 = vsel %vm6321, %v6405, %v6427
        %v6429 = vrot.slane %v5981, 7
        %v6430 = vor.u32 %v6429, %v5977
        %v6431 = vsel %vm6321, %v6410, %v6430
        %v6433 = vshrl.u32 %v5988, 16
        %v6435 = vrot.slane %v6433, 7
        %v6436 = vshll.u32 %v5988, 16
        %v6438 = vor.u32 %v6435, %v6436
        %v6439 = vsel %vm6321, %v6416, %v6438
        %v6441 = vshrl.u32 %v6162, 16
        %v6443 = vrot.slane %v6441, 7
        %v6444 = vshll.u32 %v6162, 16
        %v6446 = vor.u32 %v6443, %v6444
        %v6447 = vsel %vm6321, %v6424, %v6446
        %v6448 = vrot.slane %v5989, 7
        %v6449 = vor.u32 %v6448, %v5985
        %v6450 = vsel %vm6321, %v6429, %v6449
        %v6452 = vshrl.u32 %v5996, 16
        %v6454 = vrot.slane %v6452, 7
        %v6455 = vshll.u32 %v5996, 16
        %v6457 = vor.u32 %v6454, %v6455
        %v6458 = vsel %vm6321, %v6435, %v6457
        %v6460 = vshrl.u32 %v6164, 16
        %v6462 = vrot.slane %v6460, 7
        %v6463 = vshll.u32 %v6164, 16
        %v6465 = vor.u32 %v6462, %v6463
        %v6466 = vsel %vm6321, %v6443, %v6465
        %v6467 = vrot.slane %v5997, 7
        %v6468 = vor.u32 %v6467, %v5993
        %v6469 = vsel %vm6321, %v6448, %v6468
        %v6471 = vshrl.u32 %v6004, 16
        %v6473 = vrot.slane %v6471, 7
        %v6474 = vshll.u32 %v6004, 16
        %v6476 = vor.u32 %v6473, %v6474
        %v6477 = vsel %vm6321, %v6454, %v6476
        %v6479 = vshrl.u32 %v6166, 16
        %v6481 = vrot.slane %v6479, 7
        %v6482 = vshll.u32 %v6166, 16
        %v6484 = vor.u32 %v6481, %v6482
        %v6485 = vsel %vm6321, %v6462, %v6484
        %v6486 = vrot.slane %v6005, 7
        %v6487 = vor.u32 %v6486, %v6001
        %v6488 = vsel %vm6321, %v6467, %v6487
        %v6490 = vshrl.u32 %v6012, 16
        %v6492 = vrot.slane %v6490, 7
        %v6493 = vshll.u32 %v6012, 16
        %v6495 = vor.u32 %v6492, %v6493
        %v6496 = vsel %vm6321, %v6473, %v6495
        %v6498 = vshrl.u32 %v6168, 16
        %v6500 = vrot.slane %v6498, 7
        %v6501 = vshll.u32 %v6168, 16
        %v6503 = vor.u32 %v6500, %v6501
        %v6504 = vsel %vm6321, %v6481, %v6503
        %v6505 = vrot.slane %v6013, 7
        %v6506 = vor.u32 %v6505, %v6009
        %v6507 = vsel %vm6321, %v6486, %v6506
        %v6509 = vshrl.u32 %v6020, 16
        %v6511 = vrot.slane %v6509, 7
        %v6512 = vshll.u32 %v6020, 16
        %v6514 = vor.u32 %v6511, %v6512
        %v6515 = vsel %vm6321, %v6492, %v6514
        %v6517 = vshrl.u32 %v6170, 16
        %v6519 = vrot.slane %v6517, 7
        %v6520 = vshll.u32 %v6170, 16
        %v6522 = vor.u32 %v6519, %v6520
        %v6523 = vsel %vm6321, %v6500, %v6522
        %v6524 = vrot.slane %v6021, 7
        %v6525 = vor.u32 %v6524, %v6017
        %v6526 = vsel %vm6321, %v6505, %v6525
        %v6528 = vshrl.u32 %v6028, 16
        %v6530 = vrot.slane %v6528, 7
        %v6531 = vshll.u32 %v6028, 16
        %v6533 = vor.u32 %v6530, %v6531
        %v6534 = vsel %vm6321, %v6511, %v6533
        %v6536 = vshrl.u32 %v6172, 16
        %v6538 = vrot.slane %v6536, 7
        %v6539 = vshll.u32 %v6172, 16
        %v6541 = vor.u32 %v6538, %v6539
        %v6542 = vsel %vm6321, %v6519, %v6541
        %v6543 = vrot.slane %v6029, 7
        %v6544 = vor.u32 %v6543, %v6025
        %v6545 = vsel %vm6321, %v6524, %v6544
        %v6547 = vshrl.u32 %v6036, 16
        %v6549 = vrot.slane %v6547, 7
        %v6550 = vshll.u32 %v6036, 16
        %v6552 = vor.u32 %v6549, %v6550
        %v6553 = vsel %vm6321, %v6530, %v6552
        %v6555 = vshrl.u32 %v6174, 16
        %v6557 = vrot.slane %v6555, 7
        %v6558 = vshll.u32 %v6174, 16
        %v6560 = vor.u32 %v6557, %v6558
        %v6561 = vsel %vm6321, %v6538, %v6560
        %v6562 = vrot.slane %v6037, 7
        %v6563 = vor.u32 %v6562, %v6033
        %v6564 = vsel %vm6321, %v6543, %v6563
        %v6566 = vshrl.u32 %v6044, 16
        %v6568 = vrot.slane %v6566, 7
        %v6569 = vshll.u32 %v6044, 16
        %v6571 = vor.u32 %v6568, %v6569
        %v6572 = vsel %vm6321, %v6549, %v6571
        %v6574 = vshrl.u32 %v6176, 16
        %v6576 = vrot.slane %v6574, 7
        %v6577 = vshll.u32 %v6176, 16
        %v6579 = vor.u32 %v6576, %v6577
        %v6580 = vsel %vm6321, %v6557, %v6579
        %v6581 = vrot.slane %v6045, 7
        %v6582 = vor.u32 %v6581, %v6041
        %v6583 = vsel %vm6321, %v6562, %v6582
        %v6585 = vshrl.u32 %v6052, 16
        %v6587 = vrot.slane %v6585, 7
        %v6588 = vshll.u32 %v6052, 16
        %v6590 = vor.u32 %v6587, %v6588
        %v6591 = vsel %vm6321, %v6568, %v6590
        %v6593 = vshrl.u32 %v6178, 16
        %v6595 = vrot.slane %v6593, 7
        %v6596 = vshll.u32 %v6178, 16
        %v6598 = vor.u32 %v6595, %v6596
        %v6599 = vsel %vm6321, %v6576, %v6598
        %v6600 = vrot.slane %v6053, 7
        %v6601 = vor.u32 %v6600, %v6049
        %v6602 = vsel %vm6321, %v6581, %v6601
        %v6604 = vshrl.u32 %v6060, 16
        %v6606 = vrot.slane %v6604, 7
        %v6607 = vshll.u32 %v6060, 16
        %v6609 = vor.u32 %v6606, %v6607
        %v6610 = vsel %vm6321, %v6587, %v6609
        %v6612 = vshrl.u32 %v6180, 16
        %v6614 = vrot.slane %v6612, 7
        %v6615 = vshll.u32 %v6180, 16
        %v6617 = vor.u32 %v6614, %v6615
        %v6618 = vsel %vm6321, %v6595, %v6617
        %v6619 = vrot.slane %v6061, 7
        %v6620 = vor.u32 %v6619, %v6057
        %v6621 = vsel %vm6321, %v6600, %v6620
        %v6623 = vshrl.u32 %v6068, 16
        %v6625 = vrot.slane %v6623, 7
        %v6626 = vshll.u32 %v6068, 16
        %v6628 = vor.u32 %v6625, %v6626
        %v6629 = vsel %vm6321, %v6606, %v6628
        %v6631 = vshrl.u32 %v6182, 16
        %v6633 = vrot.slane %v6631, 7
        %v6634 = vshll.u32 %v6182, 16
        %v6636 = vor.u32 %v6633, %v6634
        %v6637 = vsel %vm6321, %v6614, %v6636
        %v6638 = vrot.slane %v6069, 7
        %v6639 = vor.u32 %v6638, %v6065
        %v6640 = vsel %vm6321, %v6619, %v6639
        %v6642 = vshrl.u32 %v6076, 16
        %v6644 = vrot.slane %v6642, 7
        %v6645 = vshll.u32 %v6076, 16
        %v6647 = vor.u32 %v6644, %v6645
        %v6648 = vsel %vm6321, %v6625, %v6647
        %v6650 = vshrl.u32 %v6184, 16
        %v6652 = vrot.slane %v6650, 7
        %v6653 = vshll.u32 %v6184, 16
        %v6655 = vor.u32 %v6652, %v6653
        %v6656 = vsel %vm6321, %v6633, %v6655
        %v6657 = vrot.slane %v6077, 7
        %v6658 = vor.u32 %v6657, %v6073
        %v6659 = vsel %vm6321, %v6638, %v6658
        %v6661 = vshrl.u32 %v6084, 16
        %v6663 = vrot.slane %v6661, 7
        %v6664 = vshll.u32 %v6084, 16
        %v6666 = vor.u32 %v6663, %v6664
        %v6667 = vsel %vm6321, %v6644, %v6666
        %v6669 = vshrl.u32 %v6186, 16
        %v6671 = vrot.slane %v6669, 7
        %v6672 = vshll.u32 %v6186, 16
        %v6674 = vor.u32 %v6671, %v6672
        %v6675 = vsel %vm6321, %v6652, %v6674
        %v6676 = vrot.slane %v6085, 7
        %v6677 = vor.u32 %v6676, %v6081
        %v6678 = vsel %vm6321, %v6657, %v6677
        %v6680 = vshrl.u32 %v6092, 16
        %v6682 = vrot.slane %v6680, 7
        %v6683 = vshll.u32 %v6092, 16
        %v6685 = vor.u32 %v6682, %v6683
        %v6686 = vsel %vm6321, %v6663, %v6685
        %v6688 = vshrl.u32 %v6188, 16
        %v6690 = vrot.slane %v6688, 7
        %v6691 = vshll.u32 %v6188, 16
        %v6693 = vor.u32 %v6690, %v6691
        %v6694 = vsel %vm6321, %v6671, %v6693
        %v6695 = vrot.slane %v6093, 7
        %v6696 = vor.u32 %v6695, %v6089
        %v6697 = vsel %vm6321, %v6676, %v6696
        %v6699 = vshrl.u32 %v6100, 16
        %v6701 = vrot.slane %v6699, 7
        %v6702 = vshll.u32 %v6100, 16
        %v6704 = vor.u32 %v6701, %v6702
        %v6705 = vsel %vm6321, %v6682, %v6704
        %v6707 = vshrl.u32 %v6190, 16
        %v6709 = vrot.slane %v6707, 7
        %v6710 = vshll.u32 %v6190, 16
        %v6712 = vor.u32 %v6709, %v6710
        %v6713 = vsel %vm6321, %v6690, %v6712
        %v6714 = vrot.slane %v6101, 7
        %v6715 = vor.u32 %v6714, %v6097
        %v6716 = vsel %vm6321, %v6695, %v6715
        %v6718 = vshrl.u32 %v6108, 16
        %v6720 = vrot.slane %v6718, 7
        %v6721 = vshll.u32 %v6108, 16
        %v6723 = vor.u32 %v6720, %v6721
        %v6724 = vsel %vm6321, %v6701, %v6723
        %v6726 = vshrl.u32 %v6192, 16
        %v6728 = vrot.slane %v6726, 7
        %v6729 = vshll.u32 %v6192, 16
        %v6731 = vor.u32 %v6728, %v6729
        %v6732 = vsel %vm6321, %v6709, %v6731
        %v6733 = vrot.slane %v6109, 7
        %v6734 = vor.u32 %v6733, %v6105
        %v6735 = vsel %vm6321, %v6714, %v6734
        %v6737 = vshrl.u32 %v6251, 16
        %v6739 = vrot.slane %v6737, 7
        %v6740 = vshll.u32 %v6251, 16
        %v6742 = vor.u32 %v6739, %v6740
        %v6743 = vsel %vm6321, %v6720, %v6742
        %v6745 = vshrl.u32 %v6267, 16
        %v6747 = vrot.slane %v6745, 7
        %v6748 = vshll.u32 %v6267, 16
        %v6750 = vor.u32 %v6747, %v6748
        %v6751 = vsel %vm6321, %v6728, %v6750
        %v6752 = vrot.slane %v6252, 7
        %v6753 = vor.u32 %v6752, %v6248
        %v6754 = vsel %vm6321, %v6733, %v6753
        %v6756 = vshrl.u32 %v6259, 16
        %v6758 = vrot.slane %v6756, 7
        %v6759 = vshll.u32 %v6259, 16
        %v6761 = vor.u32 %v6758, %v6759
        %v6762 = vsel %vm6321, %v6739, %v6761
        %v6764 = vshrl.u32 %v6269, 16
        %v6766 = vrot.slane %v6764, 7
        %v6767 = vshll.u32 %v6269, 16
        %v6769 = vor.u32 %v6766, %v6767
        %v6770 = vsel %vm6321, %v6747, %v6769
        %v6771 = vrot.slane %v6260, 7
        %v6772 = vor.u32 %v6771, %v6256
        %v6773 = vsel %vm6321, %v6752, %v6772
        %v6775 = vshrl.u32 %v6262, 16
        %v6777 = vrot.slane %v6775, 7
        %v6778 = vshll.u32 %v6262, 16
        %v6780 = vor.u32 %v6777, %v6778
        %v6781 = vsel %vm6321, %v6758, %v6780
        %v6783 = vshrl.u32 %v6271, 16
        %v6785 = vrot.slane %v6783, 7
        %v6786 = vshll.u32 %v6271, 16
        %v6788 = vor.u32 %v6785, %v6786
        %v6789 = vsel %vm6321, %v6766, %v6788
        %v6910 = vunpack.c.l.b16 %v6273
        %v6911 = vunpack.c.l.b16 %v6274
        %v6912 = vunpack.c.l.b16 %v6275
        %v6913 = vunpack.c.l.b16 %v6276
        %v6914 = vunpack.c.l.b16 %v6277
        %v6915 = vunpack.c.l.b16 %v6278
        %v6916 = vunpack.c.l.b16 %v6279
        %v6917 = vunpack.c.l.b16 %v6280
        %v6918 = vunpack.c.l.b16 %v6281
        %v6919 = vunpack.c.l.b16 %v6282
        %v6920 = vunpack.c.l.b16 %v6283
        %v6921 = vunpack.c.l.b16 %v6284
        %v6922 = vunpack.c.l.b16 %v6285
        %v6923 = vunpack.c.l.b16 %v6286
        %v6924 = vunpack.c.l.b16 %v6287
        %v6925 = vunpack.c.l.b16 %v6288
        %v6926 = vunpack.c.l.b16 %v6289
        %v6927 = vunpack.c.l.b16 %v6290
        %v6928 = vunpack.c.l.b16 %v6291
        %v6929 = vunpack.c.l.b16 %v6292
        %v6930 = vunpack.c.l.b16 %v6293
        %v6931 = vunpack.c.l.b16 %v6294
        %v6932 = vunpack.c.l.b16 %v6295
        %v6933 = vunpack.c.l.b16 %v6296
        %v6934 = vunpack.c.l.b16 %v6297
        %v6935 = vunpack.c.l.b16 %v6298
        %v6936 = vunpack.c.l.b16 %v6299
        %v6937 = vunpack.c.l.b16 %v6300
        %v6938 = vunpack.c.l.b16 %v6301
        %v6939 = vunpack.c.l.b16 %v6302
        %v6940 = vunpack.c.l.b16 %v6303
        %v6941 = vunpack.c.l.b16 %v6304
        %v6942 = vunpack.c.l.b16 %v6305
        %v6943 = vunpack.c.l.b16 %v6306
        %v6944 = vunpack.c.l.b16 %v6307
        %v6945 = vunpack.c.l.b16 %v6308
        %v6946 = vunpack.c.l.b16 %v6309
        %v6947 = vunpack.c.l.b16 %v6310
        %v6948 = vunpack.c.l.b16 %v6311
        %v6949 = vunpack.c.l.b16 %v6312
        %v6950 = vunpack.c.l.b16 %v6313
        %v6951 = vunpack.c.l.b16 %v6314
        %v6952 = vunpack.c.l.b16 %v6315
        %v6953 = vunpack.c.l.b16 %v6316
        %v6954 = vunpack.c.l.b16 %v6317
        %v6955 = vunpack.c.l.b16 %v6318
        %v6956 = vunpack.c.l.b16 %v6319
        %v6957 = vunpack.c.l.b16 %v6320
        %v6958 = vpack.c.b16 %v6911, %v6910
        %v6959 = vpack.c.b16 %v6913, %v6912
        %v6960 = vpack.c.b16 %v6915, %v6914
        %v6961 = vpack.c.b16 %v6917, %v6916
        %v6962 = vpack.c.b16 %v6919, %v6918
        %v6963 = vpack.c.b16 %v6921, %v6920
        %v6964 = vpack.c.b16 %v6923, %v6922
        %v6965 = vpack.c.b16 %v6925, %v6924
        %v6966 = vpack.c.b16 %v6927, %v6926
        %v6967 = vpack.c.b16 %v6929, %v6928
        %v6968 = vpack.c.b16 %v6931, %v6930
        %v6969 = vpack.c.b16 %v6933, %v6932
        %v6970 = vpack.c.b16 %v6935, %v6934
        %v6971 = vpack.c.b16 %v6937, %v6936
        %v6972 = vpack.c.b16 %v6939, %v6938
        %v6973 = vpack.c.b16 %v6941, %v6940
        %v6974 = vpack.c.b16 %v6943, %v6942
        %v6975 = vpack.c.b16 %v6945, %v6944
        %v6976 = vpack.c.b16 %v6947, %v6946
        %v6977 = vpack.c.b16 %v6949, %v6948
        %v6978 = vpack.c.b16 %v6951, %v6950
        %v6979 = vpack.c.b16 %v6953, %v6952
        %v6980 = vpack.c.b16 %v6955, %v6954
        %v6981 = vpack.c.b16 %v6957, %v6956
        %7006 = vmatprep.subr.bf16.mxu0 0
        %7007 = vmatpush1.bf16.msra.mxu0 %v6958
        %7008 = vmatprep.subr.bf16.mxu0 0
        %7009 = vmatpush1.bf16.msra.mxu0 %v6959
        %7010 = vmatprep.subr.bf16.mxu0 0
        %7011 = vmatpush1.bf16.msra.mxu0 %v6960
        %7012 = vmatprep.subr.bf16.mxu0 0
        %7013 = vmatpush1.bf16.msra.mxu0 %v6961
        %7014 = vmatprep.subr.bf16.mxu0 0
        %7015 = vmatpush1.bf16.msra.mxu0 %v6962
        %7016 = vmatprep.subr.bf16.mxu0 0
        %7017 = vmatpush1.bf16.msra.mxu0 %v6963
        %7018 = vmatprep.subr.bf16.mxu0 0
        %7019 = vmatpush1.bf16.msra.mxu0 %v6964
        %7020 = vmatprep.subr.bf16.mxu0 0
        %7021 = vmatpush1.bf16.msra.mxu0 %v6965
        %7022 = vmatprep.subr.bf16.mxu0 0
        %7023 = vmatpush1.bf16.msra.mxu0 %v6966
        %7024 = vmatprep.subr.bf16.mxu0 0
        %7025 = vmatpush1.bf16.msra.mxu0 %v6967
        %7026 = vmatprep.subr.bf16.mxu0 0
        %7027 = vmatpush1.bf16.msra.mxu0 %v6968
        %7028 = vmatprep.subr.bf16.mxu0 0
        %7029 = vmatpush1.bf16.msra.mxu0 %v6969
        %7030 = vmatprep.subr.bf16.mxu0 0
        %7031 = vmatpush1.bf16.msra.mxu0 %v6970
        %7032 = vmatprep.subr.bf16.mxu0 0
        %7033 = vmatpush1.bf16.msra.mxu0 %v6971
        %7034 = vmatprep.subr.bf16.mxu0 0
        %7035 = vmatpush1.bf16.msra.mxu0 %v6972
        %7036 = vmatprep.subr.bf16.mxu0 0
        %7037 = vmatpush1.bf16.msra.mxu0 %v6973
        %7038 = vmatprep.mubr.bf16.mxu0 %v6340
        %7039 = vmatmul.mubr.bf16.gmra.mrb[0].mxu0 %v6328
        %v7040 = vpop.f32.mrb[0].mxu0
        %v7041 = vadd.f32 0.0, %v7040
        %v7042 = vpop.f32.mrb[0].mxu0
        %v7043 = vpop.f32.mrb[0].mxu0
        %v7044 = vadd.f32 0.0, %v7043
        %v7045 = vpop.f32.mrb[0].mxu0
        %7046 = vmatprep.mubr.bf16.mxu0 %v6363
        %7047 = vmatmul.mubr.bf16.gmra.mrb[0].mxu0 %v6355
        %v7048 = vpop.f32.mrb[0].mxu0
        %v7049 = vadd.f32 0.0, %v7048
        %v7050 = vpop.f32.mrb[0].mxu0
        %v7051 = vpop.f32.mrb[0].mxu0
        %v7052 = vadd.f32 0.0, %v7051
        %v7053 = vpop.f32.mrb[0].mxu0
        %7054 = vmatprep.mubr.bf16.mxu0 %v6382
        %7055 = vmatmul.mubr.bf16.gmra.mrb[0].mxu0 %v6374
        %v7056 = vpop.f32.mrb[0].mxu0
        %v7057 = vadd.f32 0.0, %v7056
        %v7058 = vpop.f32.mrb[0].mxu0
        %v7059 = vpop.f32.mrb[0].mxu0
        %v7060 = vadd.f32 0.0, %v7059
        %v7061 = vpop.f32.mrb[0].mxu0
        %7062 = vmatprep.mubr.bf16.mxu0 %v6401
        %7063 = vmatmul.mubr.bf16.gmra.mrb[0].mxu0 %v6393
        %v7064 = vpop.f32.mrb[0].mxu0
        %v7065 = vadd.f32 0.0, %v7064
        %v7066 = vpop.f32.mrb[0].mxu0
        %v7067 = vpop.f32.mrb[0].mxu0
        %v7068 = vadd.f32 0.0, %v7067
        %v7069 = vpop.f32.mrb[0].mxu0
        %7070 = vmatprep.mubr.bf16.mxu0 %v6420
        %7071 = vmatmul.mubr.bf16.gmra.mrb[0].mxu0 %v6412
        %v7072 = vpop.f32.mrb[0].mxu0
        %v7073 = vadd.f32 0.0, %v7072
        %v7074 = vpop.f32.mrb[0].mxu0
        %v7075 = vpop.f32.mrb[0].mxu0
        %v7076 = vadd.f32 0.0, %v7075
        %v7077 = vpop.f32.mrb[0].mxu0
        %7078 = vmatprep.mubr.bf16.mxu0 %v6439
        %7079 = vmatmul.mubr.bf16.gmra.mrb[0].mxu0 %v6431
        %v7080 = vpop.f32.mrb[0].mxu0
        %v7081 = vadd.f32 0.0, %v7080
        %v7082 = vpop.f32.mrb[0].mxu0
        %v7083 = vpop.f32.mrb[0].mxu0
        %v7084 = vadd.f32 0.0, %v7083
        %v7085 = vpop.f32.mrb[0].mxu0
        %7086 = vmatprep.mubr.bf16.mxu0 %v6458
        %7087 = vmatmul.mubr.bf16.gmra.mrb[0].mxu0 %v6450
        %v7088 = vpop.f32.mrb[0].mxu0
        %v7089 = vadd.f32 0.0, %v7088
        %v7090 = vpop.f32.mrb[0].mxu0
        %v7091 = vpop.f32.mrb[0].mxu0
        %v7092 = vadd.f32 0.0, %v7091
        %v7093 = vpop.f32.mrb[0].mxu0
        %7094 = vmatprep.mubr.bf16.mxu0 %v6477
        %7095 = vmatmul.mubr.bf16.gmra.mrb[0].mxu0 %v6469
        %v7096 = vpop.f32.mrb[0].mxu0
        %v7097 = vadd.f32 0.0, %v7096
        %v7098 = vpop.f32.mrb[0].mxu0
        %v7099 = vpop.f32.mrb[0].mxu0
        %v7100 = vadd.f32 0.0, %v7099
        %v7101 = vpop.f32.mrb[0].mxu0
        %7102 = vmatprep.mubr.bf16.mxu0 %v6496
        %7103 = vmatmul.mubr.bf16.gmra.mrb[0].mxu0 %v6488
        %v7104 = vpop.f32.mrb[0].mxu0
        %v7105 = vadd.f32 0.0, %v7104
        %v7106 = vpop.f32.mrb[0].mxu0
        %v7107 = vpop.f32.mrb[0].mxu0
        %v7108 = vadd.f32 0.0, %v7107
        %v7109 = vpop.f32.mrb[0].mxu0
        %7110 = vmatprep.mubr.bf16.mxu0 %v6515
        %7111 = vmatmul.mubr.bf16.gmra.mrb[0].mxu0 %v6507
        %v7112 = vpop.f32.mrb[0].mxu0
        %v7113 = vadd.f32 0.0, %v7112
        %v7114 = vpop.f32.mrb[0].mxu0
        %v7115 = vpop.f32.mrb[0].mxu0
        %v7116 = vadd.f32 0.0, %v7115
        %v7117 = vpop.f32.mrb[0].mxu0
        %7118 = vmatprep.mubr.bf16.mxu0 %v6534
        %7119 = vmatmul.mubr.bf16.gmra.mrb[0].mxu0 %v6526
        %v7120 = vpop.f32.mrb[0].mxu0
        %v7121 = vadd.f32 0.0, %v7120
        %v7122 = vpop.f32.mrb[0].mxu0
        %v7123 = vpop.f32.mrb[0].mxu0
        %v7124 = vadd.f32 0.0, %v7123
        %v7125 = vpop.f32.mrb[0].mxu0
        %7126 = vmatprep.mubr.bf16.mxu0 %v6553
        %7127 = vmatmul.mubr.bf16.gmra.mrb[0].mxu0 %v6545
        %v7128 = vpop.f32.mrb[0].mxu0
        %v7129 = vadd.f32 0.0, %v7128
        %v7130 = vpop.f32.mrb[0].mxu0
        %v7131 = vpop.f32.mrb[0].mxu0
        %v7132 = vadd.f32 0.0, %v7131
        %v7133 = vpop.f32.mrb[0].mxu0
        %7134 = vmatprep.mubr.bf16.mxu0 %v6572
        %7135 = vmatmul.mubr.bf16.gmra.mrb[0].mxu0 %v6564
        %v7136 = vpop.f32.mrb[0].mxu0
        %v7137 = vadd.f32 0.0, %v7136
        %v7138 = vpop.f32.mrb[0].mxu0
        %v7139 = vpop.f32.mrb[0].mxu0
        %v7140 = vadd.f32 0.0, %v7139
        %v7141 = vpop.f32.mrb[0].mxu0
        %7142 = vmatprep.mubr.bf16.mxu0 %v6591
        %7143 = vmatmul.mubr.bf16.gmra.mrb[0].mxu0 %v6583
        %v7144 = vpop.f32.mrb[0].mxu0
        %v7145 = vadd.f32 0.0, %v7144
        %v7146 = vpop.f32.mrb[0].mxu0
        %v7147 = vpop.f32.mrb[0].mxu0
        %v7148 = vadd.f32 0.0, %v7147
        %v7149 = vpop.f32.mrb[0].mxu0
        %7150 = vmatprep.mubr.bf16.mxu0 %v6610
        %7151 = vmatmul.mubr.bf16.gmra.mrb[0].mxu0 %v6602
        %v7152 = vpop.f32.mrb[0].mxu0
        %v7153 = vadd.f32 0.0, %v7152
        %v7154 = vpop.f32.mrb[0].mxu0
        %v7155 = vpop.f32.mrb[0].mxu0
        %v7156 = vadd.f32 0.0, %v7155
        %v7157 = vpop.f32.mrb[0].mxu0
        %7158 = vmatprep.mubr.bf16.mxu0 %v6629
        %7159 = vmatmul.mubr.bf16.gmra.mrb[0].mxu0 %v6621
        %v7160 = vpop.f32.mrb[0].mxu0
        %v7161 = vadd.f32 0.0, %v7160
        %v7162 = vpop.f32.mrb[0].mxu0
        %v7163 = vpop.f32.mrb[0].mxu0
        %v7164 = vadd.f32 0.0, %v7163
        %v7165 = vpop.f32.mrb[0].mxu0
        %7166 = vmatprep.mubr.bf16.mxu0 %v6648
        %7167 = vmatmul.mubr.bf16.gmra.mrb[0].mxu0 %v6640
        %v7168 = vpop.f32.mrb[0].mxu0
        %v7169 = vadd.f32 0.0, %v7168
        %v7170 = vpop.f32.mrb[0].mxu0
        %v7171 = vpop.f32.mrb[0].mxu0
        %v7172 = vadd.f32 0.0, %v7171
        %v7173 = vpop.f32.mrb[0].mxu0
        %7174 = vmatprep.mubr.bf16.mxu0 %v6667
        %7175 = vmatmul.mubr.bf16.gmra.mrb[0].mxu0 %v6659
        %v7176 = vpop.f32.mrb[0].mxu0
        %v7177 = vadd.f32 0.0, %v7176
        %v7178 = vpop.f32.mrb[0].mxu0
        %v7179 = vpop.f32.mrb[0].mxu0
        %v7180 = vadd.f32 0.0, %v7179
        %v7181 = vpop.f32.mrb[0].mxu0
        %7182 = vmatprep.mubr.bf16.mxu0 %v6686
        %7183 = vmatmul.mubr.bf16.gmra.mrb[0].mxu0 %v6678
        %v7184 = vpop.f32.mrb[0].mxu0
        %v7185 = vadd.f32 0.0, %v7184
        %v7186 = vpop.f32.mrb[0].mxu0
        %v7187 = vpop.f32.mrb[0].mxu0
        %v7188 = vadd.f32 0.0, %v7187
        %v7189 = vpop.f32.mrb[0].mxu0
        %7190 = vmatprep.mubr.bf16.mxu0 %v6705
        %7191 = vmatmul.mubr.bf16.gmra.mrb[0].mxu0 %v6697
        %v7192 = vpop.f32.mrb[0].mxu0
        %v7193 = vadd.f32 0.0, %v7192
        %v7194 = vpop.f32.mrb[0].mxu0
        %v7195 = vpop.f32.mrb[0].mxu0
        %v7196 = vadd.f32 0.0, %v7195
        %v7197 = vpop.f32.mrb[0].mxu0
        %7198 = vmatprep.mubr.bf16.mxu0 %v6724
        %7199 = vmatmul.mubr.bf16.gmra.mrb[0].mxu0 %v6716
        %v7200 = vpop.f32.mrb[0].mxu0
        %v7201 = vadd.f32 0.0, %v7200
        %v7202 = vpop.f32.mrb[0].mxu0
        %v7203 = vpop.f32.mrb[0].mxu0
        %v7204 = vadd.f32 0.0, %v7203
        %v7205 = vpop.f32.mrb[0].mxu0
        %7206 = vmatprep.mubr.bf16.mxu0 %v6743
        %7207 = vmatmul.mubr.bf16.gmra.mrb[0].mxu0 %v6735
        %v7208 = vpop.f32.mrb[0].mxu0
        %v7209 = vadd.f32 0.0, %v7208
        %v7210 = vpop.f32.mrb[0].mxu0
        %v7211 = vpop.f32.mrb[0].mxu0
        %v7212 = vadd.f32 0.0, %v7211
        %v7213 = vpop.f32.mrb[0].mxu0
        %7214 = vmatprep.mubr.bf16.mxu0 %v6762
        %7215 = vmatmul.mubr.bf16.gmra.mrb[0].mxu0 %v6754
        %v7216 = vpop.f32.mrb[0].mxu0
        %v7217 = vadd.f32 0.0, %v7216
        %v7218 = vpop.f32.mrb[0].mxu0
        %v7219 = vpop.f32.mrb[0].mxu0
        %v7220 = vadd.f32 0.0, %v7219
        %v7221 = vpop.f32.mrb[0].mxu0
        %7222 = vmatprep.mubr.bf16.mxu0 %v6781
        %7223 = vmatmul.mubr.bf16.gmra.mrb[0].mxu0 %v6773
        %v7224 = vpop.f32.mrb[0].mxu0
        %v7225 = vadd.f32 0.0, %v7224
        %v7226 = vpop.f32.mrb[0].mxu0
        %v7227 = vpop.f32.mrb[0].mxu0
        %v7228 = vadd.f32 0.0, %v7227
        %v7229 = vpop.f32.mrb[0].mxu0
        %7230 = vdwg.mxu0
        %7231 = vmatprep.subr.bf16.mxu0 0
        %7232 = vmatpush1.bf16.msra.mxu0 %v6974
        %7233 = vmatprep.subr.bf16.mxu0 0
        %7234 = vmatpush1.bf16.msra.mxu0 %v6975
        %7235 = vmatprep.subr.bf16.mxu0 0
        %7236 = vmatpush1.bf16.msra.mxu0 %v6976
        %7237 = vmatprep.subr.bf16.mxu0 0
        %7238 = vmatpush1.bf16.msra.mxu0 %v6977
        %7239 = vmatprep.subr.bf16.mxu0 0
        %7240 = vmatpush1.bf16.msra.mxu0 %v6978
        %7241 = vmatprep.subr.bf16.mxu0 0
        %7242 = vmatpush1.bf16.msra.mxu0 %v6979
        %7243 = vmatprep.subr.bf16.mxu0 0
        %7244 = vmatpush1.bf16.msra.mxu0 %v6980
        %7245 = vmatprep.subr.bf16.mxu0 0
        %7246 = vmatpush1.bf16.msra.mxu0 %v6981
        %7247 = vmatprep.subr.bf16.mxu0 0
        %7248 = vmatpush1.bf16.msra.mxu0 0
        %7249 = vmatprep.subr.bf16.mxu0 0
        %7250 = vmatpush1.bf16.msra.mxu0 0
        %7251 = vmatprep.subr.bf16.mxu0 0
        %7252 = vmatpush1.bf16.msra.mxu0 0
        %7253 = vmatprep.subr.bf16.mxu0 0
        %7254 = vmatpush1.bf16.msra.mxu0 0
        %7255 = vmatprep.subr.bf16.mxu0 0
        %7256 = vmatpush1.bf16.msra.mxu0 0
        %7257 = vmatprep.subr.bf16.mxu0 0
        %7258 = vmatpush1.bf16.msra.mxu0 0
        %7259 = vmatprep.subr.bf16.mxu0 0
        %7260 = vmatpush1.bf16.msra.mxu0 0
        %7261 = vmatprep.subr.bf16.mxu0 0
        %7262 = vmatpush1.bf16.msra.mxu0 0
        %7263 = vmatprep.mubr.bf16.mxu0 0
        %7264 = vmatmul.mubr.bf16.gmra.mrb[0].mxu0 %v6352
        %v7265 = vpop.f32.mrb[0].mxu0
        %v7266 = vadd.f32 %v7041, %v7265
        %v7267 = vpop.f32.mrb[0].mxu0
        %v7268 = vpop.f32.mrb[0].mxu0
        %v7269 = vadd.f32 %v7044, %v7268
        %v7270 = vpop.f32.mrb[0].mxu0
        %7271 = vmatprep.mubr.bf16.mxu0 0
        %7272 = vmatmul.mubr.bf16.gmra.mrb[0].mxu0 %v6371
        %v7273 = vpop.f32.mrb[0].mxu0
        %v7274 = vadd.f32 %v7049, %v7273
        %v7275 = vpop.f32.mrb[0].mxu0
        %v7276 = vpop.f32.mrb[0].mxu0
        %v7277 = vadd.f32 %v7052, %v7276
        %v7278 = vpop.f32.mrb[0].mxu0
        %7279 = vmatprep.mubr.bf16.mxu0 0
        %7280 = vmatmul.mubr.bf16.gmra.mrb[0].mxu0 %v6390
        %v7281 = vpop.f32.mrb[0].mxu0
        %v7282 = vadd.f32 %v7057, %v7281
        %v7283 = vpop.f32.mrb[0].mxu0
        %v7284 = vpop.f32.mrb[0].mxu0
        %v7285 = vadd.f32 %v7060, %v7284
        %v7286 = vpop.f32.mrb[0].mxu0
        %7287 = vmatprep.mubr.bf16.mxu0 0
        %7288 = vmatmul.mubr.bf16.gmra.mrb[0].mxu0 %v6409
        %v7289 = vpop.f32.mrb[0].mxu0
        %v7290 = vadd.f32 %v7065, %v7289
        %v7291 = vpop.f32.mrb[0].mxu0
        %v7292 = vpop.f32.mrb[0].mxu0
        %v7293 = vadd.f32 %v7068, %v7292
        %v7294 = vpop.f32.mrb[0].mxu0
        %7295 = vmatprep.mubr.bf16.mxu0 0
        %7296 = vmatmul.mubr.bf16.gmra.mrb[0].mxu0 %v6428
        %v7297 = vpop.f32.mrb[0].mxu0
        %v7298 = vadd.f32 %v7073, %v7297
        %v7299 = vpop.f32.mrb[0].mxu0
        %v7300 = vpop.f32.mrb[0].mxu0
        %v7301 = vadd.f32 %v7076, %v7300
        %v7302 = vpop.f32.mrb[0].mxu0
        %7303 = vmatprep.mubr.bf16.mxu0 0
        %7304 = vmatmul.mubr.bf16.gmra.mrb[0].mxu0 %v6447
        %v7305 = vpop.f32.mrb[0].mxu0
        %v7306 = vadd.f32 %v7081, %v7305
        %v7307 = vpop.f32.mrb[0].mxu0
        %v7308 = vpop.f32.mrb[0].mxu0
        %v7309 = vadd.f32 %v7084, %v7308
        %v7310 = vpop.f32.mrb[0].mxu0
        %7311 = vmatprep.mubr.bf16.mxu0 0
        %7312 = vmatmul.mubr.bf16.gmra.mrb[0].mxu0 %v6466
        %v7313 = vpop.f32.mrb[0].mxu0
        %v7314 = vadd.f32 %v7089, %v7313
        %v7315 = vpop.f32.mrb[0].mxu0
        %v7316 = vpop.f32.mrb[0].mxu0
        %v7317 = vadd.f32 %v7092, %v7316
        %v7318 = vpop.f32.mrb[0].mxu0
        %7319 = vmatprep.mubr.bf16.mxu0 0
        %7320 = vmatmul.mubr.bf16.gmra.mrb[0].mxu0 %v6485
        %v7321 = vpop.f32.mrb[0].mxu0
        %v7322 = vadd.f32 %v7097, %v7321
        %v7323 = vpop.f32.mrb[0].mxu0
        %v7324 = vpop.f32.mrb[0].mxu0
        %v7325 = vadd.f32 %v7100, %v7324
        %v7326 = vpop.f32.mrb[0].mxu0
        %7327 = vmatprep.mubr.bf16.mxu0 0
        %7328 = vmatmul.mubr.bf16.gmra.mrb[0].mxu0 %v6504
        %v7329 = vpop.f32.mrb[0].mxu0
        %v7330 = vadd.f32 %v7105, %v7329
        %v7331 = vpop.f32.mrb[0].mxu0
        %v7332 = vpop.f32.mrb[0].mxu0
        %v7333 = vadd.f32 %v7108, %v7332
        %v7334 = vpop.f32.mrb[0].mxu0
        %7335 = vmatprep.mubr.bf16.mxu0 0
        %7336 = vmatmul.mubr.bf16.gmra.mrb[0].mxu0 %v6523
        %v7337 = vpop.f32.mrb[0].mxu0
        %v7338 = vadd.f32 %v7113, %v7337
        %v7339 = vpop.f32.mrb[0].mxu0
        %v7340 = vpop.f32.mrb[0].mxu0
        %v7341 = vadd.f32 %v7116, %v7340
        %v7342 = vpop.f32.mrb[0].mxu0
        %7343 = vmatprep.mubr.bf16.mxu0 0
        %7344 = vmatmul.mubr.bf16.gmra.mrb[0].mxu0 %v6542
        %v7345 = vpop.f32.mrb[0].mxu0
        %v7346 = vadd.f32 %v7121, %v7345
        %v7347 = vpop.f32.mrb[0].mxu0
        %v7348 = vpop.f32.mrb[0].mxu0
        %v7349 = vadd.f32 %v7124, %v7348
        %v7350 = vpop.f32.mrb[0].mxu0
        %7351 = vmatprep.mubr.bf16.mxu0 0
        %7352 = vmatmul.mubr.bf16.gmra.mrb[0].mxu0 %v6561
        %v7353 = vpop.f32.mrb[0].mxu0
        %v7354 = vadd.f32 %v7129, %v7353
        %v7355 = vpop.f32.mrb[0].mxu0
        %v7356 = vpop.f32.mrb[0].mxu0
        %v7357 = vadd.f32 %v7132, %v7356
        %v7358 = vpop.f32.mrb[0].mxu0
        %7359 = vmatprep.mubr.bf16.mxu0 0
        %7360 = vmatmul.mubr.bf16.gmra.mrb[0].mxu0 %v6580
        %v7361 = vpop.f32.mrb[0].mxu0
        %v7362 = vadd.f32 %v7137, %v7361
        %v7363 = vpop.f32.mrb[0].mxu0
        %v7364 = vpop.f32.mrb[0].mxu0
        %v7365 = vadd.f32 %v7140, %v7364
        %v7366 = vpop.f32.mrb[0].mxu0
        %7367 = vmatprep.mubr.bf16.mxu0 0
        %7368 = vmatmul.mubr.bf16.gmra.mrb[0].mxu0 %v6599
        %v7369 = vpop.f32.mrb[0].mxu0
        %v7370 = vadd.f32 %v7145, %v7369
        %v7371 = vpop.f32.mrb[0].mxu0
        %v7372 = vpop.f32.mrb[0].mxu0
        %v7373 = vadd.f32 %v7148, %v7372
        %v7374 = vpop.f32.mrb[0].mxu0
        %7375 = vmatprep.mubr.bf16.mxu0 0
        %7376 = vmatmul.mubr.bf16.gmra.mrb[0].mxu0 %v6618
        %v7377 = vpop.f32.mrb[0].mxu0
        %v7378 = vadd.f32 %v7153, %v7377
        %v7379 = vpop.f32.mrb[0].mxu0
        %v7380 = vpop.f32.mrb[0].mxu0
        %v7381 = vadd.f32 %v7156, %v7380
        %v7382 = vpop.f32.mrb[0].mxu0
        %7383 = vmatprep.mubr.bf16.mxu0 0
        %7384 = vmatmul.mubr.bf16.gmra.mrb[0].mxu0 %v6637
        %v7385 = vpop.f32.mrb[0].mxu0
        %v7386 = vadd.f32 %v7161, %v7385
        %v7387 = vpop.f32.mrb[0].mxu0
        %v7388 = vpop.f32.mrb[0].mxu0
        %v7389 = vadd.f32 %v7164, %v7388
        %v7390 = vpop.f32.mrb[0].mxu0
        %7391 = vmatprep.mubr.bf16.mxu0 0
        %7392 = vmatmul.mubr.bf16.gmra.mrb[0].mxu0 %v6656
        %v7393 = vpop.f32.mrb[0].mxu0
        %v7394 = vadd.f32 %v7169, %v7393
        %v7395 = vpop.f32.mrb[0].mxu0
        %v7396 = vpop.f32.mrb[0].mxu0
        %v7397 = vadd.f32 %v7172, %v7396
        %v7398 = vpop.f32.mrb[0].mxu0
        %7399 = vmatprep.mubr.bf16.mxu0 0
        %7400 = vmatmul.mubr.bf16.gmra.mrb[0].mxu0 %v6675
        %v7401 = vpop.f32.mrb[0].mxu0
        %v7402 = vadd.f32 %v7177, %v7401
        %v7403 = vpop.f32.mrb[0].mxu0
        %v7404 = vpop.f32.mrb[0].mxu0
        %v7405 = vadd.f32 %v7180, %v7404
        %v7406 = vpop.f32.mrb[0].mxu0
        %7407 = vmatprep.mubr.bf16.mxu0 0
        %7408 = vmatmul.mubr.bf16.gmra.mrb[0].mxu0 %v6694
        %v7409 = vpop.f32.mrb[0].mxu0
        %v7410 = vadd.f32 %v7185, %v7409
        %v7411 = vpop.f32.mrb[0].mxu0
        %v7412 = vpop.f32.mrb[0].mxu0
        %v7413 = vadd.f32 %v7188, %v7412
        %v7414 = vpop.f32.mrb[0].mxu0
        %7415 = vmatprep.mubr.bf16.mxu0 0
        %7416 = vmatmul.mubr.bf16.gmra.mrb[0].mxu0 %v6713
        %v7417 = vpop.f32.mrb[0].mxu0
        %v7418 = vadd.f32 %v7193, %v7417
        %v7419 = vpop.f32.mrb[0].mxu0
        %v7420 = vpop.f32.mrb[0].mxu0
        %v7421 = vadd.f32 %v7196, %v7420
        %v7422 = vpop.f32.mrb[0].mxu0
        %7423 = vmatprep.mubr.bf16.mxu0 0
        %7424 = vmatmul.mubr.bf16.gmra.mrb[0].mxu0 %v6732
        %v7425 = vpop.f32.mrb[0].mxu0
        %v7426 = vadd.f32 %v7201, %v7425
        %v7427 = vpop.f32.mrb[0].mxu0
        %v7428 = vpop.f32.mrb[0].mxu0
        %v7429 = vadd.f32 %v7204, %v7428
        %v7430 = vpop.f32.mrb[0].mxu0
        %7431 = vmatprep.mubr.bf16.mxu0 0
        %7432 = vmatmul.mubr.bf16.gmra.mrb[0].mxu0 %v6751
        %v7433 = vpop.f32.mrb[0].mxu0
        %v7434 = vadd.f32 %v7209, %v7433
        %v7435 = vpop.f32.mrb[0].mxu0
        %v7436 = vpop.f32.mrb[0].mxu0
        %v7437 = vadd.f32 %v7212, %v7436
        %v7438 = vpop.f32.mrb[0].mxu0
        %7439 = vmatprep.mubr.bf16.mxu0 0
        %7440 = vmatmul.mubr.bf16.gmra.mrb[0].mxu0 %v6770
        %v7441 = vpop.f32.mrb[0].mxu0
        %v7442 = vadd.f32 %v7217, %v7441
        %v7443 = vpop.f32.mrb[0].mxu0
        %v7444 = vpop.f32.mrb[0].mxu0
        %v7445 = vadd.f32 %v7220, %v7444
        %v7446 = vpop.f32.mrb[0].mxu0
        %7447 = vmatprep.mubr.bf16.mxu0 0
        %7448 = vmatmul.mubr.bf16.gmra.mrb[0].mxu0 %v6789
        %v7449 = vpop.f32.mrb[0].mxu0
        %v7450 = vadd.f32 %v7225, %v7449
        %v7451 = vpop.f32.mrb[0].mxu0
        %v7452 = vpop.f32.mrb[0].mxu0
        %v7453 = vadd.f32 %v7228, %v7452
        %v7454 = vpop.f32.mrb[0].mxu0
        %7455 = vdwg.mxu0
        %v7457 = vshrl.u32 %v5893, 16
        %v7459 = vrot.slane %v7457, 3
        %v7460 = vshll.u32 %v5893, 16
        %v7462 = vrot.slane %v7460, 4
        %v7463 = vor.u32 %v7459, %v7462
        %v7464 = vrot.slane %v5933, 3
        %v7465 = vrot.slane %v5929, 4
        %v7466 = vor.u32 %v7464, %v7465
        %v7467 = vsel %vm1098, %v7463, %v7466
        %v7469 = vshrl.u32 %v5932, 16
        %v7471 = vrot.slane %v7469, 3
        %v7472 = vshll.u32 %v5932, 16
        %v7474 = vrot.slane %v7472, 4
        %v7475 = vor.u32 %v7471, %v7474
        %v7477 = vshrl.u32 %v5940, 16
        %v7479 = vrot.slane %v7477, 3
        %v7480 = vshll.u32 %v5940, 16
        %v7482 = vrot.slane %v7480, 4
        %v7483 = vor.u32 %v7479, %v7482
        %v7484 = vsel %vm1098, %v7475, %v7483
        %v7486 = vshrl.u32 %v6148, 16
        %v7488 = vrot.slane %v7486, 3
        %v7489 = vshll.u32 %v6148, 16
        %v7491 = vrot.slane %v7489, 4
        %v7492 = vor.u32 %v7488, %v7491
        %v7494 = vshrl.u32 %v6150, 16
        %v7496 = vrot.slane %v7494, 3
        %v7497 = vshll.u32 %v6150, 16
        %v7499 = vrot.slane %v7497, 4
        %v7500 = vor.u32 %v7496, %v7499
        %v7501 = vsel %vm1098, %v7492, %v7500
        %v7502 = vrot.slane %v5941, 3
        %v7503 = vrot.slane %v5937, 4
        %v7504 = vor.u32 %v7502, %v7503
        %v7505 = vsel %vm1098, %v7466, %v7504
        %v7506 = vrot.slane %v6334, 3
        %v7507 = vrot.slane %v6337, 4
        %v7508 = vor.u32 %v7506, %v7507
        %v7509 = vsel %vm1098, %v7483, %v7508
        %v7510 = vrot.slane %v6346, 3
        %v7511 = vrot.slane %v6349, 4
        %v7512 = vor.u32 %v7510, %v7511
        %v7513 = vsel %vm1098, %v7500, %v7512
        %v7514 = vrot.slane %v5949, 3
        %v7515 = vrot.slane %v5945, 4
        %v7516 = vor.u32 %v7514, %v7515
        %v7517 = vsel %vm1098, %v7504, %v7516
        %v7518 = vrot.slane %v6357, 3
        %v7519 = vrot.slane %v6360, 4
        %v7520 = vor.u32 %v7518, %v7519
        %v7521 = vsel %vm1098, %v7508, %v7520
        %v7522 = vrot.slane %v6365, 3
        %v7523 = vrot.slane %v6368, 4
        %v7524 = vor.u32 %v7522, %v7523
        %v7525 = vsel %vm1098, %v7512, %v7524
        %v7526 = vrot.slane %v5957, 3
        %v7527 = vrot.slane %v5953, 4
        %v7528 = vor.u32 %v7526, %v7527
        %v7529 = vsel %vm1098, %v7516, %v7528
        %v7530 = vrot.slane %v6376, 3
        %v7531 = vrot.slane %v6379, 4
        %v7532 = vor.u32 %v7530, %v7531
        %v7533 = vsel %vm1098, %v7520, %v7532
        %v7534 = vrot.slane %v6384, 3
        %v7535 = vrot.slane %v6387, 4
        %v7536 = vor.u32 %v7534, %v7535
        %v7537 = vsel %vm1098, %v7524, %v7536
        %v7538 = vrot.slane %v5965, 3
        %v7539 = vrot.slane %v5961, 4
        %v7540 = vor.u32 %v7538, %v7539
        %v7541 = vsel %vm1098, %v7528, %v7540
        %v7542 = vrot.slane %v6395, 3
        %v7543 = vrot.slane %v6398, 4
        %v7544 = vor.u32 %v7542, %v7543
        %v7545 = vsel %vm1098, %v7532, %v7544
        %v7546 = vrot.slane %v6403, 3
        %v7547 = vrot.slane %v6406, 4
        %v7548 = vor.u32 %v7546, %v7547
        %v7549 = vsel %vm1098, %v7536, %v7548
        %v7550 = vrot.slane %v5973, 3
        %v7551 = vrot.slane %v5969, 4
        %v7552 = vor.u32 %v7550, %v7551
        %v7553 = vsel %vm1098, %v7540, %v7552
        %v7554 = vrot.slane %v6414, 3
        %v7555 = vrot.slane %v6417, 4
        %v7556 = vor.u32 %v7554, %v7555
        %v7557 = vsel %vm1098, %v7544, %v7556
        %v7558 = vrot.slane %v6422, 3
        %v7559 = vrot.slane %v6425, 4
        %v7560 = vor.u32 %v7558, %v7559
        %v7561 = vsel %vm1098, %v7548, %v7560
        %v7562 = vrot.slane %v5981, 3
        %v7563 = vrot.slane %v5977, 4
        %v7564 = vor.u32 %v7562, %v7563
        %v7565 = vsel %vm1098, %v7552, %v7564
        %v7566 = vrot.slane %v6433, 3
        %v7567 = vrot.slane %v6436, 4
        %v7568 = vor.u32 %v7566, %v7567
        %v7569 = vsel %vm1098, %v7556, %v7568
        %v7570 = vrot.slane %v6441, 3
        %v7571 = vrot.slane %v6444, 4
        %v7572 = vor.u32 %v7570, %v7571
        %v7573 = vsel %vm1098, %v7560, %v7572
        %v7574 = vrot.slane %v5989, 3
        %v7575 = vrot.slane %v5985, 4
        %v7576 = vor.u32 %v7574, %v7575
        %v7577 = vsel %vm1098, %v7564, %v7576
        %v7578 = vrot.slane %v6452, 3
        %v7579 = vrot.slane %v6455, 4
        %v7580 = vor.u32 %v7578, %v7579
        %v7581 = vsel %vm1098, %v7568, %v7580
        %v7582 = vrot.slane %v6460, 3
        %v7583 = vrot.slane %v6463, 4
        %v7584 = vor.u32 %v7582, %v7583
        %v7585 = vsel %vm1098, %v7572, %v7584
        %v7586 = vrot.slane %v5997, 3
        %v7587 = vrot.slane %v5993, 4
        %v7588 = vor.u32 %v7586, %v7587
        %v7589 = vsel %vm1098, %v7576, %v7588
        %v7590 = vrot.slane %v6471, 3
        %v7591 = vrot.slane %v6474, 4
        %v7592 = vor.u32 %v7590, %v7591
        %v7593 = vsel %vm1098, %v7580, %v7592
        %v7594 = vrot.slane %v6479, 3
        %v7595 = vrot.slane %v6482, 4
        %v7596 = vor.u32 %v7594, %v7595
        %v7597 = vsel %vm1098, %v7584, %v7596
        %v7598 = vrot.slane %v6005, 3
        %v7599 = vrot.slane %v6001, 4
        %v7600 = vor.u32 %v7598, %v7599
        %v7601 = vsel %vm1098, %v7588, %v7600
        %v7602 = vrot.slane %v6490, 3
        %v7603 = vrot.slane %v6493, 4
        %v7604 = vor.u32 %v7602, %v7603
        %v7605 = vsel %vm1098, %v7592, %v7604
        %v7606 = vrot.slane %v6498, 3
        %v7607 = vrot.slane %v6501, 4
        %v7608 = vor.u32 %v7606, %v7607
        %v7609 = vsel %vm1098, %v7596, %v7608
        %v7610 = vrot.slane %v6013, 3
        %v7611 = vrot.slane %v6009, 4
        %v7612 = vor.u32 %v7610, %v7611
        %v7613 = vsel %vm1098, %v7600, %v7612
        %v7614 = vrot.slane %v6509, 3
        %v7615 = vrot.slane %v6512, 4
        %v7616 = vor.u32 %v7614, %v7615
        %v7617 = vsel %vm1098, %v7604, %v7616
        %v7618 = vrot.slane %v6517, 3
        %v7619 = vrot.slane %v6520, 4
        %v7620 = vor.u32 %v7618, %v7619
        %v7621 = vsel %vm1098, %v7608, %v7620
        %v7622 = vrot.slane %v6021, 3
        %v7623 = vrot.slane %v6017, 4
        %v7624 = vor.u32 %v7622, %v7623
        %v7625 = vsel %vm1098, %v7612, %v7624
        %v7626 = vrot.slane %v6528, 3
        %v7627 = vrot.slane %v6531, 4
        %v7628 = vor.u32 %v7626, %v7627
        %v7629 = vsel %vm1098, %v7616, %v7628
        %v7630 = vrot.slane %v6536, 3
        %v7631 = vrot.slane %v6539, 4
        %v7632 = vor.u32 %v7630, %v7631
        %v7633 = vsel %vm1098, %v7620, %v7632
        %v7634 = vrot.slane %v6029, 3
        %v7635 = vrot.slane %v6025, 4
        %v7636 = vor.u32 %v7634, %v7635
        %v7637 = vsel %vm1098, %v7624, %v7636
        %v7638 = vrot.slane %v6547, 3
        %v7639 = vrot.slane %v6550, 4
        %v7640 = vor.u32 %v7638, %v7639
        %v7641 = vsel %vm1098, %v7628, %v7640
        %v7642 = vrot.slane %v6555, 3
        %v7643 = vrot.slane %v6558, 4
        %v7644 = vor.u32 %v7642, %v7643
        %v7645 = vsel %vm1098, %v7632, %v7644
        %v7646 = vrot.slane %v6037, 3
        %v7647 = vrot.slane %v6033, 4
        %v7648 = vor.u32 %v7646, %v7647
        %v7649 = vsel %vm1098, %v7636, %v7648
        %v7650 = vrot.slane %v6566, 3
        %v7651 = vrot.slane %v6569, 4
        %v7652 = vor.u32 %v7650, %v7651
        %v7653 = vsel %vm1098, %v7640, %v7652
        %v7654 = vrot.slane %v6574, 3
        %v7655 = vrot.slane %v6577, 4
        %v7656 = vor.u32 %v7654, %v7655
        %v7657 = vsel %vm1098, %v7644, %v7656
        %v7658 = vrot.slane %v6045, 3
        %v7659 = vrot.slane %v6041, 4
        %v7660 = vor.u32 %v7658, %v7659
        %v7661 = vsel %vm1098, %v7648, %v7660
        %v7662 = vrot.slane %v6585, 3
        %v7663 = vrot.slane %v6588, 4
        %v7664 = vor.u32 %v7662, %v7663
        %v7665 = vsel %vm1098, %v7652, %v7664
        %v7666 = vrot.slane %v6593, 3
        %v7667 = vrot.slane %v6596, 4
        %v7668 = vor.u32 %v7666, %v7667
        %v7669 = vsel %vm1098, %v7656, %v7668
        %v7670 = vrot.slane %v6053, 3
        %v7671 = vrot.slane %v6049, 4
        %v7672 = vor.u32 %v7670, %v7671
        %v7673 = vsel %vm1098, %v7660, %v7672
        %v7674 = vrot.slane %v6604, 3
        %v7675 = vrot.slane %v6607, 4
        %v7676 = vor.u32 %v7674, %v7675
        %v7677 = vsel %vm1098, %v7664, %v7676
        %v7678 = vrot.slane %v6612, 3
        %v7679 = vrot.slane %v6615, 4
        %v7680 = vor.u32 %v7678, %v7679
        %v7681 = vsel %vm1098, %v7668, %v7680
        %v7682 = vrot.slane %v6061, 3
        %v7683 = vrot.slane %v6057, 4
        %v7684 = vor.u32 %v7682, %v7683
        %v7685 = vsel %vm1098, %v7672, %v7684
        %v7686 = vrot.slane %v6623, 3
        %v7687 = vrot.slane %v6626, 4
        %v7688 = vor.u32 %v7686, %v7687
        %v7689 = vsel %vm1098, %v7676, %v7688
        %v7690 = vrot.slane %v6631, 3
        %v7691 = vrot.slane %v6634, 4
        %v7692 = vor.u32 %v7690, %v7691
        %v7693 = vsel %vm1098, %v7680, %v7692
        %v7694 = vrot.slane %v6069, 3
        %v7695 = vrot.slane %v6065, 4
        %v7696 = vor.u32 %v7694, %v7695
        %v7697 = vsel %vm1098, %v7684, %v7696
        %v7698 = vrot.slane %v6642, 3
        %v7699 = vrot.slane %v6645, 4
        %v7700 = vor.u32 %v7698, %v7699
        %v7701 = vsel %vm1098, %v7688, %v7700
        %v7702 = vrot.slane %v6650, 3
        %v7703 = vrot.slane %v6653, 4
        %v7704 = vor.u32 %v7702, %v7703
        %v7705 = vsel %vm1098, %v7692, %v7704
        %v7706 = vrot.slane %v6077, 3
        %v7707 = vrot.slane %v6073, 4
        %v7708 = vor.u32 %v7706, %v7707
        %v7709 = vsel %vm1098, %v7696, %v7708
        %v7710 = vrot.slane %v6661, 3
        %v7711 = vrot.slane %v6664, 4
        %v7712 = vor.u32 %v7710, %v7711
        %v7713 = vsel %vm1098, %v7700, %v7712
        %v7714 = vrot.slane %v6669, 3
        %v7715 = vrot.slane %v6672, 4
        %v7716 = vor.u32 %v7714, %v7715
        %v7717 = vsel %vm1098, %v7704, %v7716
        %v7718 = vrot.slane %v6085, 3
        %v7719 = vrot.slane %v6081, 4
        %v7720 = vor.u32 %v7718, %v7719
        %v7721 = vsel %vm1098, %v7708, %v7720
        %v7722 = vrot.slane %v6680, 3
        %v7723 = vrot.slane %v6683, 4
        %v7724 = vor.u32 %v7722, %v7723
        %v7725 = vsel %vm1098, %v7712, %v7724
        %v7726 = vrot.slane %v6688, 3
        %v7727 = vrot.slane %v6691, 4
        %v7728 = vor.u32 %v7726, %v7727
        %v7729 = vsel %vm1098, %v7716, %v7728
        %v7730 = vrot.slane %v6093, 3
        %v7731 = vrot.slane %v6089, 4
        %v7732 = vor.u32 %v7730, %v7731
        %v7733 = vsel %vm1098, %v7720, %v7732
        %v7734 = vrot.slane %v6699, 3
        %v7735 = vrot.slane %v6702, 4
        %v7736 = vor.u32 %v7734, %v7735
        %v7737 = vsel %vm1098, %v7724, %v7736
        %v7738 = vrot.slane %v6707, 3
        %v7739 = vrot.slane %v6710, 4
        %v7740 = vor.u32 %v7738, %v7739
        %v7741 = vsel %vm1098, %v7728, %v7740
        %v7742 = vrot.slane %v6101, 3
        %v7743 = vrot.slane %v6097, 4
        %v7744 = vor.u32 %v7742, %v7743
        %v7745 = vsel %vm1098, %v7732, %v7744
        %v7746 = vrot.slane %v6718, 3
        %v7747 = vrot.slane %v6721, 4
        %v7748 = vor.u32 %v7746, %v7747
        %v7749 = vsel %vm1098, %v7736, %v7748
        %v7750 = vrot.slane %v6726, 3
        %v7751 = vrot.slane %v6729, 4
        %v7752 = vor.u32 %v7750, %v7751
        %v7753 = vsel %vm1098, %v7740, %v7752
        %v7754 = vrot.slane %v6109, 3
        %v7755 = vrot.slane %v6105, 4
        %v7756 = vor.u32 %v7754, %v7755
        %v7757 = vsel %vm1098, %v7744, %v7756
        %v7759 = vshrl.u32 %v6116, 16
        %v7761 = vrot.slane %v7759, 3
        %v7762 = vshll.u32 %v6116, 16
        %v7764 = vrot.slane %v7762, 4
        %v7765 = vor.u32 %v7761, %v7764
        %v7766 = vsel %vm1098, %v7748, %v7765
        %v7768 = vshrl.u32 %v6194, 16
        %v7770 = vrot.slane %v7768, 3
        %v7771 = vshll.u32 %v6194, 16
        %v7773 = vrot.slane %v7771, 4
        %v7774 = vor.u32 %v7770, %v7773
        %v7775 = vsel %vm1098, %v7752, %v7774
        %v7776 = vrot.slane %v6117, 3
        %v7777 = vrot.slane %v6113, 4
        %v7778 = vor.u32 %v7776, %v7777
        %v7779 = vsel %vm1098, %v7756, %v7778
        %v7781 = vshrl.u32 %v6119, 16
        %v7783 = vrot.slane %v7781, 3
        %v7784 = vshll.u32 %v6119, 16
        %v7786 = vrot.slane %v7784, 4
        %v7787 = vor.u32 %v7783, %v7786
        %v7788 = vsel %vm1098, %v7765, %v7787
        %v7790 = vshrl.u32 %v6193, 16
        %v7792 = vrot.slane %v7790, 3
        %v7793 = vshll.u32 %v6193, 16
        %v7795 = vrot.slane %v7793, 4
        %v7796 = vor.u32 %v7792, %v7795
        %v7797 = vsel %vm1098, %v7774, %v7796
        %v7918 = vunpack.c.l.b16 %v6195
        %v7919 = vunpack.c.l.b16 %v6196
        %v7920 = vunpack.c.l.b16 %v6197
        %v7921 = vunpack.c.l.b16 %v6198
        %v7922 = vunpack.c.l.b16 %v6199
        %v7923 = vunpack.c.l.b16 %v6200
        %v7924 = vunpack.c.l.b16 %v6201
        %v7925 = vunpack.c.l.b16 %v6202
        %v7926 = vunpack.c.l.b16 %v6203
        %v7927 = vunpack.c.l.b16 %v6204
        %v7928 = vunpack.c.l.b16 %v6205
        %v7929 = vunpack.c.l.b16 %v6206
        %v7930 = vunpack.c.l.b16 %v6207
        %v7931 = vunpack.c.l.b16 %v6208
        %v7932 = vunpack.c.l.b16 %v6209
        %v7933 = vunpack.c.l.b16 %v6210
        %v7934 = vunpack.c.l.b16 %v6211
        %v7935 = vunpack.c.l.b16 %v6212
        %v7936 = vunpack.c.l.b16 %v6213
        %v7937 = vunpack.c.l.b16 %v6214
        %v7938 = vunpack.c.l.b16 %v6215
        %v7939 = vunpack.c.l.b16 %v6216
        %v7940 = vunpack.c.l.b16 %v6217
        %v7941 = vunpack.c.l.b16 %v6218
        %v7942 = vunpack.c.l.b16 %v6219
        %v7943 = vunpack.c.l.b16 %v6220
        %v7944 = vunpack.c.l.b16 %v6221
        %v7945 = vunpack.c.l.b16 %v6222
        %v7946 = vunpack.c.l.b16 %v6223
        %v7947 = vunpack.c.l.b16 %v6224
        %v7948 = vunpack.c.l.b16 %v6225
        %v7949 = vunpack.c.l.b16 %v6226
        %v7950 = vunpack.c.l.b16 %v6227
        %v7951 = vunpack.c.l.b16 %v6228
        %v7952 = vunpack.c.l.b16 %v6229
        %v7953 = vunpack.c.l.b16 %v6230
        %v7954 = vunpack.c.l.b16 %v6231
        %v7955 = vunpack.c.l.b16 %v6232
        %v7956 = vunpack.c.l.b16 %v6233
        %v7957 = vunpack.c.l.b16 %v6234
        %v7958 = vunpack.c.l.b16 %v6235
        %v7959 = vunpack.c.l.b16 %v6236
        %v7960 = vunpack.c.l.b16 %v6237
        %v7961 = vunpack.c.l.b16 %v6238
        %v7962 = vunpack.c.l.b16 %v6239
        %v7963 = vunpack.c.l.b16 %v6240
        %v7964 = vunpack.c.l.b16 %v6241
        %v7965 = vunpack.c.l.b16 %v6242
        %v7966 = vpack.c.b16 %v7919, %v7918
        %v7967 = vpack.c.b16 %v7921, %v7920
        %v7968 = vpack.c.b16 %v7923, %v7922
        %v7969 = vpack.c.b16 %v7925, %v7924
        %v7970 = vpack.c.b16 %v7927, %v7926
        %v7971 = vpack.c.b16 %v7929, %v7928
        %v7972 = vpack.c.b16 %v7931, %v7930
        %v7973 = vpack.c.b16 %v7933, %v7932
        %v7974 = vpack.c.b16 %v7935, %v7934
        %v7975 = vpack.c.b16 %v7937, %v7936
        %v7976 = vpack.c.b16 %v7939, %v7938
        %v7977 = vpack.c.b16 %v7941, %v7940
        %v7978 = vpack.c.b16 %v7943, %v7942
        %v7979 = vpack.c.b16 %v7945, %v7944
        %v7980 = vpack.c.b16 %v7947, %v7946
        %v7981 = vpack.c.b16 %v7949, %v7948
        %v7982 = vpack.c.b16 %v7951, %v7950
        %v7983 = vpack.c.b16 %v7953, %v7952
        %v7984 = vpack.c.b16 %v7955, %v7954
        %v7985 = vpack.c.b16 %v7957, %v7956
        %v7986 = vpack.c.b16 %v7959, %v7958
        %v7987 = vpack.c.b16 %v7961, %v7960
        %v7988 = vpack.c.b16 %v7963, %v7962
        %v7989 = vpack.c.b16 %v7965, %v7964
        %8014 = vmatprep.subr.bf16.mxu0 0
        %8015 = vmatpush1.bf16.msra.mxu0 %v7966
        %8016 = vmatprep.subr.bf16.mxu0 0
        %8017 = vmatpush1.bf16.msra.mxu0 %v7967
        %8018 = vmatprep.subr.bf16.mxu0 0
        %8019 = vmatpush1.bf16.msra.mxu0 %v7968
        %8020 = vmatprep.subr.bf16.mxu0 0
        %8021 = vmatpush1.bf16.msra.mxu0 %v7969
        %8022 = vmatprep.subr.bf16.mxu0 0
        %8023 = vmatpush1.bf16.msra.mxu0 %v7970
        %8024 = vmatprep.subr.bf16.mxu0 0
        %8025 = vmatpush1.bf16.msra.mxu0 %v7971
        %8026 = vmatprep.subr.bf16.mxu0 0
        %8027 = vmatpush1.bf16.msra.mxu0 %v7972
        %8028 = vmatprep.subr.bf16.mxu0 0
        %8029 = vmatpush1.bf16.msra.mxu0 %v7973
        %8030 = vmatprep.subr.bf16.mxu0 0
        %8031 = vmatpush1.bf16.msra.mxu0 %v7974
        %8032 = vmatprep.subr.bf16.mxu0 0
        %8033 = vmatpush1.bf16.msra.mxu0 %v7975
        %8034 = vmatprep.subr.bf16.mxu0 0
        %8035 = vmatpush1.bf16.msra.mxu0 %v7976
        %8036 = vmatprep.subr.bf16.mxu0 0
        %8037 = vmatpush1.bf16.msra.mxu0 %v7977
        %8038 = vmatprep.subr.bf16.mxu0 0
        %8039 = vmatpush1.bf16.msra.mxu0 %v7978
        %8040 = vmatprep.subr.bf16.mxu0 0
        %8041 = vmatpush1.bf16.msra.mxu0 %v7979
        %8042 = vmatprep.subr.bf16.mxu0 0
        %8043 = vmatpush1.bf16.msra.mxu0 %v7980
        %8044 = vmatprep.subr.bf16.mxu0 0
        %8045 = vmatpush1.bf16.msra.mxu0 %v7981
        %8046 = vmatprep.mubr.bf16.mxu0 %v7484
        %8047 = vmatmul.mubr.bf16.gmra.mrb[0].mxu0 %v7467
        %v8048 = vpop.f32.mrb[0].mxu0
        %v8049 = vadd.f32 %v7266, %v8048
        %v8050 = vpop.f32.mrb[0].mxu0
        %v8051 = vpop.f32.mrb[0].mxu0
        %v8052 = vadd.f32 %v7269, %v8051
        %v8053 = vpop.f32.mrb[0].mxu0
        %8054 = vmatprep.mubr.bf16.mxu0 %v7509
        %8055 = vmatmul.mubr.bf16.gmra.mrb[0].mxu0 %v7505
        %v8056 = vpop.f32.mrb[0].mxu0
        %v8057 = vadd.f32 %v7274, %v8056
        %v8058 = vpop.f32.mrb[0].mxu0
        %v8059 = vpop.f32.mrb[0].mxu0
        %v8060 = vadd.f32 %v7277, %v8059
        %v8061 = vpop.f32.mrb[0].mxu0
        %8062 = vmatprep.mubr.bf16.mxu0 %v7521
        %8063 = vmatmul.mubr.bf16.gmra.mrb[0].mxu0 %v7517
        %v8064 = vpop.f32.mrb[0].mxu0
        %v8065 = vadd.f32 %v7282, %v8064
        %v8066 = vpop.f32.mrb[0].mxu0
        %v8067 = vpop.f32.mrb[0].mxu0
        %v8068 = vadd.f32 %v7285, %v8067
        %v8069 = vpop.f32.mrb[0].mxu0
        %8070 = vmatprep.mubr.bf16.mxu0 %v7533
        %8071 = vmatmul.mubr.bf16.gmra.mrb[0].mxu0 %v7529
        %v8072 = vpop.f32.mrb[0].mxu0
        %v8073 = vadd.f32 %v7290, %v8072
        %v8074 = vpop.f32.mrb[0].mxu0
        %v8075 = vpop.f32.mrb[0].mxu0
        %v8076 = vadd.f32 %v7293, %v8075
        %v8077 = vpop.f32.mrb[0].mxu0
        %8078 = vmatprep.mubr.bf16.mxu0 %v7545
        %8079 = vmatmul.mubr.bf16.gmra.mrb[0].mxu0 %v7541
        %v8080 = vpop.f32.mrb[0].mxu0
        %v8081 = vadd.f32 %v7298, %v8080
        %v8082 = vpop.f32.mrb[0].mxu0
        %v8083 = vpop.f32.mrb[0].mxu0
        %v8084 = vadd.f32 %v7301, %v8083
        %v8085 = vpop.f32.mrb[0].mxu0
        %8086 = vmatprep.mubr.bf16.mxu0 %v7557
        %8087 = vmatmul.mubr.bf16.gmra.mrb[0].mxu0 %v7553
        %v8088 = vpop.f32.mrb[0].mxu0
        %v8089 = vadd.f32 %v7306, %v8088
        %v8090 = vpop.f32.mrb[0].mxu0
        %v8091 = vpop.f32.mrb[0].mxu0
        %v8092 = vadd.f32 %v7309, %v8091
        %v8093 = vpop.f32.mrb[0].mxu0
        %8094 = vmatprep.mubr.bf16.mxu0 %v7569
        %8095 = vmatmul.mubr.bf16.gmra.mrb[0].mxu0 %v7565
        %v8096 = vpop.f32.mrb[0].mxu0
        %v8097 = vadd.f32 %v7314, %v8096
        %v8098 = vpop.f32.mrb[0].mxu0
        %v8099 = vpop.f32.mrb[0].mxu0
        %v8100 = vadd.f32 %v7317, %v8099
        %v8101 = vpop.f32.mrb[0].mxu0
        %8102 = vmatprep.mubr.bf16.mxu0 %v7581
        %8103 = vmatmul.mubr.bf16.gmra.mrb[0].mxu0 %v7577
        %v8104 = vpop.f32.mrb[0].mxu0
        %v8105 = vadd.f32 %v7322, %v8104
        %v8106 = vpop.f32.mrb[0].mxu0
        %v8107 = vpop.f32.mrb[0].mxu0
        %v8108 = vadd.f32 %v7325, %v8107
        %v8109 = vpop.f32.mrb[0].mxu0
        %8110 = vmatprep.mubr.bf16.mxu0 %v7593
        %8111 = vmatmul.mubr.bf16.gmra.mrb[0].mxu0 %v7589
        %v8112 = vpop.f32.mrb[0].mxu0
        %v8113 = vadd.f32 %v7330, %v8112
        %v8114 = vpop.f32.mrb[0].mxu0
        %v8115 = vpop.f32.mrb[0].mxu0
        %v8116 = vadd.f32 %v7333, %v8115
        %v8117 = vpop.f32.mrb[0].mxu0
        %8118 = vmatprep.mubr.bf16.mxu0 %v7605
        %8119 = vmatmul.mubr.bf16.gmra.mrb[0].mxu0 %v7601
        %v8120 = vpop.f32.mrb[0].mxu0
        %v8121 = vadd.f32 %v7338, %v8120
        %v8122 = vpop.f32.mrb[0].mxu0
        %v8123 = vpop.f32.mrb[0].mxu0
        %v8124 = vadd.f32 %v7341, %v8123
        %v8125 = vpop.f32.mrb[0].mxu0
        %8126 = vmatprep.mubr.bf16.mxu0 %v7617
        %8127 = vmatmul.mubr.bf16.gmra.mrb[0].mxu0 %v7613
        %v8128 = vpop.f32.mrb[0].mxu0
        %v8129 = vadd.f32 %v7346, %v8128
        %v8130 = vpop.f32.mrb[0].mxu0
        %v8131 = vpop.f32.mrb[0].mxu0
        %v8132 = vadd.f32 %v7349, %v8131
        %v8133 = vpop.f32.mrb[0].mxu0
        %8134 = vmatprep.mubr.bf16.mxu0 %v7629
        %8135 = vmatmul.mubr.bf16.gmra.mrb[0].mxu0 %v7625
        %v8136 = vpop.f32.mrb[0].mxu0
        %v8137 = vadd.f32 %v7354, %v8136
        %v8138 = vpop.f32.mrb[0].mxu0
        %v8139 = vpop.f32.mrb[0].mxu0
        %v8140 = vadd.f32 %v7357, %v8139
        %v8141 = vpop.f32.mrb[0].mxu0
        %8142 = vmatprep.mubr.bf16.mxu0 %v7641
        %8143 = vmatmul.mubr.bf16.gmra.mrb[0].mxu0 %v7637
        %v8144 = vpop.f32.mrb[0].mxu0
        %v8145 = vadd.f32 %v7362, %v8144
        %v8146 = vpop.f32.mrb[0].mxu0
        %v8147 = vpop.f32.mrb[0].mxu0
        %v8148 = vadd.f32 %v7365, %v8147
        %v8149 = vpop.f32.mrb[0].mxu0
        %8150 = vmatprep.mubr.bf16.mxu0 %v7653
        %8151 = vmatmul.mubr.bf16.gmra.mrb[0].mxu0 %v7649
        %v8152 = vpop.f32.mrb[0].mxu0
        %v8153 = vadd.f32 %v7370, %v8152
        %v8154 = vpop.f32.mrb[0].mxu0
        %v8155 = vpop.f32.mrb[0].mxu0
        %v8156 = vadd.f32 %v7373, %v8155
        %v8157 = vpop.f32.mrb[0].mxu0
        %8158 = vmatprep.mubr.bf16.mxu0 %v7665
        %8159 = vmatmul.mubr.bf16.gmra.mrb[0].mxu0 %v7661
        %v8160 = vpop.f32.mrb[0].mxu0
        %v8161 = vadd.f32 %v7378, %v8160
        %v8162 = vpop.f32.mrb[0].mxu0
        %v8163 = vpop.f32.mrb[0].mxu0
        %v8164 = vadd.f32 %v7381, %v8163
        %v8165 = vpop.f32.mrb[0].mxu0
        %8166 = vmatprep.mubr.bf16.mxu0 %v7677
        %8167 = vmatmul.mubr.bf16.gmra.mrb[0].mxu0 %v7673
        %v8168 = vpop.f32.mrb[0].mxu0
        %v8169 = vadd.f32 %v7386, %v8168
        %v8170 = vpop.f32.mrb[0].mxu0
        %v8171 = vpop.f32.mrb[0].mxu0
        %v8172 = vadd.f32 %v7389, %v8171
        %v8173 = vpop.f32.mrb[0].mxu0
        %8174 = vmatprep.mubr.bf16.mxu0 %v7689
        %8175 = vmatmul.mubr.bf16.gmra.mrb[0].mxu0 %v7685
        %v8176 = vpop.f32.mrb[0].mxu0
        %v8177 = vadd.f32 %v7394, %v8176
        %v8178 = vpop.f32.mrb[0].mxu0
        %v8179 = vpop.f32.mrb[0].mxu0
        %v8180 = vadd.f32 %v7397, %v8179
        %v8181 = vpop.f32.mrb[0].mxu0
        %8182 = vmatprep.mubr.bf16.mxu0 %v7701
        %8183 = vmatmul.mubr.bf16.gmra.mrb[0].mxu0 %v7697
        %v8184 = vpop.f32.mrb[0].mxu0
        %v8185 = vadd.f32 %v7402, %v8184
        %v8186 = vpop.f32.mrb[0].mxu0
        %v8187 = vpop.f32.mrb[0].mxu0
        %v8188 = vadd.f32 %v7405, %v8187
        %v8189 = vpop.f32.mrb[0].mxu0
        %8190 = vmatprep.mubr.bf16.mxu0 %v7713
        %8191 = vmatmul.mubr.bf16.gmra.mrb[0].mxu0 %v7709
        %v8192 = vpop.f32.mrb[0].mxu0
        %v8193 = vadd.f32 %v7410, %v8192
        %v8194 = vpop.f32.mrb[0].mxu0
        %v8195 = vpop.f32.mrb[0].mxu0
        %v8196 = vadd.f32 %v7413, %v8195
        %v8197 = vpop.f32.mrb[0].mxu0
        %8198 = vmatprep.mubr.bf16.mxu0 %v7725
        %8199 = vmatmul.mubr.bf16.gmra.mrb[0].mxu0 %v7721
        %v8200 = vpop.f32.mrb[0].mxu0
        %v8201 = vadd.f32 %v7418, %v8200
        %v8202 = vpop.f32.mrb[0].mxu0
        %v8203 = vpop.f32.mrb[0].mxu0
        %v8204 = vadd.f32 %v7421, %v8203
        %v8205 = vpop.f32.mrb[0].mxu0
        %8206 = vmatprep.mubr.bf16.mxu0 %v7737
        %8207 = vmatmul.mubr.bf16.gmra.mrb[0].mxu0 %v7733
        %v8208 = vpop.f32.mrb[0].mxu0
        %v8209 = vadd.f32 %v7426, %v8208
        %v8210 = vpop.f32.mrb[0].mxu0
        %v8211 = vpop.f32.mrb[0].mxu0
        %v8212 = vadd.f32 %v7429, %v8211
        %v8213 = vpop.f32.mrb[0].mxu0
        %8214 = vmatprep.mubr.bf16.mxu0 %v7749
        %8215 = vmatmul.mubr.bf16.gmra.mrb[0].mxu0 %v7745
        %v8216 = vpop.f32.mrb[0].mxu0
        %v8217 = vadd.f32 %v7434, %v8216
        %v8218 = vpop.f32.mrb[0].mxu0
        %v8219 = vpop.f32.mrb[0].mxu0
        %v8220 = vadd.f32 %v7437, %v8219
        %v8221 = vpop.f32.mrb[0].mxu0
        %8222 = vmatprep.mubr.bf16.mxu0 %v7766
        %8223 = vmatmul.mubr.bf16.gmra.mrb[0].mxu0 %v7757
        %v8224 = vpop.f32.mrb[0].mxu0
        %v8225 = vadd.f32 %v7442, %v8224
        %v8226 = vpop.f32.mrb[0].mxu0
        %v8227 = vpop.f32.mrb[0].mxu0
        %v8228 = vadd.f32 %v7445, %v8227
        %v8229 = vpop.f32.mrb[0].mxu0
        %8230 = vmatprep.mubr.bf16.mxu0 %v7788
        %8231 = vmatmul.mubr.bf16.gmra.mrb[0].mxu0 %v7779
        %v8232 = vpop.f32.mrb[0].mxu0
        %v8233 = vadd.f32 %v7450, %v8232
        %v8234 = vpop.f32.mrb[0].mxu0
        %v8235 = vpop.f32.mrb[0].mxu0
        %v8236 = vadd.f32 %v7453, %v8235
        %v8237 = vpop.f32.mrb[0].mxu0
        %8238 = vdwg.mxu0
        %8239 = vmatprep.subr.bf16.mxu0 0
        %8240 = vmatpush1.bf16.msra.mxu0 %v7982
        %8241 = vmatprep.subr.bf16.mxu0 0
        %8242 = vmatpush1.bf16.msra.mxu0 %v7983
        %8243 = vmatprep.subr.bf16.mxu0 0
        %8244 = vmatpush1.bf16.msra.mxu0 %v7984
        %8245 = vmatprep.subr.bf16.mxu0 0
        %8246 = vmatpush1.bf16.msra.mxu0 %v7985
        %8247 = vmatprep.subr.bf16.mxu0 0
        %8248 = vmatpush1.bf16.msra.mxu0 %v7986
        %8249 = vmatprep.subr.bf16.mxu0 0
        %8250 = vmatpush1.bf16.msra.mxu0 %v7987
        %8251 = vmatprep.subr.bf16.mxu0 0
        %8252 = vmatpush1.bf16.msra.mxu0 %v7988
        %8253 = vmatprep.subr.bf16.mxu0 0
        %8254 = vmatpush1.bf16.msra.mxu0 %v7989
        %8255 = vmatprep.subr.bf16.mxu0 0
        %8256 = vmatpush1.bf16.msra.mxu0 0
        %8257 = vmatprep.subr.bf16.mxu0 0
        %8258 = vmatpush1.bf16.msra.mxu0 0
        %8259 = vmatprep.subr.bf16.mxu0 0
        %8260 = vmatpush1.bf16.msra.mxu0 0
        %8261 = vmatprep.subr.bf16.mxu0 0
        %8262 = vmatpush1.bf16.msra.mxu0 0
        %8263 = vmatprep.subr.bf16.mxu0 0
        %8264 = vmatpush1.bf16.msra.mxu0 0
        %8265 = vmatprep.subr.bf16.mxu0 0
        %8266 = vmatpush1.bf16.msra.mxu0 0
        %8267 = vmatprep.subr.bf16.mxu0 0
        %8268 = vmatpush1.bf16.msra.mxu0 0
        %8269 = vmatprep.subr.bf16.mxu0 0
        %8270 = vmatpush1.bf16.msra.mxu0 0
        %8271 = vmatprep.mubr.bf16.mxu0 0
        %8272 = vmatmul.mubr.bf16.gmra.mrb[0].mxu0 %v7501
        %v8273 = vpop.f32.mrb[0].mxu0
        %v8274 = vadd.f32 %v8049, %v8273
        %v8275 = vpop.f32.mrb[0].mxu0
        %v8276 = vpop.f32.mrb[0].mxu0
        %v8277 = vadd.f32 %v8052, %v8276
        %v8278 = vpop.f32.mrb[0].mxu0
        %8279 = vmatprep.mubr.bf16.mxu0 0
        %8280 = vmatmul.mubr.bf16.gmra.mrb[0].mxu0 %v7513
        %v8281 = vpop.f32.mrb[0].mxu0
        %v8282 = vadd.f32 %v8057, %v8281
        %v8283 = vpop.f32.mrb[0].mxu0
        %v8284 = vpop.f32.mrb[0].mxu0
        %v8285 = vadd.f32 %v8060, %v8284
        %v8286 = vpop.f32.mrb[0].mxu0
        %8287 = vmatprep.mubr.bf16.mxu0 0
        %8288 = vmatmul.mubr.bf16.gmra.mrb[0].mxu0 %v7525
        %v8289 = vpop.f32.mrb[0].mxu0
        %v8290 = vadd.f32 %v8065, %v8289
        %v8291 = vpop.f32.mrb[0].mxu0
        %v8292 = vpop.f32.mrb[0].mxu0
        %v8293 = vadd.f32 %v8068, %v8292
        %v8294 = vpop.f32.mrb[0].mxu0
        %8295 = vmatprep.mubr.bf16.mxu0 0
        %8296 = vmatmul.mubr.bf16.gmra.mrb[0].mxu0 %v7537
        %v8297 = vpop.f32.mrb[0].mxu0
        %v8298 = vadd.f32 %v8073, %v8297
        %v8299 = vpop.f32.mrb[0].mxu0
        %v8300 = vpop.f32.mrb[0].mxu0
        %v8301 = vadd.f32 %v8076, %v8300
        %v8302 = vpop.f32.mrb[0].mxu0
        %8303 = vmatprep.mubr.bf16.mxu0 0
        %8304 = vmatmul.mubr.bf16.gmra.mrb[0].mxu0 %v7549
        %v8305 = vpop.f32.mrb[0].mxu0
        %v8306 = vadd.f32 %v8081, %v8305
        %v8307 = vpop.f32.mrb[0].mxu0
        %v8308 = vpop.f32.mrb[0].mxu0
        %v8309 = vadd.f32 %v8084, %v8308
        %v8310 = vpop.f32.mrb[0].mxu0
        %8311 = vmatprep.mubr.bf16.mxu0 0
        %8312 = vmatmul.mubr.bf16.gmra.mrb[0].mxu0 %v7561
        %v8313 = vpop.f32.mrb[0].mxu0
        %v8314 = vadd.f32 %v8089, %v8313
        %v8315 = vpop.f32.mrb[0].mxu0
        %v8316 = vpop.f32.mrb[0].mxu0
        %v8317 = vadd.f32 %v8092, %v8316
        %v8318 = vpop.f32.mrb[0].mxu0
        %8319 = vmatprep.mubr.bf16.mxu0 0
        %8320 = vmatmul.mubr.bf16.gmra.mrb[0].mxu0 %v7573
        %v8321 = vpop.f32.mrb[0].mxu0
        %v8322 = vadd.f32 %v8097, %v8321
        %v8323 = vpop.f32.mrb[0].mxu0
        %v8324 = vpop.f32.mrb[0].mxu0
        %v8325 = vadd.f32 %v8100, %v8324
        %v8326 = vpop.f32.mrb[0].mxu0
        %8327 = vmatprep.mubr.bf16.mxu0 0
        %8328 = vmatmul.mubr.bf16.gmra.mrb[0].mxu0 %v7585
        %v8329 = vpop.f32.mrb[0].mxu0
        %v8330 = vadd.f32 %v8105, %v8329
        %v8331 = vpop.f32.mrb[0].mxu0
        %v8332 = vpop.f32.mrb[0].mxu0
        %v8333 = vadd.f32 %v8108, %v8332
        %v8334 = vpop.f32.mrb[0].mxu0
        %8335 = vmatprep.mubr.bf16.mxu0 0
        %8336 = vmatmul.mubr.bf16.gmra.mrb[0].mxu0 %v7597
        %v8337 = vpop.f32.mrb[0].mxu0
        %v8338 = vadd.f32 %v8113, %v8337
        %v8339 = vpop.f32.mrb[0].mxu0
        %v8340 = vpop.f32.mrb[0].mxu0
        %v8341 = vadd.f32 %v8116, %v8340
        %v8342 = vpop.f32.mrb[0].mxu0
        %8343 = vmatprep.mubr.bf16.mxu0 0
        %8344 = vmatmul.mubr.bf16.gmra.mrb[0].mxu0 %v7609
        %v8345 = vpop.f32.mrb[0].mxu0
        %v8346 = vadd.f32 %v8121, %v8345
        %v8347 = vpop.f32.mrb[0].mxu0
        %v8348 = vpop.f32.mrb[0].mxu0
        %v8349 = vadd.f32 %v8124, %v8348
        %v8350 = vpop.f32.mrb[0].mxu0
        %8351 = vmatprep.mubr.bf16.mxu0 0
        %8352 = vmatmul.mubr.bf16.gmra.mrb[0].mxu0 %v7621
        %v8353 = vpop.f32.mrb[0].mxu0
        %v8354 = vadd.f32 %v8129, %v8353
        %v8355 = vpop.f32.mrb[0].mxu0
        %v8356 = vpop.f32.mrb[0].mxu0
        %v8357 = vadd.f32 %v8132, %v8356
        %v8358 = vpop.f32.mrb[0].mxu0
        %8359 = vmatprep.mubr.bf16.mxu0 0
        %8360 = vmatmul.mubr.bf16.gmra.mrb[0].mxu0 %v7633
        %v8361 = vpop.f32.mrb[0].mxu0
        %v8362 = vadd.f32 %v8137, %v8361
        %v8363 = vpop.f32.mrb[0].mxu0
        %v8364 = vpop.f32.mrb[0].mxu0
        %v8365 = vadd.f32 %v8140, %v8364
        %v8366 = vpop.f32.mrb[0].mxu0
        %8367 = vmatprep.mubr.bf16.mxu0 0
        %8368 = vmatmul.mubr.bf16.gmra.mrb[0].mxu0 %v7645
        %v8369 = vpop.f32.mrb[0].mxu0
        %v8370 = vadd.f32 %v8145, %v8369
        %v8371 = vpop.f32.mrb[0].mxu0
        %v8372 = vpop.f32.mrb[0].mxu0
        %v8373 = vadd.f32 %v8148, %v8372
        %v8374 = vpop.f32.mrb[0].mxu0
        %8375 = vmatprep.mubr.bf16.mxu0 0
        %8376 = vmatmul.mubr.bf16.gmra.mrb[0].mxu0 %v7657
        %v8377 = vpop.f32.mrb[0].mxu0
        %v8378 = vadd.f32 %v8153, %v8377
        %v8379 = vpop.f32.mrb[0].mxu0
        %v8380 = vpop.f32.mrb[0].mxu0
        %v8381 = vadd.f32 %v8156, %v8380
        %v8382 = vpop.f32.mrb[0].mxu0
        %8383 = vmatprep.mubr.bf16.mxu0 0
        %8384 = vmatmul.mubr.bf16.gmra.mrb[0].mxu0 %v7669
        %v8385 = vpop.f32.mrb[0].mxu0
        %v8386 = vadd.f32 %v8161, %v8385
        %v8387 = vpop.f32.mrb[0].mxu0
        %v8388 = vpop.f32.mrb[0].mxu0
        %v8389 = vadd.f32 %v8164, %v8388
        %v8390 = vpop.f32.mrb[0].mxu0
        %8391 = vmatprep.mubr.bf16.mxu0 0
        %8392 = vmatmul.mubr.bf16.gmra.mrb[0].mxu0 %v7681
        %v8393 = vpop.f32.mrb[0].mxu0
        %v8394 = vadd.f32 %v8169, %v8393
        %v8395 = vpop.f32.mrb[0].mxu0
        %v8396 = vpop.f32.mrb[0].mxu0
        %v8397 = vadd.f32 %v8172, %v8396
        %v8398 = vpop.f32.mrb[0].mxu0
        %8399 = vmatprep.mubr.bf16.mxu0 0
        %8400 = vmatmul.mubr.bf16.gmra.mrb[0].mxu0 %v7693
        %v8401 = vpop.f32.mrb[0].mxu0
        %v8402 = vadd.f32 %v8177, %v8401
        %v8403 = vpop.f32.mrb[0].mxu0
        %v8404 = vpop.f32.mrb[0].mxu0
        %v8405 = vadd.f32 %v8180, %v8404
        %v8406 = vpop.f32.mrb[0].mxu0
        %8407 = vmatprep.mubr.bf16.mxu0 0
        %8408 = vmatmul.mubr.bf16.gmra.mrb[0].mxu0 %v7705
        %v8409 = vpop.f32.mrb[0].mxu0
        %v8410 = vadd.f32 %v8185, %v8409
        %v8411 = vpop.f32.mrb[0].mxu0
        %v8412 = vpop.f32.mrb[0].mxu0
        %v8413 = vadd.f32 %v8188, %v8412
        %v8414 = vpop.f32.mrb[0].mxu0
        %8415 = vmatprep.mubr.bf16.mxu0 0
        %8416 = vmatmul.mubr.bf16.gmra.mrb[0].mxu0 %v7717
        %v8417 = vpop.f32.mrb[0].mxu0
        %v8418 = vadd.f32 %v8193, %v8417
        %v8419 = vpop.f32.mrb[0].mxu0
        %v8420 = vpop.f32.mrb[0].mxu0
        %v8421 = vadd.f32 %v8196, %v8420
        %v8422 = vpop.f32.mrb[0].mxu0
        %8423 = vmatprep.mubr.bf16.mxu0 0
        %8424 = vmatmul.mubr.bf16.gmra.mrb[0].mxu0 %v7729
        %v8425 = vpop.f32.mrb[0].mxu0
        %v8426 = vadd.f32 %v8201, %v8425
        %v8427 = vpop.f32.mrb[0].mxu0
        %v8428 = vpop.f32.mrb[0].mxu0
        %v8429 = vadd.f32 %v8204, %v8428
        %v8430 = vpop.f32.mrb[0].mxu0
        %8431 = vmatprep.mubr.bf16.mxu0 0
        %8432 = vmatmul.mubr.bf16.gmra.mrb[0].mxu0 %v7741
        %v8433 = vpop.f32.mrb[0].mxu0
        %v8434 = vadd.f32 %v8209, %v8433
        %v8435 = vpop.f32.mrb[0].mxu0
        %v8436 = vpop.f32.mrb[0].mxu0
        %v8437 = vadd.f32 %v8212, %v8436
        %v8438 = vpop.f32.mrb[0].mxu0
        %8439 = vmatprep.mubr.bf16.mxu0 0
        %8440 = vmatmul.mubr.bf16.gmra.mrb[0].mxu0 %v7753
        %v8441 = vpop.f32.mrb[0].mxu0
        %v8442 = vadd.f32 %v8217, %v8441
        %v8443 = vpop.f32.mrb[0].mxu0
        %v8444 = vpop.f32.mrb[0].mxu0
        %v8445 = vadd.f32 %v8220, %v8444
        %v8446 = vpop.f32.mrb[0].mxu0
        %8447 = vmatprep.mubr.bf16.mxu0 0
        %8448 = vmatmul.mubr.bf16.gmra.mrb[0].mxu0 %v7775
        %v8449 = vpop.f32.mrb[0].mxu0
        %v8450 = vadd.f32 %v8225, %v8449
        %v8451 = vpop.f32.mrb[0].mxu0
        %v8452 = vpop.f32.mrb[0].mxu0
        %v8453 = vadd.f32 %v8228, %v8452
        %v8454 = vpop.f32.mrb[0].mxu0
        %8455 = vmatprep.mubr.bf16.mxu0 0
        %8456 = vmatmul.mubr.bf16.gmra.mrb[0].mxu0 %v7797
        %v8457 = vpop.f32.mrb[0].mxu0
        %v8458 = vadd.f32 %v8233, %v8457
        %v8459 = vpop.f32.mrb[0].mxu0
        %v8460 = vpop.f32.mrb[0].mxu0
        %v8461 = vadd.f32 %v8236, %v8460
        %v8462 = vpop.f32.mrb[0].mxu0
        %8463 = vdwg.mxu0
        %v8464 = vld [vmem:[#allocation2 + $0x18] sm:$0xf8]
        %v8465 = vld [vmem:[#allocation2 + $0x20] sm:$0xff]
        %v8466 = vld [vmem:[#allocation2 + $0x28] sm:$0xff]
        %v8467 = vld [vmem:[#allocation2 + $0x30] sm:$0xff]
        %v8468 = vld [vmem:[#allocation2 + $0x38] sm:$0xff]
        %v8469 = vld [vmem:[#allocation2 + $0x40] sm:$0xff]
        %v8470 = vld [vmem:[#allocation2 + $0x48] sm:$0xff]
        %v8471 = vld [vmem:[#allocation2 + $0x50] sm:$0xff]
        %v8472 = vld [vmem:[#allocation2 + $0x58] sm:$0xff]
        %v8473 = vld [vmem:[#allocation2 + $0x60] sm:$0xff]
        %v8474 = vld [vmem:[#allocation2 + $0x68] sm:$0xff]
        %v8475 = vld [vmem:[#allocation2 + $0x70] sm:$0xff]
        %v8476 = vld [vmem:[#allocation2 + $0x78] sm:$0xff]
        %v8477 = vld [vmem:[#allocation2 + $0x80] sm:$0xff]
        %v8478 = vld [vmem:[#allocation2 + $0x88] sm:$0xff]
        %v8479 = vld [vmem:[#allocation2 + $0x90] sm:$0xff]
        %v8480 = vld [vmem:[#allocation2 + $0x98] sm:$0xff]
        %v8481 = vld [vmem:[#allocation2 + $0xa0] sm:$0xff]
        %v8482 = vld [vmem:[#allocation2 + $0xa8] sm:$0xff]
        %v8483 = vld [vmem:[#allocation2 + $0xb0] sm:$0xff]
        %v8484 = vld [vmem:[#allocation2 + $0xb8] sm:$0xff]
        %v8485 = vld [vmem:[#allocation2 + $0xc0] sm:$0xff]
        %v8486 = vld [vmem:[#allocation2 + $0xc8] sm:$0xff]
        %v8487 = vld [vmem:[#allocation2 + $0xd0] sm:$0xff]
        %v8488 = vld [vmem:[#allocation2 + $0xd8] sm:$0xf]
        %v8489 = vld [vmem:[#allocation2 + $0x18] sm:$0xf0]
        %v8490 = vld [vmem:[#allocation2 + $0xd8] sm:$0x1f]
        %v8492 = vshrl.u32 %v8489, 16
        %v8494 = vshll.u32 %v8489, 16
        %v8496 = vrot.slane %v8494, 1
        %v8497 = vor.u32 %v8492, %v8496
        %v8499 = vshll.u32 %v8465, 16
        %v8501 = vrot.slane %v8499, 1
        %v8502 = vsel %vm5920, %v8497, %v8501
        %v8503 = vshrl.u32 %v8465, 16
        %v8505 = vor.u32 %v8503, %v8501
        %v8507 = vshll.u32 %v8466, 16
        %v8509 = vrot.slane %v8507, 1
        %v8510 = vsel %vm5920, %v8505, %v8509
        %v8511 = vshrl.u32 %v8466, 16
        %v8513 = vor.u32 %v8511, %v8509
        %v8515 = vshll.u32 %v8467, 16
        %v8517 = vrot.slane %v8515, 1
        %v8518 = vsel %vm5920, %v8513, %v8517
        %v8519 = vshrl.u32 %v8467, 16
        %v8521 = vor.u32 %v8519, %v8517
        %v8523 = vshll.u32 %v8468, 16
        %v8525 = vrot.slane %v8523, 1
        %v8526 = vsel %vm5920, %v8521, %v8525
        %v8527 = vshrl.u32 %v8468, 16
        %v8529 = vor.u32 %v8527, %v8525
        %v8531 = vshll.u32 %v8469, 16
        %v8533 = vrot.slane %v8531, 1
        %v8534 = vsel %vm5920, %v8529, %v8533
        %v8535 = vshrl.u32 %v8469, 16
        %v8537 = vor.u32 %v8535, %v8533
        %v8539 = vshll.u32 %v8470, 16
        %v8541 = vrot.slane %v8539, 1
        %v8542 = vsel %vm5920, %v8537, %v8541
        %v8543 = vshrl.u32 %v8470, 16
        %v8545 = vor.u32 %v8543, %v8541
        %v8547 = vshll.u32 %v8471, 16
        %v8549 = vrot.slane %v8547, 1
        %v8550 = vsel %vm5920, %v8545, %v8549
        %v8551 = vshrl.u32 %v8471, 16
        %v8553 = vor.u32 %v8551, %v8549
        %v8555 = vshll.u32 %v8472, 16
        %v8557 = vrot.slane %v8555, 1
        %v8558 = vsel %vm5920, %v8553, %v8557
        %v8559 = vshrl.u32 %v8472, 16
        %v8561 = vor.u32 %v8559, %v8557
        %v8563 = vshll.u32 %v8473, 16
        %v8565 = vrot.slane %v8563, 1
        %v8566 = vsel %vm5920, %v8561, %v8565
        %v8567 = vshrl.u32 %v8473, 16
        %v8569 = vor.u32 %v8567, %v8565
        %v8571 = vshll.u32 %v8474, 16
        %v8573 = vrot.slane %v8571, 1
        %v8574 = vsel %vm5920, %v8569, %v8573
        %v8575 = vshrl.u32 %v8474, 16
        %v8577 = vor.u32 %v8575, %v8573
        %v8579 = vshll.u32 %v8475, 16
        %v8581 = vrot.slane %v8579, 1
        %v8582 = vsel %vm5920, %v8577, %v8581
        %v8583 = vshrl.u32 %v8475, 16
        %v8585 = vor.u32 %v8583, %v8581
        %v8587 = vshll.u32 %v8476, 16
        %v8589 = vrot.slane %v8587, 1
        %v8590 = vsel %vm5920, %v8585, %v8589
        %v8591 = vshrl.u32 %v8476, 16
        %v8593 = vor.u32 %v8591, %v8589
        %v8595 = vshll.u32 %v8477, 16
        %v8597 = vrot.slane %v8595, 1
        %v8598 = vsel %vm5920, %v8593, %v8597
        %v8599 = vshrl.u32 %v8477, 16
        %v8601 = vor.u32 %v8599, %v8597
        %v8603 = vshll.u32 %v8478, 16
        %v8605 = vrot.slane %v8603, 1
        %v8606 = vsel %vm5920, %v8601, %v8605
        %v8607 = vshrl.u32 %v8478, 16
        %v8609 = vor.u32 %v8607, %v8605
        %v8611 = vshll.u32 %v8479, 16
        %v8613 = vrot.slane %v8611, 1
        %v8614 = vsel %vm5920, %v8609, %v8613
        %v8615 = vshrl.u32 %v8479, 16
        %v8617 = vor.u32 %v8615, %v8613
        %v8619 = vshll.u32 %v8480, 16
        %v8621 = vrot.slane %v8619, 1
        %v8622 = vsel %vm5920, %v8617, %v8621
        %v8623 = vshrl.u32 %v8480, 16
        %v8625 = vor.u32 %v8623, %v8621
        %v8627 = vshll.u32 %v8481, 16
        %v8629 = vrot.slane %v8627, 1
        %v8630 = vsel %vm5920, %v8625, %v8629
        %v8631 = vshrl.u32 %v8481, 16
        %v8633 = vor.u32 %v8631, %v8629
        %v8635 = vshll.u32 %v8482, 16
        %v8637 = vrot.slane %v8635, 1
        %v8638 = vsel %vm5920, %v8633, %v8637
        %v8639 = vshrl.u32 %v8482, 16
        %v8641 = vor.u32 %v8639, %v8637
        %v8643 = vshll.u32 %v8483, 16
        %v8645 = vrot.slane %v8643, 1
        %v8646 = vsel %vm5920, %v8641, %v8645
        %v8647 = vshrl.u32 %v8483, 16
        %v8649 = vor.u32 %v8647, %v8645
        %v8651 = vshll.u32 %v8484, 16
        %v8653 = vrot.slane %v8651, 1
        %v8654 = vsel %vm5920, %v8649, %v8653
        %v8655 = vshrl.u32 %v8484, 16
        %v8657 = vor.u32 %v8655, %v8653
        %v8659 = vshll.u32 %v8485, 16
        %v8661 = vrot.slane %v8659, 1
        %v8662 = vsel %vm5920, %v8657, %v8661
        %v8663 = vshrl.u32 %v8485, 16
        %v8665 = vor.u32 %v8663, %v8661
        %v8667 = vshll.u32 %v8486, 16
        %v8669 = vrot.slane %v8667, 1
        %v8670 = vsel %vm5920, %v8665, %v8669
        %v8671 = vshrl.u32 %v8486, 16
        %v8673 = vor.u32 %v8671, %v8669
        %v8675 = vshll.u32 %v8487, 16
        %v8677 = vrot.slane %v8675, 1
        %v8678 = vsel %vm5920, %v8673, %v8677
        %v8679 = vshrl.u32 %v8487, 16
        %v8681 = vor.u32 %v8679, %v8677
        %v8683 = vshll.u32 %v8488, 16
        %v8685 = vrot.slane %v8683, 1
        %v8686 = vsel %vm5920, %v8681, %v8685
        %v8687 = vshrl.u32 %v8488, 16
        %v8689 = vor.u32 %v8687, %v8685
        %v8715 = vrot.slane %v8489, 1
        %v8716 = vrot.slane %v8465, 1
        %v8717 = vsel %vm6145, %v8715, %v8716
        %v8718 = vrot.slane %v8466, 1
        %v8719 = vsel %vm6145, %v8716, %v8718
        %v8720 = vrot.slane %v8467, 1
        %v8721 = vsel %vm6145, %v8718, %v8720
        %v8722 = vrot.slane %v8468, 1
        %v8723 = vsel %vm6145, %v8720, %v8722
        %v8724 = vrot.slane %v8469, 1
        %v8725 = vsel %vm6145, %v8722, %v8724
        %v8726 = vrot.slane %v8470, 1
        %v8727 = vsel %vm6145, %v8724, %v8726
        %v8728 = vrot.slane %v8471, 1
        %v8729 = vsel %vm6145, %v8726, %v8728
        %v8730 = vrot.slane %v8472, 1
        %v8731 = vsel %vm6145, %v8728, %v8730
        %v8732 = vrot.slane %v8473, 1
        %v8733 = vsel %vm6145, %v8730, %v8732
        %v8734 = vrot.slane %v8474, 1
        %v8735 = vsel %vm6145, %v8732, %v8734
        %v8736 = vrot.slane %v8475, 1
        %v8737 = vsel %vm6145, %v8734, %v8736
        %v8738 = vrot.slane %v8476, 1
        %v8739 = vsel %vm6145, %v8736, %v8738
        %v8740 = vrot.slane %v8477, 1
        %v8741 = vsel %vm6145, %v8738, %v8740
        %v8742 = vrot.slane %v8478, 1
        %v8743 = vsel %vm6145, %v8740, %v8742
        %v8744 = vrot.slane %v8479, 1
        %v8745 = vsel %vm6145, %v8742, %v8744
        %v8746 = vrot.slane %v8480, 1
        %v8747 = vsel %vm6145, %v8744, %v8746
        %v8748 = vrot.slane %v8481, 1
        %v8749 = vsel %vm6145, %v8746, %v8748
        %v8750 = vrot.slane %v8482, 1
        %v8751 = vsel %vm6145, %v8748, %v8750
        %v8752 = vrot.slane %v8483, 1
        %v8753 = vsel %vm6145, %v8750, %v8752
        %v8754 = vrot.slane %v8484, 1
        %v8755 = vsel %vm6145, %v8752, %v8754
        %v8756 = vrot.slane %v8485, 1
        %v8757 = vsel %vm6145, %v8754, %v8756
        %v8758 = vrot.slane %v8486, 1
        %v8759 = vsel %vm6145, %v8756, %v8758
        %v8760 = vrot.slane %v8487, 1
        %v8761 = vsel %vm6145, %v8758, %v8760
        %v8762 = vrot.slane %v8490, 1
        %v8763 = vsel %vm6145, %v8760, %v8762
        %s8764 = scalar_lea.vmem [#allocation8], 384
        %v8765 = vld [vmem:[%s8764] sm:$0xf]
        %v8766 = vld [vmem:[%s8764 + $0x4] sm:$0xf]
        %v8767 = vld [vmem:[%s8764 + $0x8] sm:$0xf]
        %v8768 = vld [vmem:[%s8764 + $0xc] sm:$0xf]
        %v8769 = vld [vmem:[%s8764 + $0x10] sm:$0xf]
        %v8770 = vld [vmem:[%s8764 + $0x14] sm:$0xf]
        %v8771 = vld [vmem:[%s8764 + $0x18] sm:$0xf]
        %v8772 = vld [vmem:[%s8764 + $0x1c] sm:$0xf]
        %v8773 = vld [vmem:[%s8764 + $0x20] sm:$0xf]
        %v8774 = vld [vmem:[%s8764 + $0x24] sm:$0xf]
        %v8775 = vld [vmem:[%s8764 + $0x28] sm:$0xf]
        %v8776 = vld [vmem:[%s8764 + $0x2c] sm:$0xf]
        %v8777 = vld [vmem:[%s8764 + $0x30] sm:$0xf]
        %v8778 = vld [vmem:[%s8764 + $0x34] sm:$0xf]
        %v8779 = vld [vmem:[%s8764 + $0x38] sm:$0xf]
        %v8780 = vld [vmem:[%s8764 + $0x3c] sm:$0xf]
        %v8781 = vld [vmem:[%s8764 + $0x40] sm:$0xf]
        %v8782 = vld [vmem:[%s8764 + $0x44] sm:$0xf]
        %v8783 = vld [vmem:[%s8764 + $0x48] sm:$0xf]
        %v8784 = vld [vmem:[%s8764 + $0x4c] sm:$0xf]
        %v8785 = vld [vmem:[%s8764 + $0x50] sm:$0xf]
        %v8786 = vld [vmem:[%s8764 + $0x54] sm:$0xf]
        %v8787 = vld [vmem:[%s8764 + $0x58] sm:$0xf]
        %v8788 = vld [vmem:[%s8764 + $0x5c] sm:$0xf]
        %v8789 = vld [vmem:[%s8764 + $0x60] sm:$0xf]
        %v8790 = vld [vmem:[%s8764 + $0x64] sm:$0xf]
        %v8791 = vld [vmem:[%s8764 + $0x68] sm:$0xf]
        %v8792 = vld [vmem:[%s8764 + $0x6c] sm:$0xf]
        %v8793 = vld [vmem:[%s8764 + $0x70] sm:$0xf]
        %v8794 = vld [vmem:[%s8764 + $0x74] sm:$0xf]
        %v8795 = vld [vmem:[%s8764 + $0x78] sm:$0xf]
        %v8796 = vld [vmem:[%s8764 + $0x7c] sm:$0xf]
        %v8797 = vld [vmem:[%s8764 + $0x80] sm:$0xf]
        %v8798 = vld [vmem:[%s8764 + $0x84] sm:$0xf]
        %v8799 = vld [vmem:[%s8764 + $0x88] sm:$0xf]
        %v8800 = vld [vmem:[%s8764 + $0x8c] sm:$0xf]
        %v8801 = vld [vmem:[%s8764 + $0x90] sm:$0xf]
        %v8802 = vld [vmem:[%s8764 + $0x94] sm:$0xf]
        %v8803 = vld [vmem:[%s8764 + $0x98] sm:$0xf]
        %v8804 = vld [vmem:[%s8764 + $0x9c] sm:$0xf]
        %v8805 = vld [vmem:[%s8764 + $0xa0] sm:$0xf]
        %v8806 = vld [vmem:[%s8764 + $0xa4] sm:$0xf]
        %v8807 = vld [vmem:[%s8764 + $0xa8] sm:$0xf]
        %v8808 = vld [vmem:[%s8764 + $0xac] sm:$0xf]
        %v8809 = vld [vmem:[%s8764 + $0xb0] sm:$0xf]
        %v8810 = vld [vmem:[%s8764 + $0xb4] sm:$0xf]
        %v8811 = vld [vmem:[%s8764 + $0xb8] sm:$0xf]
        %v8812 = vld [vmem:[%s8764 + $0xbc] sm:$0xf]
        %v8814 = vshrl.u32 %v8464, 16
        %v8816 = vrot.slane %v8814, 3
        %v8817 = vshll.u32 %v8464, 16
        %v8819 = vrot.slane %v8817, 4
        %v8820 = vor.u32 %v8816, %v8819
        %v8821 = vrot.slane %v8503, 3
        %v8822 = vrot.slane %v8499, 4
        %v8823 = vor.u32 %v8821, %v8822
        %v8824 = vsel %vm1098, %v8820, %v8823
        %v8826 = vshrl.u32 %v8502, 16
        %v8828 = vrot.slane %v8826, 3
        %v8829 = vshll.u32 %v8502, 16
        %v8831 = vrot.slane %v8829, 4
        %v8832 = vor.u32 %v8828, %v8831
        %v8834 = vshrl.u32 %v8510, 16
        %v8836 = vrot.slane %v8834, 3
        %v8837 = vshll.u32 %v8510, 16
        %v8839 = vrot.slane %v8837, 4
        %v8840 = vor.u32 %v8836, %v8839
        %v8841 = vsel %vm1098, %v8832, %v8840
        %v8843 = vshrl.u32 %v8717, 16
        %v8845 = vrot.slane %v8843, 3
        %v8846 = vshll.u32 %v8717, 16
        %v8848 = vrot.slane %v8846, 4
        %v8849 = vor.u32 %v8845, %v8848
        %v8851 = vshrl.u32 %v8719, 16
        %v8853 = vrot.slane %v8851, 3
        %v8854 = vshll.u32 %v8719, 16
        %v8856 = vrot.slane %v8854, 4
        %v8857 = vor.u32 %v8853, %v8856
        %v8858 = vsel %vm1098, %v8849, %v8857
        %v8859 = vrot.slane %v8511, 3
        %v8860 = vrot.slane %v8507, 4
        %v8861 = vor.u32 %v8859, %v8860
        %v8862 = vsel %vm1098, %v8823, %v8861
        %v8864 = vshrl.u32 %v8518, 16
        %v8866 = vrot.slane %v8864, 3
        %v8867 = vshll.u32 %v8518, 16
        %v8869 = vrot.slane %v8867, 4
        %v8870 = vor.u32 %v8866, %v8869
        %v8871 = vsel %vm1098, %v8840, %v8870
        %v8873 = vshrl.u32 %v8721, 16
        %v8875 = vrot.slane %v8873, 3
        %v8876 = vshll.u32 %v8721, 16
        %v8878 = vrot.slane %v8876, 4
        %v8879 = vor.u32 %v8875, %v8878
        %v8880 = vsel %vm1098, %v8857, %v8879
        %v8881 = vrot.slane %v8519, 3
        %v8882 = vrot.slane %v8515, 4
        %v8883 = vor.u32 %v8881, %v8882
        %v8884 = vsel %vm1098, %v8861, %v8883
        %v8886 = vshrl.u32 %v8526, 16
        %v8888 = vrot.slane %v8886, 3
        %v8889 = vshll.u32 %v8526, 16
        %v8891 = vrot.slane %v8889, 4
        %v8892 = vor.u32 %v8888, %v8891
        %v8893 = vsel %vm1098, %v8870, %v8892
        %v8895 = vshrl.u32 %v8723, 16
        %v8897 = vrot.slane %v8895, 3
        %v8898 = vshll.u32 %v8723, 16
        %v8900 = vrot.slane %v8898, 4
        %v8901 = vor.u32 %v8897, %v8900
        %v8902 = vsel %vm1098, %v8879, %v8901
        %v8903 = vrot.slane %v8527, 3
        %v8904 = vrot.slane %v8523, 4
        %v8905 = vor.u32 %v8903, %v8904
        %v8906 = vsel %vm1098, %v8883, %v8905
        %v8908 = vshrl.u32 %v8534, 16
        %v8910 = vrot.slane %v8908, 3
        %v8911 = vshll.u32 %v8534, 16
        %v8913 = vrot.slane %v8911, 4
        %v8914 = vor.u32 %v8910, %v8913
        %v8915 = vsel %vm1098, %v8892, %v8914
        %v8917 = vshrl.u32 %v8725, 16
        %v8919 = vrot.slane %v8917, 3
        %v8920 = vshll.u32 %v8725, 16
        %v8922 = vrot.slane %v8920, 4
        %v8923 = vor.u32 %v8919, %v8922
        %v8924 = vsel %vm1098, %v8901, %v8923
        %v8925 = vrot.slane %v8535, 3
        %v8926 = vrot.slane %v8531, 4
        %v8927 = vor.u32 %v8925, %v8926
        %v8928 = vsel %vm1098, %v8905, %v8927
        %v8930 = vshrl.u32 %v8542, 16
        %v8932 = vrot.slane %v8930, 3
        %v8933 = vshll.u32 %v8542, 16
        %v8935 = vrot.slane %v8933, 4
        %v8936 = vor.u32 %v8932, %v8935
        %v8937 = vsel %vm1098, %v8914, %v8936
        %v8939 = vshrl.u32 %v8727, 16
        %v8941 = vrot.slane %v8939, 3
        %v8942 = vshll.u32 %v8727, 16
        %v8944 = vrot.slane %v8942, 4
        %v8945 = vor.u32 %v8941, %v8944
        %v8946 = vsel %vm1098, %v8923, %v8945
        %v8947 = vrot.slane %v8543, 3
        %v8948 = vrot.slane %v8539, 4
        %v8949 = vor.u32 %v8947, %v8948
        %v8950 = vsel %vm1098, %v8927, %v8949
        %v8952 = vshrl.u32 %v8550, 16
        %v8954 = vrot.slane %v8952, 3
        %v8955 = vshll.u32 %v8550, 16
        %v8957 = vrot.slane %v8955, 4
        %v8958 = vor.u32 %v8954, %v8957
        %v8959 = vsel %vm1098, %v8936, %v8958
        %v8961 = vshrl.u32 %v8729, 16
        %v8963 = vrot.slane %v8961, 3
        %v8964 = vshll.u32 %v8729, 16
        %v8966 = vrot.slane %v8964, 4
        %v8967 = vor.u32 %v8963, %v8966
        %v8968 = vsel %vm1098, %v8945, %v8967
        %v8969 = vrot.slane %v8551, 3
        %v8970 = vrot.slane %v8547, 4
        %v8971 = vor.u32 %v8969, %v8970
        %v8972 = vsel %vm1098, %v8949, %v8971
        %v8974 = vshrl.u32 %v8558, 16
        %v8976 = vrot.slane %v8974, 3
        %v8977 = vshll.u32 %v8558, 16
        %v8979 = vrot.slane %v8977, 4
        %v8980 = vor.u32 %v8976, %v8979
        %v8981 = vsel %vm1098, %v8958, %v8980
        %v8983 = vshrl.u32 %v8731, 16
        %v8985 = vrot.slane %v8983, 3
        %v8986 = vshll.u32 %v8731, 16
        %v8988 = vrot.slane %v8986, 4
        %v8989 = vor.u32 %v8985, %v8988
        %v8990 = vsel %vm1098, %v8967, %v8989
        %v8991 = vrot.slane %v8559, 3
        %v8992 = vrot.slane %v8555, 4
        %v8993 = vor.u32 %v8991, %v8992
        %v8994 = vsel %vm1098, %v8971, %v8993
        %v8996 = vshrl.u32 %v8566, 16
        %v8998 = vrot.slane %v8996, 3
        %v8999 = vshll.u32 %v8566, 16
        %v9001 = vrot.slane %v8999, 4
        %v9002 = vor.u32 %v8998, %v9001
        %v9003 = vsel %vm1098, %v8980, %v9002
        %v9005 = vshrl.u32 %v8733, 16
        %v9007 = vrot.slane %v9005, 3
        %v9008 = vshll.u32 %v8733, 16
        %v9010 = vrot.slane %v9008, 4
        %v9011 = vor.u32 %v9007, %v9010
        %v9012 = vsel %vm1098, %v8989, %v9011
        %v9013 = vrot.slane %v8567, 3
        %v9014 = vrot.slane %v8563, 4
        %v9015 = vor.u32 %v9013, %v9014
        %v9016 = vsel %vm1098, %v8993, %v9015
        %v9018 = vshrl.u32 %v8574, 16
        %v9020 = vrot.slane %v9018, 3
        %v9021 = vshll.u32 %v8574, 16
        %v9023 = vrot.slane %v9021, 4
        %v9024 = vor.u32 %v9020, %v9023
        %v9025 = vsel %vm1098, %v9002, %v9024
        %v9027 = vshrl.u32 %v8735, 16
        %v9029 = vrot.slane %v9027, 3
        %v9030 = vshll.u32 %v8735, 16
        %v9032 = vrot.slane %v9030, 4
        %v9033 = vor.u32 %v9029, %v9032
        %v9034 = vsel %vm1098, %v9011, %v9033
        %v9035 = vrot.slane %v8575, 3
        %v9036 = vrot.slane %v8571, 4
        %v9037 = vor.u32 %v9035, %v9036
        %v9038 = vsel %vm1098, %v9015, %v9037
        %v9040 = vshrl.u32 %v8582, 16
        %v9042 = vrot.slane %v9040, 3
        %v9043 = vshll.u32 %v8582, 16
        %v9045 = vrot.slane %v9043, 4
        %v9046 = vor.u32 %v9042, %v9045
        %v9047 = vsel %vm1098, %v9024, %v9046
        %v9049 = vshrl.u32 %v8737, 16
        %v9051 = vrot.slane %v9049, 3
        %v9052 = vshll.u32 %v8737, 16
        %v9054 = vrot.slane %v9052, 4
        %v9055 = vor.u32 %v9051, %v9054
        %v9056 = vsel %vm1098, %v9033, %v9055
        %v9057 = vrot.slane %v8583, 3
        %v9058 = vrot.slane %v8579, 4
        %v9059 = vor.u32 %v9057, %v9058
        %v9060 = vsel %vm1098, %v9037, %v9059
        %v9062 = vshrl.u32 %v8590, 16
        %v9064 = vrot.slane %v9062, 3
        %v9065 = vshll.u32 %v8590, 16
        %v9067 = vrot.slane %v9065, 4
        %v9068 = vor.u32 %v9064, %v9067
        %v9069 = vsel %vm1098, %v9046, %v9068
        %v9071 = vshrl.u32 %v8739, 16
        %v9073 = vrot.slane %v9071, 3
        %v9074 = vshll.u32 %v8739, 16
        %v9076 = vrot.slane %v9074, 4
        %v9077 = vor.u32 %v9073, %v9076
        %v9078 = vsel %vm1098, %v9055, %v9077
        %v9079 = vrot.slane %v8591, 3
        %v9080 = vrot.slane %v8587, 4
        %v9081 = vor.u32 %v9079, %v9080
        %v9082 = vsel %vm1098, %v9059, %v9081
        %v9084 = vshrl.u32 %v8598, 16
        %v9086 = vrot.slane %v9084, 3
        %v9087 = vshll.u32 %v8598, 16
        %v9089 = vrot.slane %v9087, 4
        %v9090 = vor.u32 %v9086, %v9089
        %v9091 = vsel %vm1098, %v9068, %v9090
        %v9093 = vshrl.u32 %v8741, 16
        %v9095 = vrot.slane %v9093, 3
        %v9096 = vshll.u32 %v8741, 16
        %v9098 = vrot.slane %v9096, 4
        %v9099 = vor.u32 %v9095, %v9098
        %v9100 = vsel %vm1098, %v9077, %v9099
        %v9101 = vrot.slane %v8599, 3
        %v9102 = vrot.slane %v8595, 4
        %v9103 = vor.u32 %v9101, %v9102
        %v9104 = vsel %vm1098, %v9081, %v9103
        %v9106 = vshrl.u32 %v8606, 16
        %v9108 = vrot.slane %v9106, 3
        %v9109 = vshll.u32 %v8606, 16
        %v9111 = vrot.slane %v9109, 4
        %v9112 = vor.u32 %v9108, %v9111
        %v9113 = vsel %vm1098, %v9090, %v9112
        %v9115 = vshrl.u32 %v8743, 16
        %v9117 = vrot.slane %v9115, 3
        %v9118 = vshll.u32 %v8743, 16
        %v9120 = vrot.slane %v9118, 4
        %v9121 = vor.u32 %v9117, %v9120
        %v9122 = vsel %vm1098, %v9099, %v9121
        %v9123 = vrot.slane %v8607, 3
        %v9124 = vrot.slane %v8603, 4
        %v9125 = vor.u32 %v9123, %v9124
        %v9126 = vsel %vm1098, %v9103, %v9125
        %v9128 = vshrl.u32 %v8614, 16
        %v9130 = vrot.slane %v9128, 3
        %v9131 = vshll.u32 %v8614, 16
        %v9133 = vrot.slane %v9131, 4
        %v9134 = vor.u32 %v9130, %v9133
        %v9135 = vsel %vm1098, %v9112, %v9134
        %v9137 = vshrl.u32 %v8745, 16
        %v9139 = vrot.slane %v9137, 3
        %v9140 = vshll.u32 %v8745, 16
        %v9142 = vrot.slane %v9140, 4
        %v9143 = vor.u32 %v9139, %v9142
        %v9144 = vsel %vm1098, %v9121, %v9143
        %v9145 = vrot.slane %v8615, 3
        %v9146 = vrot.slane %v8611, 4
        %v9147 = vor.u32 %v9145, %v9146
        %v9148 = vsel %vm1098, %v9125, %v9147
        %v9150 = vshrl.u32 %v8622, 16
        %v9152 = vrot.slane %v9150, 3
        %v9153 = vshll.u32 %v8622, 16
        %v9155 = vrot.slane %v9153, 4
        %v9156 = vor.u32 %v9152, %v9155
        %v9157 = vsel %vm1098, %v9134, %v9156
        %v9159 = vshrl.u32 %v8747, 16
        %v9161 = vrot.slane %v9159, 3
        %v9162 = vshll.u32 %v8747, 16
        %v9164 = vrot.slane %v9162, 4
        %v9165 = vor.u32 %v9161, %v9164
        %v9166 = vsel %vm1098, %v9143, %v9165
        %v9167 = vrot.slane %v8623, 3
        %v9168 = vrot.slane %v8619, 4
        %v9169 = vor.u32 %v9167, %v9168
        %v9170 = vsel %vm1098, %v9147, %v9169
        %v9172 = vshrl.u32 %v8630, 16
        %v9174 = vrot.slane %v9172, 3
        %v9175 = vshll.u32 %v8630, 16
        %v9177 = vrot.slane %v9175, 4
        %v9178 = vor.u32 %v9174, %v9177
        %v9179 = vsel %vm1098, %v9156, %v9178
        %v9181 = vshrl.u32 %v8749, 16
        %v9183 = vrot.slane %v9181, 3
        %v9184 = vshll.u32 %v8749, 16
        %v9186 = vrot.slane %v9184, 4
        %v9187 = vor.u32 %v9183, %v9186
        %v9188 = vsel %vm1098, %v9165, %v9187
        %v9189 = vrot.slane %v8631, 3
        %v9190 = vrot.slane %v8627, 4
        %v9191 = vor.u32 %v9189, %v9190
        %v9192 = vsel %vm1098, %v9169, %v9191
        %v9194 = vshrl.u32 %v8638, 16
        %v9196 = vrot.slane %v9194, 3
        %v9197 = vshll.u32 %v8638, 16
        %v9199 = vrot.slane %v9197, 4
        %v9200 = vor.u32 %v9196, %v9199
        %v9201 = vsel %vm1098, %v9178, %v9200
        %v9203 = vshrl.u32 %v8751, 16
        %v9205 = vrot.slane %v9203, 3
        %v9206 = vshll.u32 %v8751, 16
        %v9208 = vrot.slane %v9206, 4
        %v9209 = vor.u32 %v9205, %v9208
        %v9210 = vsel %vm1098, %v9187, %v9209
        %v9211 = vrot.slane %v8639, 3
        %v9212 = vrot.slane %v8635, 4
        %v9213 = vor.u32 %v9211, %v9212
        %v9214 = vsel %vm1098, %v9191, %v9213
        %v9216 = vshrl.u32 %v8646, 16
        %v9218 = vrot.slane %v9216, 3
        %v9219 = vshll.u32 %v8646, 16
        %v9221 = vrot.slane %v9219, 4
        %v9222 = vor.u32 %v9218, %v9221
        %v9223 = vsel %vm1098, %v9200, %v9222
        %v9225 = vshrl.u32 %v8753, 16
        %v9227 = vrot.slane %v9225, 3
        %v9228 = vshll.u32 %v8753, 16
        %v9230 = vrot.slane %v9228, 4
        %v9231 = vor.u32 %v9227, %v9230
        %v9232 = vsel %vm1098, %v9209, %v9231
        %v9233 = vrot.slane %v8647, 3
        %v9234 = vrot.slane %v8643, 4
        %v9235 = vor.u32 %v9233, %v9234
        %v9236 = vsel %vm1098, %v9213, %v9235
        %v9238 = vshrl.u32 %v8654, 16
        %v9240 = vrot.slane %v9238, 3
        %v9241 = vshll.u32 %v8654, 16
        %v9243 = vrot.slane %v9241, 4
        %v9244 = vor.u32 %v9240, %v9243
        %v9245 = vsel %vm1098, %v9222, %v9244
        %v9247 = vshrl.u32 %v8755, 16
        %v9249 = vrot.slane %v9247, 3
        %v9250 = vshll.u32 %v8755, 16
        %v9252 = vrot.slane %v9250, 4
        %v9253 = vor.u32 %v9249, %v9252
        %v9254 = vsel %vm1098, %v9231, %v9253
        %v9255 = vrot.slane %v8655, 3
        %v9256 = vrot.slane %v8651, 4
        %v9257 = vor.u32 %v9255, %v9256
        %v9258 = vsel %vm1098, %v9235, %v9257
        %v9260 = vshrl.u32 %v8662, 16
        %v9262 = vrot.slane %v9260, 3
        %v9263 = vshll.u32 %v8662, 16
        %v9265 = vrot.slane %v9263, 4
        %v9266 = vor.u32 %v9262, %v9265
        %v9267 = vsel %vm1098, %v9244, %v9266
        %v9269 = vshrl.u32 %v8757, 16
        %v9271 = vrot.slane %v9269, 3
        %v9272 = vshll.u32 %v8757, 16
        %v9274 = vrot.slane %v9272, 4
        %v9275 = vor.u32 %v9271, %v9274
        %v9276 = vsel %vm1098, %v9253, %v9275
        %v9277 = vrot.slane %v8663, 3
        %v9278 = vrot.slane %v8659, 4
        %v9279 = vor.u32 %v9277, %v9278
        %v9280 = vsel %vm1098, %v9257, %v9279
        %v9282 = vshrl.u32 %v8670, 16
        %v9284 = vrot.slane %v9282, 3
        %v9285 = vshll.u32 %v8670, 16
        %v9287 = vrot.slane %v9285, 4
        %v9288 = vor.u32 %v9284, %v9287
        %v9289 = vsel %vm1098, %v9266, %v9288
        %v9291 = vshrl.u32 %v8759, 16
        %v9293 = vrot.slane %v9291, 3
        %v9294 = vshll.u32 %v8759, 16
        %v9296 = vrot.slane %v9294, 4
        %v9297 = vor.u32 %v9293, %v9296
        %v9298 = vsel %vm1098, %v9275, %v9297
        %v9299 = vrot.slane %v8671, 3
        %v9300 = vrot.slane %v8667, 4
        %v9301 = vor.u32 %v9299, %v9300
        %v9302 = vsel %vm1098, %v9279, %v9301
        %v9304 = vshrl.u32 %v8678, 16
        %v9306 = vrot.slane %v9304, 3
        %v9307 = vshll.u32 %v8678, 16
        %v9309 = vrot.slane %v9307, 4
        %v9310 = vor.u32 %v9306, %v9309
        %v9311 = vsel %vm1098, %v9288, %v9310
        %v9313 = vshrl.u32 %v8761, 16
        %v9315 = vrot.slane %v9313, 3
        %v9316 = vshll.u32 %v8761, 16
        %v9318 = vrot.slane %v9316, 4
        %v9319 = vor.u32 %v9315, %v9318
        %v9320 = vsel %vm1098, %v9297, %v9319
        %v9321 = vrot.slane %v8679, 3
        %v9322 = vrot.slane %v8675, 4
        %v9323 = vor.u32 %v9321, %v9322
        %v9324 = vsel %vm1098, %v9301, %v9323
        %v9326 = vshrl.u32 %v8686, 16
        %v9328 = vrot.slane %v9326, 3
        %v9329 = vshll.u32 %v8686, 16
        %v9331 = vrot.slane %v9329, 4
        %v9332 = vor.u32 %v9328, %v9331
        %v9333 = vsel %vm1098, %v9310, %v9332
        %v9335 = vshrl.u32 %v8763, 16
        %v9337 = vrot.slane %v9335, 3
        %v9338 = vshll.u32 %v8763, 16
        %v9340 = vrot.slane %v9338, 4
        %v9341 = vor.u32 %v9337, %v9340
        %v9342 = vsel %vm1098, %v9319, %v9341
        %v9343 = vrot.slane %v8687, 3
        %v9344 = vrot.slane %v8683, 4
        %v9345 = vor.u32 %v9343, %v9344
        %v9346 = vsel %vm1098, %v9323, %v9345
        %v9348 = vshrl.u32 %v8689, 16
        %v9350 = vrot.slane %v9348, 3
        %v9351 = vshll.u32 %v8689, 16
        %v9353 = vrot.slane %v9351, 4
        %v9354 = vor.u32 %v9350, %v9353
        %v9355 = vsel %vm1098, %v9332, %v9354
        %v9357 = vshrl.u32 %v8762, 16
        %v9359 = vrot.slane %v9357, 3
        %v9360 = vshll.u32 %v8762, 16
        %v9362 = vrot.slane %v9360, 4
        %v9363 = vor.u32 %v9359, %v9362
        %v9364 = vsel %vm1098, %v9341, %v9363
        %v9485 = vunpack.c.l.b16 %v8765
        %v9486 = vunpack.c.l.b16 %v8766
        %v9487 = vunpack.c.l.b16 %v8767
        %v9488 = vunpack.c.l.b16 %v8768
        %v9489 = vunpack.c.l.b16 %v8769
        %v9490 = vunpack.c.l.b16 %v8770
        %v9491 = vunpack.c.l.b16 %v8771
        %v9492 = vunpack.c.l.b16 %v8772
        %v9493 = vunpack.c.l.b16 %v8773
        %v9494 = vunpack.c.l.b16 %v8774
        %v9495 = vunpack.c.l.b16 %v8775
        %v9496 = vunpack.c.l.b16 %v8776
        %v9497 = vunpack.c.l.b16 %v8777
        %v9498 = vunpack.c.l.b16 %v8778
        %v9499 = vunpack.c.l.b16 %v8779
        %v9500 = vunpack.c.l.b16 %v8780
        %v9501 = vunpack.c.l.b16 %v8781
        %v9502 = vunpack.c.l.b16 %v8782
        %v9503 = vunpack.c.l.b16 %v8783
        %v9504 = vunpack.c.l.b16 %v8784
        %v9505 = vunpack.c.l.b16 %v8785
        %v9506 = vunpack.c.l.b16 %v8786
        %v9507 = vunpack.c.l.b16 %v8787
        %v9508 = vunpack.c.l.b16 %v8788
        %v9509 = vunpack.c.l.b16 %v8789
        %v9510 = vunpack.c.l.b16 %v8790
        %v9511 = vunpack.c.l.b16 %v8791
        %v9512 = vunpack.c.l.b16 %v8792
        %v9513 = vunpack.c.l.b16 %v8793
        %v9514 = vunpack.c.l.b16 %v8794
        %v9515 = vunpack.c.l.b16 %v8795
        %v9516 = vunpack.c.l.b16 %v8796
        %v9517 = vunpack.c.l.b16 %v8797
        %v9518 = vunpack.c.l.b16 %v8798
        %v9519 = vunpack.c.l.b16 %v8799
        %v9520 = vunpack.c.l.b16 %v8800
        %v9521 = vunpack.c.l.b16 %v8801
        %v9522 = vunpack.c.l.b16 %v8802
        %v9523 = vunpack.c.l.b16 %v8803
        %v9524 = vunpack.c.l.b16 %v8804
        %v9525 = vunpack.c.l.b16 %v8805
        %v9526 = vunpack.c.l.b16 %v8806
        %v9527 = vunpack.c.l.b16 %v8807
        %v9528 = vunpack.c.l.b16 %v8808
        %v9529 = vunpack.c.l.b16 %v8809
        %v9530 = vunpack.c.l.b16 %v8810
        %v9531 = vunpack.c.l.b16 %v8811
        %v9532 = vunpack.c.l.b16 %v8812
        %v9533 = vpack.c.b16 %v9486, %v9485
        %v9534 = vpack.c.b16 %v9488, %v9487
        %v9535 = vpack.c.b16 %v9490, %v9489
        %v9536 = vpack.c.b16 %v9492, %v9491
        %v9537 = vpack.c.b16 %v9494, %v9493
        %v9538 = vpack.c.b16 %v9496, %v9495
        %v9539 = vpack.c.b16 %v9498, %v9497
        %v9540 = vpack.c.b16 %v9500, %v9499
        %v9541 = vpack.c.b16 %v9502, %v9501
        %v9542 = vpack.c.b16 %v9504, %v9503
        %v9543 = vpack.c.b16 %v9506, %v9505
        %v9544 = vpack.c.b16 %v9508, %v9507
        %v9545 = vpack.c.b16 %v9510, %v9509
        %v9546 = vpack.c.b16 %v9512, %v9511
        %v9547 = vpack.c.b16 %v9514, %v9513
        %v9548 = vpack.c.b16 %v9516, %v9515
        %v9549 = vpack.c.b16 %v9518, %v9517
        %v9550 = vpack.c.b16 %v9520, %v9519
        %v9551 = vpack.c.b16 %v9522, %v9521
        %v9552 = vpack.c.b16 %v9524, %v9523
        %v9553 = vpack.c.b16 %v9526, %v9525
        %v9554 = vpack.c.b16 %v9528, %v9527
        %v9555 = vpack.c.b16 %v9530, %v9529
        %v9556 = vpack.c.b16 %v9532, %v9531
        %9581 = vmatprep.subr.bf16.mxu0 0
        %9582 = vmatpush1.bf16.msra.mxu0 %v9533
        %9583 = vmatprep.subr.bf16.mxu0 0
        %9584 = vmatpush1.bf16.msra.mxu0 %v9534
        %9585 = vmatprep.subr.bf16.mxu0 0
        %9586 = vmatpush1.bf16.msra.mxu0 %v9535
        %9587 = vmatprep.subr.bf16.mxu0 0
        %9588 = vmatpush1.bf16.msra.mxu0 %v9536
        %9589 = vmatprep.subr.bf16.mxu0 0
        %9590 = vmatpush1.bf16.msra.mxu0 %v9537
        %9591 = vmatprep.subr.bf16.mxu0 0
        %9592 = vmatpush1.bf16.msra.mxu0 %v9538
        %9593 = vmatprep.subr.bf16.mxu0 0
        %9594 = vmatpush1.bf16.msra.mxu0 %v9539
        %9595 = vmatprep.subr.bf16.mxu0 0
        %9596 = vmatpush1.bf16.msra.mxu0 %v9540
        %9597 = vmatprep.subr.bf16.mxu0 0
        %9598 = vmatpush1.bf16.msra.mxu0 %v9541
        %9599 = vmatprep.subr.bf16.mxu0 0
        %9600 = vmatpush1.bf16.msra.mxu0 %v9542
        %9601 = vmatprep.subr.bf16.mxu0 0
        %9602 = vmatpush1.bf16.msra.mxu0 %v9543
        %9603 = vmatprep.subr.bf16.mxu0 0
        %9604 = vmatpush1.bf16.msra.mxu0 %v9544
        %9605 = vmatprep.subr.bf16.mxu0 0
        %9606 = vmatpush1.bf16.msra.mxu0 %v9545
        %9607 = vmatprep.subr.bf16.mxu0 0
        %9608 = vmatpush1.bf16.msra.mxu0 %v9546
        %9609 = vmatprep.subr.bf16.mxu0 0
        %9610 = vmatpush1.bf16.msra.mxu0 %v9547
        %9611 = vmatprep.subr.bf16.mxu0 0
        %9612 = vmatpush1.bf16.msra.mxu0 %v9548
        %9613 = vmatprep.mubr.bf16.mxu0 %v8841
        %9614 = vmatmul.mubr.bf16.gmra.mrb[0].mxu0 %v8824
        %v9615 = vpop.f32.mrb[0].mxu0
        %v9616 = vadd.f32 0.0, %v9615
        %v9617 = vpop.f32.mrb[0].mxu0
        %v9618 = vpop.f32.mrb[0].mxu0
        %v9619 = vadd.f32 0.0, %v9618
        %v9620 = vpop.f32.mrb[0].mxu0
        %9621 = vmatprep.mubr.bf16.mxu0 %v8871
        %9622 = vmatmul.mubr.bf16.gmra.mrb[0].mxu0 %v8862
        %v9623 = vpop.f32.mrb[0].mxu0
        %v9624 = vadd.f32 0.0, %v9623
        %v9625 = vpop.f32.mrb[0].mxu0
        %v9626 = vpop.f32.mrb[0].mxu0
        %v9627 = vadd.f32 0.0, %v9626
        %v9628 = vpop.f32.mrb[0].mxu0
        %9629 = vmatprep.mubr.bf16.mxu0 %v8893
        %9630 = vmatmul.mubr.bf16.gmra.mrb[0].mxu0 %v8884
        %v9631 = vpop.f32.mrb[0].mxu0
        %v9632 = vadd.f32 0.0, %v9631
        %v9633 = vpop.f32.mrb[0].mxu0
        %v9634 = vpop.f32.mrb[0].mxu0
        %v9635 = vadd.f32 0.0, %v9634
        %v9636 = vpop.f32.mrb[0].mxu0
        %9637 = vmatprep.mubr.bf16.mxu0 %v8915
        %9638 = vmatmul.mubr.bf16.gmra.mrb[0].mxu0 %v8906
        %v9639 = vpop.f32.mrb[0].mxu0
        %v9640 = vadd.f32 0.0, %v9639
        %v9641 = vpop.f32.mrb[0].mxu0
        %v9642 = vpop.f32.mrb[0].mxu0
        %v9643 = vadd.f32 0.0, %v9642
        %v9644 = vpop.f32.mrb[0].mxu0
        %9645 = vmatprep.mubr.bf16.mxu0 %v8937
        %9646 = vmatmul.mubr.bf16.gmra.mrb[0].mxu0 %v8928
        %v9647 = vpop.f32.mrb[0].mxu0
        %v9648 = vadd.f32 0.0, %v9647
        %v9649 = vpop.f32.mrb[0].mxu0
        %v9650 = vpop.f32.mrb[0].mxu0
        %v9651 = vadd.f32 0.0, %v9650
        %v9652 = vpop.f32.mrb[0].mxu0
        %9653 = vmatprep.mubr.bf16.mxu0 %v8959
        %9654 = vmatmul.mubr.bf16.gmra.mrb[0].mxu0 %v8950
        %v9655 = vpop.f32.mrb[0].mxu0
        %v9656 = vadd.f32 0.0, %v9655
        %v9657 = vpop.f32.mrb[0].mxu0
        %v9658 = vpop.f32.mrb[0].mxu0
        %v9659 = vadd.f32 0.0, %v9658
        %v9660 = vpop.f32.mrb[0].mxu0
        %9661 = vmatprep.mubr.bf16.mxu0 %v8981
        %9662 = vmatmul.mubr.bf16.gmra.mrb[0].mxu0 %v8972
        %v9663 = vpop.f32.mrb[0].mxu0
        %v9664 = vadd.f32 0.0, %v9663
        %v9665 = vpop.f32.mrb[0].mxu0
        %v9666 = vpop.f32.mrb[0].mxu0
        %v9667 = vadd.f32 0.0, %v9666
        %v9668 = vpop.f32.mrb[0].mxu0
        %9669 = vmatprep.mubr.bf16.mxu0 %v9003
        %9670 = vmatmul.mubr.bf16.gmra.mrb[0].mxu0 %v8994
        %v9671 = vpop.f32.mrb[0].mxu0
        %v9672 = vadd.f32 0.0, %v9671
        %v9673 = vpop.f32.mrb[0].mxu0
        %v9674 = vpop.f32.mrb[0].mxu0
        %v9675 = vadd.f32 0.0, %v9674
        %v9676 = vpop.f32.mrb[0].mxu0
        %9677 = vmatprep.mubr.bf16.mxu0 %v9025
        %9678 = vmatmul.mubr.bf16.gmra.mrb[0].mxu0 %v9016
        %v9679 = vpop.f32.mrb[0].mxu0
        %v9680 = vadd.f32 0.0, %v9679
        %v9681 = vpop.f32.mrb[0].mxu0
        %v9682 = vpop.f32.mrb[0].mxu0
        %v9683 = vadd.f32 0.0, %v9682
        %v9684 = vpop.f32.mrb[0].mxu0
        %9685 = vmatprep.mubr.bf16.mxu0 %v9047
        %9686 = vmatmul.mubr.bf16.gmra.mrb[0].mxu0 %v9038
        %v9687 = vpop.f32.mrb[0].mxu0
        %v9688 = vadd.f32 0.0, %v9687
        %v9689 = vpop.f32.mrb[0].mxu0
        %v9690 = vpop.f32.mrb[0].mxu0
        %v9691 = vadd.f32 0.0, %v9690
        %v9692 = vpop.f32.mrb[0].mxu0
        %9693 = vmatprep.mubr.bf16.mxu0 %v9069
        %9694 = vmatmul.mubr.bf16.gmra.mrb[0].mxu0 %v9060
        %v9695 = vpop.f32.mrb[0].mxu0
        %v9696 = vadd.f32 0.0, %v9695
        %v9697 = vpop.f32.mrb[0].mxu0
        %v9698 = vpop.f32.mrb[0].mxu0
        %v9699 = vadd.f32 0.0, %v9698
        %v9700 = vpop.f32.mrb[0].mxu0
        %9701 = vmatprep.mubr.bf16.mxu0 %v9091
        %9702 = vmatmul.mubr.bf16.gmra.mrb[0].mxu0 %v9082
        %v9703 = vpop.f32.mrb[0].mxu0
        %v9704 = vadd.f32 0.0, %v9703
        %v9705 = vpop.f32.mrb[0].mxu0
        %v9706 = vpop.f32.mrb[0].mxu0
        %v9707 = vadd.f32 0.0, %v9706
        %v9708 = vpop.f32.mrb[0].mxu0
        %9709 = vmatprep.mubr.bf16.mxu0 %v9113
        %9710 = vmatmul.mubr.bf16.gmra.mrb[0].mxu0 %v9104
        %v9711 = vpop.f32.mrb[0].mxu0
        %v9712 = vadd.f32 0.0, %v9711
        %v9713 = vpop.f32.mrb[0].mxu0
        %v9714 = vpop.f32.mrb[0].mxu0
        %v9715 = vadd.f32 0.0, %v9714
        %v9716 = vpop.f32.mrb[0].mxu0
        %9717 = vmatprep.mubr.bf16.mxu0 %v9135
        %9718 = vmatmul.mubr.bf16.gmra.mrb[0].mxu0 %v9126
        %v9719 = vpop.f32.mrb[0].mxu0
        %v9720 = vadd.f32 0.0, %v9719
        %v9721 = vpop.f32.mrb[0].mxu0
        %v9722 = vpop.f32.mrb[0].mxu0
        %v9723 = vadd.f32 0.0, %v9722
        %v9724 = vpop.f32.mrb[0].mxu0
        %9725 = vmatprep.mubr.bf16.mxu0 %v9157
        %9726 = vmatmul.mubr.bf16.gmra.mrb[0].mxu0 %v9148
        %v9727 = vpop.f32.mrb[0].mxu0
        %v9728 = vadd.f32 0.0, %v9727
        %v9729 = vpop.f32.mrb[0].mxu0
        %v9730 = vpop.f32.mrb[0].mxu0
        %v9731 = vadd.f32 0.0, %v9730
        %v9732 = vpop.f32.mrb[0].mxu0
        %9733 = vmatprep.mubr.bf16.mxu0 %v9179
        %9734 = vmatmul.mubr.bf16.gmra.mrb[0].mxu0 %v9170
        %v9735 = vpop.f32.mrb[0].mxu0
        %v9736 = vadd.f32 0.0, %v9735
        %v9737 = vpop.f32.mrb[0].mxu0
        %v9738 = vpop.f32.mrb[0].mxu0
        %v9739 = vadd.f32 0.0, %v9738
        %v9740 = vpop.f32.mrb[0].mxu0
        %9741 = vmatprep.mubr.bf16.mxu0 %v9201
        %9742 = vmatmul.mubr.bf16.gmra.mrb[0].mxu0 %v9192
        %v9743 = vpop.f32.mrb[0].mxu0
        %v9744 = vadd.f32 0.0, %v9743
        %v9745 = vpop.f32.mrb[0].mxu0
        %v9746 = vpop.f32.mrb[0].mxu0
        %v9747 = vadd.f32 0.0, %v9746
        %v9748 = vpop.f32.mrb[0].mxu0
        %9749 = vmatprep.mubr.bf16.mxu0 %v9223
        %9750 = vmatmul.mubr.bf16.gmra.mrb[0].mxu0 %v9214
        %v9751 = vpop.f32.mrb[0].mxu0
        %v9752 = vadd.f32 0.0, %v9751
        %v9753 = vpop.f32.mrb[0].mxu0
        %v9754 = vpop.f32.mrb[0].mxu0
        %v9755 = vadd.f32 0.0, %v9754
        %v9756 = vpop.f32.mrb[0].mxu0
        %9757 = vmatprep.mubr.bf16.mxu0 %v9245
        %9758 = vmatmul.mubr.bf16.gmra.mrb[0].mxu0 %v9236
        %v9759 = vpop.f32.mrb[0].mxu0
        %v9760 = vadd.f32 0.0, %v9759
        %v9761 = vpop.f32.mrb[0].mxu0
        %v9762 = vpop.f32.mrb[0].mxu0
        %v9763 = vadd.f32 0.0, %v9762
        %v9764 = vpop.f32.mrb[0].mxu0
        %9765 = vmatprep.mubr.bf16.mxu0 %v9267
        %9766 = vmatmul.mubr.bf16.gmra.mrb[0].mxu0 %v9258
        %v9767 = vpop.f32.mrb[0].mxu0
        %v9768 = vadd.f32 0.0, %v9767
        %v9769 = vpop.f32.mrb[0].mxu0
        %v9770 = vpop.f32.mrb[0].mxu0
        %v9771 = vadd.f32 0.0, %v9770
        %v9772 = vpop.f32.mrb[0].mxu0
        %9773 = vmatprep.mubr.bf16.mxu0 %v9289
        %9774 = vmatmul.mubr.bf16.gmra.mrb[0].mxu0 %v9280
        %v9775 = vpop.f32.mrb[0].mxu0
        %v9776 = vadd.f32 0.0, %v9775
        %v9777 = vpop.f32.mrb[0].mxu0
        %v9778 = vpop.f32.mrb[0].mxu0
        %v9779 = vadd.f32 0.0, %v9778
        %v9780 = vpop.f32.mrb[0].mxu0
        %9781 = vmatprep.mubr.bf16.mxu0 %v9311
        %9782 = vmatmul.mubr.bf16.gmra.mrb[0].mxu0 %v9302
        %v9783 = vpop.f32.mrb[0].mxu0
        %v9784 = vadd.f32 0.0, %v9783
        %v9785 = vpop.f32.mrb[0].mxu0
        %v9786 = vpop.f32.mrb[0].mxu0
        %v9787 = vadd.f32 0.0, %v9786
        %v9788 = vpop.f32.mrb[0].mxu0
        %9789 = vmatprep.mubr.bf16.mxu0 %v9333
        %9790 = vmatmul.mubr.bf16.gmra.mrb[0].mxu0 %v9324
        %v9791 = vpop.f32.mrb[0].mxu0
        %v9792 = vadd.f32 0.0, %v9791
        %v9793 = vpop.f32.mrb[0].mxu0
        %v9794 = vpop.f32.mrb[0].mxu0
        %v9795 = vadd.f32 0.0, %v9794
        %v9796 = vpop.f32.mrb[0].mxu0
        %9797 = vmatprep.mubr.bf16.mxu0 %v9355
        %9798 = vmatmul.mubr.bf16.gmra.mrb[0].mxu0 %v9346
        %v9799 = vpop.f32.mrb[0].mxu0
        %v9800 = vadd.f32 0.0, %v9799
        %v9801 = vpop.f32.mrb[0].mxu0
        %v9802 = vpop.f32.mrb[0].mxu0
        %v9803 = vadd.f32 0.0, %v9802
        %v9804 = vpop.f32.mrb[0].mxu0
        %9805 = vdwg.mxu0
        %9806 = vmatprep.subr.bf16.mxu0 0
        %9807 = vmatpush1.bf16.msra.mxu0 %v9549
        %9808 = vmatprep.subr.bf16.mxu0 0
        %9809 = vmatpush1.bf16.msra.mxu0 %v9550
        %9810 = vmatprep.subr.bf16.mxu0 0
        %9811 = vmatpush1.bf16.msra.mxu0 %v9551
        %9812 = vmatprep.subr.bf16.mxu0 0
        %9813 = vmatpush1.bf16.msra.mxu0 %v9552
        %9814 = vmatprep.subr.bf16.mxu0 0
        %9815 = vmatpush1.bf16.msra.mxu0 %v9553
        %9816 = vmatprep.subr.bf16.mxu0 0
        %9817 = vmatpush1.bf16.msra.mxu0 %v9554
        %9818 = vmatprep.subr.bf16.mxu0 0
        %9819 = vmatpush1.bf16.msra.mxu0 %v9555
        %9820 = vmatprep.subr.bf16.mxu0 0
        %9821 = vmatpush1.bf16.msra.mxu0 %v9556
        %9822 = vmatprep.subr.bf16.mxu0 0
        %9823 = vmatpush1.bf16.msra.mxu0 0
        %9824 = vmatprep.subr.bf16.mxu0 0
        %9825 = vmatpush1.bf16.msra.mxu0 0
        %9826 = vmatprep.subr.bf16.mxu0 0
        %9827 = vmatpush1.bf16.msra.mxu0 0
        %9828 = vmatprep.subr.bf16.mxu0 0
        %9829 = vmatpush1.bf16.msra.mxu0 0
        %9830 = vmatprep.subr.bf16.mxu0 0
        %9831 = vmatpush1.bf16.msra.mxu0 0
        %9832 = vmatprep.subr.bf16.mxu0 0
        %9833 = vmatpush1.bf16.msra.mxu0 0
        %9834 = vmatprep.subr.bf16.mxu0 0
        %9835 = vmatpush1.bf16.msra.mxu0 0
        %9836 = vmatprep.subr.bf16.mxu0 0
        %9837 = vmatpush1.bf16.msra.mxu0 0
        %9838 = vmatprep.mubr.bf16.mxu0 0
        %9839 = vmatmul.mubr.bf16.gmra.mrb[0].mxu0 %v8858
        %v9840 = vpop.f32.mrb[0].mxu0
        %v9841 = vadd.f32 %v9616, %v9840
        %v9842 = vpop.f32.mrb[0].mxu0
        %v9843 = vpop.f32.mrb[0].mxu0
        %v9844 = vadd.f32 %v9619, %v9843
        %v9845 = vpop.f32.mrb[0].mxu0
        %9846 = vmatprep.mubr.bf16.mxu0 0
        %9847 = vmatmul.mubr.bf16.gmra.mrb[0].mxu0 %v8880
        %v9848 = vpop.f32.mrb[0].mxu0
        %v9849 = vadd.f32 %v9624, %v9848
        %v9850 = vpop.f32.mrb[0].mxu0
        %v9851 = vpop.f32.mrb[0].mxu0
        %v9852 = vadd.f32 %v9627, %v9851
        %v9853 = vpop.f32.mrb[0].mxu0
        %9854 = vmatprep.mubr.bf16.mxu0 0
        %9855 = vmatmul.mubr.bf16.gmra.mrb[0].mxu0 %v8902
        %v9856 = vpop.f32.mrb[0].mxu0
        %v9857 = vadd.f32 %v9632, %v9856
        %v9858 = vpop.f32.mrb[0].mxu0
        %v9859 = vpop.f32.mrb[0].mxu0
        %v9860 = vadd.f32 %v9635, %v9859
        %v9861 = vpop.f32.mrb[0].mxu0
        %9862 = vmatprep.mubr.bf16.mxu0 0
        %9863 = vmatmul.mubr.bf16.gmra.mrb[0].mxu0 %v8924
        %v9864 = vpop.f32.mrb[0].mxu0
        %v9865 = vadd.f32 %v9640, %v9864
        %v9866 = vpop.f32.mrb[0].mxu0
        %v9867 = vpop.f32.mrb[0].mxu0
        %v9868 = vadd.f32 %v9643, %v9867
        %v9869 = vpop.f32.mrb[0].mxu0
        %9870 = vmatprep.mubr.bf16.mxu0 0
        %9871 = vmatmul.mubr.bf16.gmra.mrb[0].mxu0 %v8946
        %v9872 = vpop.f32.mrb[0].mxu0
        %v9873 = vadd.f32 %v9648, %v9872
        %v9874 = vpop.f32.mrb[0].mxu0
        %v9875 = vpop.f32.mrb[0].mxu0
        %v9876 = vadd.f32 %v9651, %v9875
        %v9877 = vpop.f32.mrb[0].mxu0
        %9878 = vmatprep.mubr.bf16.mxu0 0
        %9879 = vmatmul.mubr.bf16.gmra.mrb[0].mxu0 %v8968
        %v9880 = vpop.f32.mrb[0].mxu0
        %v9881 = vadd.f32 %v9656, %v9880
        %v9882 = vpop.f32.mrb[0].mxu0
        %v9883 = vpop.f32.mrb[0].mxu0
        %v9884 = vadd.f32 %v9659, %v9883
        %v9885 = vpop.f32.mrb[0].mxu0
        %9886 = vmatprep.mubr.bf16.mxu0 0
        %9887 = vmatmul.mubr.bf16.gmra.mrb[0].mxu0 %v8990
        %v9888 = vpop.f32.mrb[0].mxu0
        %v9889 = vadd.f32 %v9664, %v9888
        %v9890 = vpop.f32.mrb[0].mxu0
        %v9891 = vpop.f32.mrb[0].mxu0
        %v9892 = vadd.f32 %v9667, %v9891
        %v9893 = vpop.f32.mrb[0].mxu0
        %9894 = vmatprep.mubr.bf16.mxu0 0
        %9895 = vmatmul.mubr.bf16.gmra.mrb[0].mxu0 %v9012
        %v9896 = vpop.f32.mrb[0].mxu0
        %v9897 = vadd.f32 %v9672, %v9896
        %v9898 = vpop.f32.mrb[0].mxu0
        %v9899 = vpop.f32.mrb[0].mxu0
        %v9900 = vadd.f32 %v9675, %v9899
        %v9901 = vpop.f32.mrb[0].mxu0
        %9902 = vmatprep.mubr.bf16.mxu0 0
        %9903 = vmatmul.mubr.bf16.gmra.mrb[0].mxu0 %v9034
        %v9904 = vpop.f32.mrb[0].mxu0
        %v9905 = vadd.f32 %v9680, %v9904
        %v9906 = vpop.f32.mrb[0].mxu0
        %v9907 = vpop.f32.mrb[0].mxu0
        %v9908 = vadd.f32 %v9683, %v9907
        %v9909 = vpop.f32.mrb[0].mxu0
        %9910 = vmatprep.mubr.bf16.mxu0 0
        %9911 = vmatmul.mubr.bf16.gmra.mrb[0].mxu0 %v9056
        %v9912 = vpop.f32.mrb[0].mxu0
        %v9913 = vadd.f32 %v9688, %v9912
        %v9914 = vpop.f32.mrb[0].mxu0
        %v9915 = vpop.f32.mrb[0].mxu0
        %v9916 = vadd.f32 %v9691, %v9915
        %v9917 = vpop.f32.mrb[0].mxu0
        %9918 = vmatprep.mubr.bf16.mxu0 0
        %9919 = vmatmul.mubr.bf16.gmra.mrb[0].mxu0 %v9078
        %v9920 = vpop.f32.mrb[0].mxu0
        %v9921 = vadd.f32 %v9696, %v9920
        %v9922 = vpop.f32.mrb[0].mxu0
        %v9923 = vpop.f32.mrb[0].mxu0
        %v9924 = vadd.f32 %v9699, %v9923
        %v9925 = vpop.f32.mrb[0].mxu0
        %9926 = vmatprep.mubr.bf16.mxu0 0
        %9927 = vmatmul.mubr.bf16.gmra.mrb[0].mxu0 %v9100
        %v9928 = vpop.f32.mrb[0].mxu0
        %v9929 = vadd.f32 %v9704, %v9928
        %v9930 = vpop.f32.mrb[0].mxu0
        %v9931 = vpop.f32.mrb[0].mxu0
        %v9932 = vadd.f32 %v9707, %v9931
        %v9933 = vpop.f32.mrb[0].mxu0
        %9934 = vmatprep.mubr.bf16.mxu0 0
        %9935 = vmatmul.mubr.bf16.gmra.mrb[0].mxu0 %v9122
        %v9936 = vpop.f32.mrb[0].mxu0
        %v9937 = vadd.f32 %v9712, %v9936
        %v9938 = vpop.f32.mrb[0].mxu0
        %v9939 = vpop.f32.mrb[0].mxu0
        %v9940 = vadd.f32 %v9715, %v9939
        %v9941 = vpop.f32.mrb[0].mxu0
        %9942 = vmatprep.mubr.bf16.mxu0 0
        %9943 = vmatmul.mubr.bf16.gmra.mrb[0].mxu0 %v9144
        %v9944 = vpop.f32.mrb[0].mxu0
        %v9945 = vadd.f32 %v9720, %v9944
        %v9946 = vpop.f32.mrb[0].mxu0
        %v9947 = vpop.f32.mrb[0].mxu0
        %v9948 = vadd.f32 %v9723, %v9947
        %v9949 = vpop.f32.mrb[0].mxu0
        %9950 = vmatprep.mubr.bf16.mxu0 0
        %9951 = vmatmul.mubr.bf16.gmra.mrb[0].mxu0 %v9166
        %v9952 = vpop.f32.mrb[0].mxu0
        %v9953 = vadd.f32 %v9728, %v9952
        %v9954 = vpop.f32.mrb[0].mxu0
        %v9955 = vpop.f32.mrb[0].mxu0
        %v9956 = vadd.f32 %v9731, %v9955
        %v9957 = vpop.f32.mrb[0].mxu0
        %9958 = vmatprep.mubr.bf16.mxu0 0
        %9959 = vmatmul.mubr.bf16.gmra.mrb[0].mxu0 %v9188
        %v9960 = vpop.f32.mrb[0].mxu0
        %v9961 = vadd.f32 %v9736, %v9960
        %v9962 = vpop.f32.mrb[0].mxu0
        %v9963 = vpop.f32.mrb[0].mxu0
        %v9964 = vadd.f32 %v9739, %v9963
        %v9965 = vpop.f32.mrb[0].mxu0
        %9966 = vmatprep.mubr.bf16.mxu0 0
        %9967 = vmatmul.mubr.bf16.gmra.mrb[0].mxu0 %v9210
        %v9968 = vpop.f32.mrb[0].mxu0
        %v9969 = vadd.f32 %v9744, %v9968
        %v9970 = vpop.f32.mrb[0].mxu0
        %v9971 = vpop.f32.mrb[0].mxu0
        %v9972 = vadd.f32 %v9747, %v9971
        %v9973 = vpop.f32.mrb[0].mxu0
        %9974 = vmatprep.mubr.bf16.mxu0 0
        %9975 = vmatmul.mubr.bf16.gmra.mrb[0].mxu0 %v9232
        %v9976 = vpop.f32.mrb[0].mxu0
        %v9977 = vadd.f32 %v9752, %v9976
        %v9978 = vpop.f32.mrb[0].mxu0
        %v9979 = vpop.f32.mrb[0].mxu0
        %v9980 = vadd.f32 %v9755, %v9979
        %v9981 = vpop.f32.mrb[0].mxu0
        %9982 = vmatprep.mubr.bf16.mxu0 0
        %9983 = vmatmul.mubr.bf16.gmra.mrb[0].mxu0 %v9254
        %v9984 = vpop.f32.mrb[0].mxu0
        %v9985 = vadd.f32 %v9760, %v9984
        %v9986 = vpop.f32.mrb[0].mxu0
        %v9987 = vpop.f32.mrb[0].mxu0
        %v9988 = vadd.f32 %v9763, %v9987
        %v9989 = vpop.f32.mrb[0].mxu0
        %9990 = vmatprep.mubr.bf16.mxu0 0
        %9991 = vmatmul.mubr.bf16.gmra.mrb[0].mxu0 %v9276
        %v9992 = vpop.f32.mrb[0].mxu0
        %v9993 = vadd.f32 %v9768, %v9992
        %v9994 = vpop.f32.mrb[0].mxu0
        %v9995 = vpop.f32.mrb[0].mxu0
        %v9996 = vadd.f32 %v9771, %v9995
        %v9997 = vpop.f32.mrb[0].mxu0
        %9998 = vmatprep.mubr.bf16.mxu0 0
        %9999 = vmatmul.mubr.bf16.gmra.mrb[0].mxu0 %v9298
        %v10000 = vpop.f32.mrb[0].mxu0
        %v10001 = vadd.f32 %v9776, %v10000
        %v10002 = vpop.f32.mrb[0].mxu0
        %v10003 = vpop.f32.mrb[0].mxu0
        %v10004 = vadd.f32 %v9779, %v10003
        %v10005 = vpop.f32.mrb[0].mxu0
        %10006 = vmatprep.mubr.bf16.mxu0 0
        %10007 = vmatmul.mubr.bf16.gmra.mrb[0].mxu0 %v9320
        %v10008 = vpop.f32.mrb[0].mxu0
        %v10009 = vadd.f32 %v9784, %v10008
        %v10010 = vpop.f32.mrb[0].mxu0
        %v10011 = vpop.f32.mrb[0].mxu0
        %v10012 = vadd.f32 %v9787, %v10011
        %v10013 = vpop.f32.mrb[0].mxu0
        %10014 = vmatprep.mubr.bf16.mxu0 0
        %10015 = vmatmul.mubr.bf16.gmra.mrb[0].mxu0 %v9342
        %v10016 = vpop.f32.mrb[0].mxu0
        %v10017 = vadd.f32 %v9792, %v10016
        %v10018 = vpop.f32.mrb[0].mxu0
        %v10019 = vpop.f32.mrb[0].mxu0
        %v10020 = vadd.f32 %v9795, %v10019
        %v10021 = vpop.f32.mrb[0].mxu0
        %10022 = vmatprep.mubr.bf16.mxu0 0
        %10023 = vmatmul.mubr.bf16.gmra.mrb[0].mxu0 %v9364
        %v10024 = vpop.f32.mrb[0].mxu0
        %v10025 = vadd.f32 %v9800, %v10024
        %v10026 = vpop.f32.mrb[0].mxu0
        %v10027 = vpop.f32.mrb[0].mxu0
        %v10028 = vadd.f32 %v9803, %v10027
        %v10029 = vpop.f32.mrb[0].mxu0
        %10030 = vdwg.mxu0
        %v10031 = vadd.f32 %v8274, %v9841
        %v10032 = vadd.f32 %v8277, %v9844
        %v10033 = vadd.f32 %v8282, %v9849
        %v10034 = vadd.f32 %v8285, %v9852
        %v10035 = vadd.f32 %v8290, %v9857
        %v10036 = vadd.f32 %v8293, %v9860
        %v10037 = vadd.f32 %v8298, %v9865
        %v10038 = vadd.f32 %v8301, %v9868
        %v10039 = vadd.f32 %v8306, %v9873
        %v10040 = vadd.f32 %v8309, %v9876
        %v10041 = vadd.f32 %v8314, %v9881
        %v10042 = vadd.f32 %v8317, %v9884
        %v10043 = vadd.f32 %v8322, %v9889
        %v10044 = vadd.f32 %v8325, %v9892
        %v10045 = vadd.f32 %v8330, %v9897
        %v10046 = vadd.f32 %v8333, %v9900
        %v10047 = vadd.f32 %v8338, %v9905
        %v10048 = vadd.f32 %v8341, %v9908
        %v10049 = vadd.f32 %v8346, %v9913
        %v10050 = vadd.f32 %v8349, %v9916
        %v10051 = vadd.f32 %v8354, %v9921
        %v10052 = vadd.f32 %v8357, %v9924
        %v10053 = vadd.f32 %v8362, %v9929
        %v10054 = vadd.f32 %v8365, %v9932
        %v10055 = vadd.f32 %v8370, %v9937
        %v10056 = vadd.f32 %v8373, %v9940
        %v10057 = vadd.f32 %v8378, %v9945
        %v10058 = vadd.f32 %v8381, %v9948
        %v10059 = vadd.f32 %v8386, %v9953
        %v10060 = vadd.f32 %v8389, %v9956
        %v10061 = vadd.f32 %v8394, %v9961
        %v10062 = vadd.f32 %v8397, %v9964
        %v10063 = vadd.f32 %v8402, %v9969
        %v10064 = vadd.f32 %v8405, %v9972
        %v10065 = vadd.f32 %v8410, %v9977
        %v10066 = vadd.f32 %v8413, %v9980
        %v10067 = vadd.f32 %v8418, %v9985
        %v10068 = vadd.f32 %v8421, %v9988
        %v10069 = vadd.f32 %v8426, %v9993
        %v10070 = vadd.f32 %v8429, %v9996
        %v10071 = vadd.f32 %v8434, %v10001
        %v10072 = vadd.f32 %v8437, %v10004
        %v10073 = vadd.f32 %v8442, %v10009
        %v10074 = vadd.f32 %v8445, %v10012
        %v10075 = vadd.f32 %v8450, %v10017
        %v10076 = vadd.f32 %v8453, %v10020
        %v10077 = vadd.f32 %v8458, %v10025
        %v10078 = vadd.f32 %v8461, %v10028
        %v10079 = vld [vmem:[%s212 + $0x10] sm:$0xf]
        %v10080 = vld [vmem:[%s212 + $0x14] sm:$0xf]
        %v10081 = vld [vmem:[%s212 + $0x18] sm:$0xf]
        %v10082 = vld [vmem:[%s212 + $0x1c] sm:$0xf]
        %v10083 = vld [vmem:[%s212 + $0x20] sm:$0xf]
        %v10084 = vld [vmem:[%s212 + $0x24] sm:$0xf]
        %v10085 = vld [vmem:[%s212 + $0x28] sm:$0xf]
        %v10086 = vld [vmem:[%s212 + $0x2c] sm:$0xf]
        %v10087 = vld [vmem:[%s212 + $0x30] sm:$0xf]
        %v10088 = vld [vmem:[%s212 + $0x34] sm:$0xf]
        %v10089 = vld [vmem:[%s212 + $0x38] sm:$0xf]
        %v10090 = vld [vmem:[%s212 + $0x3c] sm:$0xf]
        %v10091 = vld [vmem:[%s212 + $0x40] sm:$0xf]
        %v10092 = vld [vmem:[%s212 + $0x44] sm:$0xf]
        %v10093 = vld [vmem:[%s212 + $0x48] sm:$0xf]
        %v10094 = vld [vmem:[%s212 + $0x4c] sm:$0xf]
        %v10095 = vld [vmem:[%s212 + $0x50] sm:$0xf]
        %v10096 = vld [vmem:[%s212 + $0x54] sm:$0xf]
        %v10097 = vld [vmem:[%s212 + $0x58] sm:$0xf]
        %v10098 = vld [vmem:[%s212 + $0x5c] sm:$0xf]
        %v10099 = vld [vmem:[%s212 + $0x60] sm:$0xf]
        %v10100 = vld [vmem:[%s212 + $0x64] sm:$0xf]
        %v10101 = vld [vmem:[%s212 + $0x68] sm:$0xf]
        %v10102 = vld [vmem:[%s212 + $0x6c] sm:$0xf]
        %v10103 = vld [vmem:[%s212 + $0x70] sm:$0xf]
        %v10104 = vld [vmem:[%s212 + $0x74] sm:$0xf]
        %v10105 = vld [vmem:[%s212 + $0x78] sm:$0xf]
        %v10106 = vld [vmem:[%s212 + $0x7c] sm:$0xf]
        %v10107 = vld [vmem:[%s212 + $0x80] sm:$0xf]
        %v10108 = vld [vmem:[%s212 + $0x84] sm:$0xf]
        %v10109 = vld [vmem:[%s212 + $0x88] sm:$0xf]
        %v10110 = vld [vmem:[%s212 + $0x8c] sm:$0xf]
        %v10111 = vld [vmem:[%s212 + $0x90] sm:$0xf]
        %v10112 = vld [vmem:[%s212 + $0x94] sm:$0xf]
        %v10113 = vld [vmem:[%s212 + $0x98] sm:$0xf]
        %v10114 = vld [vmem:[%s212 + $0x9c] sm:$0xf]
        %v10115 = vld [vmem:[%s212 + $0xa0] sm:$0xf]
        %v10116 = vld [vmem:[%s212 + $0xa4] sm:$0xf]
        %v10117 = vld [vmem:[%s212 + $0xa8] sm:$0xf]
        %v10118 = vld [vmem:[%s212 + $0xac] sm:$0xf]
        %v10119 = vld [vmem:[%s212 + $0xb0] sm:$0xf]
        %v10120 = vld [vmem:[%s212 + $0xb4] sm:$0xf]
        %v10121 = vld [vmem:[%s212 + $0xb8] sm:$0xf]
        %v10122 = vld [vmem:[%s212 + $0xbc] sm:$0xf]
        %v10123 = vld [vmem:[%s212 + $0xc0] sm:$0xf]
        %v10124 = vld [vmem:[%s212 + $0xc4] sm:$0xf]
        %v10125 = vld [vmem:[%s212 + $0xc8] sm:$0xf]
        %v10126 = vld [vmem:[%s212 + $0xcc] sm:$0xf]
        %v10127 = vunpack.c.l.bf16 %v10079
        %v10128 = vunpack.c.l.bf16 %v10080
        %v10129 = vunpack.c.l.bf16 %v10081
        %v10130 = vunpack.c.l.bf16 %v10082
        %v10131 = vunpack.c.l.bf16 %v10083
        %v10132 = vunpack.c.l.bf16 %v10084
        %v10133 = vunpack.c.l.bf16 %v10085
        %v10134 = vunpack.c.l.bf16 %v10086
        %v10135 = vunpack.c.l.bf16 %v10087
        %v10136 = vunpack.c.l.bf16 %v10088
        %v10137 = vunpack.c.l.bf16 %v10089
        %v10138 = vunpack.c.l.bf16 %v10090
        %v10139 = vunpack.c.l.bf16 %v10091
        %v10140 = vunpack.c.l.bf16 %v10092
        %v10141 = vunpack.c.l.bf16 %v10093
        %v10142 = vunpack.c.l.bf16 %v10094
        %v10143 = vunpack.c.l.bf16 %v10095
        %v10144 = vunpack.c.l.bf16 %v10096
        %v10145 = vunpack.c.l.bf16 %v10097
        %v10146 = vunpack.c.l.bf16 %v10098
        %v10147 = vunpack.c.l.bf16 %v10099
        %v10148 = vunpack.c.l.bf16 %v10100
        %v10149 = vunpack.c.l.bf16 %v10101
        %v10150 = vunpack.c.l.bf16 %v10102
        %v10151 = vunpack.c.l.bf16 %v10103
        %v10152 = vunpack.c.l.bf16 %v10104
        %v10153 = vunpack.c.l.bf16 %v10105
        %v10154 = vunpack.c.l.bf16 %v10106
        %v10155 = vunpack.c.l.bf16 %v10107
        %v10156 = vunpack.c.l.bf16 %v10108
        %v10157 = vunpack.c.l.bf16 %v10109
        %v10158 = vunpack.c.l.bf16 %v10110
        %v10159 = vunpack.c.l.bf16 %v10111
        %v10160 = vunpack.c.l.bf16 %v10112
        %v10161 = vunpack.c.l.bf16 %v10113
        %v10162 = vunpack.c.l.bf16 %v10114
        %v10163 = vunpack.c.l.bf16 %v10115
        %v10164 = vunpack.c.l.bf16 %v10116
        %v10165 = vunpack.c.l.bf16 %v10117
        %v10166 = vunpack.c.l.bf16 %v10118
        %v10167 = vunpack.c.l.bf16 %v10119
        %v10168 = vunpack.c.l.bf16 %v10120
        %v10169 = vunpack.c.l.bf16 %v10121
        %v10170 = vunpack.c.l.bf16 %v10122
        %v10171 = vunpack.c.l.bf16 %v10123
        %v10172 = vunpack.c.l.bf16 %v10124
        %v10173 = vunpack.c.l.bf16 %v10125
        %v10174 = vunpack.c.l.bf16 %v10126
        %v10175 = vlaneseq
        %v10176 = vshrl.u32 %v10175, 7
        %v10177 = vsub.s32 0, %v10176
        %v10178 = vrot.slane %v248, %v10177
        %v10179 = vmul.f32 %v10031, %v10178
        %v10180 = vmul.f32 %v10032, %v10178
        %v10181 = vmul.f32 %v10033, %v10178
        %v10182 = vmul.f32 %v10034, %v10178
        %v10183 = vmul.f32 %v10035, %v10178
        %v10184 = vmul.f32 %v10036, %v10178
        %v10185 = vmul.f32 %v10037, %v10178
        %v10186 = vmul.f32 %v10038, %v10178
        %v10187 = vmul.f32 %v10039, %v10178
        %v10188 = vmul.f32 %v10040, %v10178
        %v10189 = vmul.f32 %v10041, %v10178
        %v10190 = vmul.f32 %v10042, %v10178
        %v10191 = vmul.f32 %v10043, %v10178
        %v10192 = vmul.f32 %v10044, %v10178
        %v10193 = vmul.f32 %v10045, %v10178
        %v10194 = vmul.f32 %v10046, %v10178
        %v10195 = vmul.f32 %v10047, %v10178
        %v10196 = vmul.f32 %v10048, %v10178
        %v10197 = vmul.f32 %v10049, %v10178
        %v10198 = vmul.f32 %v10050, %v10178
        %v10199 = vmul.f32 %v10051, %v10178
        %v10200 = vmul.f32 %v10052, %v10178
        %v10201 = vmul.f32 %v10053, %v10178
        %v10202 = vmul.f32 %v10054, %v10178
        %v10203 = vmul.f32 %v10055, %v10178
        %v10204 = vmul.f32 %v10056, %v10178
        %v10205 = vmul.f32 %v10057, %v10178
        %v10206 = vmul.f32 %v10058, %v10178
        %v10207 = vmul.f32 %v10059, %v10178
        %v10208 = vmul.f32 %v10060, %v10178
        %v10209 = vmul.f32 %v10061, %v10178
        %v10210 = vmul.f32 %v10062, %v10178
        %v10211 = vmul.f32 %v10063, %v10178
        %v10212 = vmul.f32 %v10064, %v10178
        %v10213 = vmul.f32 %v10065, %v10178
        %v10214 = vmul.f32 %v10066, %v10178
        %v10215 = vmul.f32 %v10067, %v10178
        %v10216 = vmul.f32 %v10068, %v10178
        %v10217 = vmul.f32 %v10069, %v10178
        %v10218 = vmul.f32 %v10070, %v10178
        %v10219 = vmul.f32 %v10071, %v10178
        %v10220 = vmul.f32 %v10072, %v10178
        %v10221 = vmul.f32 %v10073, %v10178
        %v10222 = vmul.f32 %v10074, %v10178
        %v10223 = vmul.f32 %v10075, %v10178
        %v10224 = vmul.f32 %v10076, %v10178
        %v10225 = vmul.f32 %v10077, %v10178
        %v10226 = vmul.f32 %v10078, %v10178
        %v10227 = vlaneseq
        %v10228 = vshrl.u32 %v10227, 7
        %v10229 = vsub.s32 0, %v10228
        %v10230 = vrot.slane %v249, %v10229
        %v10231 = vadd.f32 %v10179, %v10230
        %v10232 = vadd.f32 %v10180, %v10230
        %v10233 = vadd.f32 %v10181, %v10230
        %v10234 = vadd.f32 %v10182, %v10230
        %v10235 = vadd.f32 %v10183, %v10230
        %v10236 = vadd.f32 %v10184, %v10230
        %v10237 = vadd.f32 %v10185, %v10230
        %v10238 = vadd.f32 %v10186, %v10230
        %v10239 = vadd.f32 %v10187, %v10230
        %v10240 = vadd.f32 %v10188, %v10230
        %v10241 = vadd.f32 %v10189, %v10230
        %v10242 = vadd.f32 %v10190, %v10230
        %v10243 = vadd.f32 %v10191, %v10230
        %v10244 = vadd.f32 %v10192, %v10230
        %v10245 = vadd.f32 %v10193, %v10230
        %v10246 = vadd.f32 %v10194, %v10230
        %v10247 = vadd.f32 %v10195, %v10230
        %v10248 = vadd.f32 %v10196, %v10230
        %v10249 = vadd.f32 %v10197, %v10230
        %v10250 = vadd.f32 %v10198, %v10230
        %v10251 = vadd.f32 %v10199, %v10230
        %v10252 = vadd.f32 %v10200, %v10230
        %v10253 = vadd.f32 %v10201, %v10230
        %v10254 = vadd.f32 %v10202, %v10230
        %v10255 = vadd.f32 %v10203, %v10230
        %v10256 = vadd.f32 %v10204, %v10230
        %v10257 = vadd.f32 %v10205, %v10230
        %v10258 = vadd.f32 %v10206, %v10230
        %v10259 = vadd.f32 %v10207, %v10230
        %v10260 = vadd.f32 %v10208, %v10230
        %v10261 = vadd.f32 %v10209, %v10230
        %v10262 = vadd.f32 %v10210, %v10230
        %v10263 = vadd.f32 %v10211, %v10230
        %v10264 = vadd.f32 %v10212, %v10230
        %v10265 = vadd.f32 %v10213, %v10230
        %v10266 = vadd.f32 %v10214, %v10230
        %v10267 = vadd.f32 %v10215, %v10230
        %v10268 = vadd.f32 %v10216, %v10230
        %v10269 = vadd.f32 %v10217, %v10230
        %v10270 = vadd.f32 %v10218, %v10230
        %v10271 = vadd.f32 %v10219, %v10230
        %v10272 = vadd.f32 %v10220, %v10230
        %v10273 = vadd.f32 %v10221, %v10230
        %v10274 = vadd.f32 %v10222, %v10230
        %v10275 = vadd.f32 %v10223, %v10230
        %v10276 = vadd.f32 %v10224, %v10230
        %v10277 = vadd.f32 %v10225, %v10230
        %v10278 = vadd.f32 %v10226, %v10230
        %v10279 = vadd.f32 %v10231, %v10127
        %v10280 = vadd.f32 %v10232, %v10128
        %v10281 = vadd.f32 %v10233, %v10129
        %v10282 = vadd.f32 %v10234, %v10130
        %v10283 = vadd.f32 %v10235, %v10131
        %v10284 = vadd.f32 %v10236, %v10132
        %v10285 = vadd.f32 %v10237, %v10133
        %v10286 = vadd.f32 %v10238, %v10134
        %v10287 = vadd.f32 %v10239, %v10135
        %v10288 = vadd.f32 %v10240, %v10136
        %v10289 = vadd.f32 %v10241, %v10137
        %v10290 = vadd.f32 %v10242, %v10138
        %v10291 = vadd.f32 %v10243, %v10139
        %v10292 = vadd.f32 %v10244, %v10140
        %v10293 = vadd.f32 %v10245, %v10141
        %v10294 = vadd.f32 %v10246, %v10142
        %v10295 = vadd.f32 %v10247, %v10143
        %v10296 = vadd.f32 %v10248, %v10144
        %v10297 = vadd.f32 %v10249, %v10145
        %v10298 = vadd.f32 %v10250, %v10146
        %v10299 = vadd.f32 %v10251, %v10147
        %v10300 = vadd.f32 %v10252, %v10148
        %v10301 = vadd.f32 %v10253, %v10149
        %v10302 = vadd.f32 %v10254, %v10150
        %v10303 = vadd.f32 %v10255, %v10151
        %v10304 = vadd.f32 %v10256, %v10152
        %v10305 = vadd.f32 %v10257, %v10153
        %v10306 = vadd.f32 %v10258, %v10154
        %v10307 = vadd.f32 %v10259, %v10155
        %v10308 = vadd.f32 %v10260, %v10156
        %v10309 = vadd.f32 %v10261, %v10157
        %v10310 = vadd.f32 %v10262, %v10158
        %v10311 = vadd.f32 %v10263, %v10159
        %v10312 = vadd.f32 %v10264, %v10160
        %v10313 = vadd.f32 %v10265, %v10161
        %v10314 = vadd.f32 %v10266, %v10162
        %v10315 = vadd.f32 %v10267, %v10163
        %v10316 = vadd.f32 %v10268, %v10164
        %v10317 = vadd.f32 %v10269, %v10165
        %v10318 = vadd.f32 %v10270, %v10166
        %v10319 = vadd.f32 %v10271, %v10167
        %v10320 = vadd.f32 %v10272, %v10168
        %v10321 = vadd.f32 %v10273, %v10169
        %v10322 = vadd.f32 %v10274, %v10170
        %v10323 = vadd.f32 %v10275, %v10171
        %v10324 = vadd.f32 %v10276, %v10172
        %v10325 = vadd.f32 %v10277, %v10173
        %v10326 = vadd.f32 %v10278, %v10174
        %v10327 = vmax.f32 %v10279, 0.0
        %v10328 = vmax.f32 %v10280, 0.0
        %v10329 = vmax.f32 %v10281, 0.0
        %v10330 = vmax.f32 %v10282, 0.0
        %v10331 = vmax.f32 %v10283, 0.0
        %v10332 = vmax.f32 %v10284, 0.0
        %v10333 = vmax.f32 %v10285, 0.0
        %v10334 = vmax.f32 %v10286, 0.0
        %v10335 = vmax.f32 %v10287, 0.0
        %v10336 = vmax.f32 %v10288, 0.0
        %v10337 = vmax.f32 %v10289, 0.0
        %v10338 = vmax.f32 %v10290, 0.0
        %v10339 = vmax.f32 %v10291, 0.0
        %v10340 = vmax.f32 %v10292, 0.0
        %v10341 = vmax.f32 %v10293, 0.0
        %v10342 = vmax.f32 %v10294, 0.0
        %v10343 = vmax.f32 %v10295, 0.0
        %v10344 = vmax.f32 %v10296, 0.0
        %v10345 = vmax.f32 %v10297, 0.0
        %v10346 = vmax.f32 %v10298, 0.0
        %v10347 = vmax.f32 %v10299, 0.0
        %v10348 = vmax.f32 %v10300, 0.0
        %v10349 = vmax.f32 %v10301, 0.0
        %v10350 = vmax.f32 %v10302, 0.0
        %v10351 = vmax.f32 %v10303, 0.0
        %v10352 = vmax.f32 %v10304, 0.0
        %v10353 = vmax.f32 %v10305, 0.0
        %v10354 = vmax.f32 %v10306, 0.0
        %v10355 = vmax.f32 %v10307, 0.0
        %v10356 = vmax.f32 %v10308, 0.0
        %v10357 = vmax.f32 %v10309, 0.0
        %v10358 = vmax.f32 %v10310, 0.0
        %v10359 = vmax.f32 %v10311, 0.0
        %v10360 = vmax.f32 %v10312, 0.0
        %v10361 = vmax.f32 %v10313, 0.0
        %v10362 = vmax.f32 %v10314, 0.0
        %v10363 = vmax.f32 %v10315, 0.0
        %v10364 = vmax.f32 %v10316, 0.0
        %v10365 = vmax.f32 %v10317, 0.0
        %v10366 = vmax.f32 %v10318, 0.0
        %v10367 = vmax.f32 %v10319, 0.0
        %v10368 = vmax.f32 %v10320, 0.0
        %v10369 = vmax.f32 %v10321, 0.0
        %v10370 = vmax.f32 %v10322, 0.0
        %v10371 = vmax.f32 %v10323, 0.0
        %v10372 = vmax.f32 %v10324, 0.0
        %v10373 = vmax.f32 %v10325, 0.0
        %v10374 = vmax.f32 %v10326, 0.0
        %10375 = vst [vmem:[%s244] sm:$0xff] %v10327
        %10376 = vst [vmem:[%s244 + $0x8] sm:$0xff] %v10328
        %10377 = vst [vmem:[%s244 + $0x10] sm:$0xff] %v10329
        %10378 = vst [vmem:[%s244 + $0x18] sm:$0xff] %v10330
        %10379 = vst [vmem:[%s244 + $0x20] sm:$0xff] %v10331
        %10380 = vst [vmem:[%s244 + $0x28] sm:$0xff] %v10332
        %10381 = vst [vmem:[%s244 + $0x30] sm:$0xff] %v10333
        %10382 = vst [vmem:[%s244 + $0x38] sm:$0xff] %v10334
        %10383 = vst [vmem:[%s244 + $0x40] sm:$0xff] %v10335
        %10384 = vst [vmem:[%s244 + $0x48] sm:$0xff] %v10336
        %10385 = vst [vmem:[%s244 + $0x50] sm:$0xff] %v10337
        %10386 = vst [vmem:[%s244 + $0x58] sm:$0xff] %v10338
        %10387 = vst [vmem:[%s244 + $0x60] sm:$0xff] %v10339
        %10388 = vst [vmem:[%s244 + $0x68] sm:$0xff] %v10340
        %10389 = vst [vmem:[%s244 + $0x70] sm:$0xff] %v10341
        %10390 = vst [vmem:[%s244 + $0x78] sm:$0xff] %v10342
        %10391 = vst [vmem:[%s244 + $0x80] sm:$0xff] %v10343
        %10392 = vst [vmem:[%s244 + $0x88] sm:$0xff] %v10344
        %10393 = vst [vmem:[%s244 + $0x90] sm:$0xff] %v10345
        %10394 = vst [vmem:[%s244 + $0x98] sm:$0xff] %v10346
        %10395 = vst [vmem:[%s244 + $0xa0] sm:$0xff] %v10347
        %10396 = vst [vmem:[%s244 + $0xa8] sm:$0xff] %v10348
        %10397 = vst [vmem:[%s244 + $0xb0] sm:$0xff] %v10349
        %10398 = vst [vmem:[%s244 + $0xb8] sm:$0xff] %v10350
        %10399 = vst [vmem:[%s244 + $0xc0] sm:$0xff] %v10351
        %10400 = vst [vmem:[%s244 + $0xc8] sm:$0xff] %v10352
        %10401 = vst [vmem:[%s244 + $0xd0] sm:$0xff] %v10353
        %10402 = vst [vmem:[%s244 + $0xd8] sm:$0xff] %v10354
        %10403 = vst [vmem:[%s244 + $0xe0] sm:$0xff] %v10355
        %10404 = vst [vmem:[%s244 + $0xe8] sm:$0xff] %v10356
        %10405 = vst [vmem:[%s244 + $0xf0] sm:$0xff] %v10357
        %10406 = vst [vmem:[%s244 + $0xf8] sm:$0xff] %v10358
        %10407 = vst [vmem:[%s244 + $0x100] sm:$0xff] %v10359
        %10408 = vst [vmem:[%s244 + $0x108] sm:$0xff] %v10360
        %10409 = vst [vmem:[%s244 + $0x110] sm:$0xff] %v10361
        %10410 = vst [vmem:[%s244 + $0x118] sm:$0xff] %v10362
        %10411 = vst [vmem:[%s244 + $0x120] sm:$0xff] %v10363
        %10412 = vst [vmem:[%s244 + $0x128] sm:$0xff] %v10364
        %10413 = vst [vmem:[%s244 + $0x130] sm:$0xff] %v10365
        %10414 = vst [vmem:[%s244 + $0x138] sm:$0xff] %v10366
        %10415 = vst [vmem:[%s244 + $0x140] sm:$0xff] %v10367
        %10416 = vst [vmem:[%s244 + $0x148] sm:$0xff] %v10368
        %10417 = vst [vmem:[%s244 + $0x150] sm:$0xff] %v10369
        %10418 = vst [vmem:[%s244 + $0x158] sm:$0xff] %v10370
        %10419 = vst [vmem:[%s244 + $0x160] sm:$0xff] %v10371
        %10420 = vst [vmem:[%s244 + $0x168] sm:$0xff] %v10372
        %10421 = vst [vmem:[%s244 + $0x170] sm:$0xff] %v10373
        %10422 = vst [vmem:[%s244 + $0x178] sm:$0xff] %v10374
        %s10423 = sand.u32 %s119, 1
        %s10424 = scalar_lea.sflag [#allocation5], %s10423
        %s10425 = sand.u32 %s119, 1
        %s10426 = smul.addr %s10425, 384
        %s10427 = scalar_lea.vmem [#allocation9], %s10426
        // Predicated region
        $region49: #{tpu_custom_call.1} parent=35 // pred_check
          %p10428 = pneg %p129
        $region50: #{tpu_custom_call.1} parent=35 // pred_check_branch
          %10430 = sbr.rel (%p10428) target = $region52
        $region51: #{tpu_custom_call.1} parent=35 // pred_region
          %s10432 = ssub.s32 6144, 6144
          %10433 = vsyncadd %s10424, %s10432
          %s10434 = smul.addr %s22, 48
          %s10435 = smul.addr %s10434, 128
          %s10436 = scalar_lea.hbm %s4, %s10435
          %s10437 = sshll.u32 %s10427, 4
          %s10438 = int_to_ptr.vmem [resolvable:$true] %s10437
          %10443 = dma.vmem_to_hbm [thread:$0]  %s10438, 6144, %s10436, %s10424, 128, 128, 8
        $region52: #{tpu_custom_call.1} parent=35 // pred_fallthru
          _
      $region36: #{tpu_custom_call.1} parent=5 // pred_fallthru
        _
      %p10444 = scmp.le.s32.totalorder 2, %s17
      // Predicated region
      $region53: #{tpu_custom_call.1} parent=5 // pred_check
        %p10445 = pneg %p10444
      $region54: #{tpu_custom_call.1} parent=5 // pred_check_branch
        %10447 = sbr.rel (%p10445) target = $region56
      $region55: #{tpu_custom_call.1} parent=5 // pred_region
        %s10448 = ssub.s32 %s17, 2
        // Predicated region
        $region57: #{tpu_custom_call.1} parent=55 // pred_check
          %p10449 = pneg %p135
        $region58: #{tpu_custom_call.1} parent=55 // pred_check_branch
          %10451 = sbr.rel (%p10449) target = $region60
        $region59: #{tpu_custom_call.1} parent=55 // pred_region
          %s10452 = sand.u32 %s120, 1
          %s10453 = scalar_lea.sflag [#allocation5], %s10452
          %s10454 = sand.u32 %s120, 1
          %s10455 = smul.addr %s10454, 384
          %s10456 = scalar_lea.vmem [#allocation9], %s10455
          %10457 = dma.done %s10453, 6144
        $region60: #{tpu_custom_call.1} parent=55 // pred_fallthru
          _
      $region56: #{tpu_custom_call.1} parent=5 // pred_fallthru
        _
    $region6: #{tpu_custom_call.1} parent=1 // loop_footer
      %s21 = sadd.s32 1, %s17
    $region7: #{tpu_custom_call.1} parent=1 // loop_footer_branch
      %16 = sbr.rel target = $region3
    $region8: #{tpu_custom_call.1} parent=1 // loop_exit
      _
    %10458 = vsyncpa [#allocation4], 1
    %s10459 = scalar_lea.sflag [#allocation4], 1
    %10460 = vsyncpa %s10459, 1
    %10461 = vsyncpa [#allocation7], 1
    %10462 = vsyncpa [#allocation5], 1
    %s10463 = scalar_lea.sflag [#allocation5], 1
    %10464 = vsyncpa %s10463, 1

</llo_original>
